<compile_context>
chip_gen: v7x
topology: tpu7x:2x2x1
jax: 0.10.0
libtpu: 0.0.40
codegen_flags: <defaults>
</compile_context>

<pallas_src>
import functools

import jax
import jax.numpy as jnp
from jax.experimental import pallas as pl
from jax.experimental.pallas import tpu as pltpu


def _round_up(x, m):
    return (x + m - 1) // m * m


# -----------------------------------------------------------------------------
# Row-tiled dense kernel:  y = x @ W + b
# Used for the embed, the hoisted layer-0 input projection, and the output head,
# each batched over every timestep at once.
# -----------------------------------------------------------------------------
def _dense_kernel(x_ref, w_ref, b_ref, y_ref):
    x = x_ref[...].astype(w_ref.dtype)            # no-op in f32; bf16 path on v6e/v7x
    y_ref[...] = (jnp.dot(x, w_ref[...], preferred_element_type=jnp.float32)
                  + b_ref[...])


def dense(x, w, b, *, row_block=512):
    """x: (N, K) f32, w: (K, M), b: (1, M) -> (N, M) f32.
    Rows are tiled (grid over row blocks, 'parallel'); W/b stay resident in VMEM.
    Callers pad M to a multiple of 128 so the output stores are lane-dense."""
    n, k = x.shape
    m = w.shape[1]
    tr = min(row_block, _round_up(n, 8))
    n_pad = _round_up(n, tr)
    if n_pad != n:
        x = jnp.pad(x, ((0, n_pad - n), (0, 0)))
    y = pl.pallas_call(
        _dense_kernel,
        out_shape=jax.ShapeDtypeStruct((n_pad, m), jnp.float32),
        grid_spec=pltpu.PrefetchScalarGridSpec(
            num_scalar_prefetch=0,
            grid=(n_pad // tr,),
            in_specs=[
                pl.BlockSpec((tr, k), lambda i: (i, 0)),     # row block of x
                pl.BlockSpec((k, m), lambda i: (0, 0)),      # W resident
                pl.BlockSpec((1, m), lambda i: (0, 0)),      # b resident
            ],
            out_specs=pl.BlockSpec((tr, m), lambda i: (i, 0)),
        ),
        compiler_params=pltpu.CompilerParams(dimension_semantics=("parallel",)),
    )(x, w, b)
    return y[:n]


# -----------------------------------------------------------------------------
# Recurrent kernel.  grid = (batch_blocks, time_chunks); h/c carried in VMEM
# scratch across grid steps (re-zeroed at time-chunk 0 of each batch block).
#   xg_ref  : (TT, BB, 4Hp)  precomputed layer-0 input gates  emb @ W_ih[0] + b[0]
#   wih_ref : (L, Hp, 4Hp)   resident (wih_ref[0] unused: hoisted)
#   whh_ref : (L, Hp, 4Hp)   resident
#   b_ref   : (L, 1, 4Hp)    resident (b_ref[0] unused: folded into xg)
#   hout_ref: (TT, BB, Hp)   per-chunk top-layer hidden states
# Gate order along 4Hp is (i, f, o, g): sigmoid over [:3Hp], tanh over [3Hp:].
# -----------------------------------------------------------------------------
def _recurrent_kernel(xg_ref, wih_ref, whh_ref, b_ref, hout_ref, h_scr, c_scr,
                      *, n_layers, hidden_p, time_chunk):
    t_chunk = pl.program_id(1)

    @pl.when(t_chunk == 0)
    def _():
        h_scr[...] = jnp.zeros_like(h_scr)
        c_scr[...] = jnp.zeros_like(c_scr)

    bb = h_scr.shape[1]
    hp = hidden_p
    cdt = wih_ref.dtype

    # Hoist the (1,4Hp)->(BB,4Hp) bias broadcasts out of the per-step loop.
    # (Layer 0's bias was folded into the hoisted input projection.)
    b_bc = [None] + [jnp.broadcast_to(b_ref[l], (bb, 4 * hp))
                     for l in range(1, n_layers)]

    def step(tt, carry):
        h_in = None
        for l in range(n_layers):                      # static unroll over layers
            h_part = jnp.dot(h_scr[l].astype(cdt), whh_ref[l],
                             preferred_element_type=jnp.float32)
            if l == 0:
                gates = xg_ref[tt] + h_part            # input part precomputed
            else:
                gates = (jnp.dot(h_in.astype(cdt), wih_ref[l],
                                 preferred_element_type=jnp.float32)
                         + h_part + b_bc[l])
            # Single-pass transcendentals thanks to (i, f, o, g) gate order.
            sig = jax.nn.sigmoid(gates[:, :3 * hp])
            g = jnp.tanh(gates[:, 3 * hp:])
            i = sig[:, :hp]
            f = sig[:, hp:2 * hp]
            o = sig[:, 2 * hp:3 * hp]
            c_new = f * c_scr[l] + i * g
            h_new = o * jnp.tanh(c_new)
            h_scr[l] = h_new
            c_scr[l] = c_new
            h_in = h_new
        hout_ref[tt] = h_in
        return carry

    jax.lax.fori_loop(0, time_chunk, step, 0, unroll=True)


# -----------------------------------------------------------------------------
# Parameter prep for the kernel path: permute gate columns (i,f,g,o) -> (i,f,o,g),
# zero-pad hidden/head features to multiples of 128, cast weights to compute dtype.
# Padding is exact: padded gate columns get zero weights and zero bias, so padded
# hidden units stay identically 0 and contribute nothing downstream.
# -----------------------------------------------------------------------------
def _prepare(params, compute_dtype):
    L, H, four_h = params["w_ih"].shape
    out_size = params["out_w"].shape[1]
    Hp = _round_up(H, 128)
    out_p = _round_up(out_size, 128)
    perm = jnp.array([0, 1, 3, 2])                    # (i,f,g,o) -> (i,f,o,g)

    def pad_gates_w(w):                               # (L, H, 4H) -> (L, Hp, 4Hp)
        w4 = jnp.take(w.reshape(L, H, 4, H), perm, axis=2)
        w4 = jnp.pad(w4, ((0, 0), (0, Hp - H), (0, 0), (0, Hp - H)))
        return w4.reshape(L, Hp, 4 * Hp)

    def pad_gates_b(b):                               # (L, 1, 4H) -> (L, 1, 4Hp)
        b4 = jnp.take(b.reshape(L, 1, 4, H), perm, axis=2)
        b4 = jnp.pad(b4, ((0, 0), (0, 0), (0, 0), (0, Hp - H)))
        return b4.reshape(L, 1, 4 * Hp)

    cast = lambda a: a.astype(compute_dtype)
    return dict(
        embed_w=cast(jnp.pad(params["embed_w"], ((0, 0), (0, Hp - H)))),
        embed_b=jnp.pad(params["embed_b"], ((0, 0), (0, Hp - H))),
        w_ih=cast(pad_gates_w(params["w_ih"])),
        w_hh=cast(pad_gates_w(params["w_hh"])),
        bias=pad_gates_b(params["bias"]),
        out_w=cast(jnp.pad(params["out_w"], ((0, Hp - H), (0, out_p - out_size)))),
        out_b=jnp.pad(params["out_b"], ((0, 0), (0, out_p - out_size))),
    )


def custom_lstm_forward(inputs, params, length=None, *,
                        time_chunk=8, compute_dtype=jnp.float32):
    """CustomLSTM(CustomLSTMCell) forward. inputs: (B, T, input_size) -> (B, T, out)."""
    B, T_total, in_size = inputs.shape
    T = T_total if length is None else length
    L, H, _ = params["w_ih"].shape
    out_size = params["out_w"].shape[1]
    Hp = _round_up(H, 128)
    p = _prepare(params, compute_dtype)

    # ---- hoisted, batched matmuls: embed + layer-0 input projection (all T at once)
    x_tb = jnp.transpose(inputs[:, :T], (1, 0, 2)).reshape(T * B, in_size)
    emb = dense(x_tb, p["embed_w"], p["embed_b"])                  # (T*B, Hp)
    xg = dense(emb, p["w_ih"][0], p["bias"][0])                    # (T*B, 4Hp) incl. b[0]
    xg = xg.reshape(T, B, 4 * Hp)

    # ---- time chunking + batch blocking (batch axis feeds v7x megacore) ----------
    TT = min(time_chunk, T)
    T_pad = _round_up(T, TT)
    if T_pad != T:
        xg = jnp.pad(xg, ((0, T_pad - T), (0, 0), (0, 0)))
    nbb = 2 if (B % 16 == 0) else 1
    BB = B // nbb

    kernel = functools.partial(_recurrent_kernel, n_layers=L, hidden_p=Hp,
                               time_chunk=TT)
    h_top = pl.pallas_call(
        kernel,
        out_shape=jax.ShapeDtypeStruct((T_pad, B, Hp), jnp.float32),
        grid_spec=pltpu.PrefetchScalarGridSpec(
            num_scalar_prefetch=0,
            grid=(nbb, T_pad // TT),                        # (batch blocks, time chunks)
            in_specs=[
                pl.BlockSpec((TT, BB, 4 * Hp), lambda bb, tc: (tc, bb, 0)),  # xg chunk
                pl.BlockSpec((L, Hp, 4 * Hp), lambda bb, tc: (0, 0, 0)),     # W_ih resident
                pl.BlockSpec((L, Hp, 4 * Hp), lambda bb, tc: (0, 0, 0)),     # W_hh resident
                pl.BlockSpec((L, 1, 4 * Hp), lambda bb, tc: (0, 0, 0)),      # bias resident
            ],
            out_specs=pl.BlockSpec((TT, BB, Hp), lambda bb, tc: (tc, bb, 0)),
            scratch_shapes=[pltpu.VMEM((L, BB, Hp), jnp.float32),   # h carry
                            pltpu.VMEM((L, BB, Hp), jnp.float32)],  # c carry
        ),
        compiler_params=pltpu.CompilerParams(
            dimension_semantics=("parallel", "arbitrary")),         # batch ||, time serial
    )(xg, p["w_ih"], p["w_hh"], p["bias"])

    # ---- hoisted output head: one batched (T*B, Hp) @ (Hp, out_p) matmul ---------
    h_flat = h_top[:T].reshape(T * B, Hp)
    out = dense(h_flat, p["out_w"], p["out_b"])[:, :out_size]
    return jnp.transpose(out.reshape(T, B, out_size), (1, 0, 2))    # (B, T, out)


# -----------------------------------------------------------------------------
# Deterministic parameter construction mirroring the nn.Module:
#   Linear embed/output (stored transposed), per-layer nn.LSTMCell weight_ih/weight_hh
#   (stored transposed, PyTorch gate order i,f,g,o).  init_bias sets the forget-gate
#   slice of BOTH bias_ih and bias_hh to 1.0, so the combined bias here has 2.0 in the
#   forget slice — matching PyTorch, where LSTMCell adds bias_ih + bias_hh.
# -----------------------------------------------------------------------------
def init_params(key, input_size, hidden, out_size, n_layers):
    def unif(key, shape, fan_in):
        bound = 1.0 / jnp.sqrt(fan_in)
        return jax.random.uniform(key, shape, jnp.float32, -bound, bound)

    keys = jax.random.split(key, 8)
    embed_w = unif(keys[0], (input_size, hidden), input_size)       # Linear.weight^T
    embed_b = unif(keys[1], (1, hidden), input_size)
    w_ih = unif(keys[2], (n_layers, hidden, 4 * hidden), hidden)    # LSTMCell.weight_ih^T
    w_hh = unif(keys[3], (n_layers, hidden, 4 * hidden), hidden)    # LSTMCell.weight_hh^T
    b_ih = unif(keys[4], (n_layers, 1, 4 * hidden), hidden)
    b_hh = unif(keys[5], (n_layers, 1, 4 * hidden), hidden)
    b_ih = b_ih.at[:, :, hidden:2 * hidden].set(1.0)                # init_bias (forget)
    b_hh = b_hh.at[:, :, hidden:2 * hidden].set(1.0)
    out_w = unif(keys[6], (hidden, out_size), hidden)               # Linear.weight^T
    out_b = unif(keys[7], (1, out_size), hidden)
    return dict(embed_w=embed_w, embed_b=embed_b, w_ih=w_ih, w_hh=w_hh,
                bias=b_ih + b_hh, out_w=out_w, out_b=out_b)


# -----------------------------------------------------------------------------
# Pure-JAX reference of the full rollout (PyTorch gate order), for correctness.
# -----------------------------------------------------------------------------
def ref_forward(inputs, p):
    B, T, _ = inputs.shape
    L, H, _ = p["w_ih"].shape
    h = jnp.zeros((L, B, H), jnp.float32)
    c = jnp.zeros((L, B, H), jnp.float32)
    outs = []
    for t in range(T):
        h_in = inputs[:, t] @ p["embed_w"] + p["embed_b"]
        h_new, c_new = [], []
        for l in range(L):
            gates = h_in @ p["w_ih"][l] + h[l] @ p["w_hh"][l] + p["bias"][l]
            i = jax.nn.sigmoid(gates[:, 0 * H:1 * H])
            f = jax.nn.sigmoid(gates[:, 1 * H:2 * H])
            g = jnp.tanh(gates[:, 2 * H:3 * H])
            o = jax.nn.sigmoid(gates[:, 3 * H:4 * H])
            cl = f * c[l] + i * g
            hl = o * jnp.tanh(cl)
            h_new.append(hl)
            c_new.append(cl)
            h_in = hl
        h, c = jnp.stack(h_new), jnp.stack(c_new)
        outs.append(h_in @ p["out_w"] + p["out_b"])
    return jnp.stack(outs, axis=1)                                  # (B, T, out)


if __name__ == "__main__":
    # TODO(synk): conv-LSTM path (hp.use_conv_lstm=True: Conv2d embed + SingleConv2dLSTMCell)
    # is not implemented; this covers the Linear / nn.LSTMCell path of CustomLSTMCell.
    B, T = 8, 12
    input_size, hidden, out_size, n_layers = 16, 32, 16, 2

    key = jax.random.PRNGKey(0)
    k_in, k_p = jax.random.split(key)
    inputs = jax.random.normal(k_in, (B, T, input_size), jnp.float32)   # time = dim 1
    params = init_params(k_p, input_size, hidden, out_size, n_layers)

    fwd = jax.jit(functools.partial(custom_lstm_forward, length=T))
    lstm_outputs = jax.block_until_ready(fwd(inputs, params))           # (B, T, out_size)

    ref = ref_forward(inputs, params)
    assert lstm_outputs.shape == (B, T, out_size)
    max_err = float(jnp.max(jnp.abs(lstm_outputs - ref)))
    assert jnp.allclose(lstm_outputs, ref, atol=2e-4, rtol=2e-4), (
        f"mismatch vs reference, max abs err = {max_err}")
    print("KERNEL_OK")
</pallas_src>

<mosaic_0001>
module attributes {stable_mosaic.version = 11 : i64} {
  func.func @_dense_kernel(%arg0: i32, %arg1: memref<96x128xf32, #tpu.memory_space<vmem>>, %arg2: memref<128x512xf32, #tpu.memory_space<vmem>>, %arg3: memref<1x512xf32, #tpu.memory_space<vmem>>, %arg4: memref<96x512xf32, #tpu.memory_space<vmem>>) attributes {dimension_semantics = [#tpu.dimension_semantics<parallel>], iteration_bounds = array<i64: 1>, scalar_prefetch = 0 : i64, scratch_operands = 0 : i64, tpu.core_type = #tpu.core_type<tc>, window_params = [{transform_indices = @transform_0, window_bounds = array<i64: 96, 128>}, {pipeline_mode = #tpu.pipeline_mode<synchronous>, transform_indices = @transform_1, window_bounds = array<i64: 128, 512>}, {pipeline_mode = #tpu.pipeline_mode<synchronous>, transform_indices = @transform_2, window_bounds = array<i64: 1, 512>}, {transform_indices = @transform_3, window_bounds = array<i64: 96, 512>}]} {
    %c0 = arith.constant 0 : index
    %c0_0 = arith.constant 0 : index
    %0 = vector.load %arg1[%c0, %c0_0] : memref<96x128xf32, #tpu.memory_space<vmem>>, vector<96x128xf32>
    %c0_1 = arith.constant 0 : index
    %c0_2 = arith.constant 0 : index
    %1 = vector.load %arg2[%c0_1, %c0_2] : memref<128x512xf32, #tpu.memory_space<vmem>>, vector<128x512xf32>
    %cst = arith.constant dense<0.000000e+00> : vector<96x512xf32>
    %2 = tpu.matmul %0, %1, %cst {dimension_numbers = #tpu.dot_dimension_numbers<[1], [0], [0], [1], [0, 0, 1, 1], [], []>} : vector<96x128xf32>, vector<128x512xf32>, vector<96x512xf32> -> vector<96x512xf32>
    %c0_3 = arith.constant 0 : index
    %c0_4 = arith.constant 0 : index
    %3 = vector.load %arg3[%c0_3, %c0_4] : memref<1x512xf32, #tpu.memory_space<vmem>>, vector<1x512xf32>
    %4 = vector.broadcast %3 : vector<1x512xf32> to vector<96x512xf32>
    %5 = arith.addf %2, %4 : vector<96x512xf32>
    %c0_5 = arith.constant 0 : index
    %c0_6 = arith.constant 0 : index
    %6 = vector.load %arg4[%c0_5, %c0_6] : memref<96x512xf32, #tpu.memory_space<vmem>>, vector<96x512xf32>
    tpu.vector_store %arg4[%c0_5, %c0_6], %5 {strides = array<i32>} : memref<96x512xf32, #tpu.memory_space<vmem>>, vector<96x512xf32>,
    return
  }
  func.func @transform_0(%arg0: i32) -> (i32, i32) {
    %c0_i32 = arith.constant 0 : i32
    %c0_i32_0 = arith.constant 0 : i32
    return %arg0, %c0_i32 : i32, i32
  }
  func.func @transform_1(%arg0: i32) -> (i32, i32) {
    %c0_i32 = arith.constant 0 : i32
    %c0_i32_0 = arith.constant 0 : i32
    %c0_i32_1 = arith.constant 0 : i32
    return %c0_i32, %c0_i32_0 : i32, i32
  }
  func.func @transform_2(%arg0: i32) -> (i32, i32) {
    %c0_i32 = arith.constant 0 : i32
    %c0_i32_0 = arith.constant 0 : i32
    %c0_i32_1 = arith.constant 0 : i32
    return %c0_i32, %c0_i32_0 : i32, i32
  }
  func.func @transform_3(%arg0: i32) -> (i32, i32) {
    %c0_i32 = arith.constant 0 : i32
    %c0_i32_0 = arith.constant 0 : i32
    return %arg0, %c0_i32 : i32, i32
  }
}

module attributes {stable_mosaic.version = 11 : i64} {
  func.func @_dense_kernel(%arg0: i32, %arg1: memref<96x16xf32, #tpu.memory_space<vmem>>, %arg2: memref<16x128xf32, #tpu.memory_space<vmem>>, %arg3: memref<1x128xf32, #tpu.memory_space<vmem>>, %arg4: memref<96x128xf32, #tpu.memory_space<vmem>>) attributes {dimension_semantics = [#tpu.dimension_semantics<parallel>], iteration_bounds = array<i64: 1>, scalar_prefetch = 0 : i64, scratch_operands = 0 : i64, tpu.core_type = #tpu.core_type<tc>, window_params = [{transform_indices = @transform_0, window_bounds = array<i64: 96, 16>}, {pipeline_mode = #tpu.pipeline_mode<synchronous>, transform_indices = @transform_1, window_bounds = array<i64: 16, 128>}, {pipeline_mode = #tpu.pipeline_mode<synchronous>, transform_indices = @transform_2, window_bounds = array<i64: 1, 128>}, {transform_indices = @transform_3, window_bounds = array<i64: 96, 128>}]} {
    %c0 = arith.constant 0 : index
    %c0_0 = arith.constant 0 : index
    %0 = vector.load %arg1[%c0, %c0_0] : memref<96x16xf32, #tpu.memory_space<vmem>>, vector<96x16xf32>
    %c0_1 = arith.constant 0 : index
    %c0_2 = arith.constant 0 : index
    %1 = vector.load %arg2[%c0_1, %c0_2] : memref<16x128xf32, #tpu.memory_space<vmem>>, vector<16x128xf32>
    %cst = arith.constant dense<0.000000e+00> : vector<96x128xf32>
    %2 = tpu.matmul %0, %1, %cst {dimension_numbers = #tpu.dot_dimension_numbers<[1], [0], [0], [1], [0, 0, 1, 1], [], []>} : vector<96x16xf32>, vector<16x128xf32>, vector<96x128xf32> -> vector<96x128xf32>
    %c0_3 = arith.constant 0 : index
    %c0_4 = arith.constant 0 : index
    %3 = vector.load %arg3[%c0_3, %c0_4] : memref<1x128xf32, #tpu.memory_space<vmem>>, vector<1x128xf32>
    %4 = vector.broadcast %3 : vector<1x128xf32> to vector<96x128xf32>
    %5 = arith.addf %2, %4 : vector<96x128xf32>
    %c0_5 = arith.constant 0 : index
    %c0_6 = arith.constant 0 : index
    %6 = vector.load %arg4[%c0_5, %c0_6] : memref<96x128xf32, #tpu.memory_space<vmem>>, vector<96x128xf32>
    tpu.vector_store %arg4[%c0_5, %c0_6], %5 {strides = array<i32>} : memref<96x128xf32, #tpu.memory_space<vmem>>, vector<96x128xf32>,
    return
  }
  func.func @transform_0(%arg0: i32) -> (i32, i32) {
    %c0_i32 = arith.constant 0 : i32
    %c0_i32_0 = arith.constant 0 : i32
    return %arg0, %c0_i32 : i32, i32
  }
  func.func @transform_1(%arg0: i32) -> (i32, i32) {
    %c0_i32 = arith.constant 0 : i32
    %c0_i32_0 = arith.constant 0 : i32
    %c0_i32_1 = arith.constant 0 : i32
    return %c0_i32, %c0_i32_0 : i32, i32
  }
  func.func @transform_2(%arg0: i32) -> (i32, i32) {
    %c0_i32 = arith.constant 0 : i32
    %c0_i32_0 = arith.constant 0 : i32
    %c0_i32_1 = arith.constant 0 : i32
    return %c0_i32, %c0_i32_0 : i32, i32
  }
  func.func @transform_3(%arg0: i32) -> (i32, i32) {
    %c0_i32 = arith.constant 0 : i32
    %c0_i32_0 = arith.constant 0 : i32
    return %arg0, %c0_i32 : i32, i32
  }
}

module attributes {stable_mosaic.version = 11 : i64} {
  func.func @_dense_kernel(%arg0: i32, %arg1: memref<96x128xf32, #tpu.memory_space<vmem>>, %arg2: memref<128x128xf32, #tpu.memory_space<vmem>>, %arg3: memref<1x128xf32, #tpu.memory_space<vmem>>, %arg4: memref<96x128xf32, #tpu.memory_space<vmem>>) attributes {dimension_semantics = [#tpu.dimension_semantics<parallel>], iteration_bounds = array<i64: 1>, scalar_prefetch = 0 : i64, scratch_operands = 0 : i64, tpu.core_type = #tpu.core_type<tc>, window_params = [{transform_indices = @transform_0, window_bounds = array<i64: 96, 128>}, {pipeline_mode = #tpu.pipeline_mode<synchronous>, transform_indices = @transform_1, window_bounds = array<i64: 128, 128>}, {pipeline_mode = #tpu.pipeline_mode<synchronous>, transform_indices = @transform_2, window_bounds = array<i64: 1, 128>}, {transform_indices = @transform_3, window_bounds = array<i64: 96, 128>}]} {
    %c0 = arith.constant 0 : index
    %c0_0 = arith.constant 0 : index
    %0 = vector.load %arg1[%c0, %c0_0] : memref<96x128xf32, #tpu.memory_space<vmem>>, vector<96x128xf32>
    %c0_1 = arith.constant 0 : index
    %c0_2 = arith.constant 0 : index
    %1 = vector.load %arg2[%c0_1, %c0_2] : memref<128x128xf32, #tpu.memory_space<vmem>>, vector<128x128xf32>
    %cst = arith.constant dense<0.000000e+00> : vector<96x128xf32>
    %2 = tpu.matmul %0, %1, %cst {dimension_numbers = #tpu.dot_dimension_numbers<[1], [0], [0], [1], [0, 0, 1, 1], [], []>} : vector<96x128xf32>, vector<128x128xf32>, vector<96x128xf32> -> vector<96x128xf32>
    %c0_3 = arith.constant 0 : index
    %c0_4 = arith.constant 0 : index
    %3 = vector.load %arg3[%c0_3, %c0_4] : memref<1x128xf32, #tpu.memory_space<vmem>>, vector<1x128xf32>
    %4 = vector.broadcast %3 : vector<1x128xf32> to vector<96x128xf32>
    %5 = arith.addf %2, %4 : vector<96x128xf32>
    %c0_5 = arith.constant 0 : index
    %c0_6 = arith.constant 0 : index
    %6 = vector.load %arg4[%c0_5, %c0_6] : memref<96x128xf32, #tpu.memory_space<vmem>>, vector<96x128xf32>
    tpu.vector_store %arg4[%c0_5, %c0_6], %5 {strides = array<i32>} : memref<96x128xf32, #tpu.memory_space<vmem>>, vector<96x128xf32>,
    return
  }
  func.func @transform_0(%arg0: i32) -> (i32, i32) {
    %c0_i32 = arith.constant 0 : i32
    %c0_i32_0 = arith.constant 0 : i32
    return %arg0, %c0_i32 : i32, i32
  }
  func.func @transform_1(%arg0: i32) -> (i32, i32) {
    %c0_i32 = arith.constant 0 : i32
    %c0_i32_0 = arith.constant 0 : i32
    %c0_i32_1 = arith.constant 0 : i32
    return %c0_i32, %c0_i32_0 : i32, i32
  }
  func.func @transform_2(%arg0: i32) -> (i32, i32) {
    %c0_i32 = arith.constant 0 : i32
    %c0_i32_0 = arith.constant 0 : i32
    %c0_i32_1 = arith.constant 0 : i32
    return %c0_i32, %c0_i32_0 : i32, i32
  }
  func.func @transform_3(%arg0: i32) -> (i32, i32) {
    %c0_i32 = arith.constant 0 : i32
    %c0_i32_0 = arith.constant 0 : i32
    return %arg0, %c0_i32 : i32, i32
  }
}

module attributes {stable_mosaic.version = 11 : i64} {
  func.func @_recurrent_kernel(%arg0: i32, %arg1: i32, %arg2: memref<8x8x512xf32, #tpu.memory_space<vmem>>, %arg3: memref<2x128x512xf32, #tpu.memory_space<vmem>>, %arg4: memref<2x128x512xf32, #tpu.memory_space<vmem>>, %arg5: memref<2x1x512xf32, #tpu.memory_space<vmem>>, %arg6: memref<8x8x128xf32, #tpu.memory_space<vmem>>, %arg7: memref<2x8x128xf32, #tpu.memory_space<vmem>>, %arg8: memref<2x8x128xf32, #tpu.memory_space<vmem>>) attributes {dimension_semantics = [#tpu.dimension_semantics<parallel>, #tpu.dimension_semantics<arbitrary>], iteration_bounds = array<i64: 1, 2>, scalar_prefetch = 0 : i64, scratch_operands = 2 : i64, tpu.core_type = #tpu.core_type<tc>, window_params = [{transform_indices = @transform_0, window_bounds = array<i64: 8, 8, 512>}, {pipeline_mode = #tpu.pipeline_mode<synchronous>, transform_indices = @transform_1, window_bounds = array<i64: 2, 128, 512>}, {pipeline_mode = #tpu.pipeline_mode<synchronous>, transform_indices = @transform_2, window_bounds = array<i64: 2, 128, 512>}, {pipeline_mode = #tpu.pipeline_mode<synchronous>, transform_indices = @transform_3, window_bounds = array<i64: 2, 1, 512>}, {transform_indices = @transform_4, window_bounds = array<i64: 8, 8, 128>}]} {
    %c0_i32 = arith.constant 0 : i32
    %0 = arith.cmpi eq, %arg1, %c0_i32 : i32
    %1 = arith.extui %0 : i1 to i32
    %c0_i32_0 = arith.constant 0 : i32
    %2 = arith.cmpi ne, %1, %c0_i32_0 : i32
    scf.if %2 {
      %cst_338 = arith.constant 0.000000e+00 : f32
      %575 = vector.broadcast %cst_338 : f32 to vector<2x8x128xf32>
      %c0_339 = arith.constant 0 : index
      %c0_340 = arith.constant 0 : index
      %c0_341 = arith.constant 0 : index
      %576 = vector.load %arg7[%c0_339, %c0_340, %c0_341] : memref<2x8x128xf32, #tpu.memory_space<vmem>>, vector<2x8x128xf32>
      tpu.vector_store %arg7[%c0_339, %c0_340, %c0_341], %575 {strides = array<i32>} : memref<2x8x128xf32, #tpu.memory_space<vmem>>, vector<2x8x128xf32>,
      %cst_342 = arith.constant 0.000000e+00 : f32
      %577 = vector.broadcast %cst_342 : f32 to vector<2x8x128xf32>
      %c0_343 = arith.constant 0 : index
      %c0_344 = arith.constant 0 : index
      %c0_345 = arith.constant 0 : index
      %578 = vector.load %arg8[%c0_343, %c0_344, %c0_345] : memref<2x8x128xf32, #tpu.memory_space<vmem>>, vector<2x8x128xf32>
      tpu.vector_store %arg8[%c0_343, %c0_344, %c0_345], %577 {strides = array<i32>} : memref<2x8x128xf32, #tpu.memory_space<vmem>>, vector<2x8x128xf32>,
    } else {
    }
    %c1 = arith.constant 1 : index
    %c0 = arith.constant 0 : index
    %c0_1 = arith.constant 0 : index
    %3 = vector.load %arg5[%c1, %c0, %c0_1] : memref<2x1x512xf32, #tpu.memory_space<vmem>>, vector<1x1x512xf32>
    %4 = vector.shape_cast %3 : vector<1x1x512xf32> to vector<1x512xf32>
    %5 = vector.shape_cast %4 : vector<1x512xf32> to vector<1x512xf32>
    %6 = vector.broadcast %5 : vector<1x512xf32> to vector<8x512xf32>
    %c0_i32_2 = arith.constant 0 : i32
    %c0_3 = arith.constant 0 : index
    %c0_4 = arith.constant 0 : index
    %c0_5 = arith.constant 0 : index
    %7 = vector.load %arg7[%c0_3, %c0_4, %c0_5] : memref<2x8x128xf32, #tpu.memory_space<vmem>>, vector<1x8x128xf32>
    %8 = vector.shape_cast %7 : vector<1x8x128xf32> to vector<8x128xf32>
    %c0_6 = arith.constant 0 : index
    %c0_7 = arith.constant 0 : index
    %c0_8 = arith.constant 0 : index
    %9 = vector.load %arg4[%c0_6, %c0_7, %c0_8] : memref<2x128x512xf32, #tpu.memory_space<vmem>>, vector<1x128x512xf32>
    %10 = vector.shape_cast %9 : vector<1x128x512xf32> to vector<128x512xf32>
    %cst = arith.constant dense<0.000000e+00> : vector<8x512xf32>
    %11 = tpu.matmul %8, %10, %cst {dimension_numbers = #tpu.dot_dimension_numbers<[1], [0], [0], [1], [0, 0, 1, 1], [], []>} : vector<8x128xf32>, vector<128x512xf32>, vector<8x512xf32> -> vector<8x512xf32>
    %12 = arith.index_cast %c0_i32_2 : i32 to index
    %c0_9 = arith.constant 0 : index
    %c0_10 = arith.constant 0 : index
    %13 = vector.load %arg2[%12, %c0_9, %c0_10] : memref<8x8x512xf32, #tpu.memory_space<vmem>>, vector<1x8x512xf32>
    %14 = vector.shape_cast %13 : vector<1x8x512xf32> to vector<8x512xf32>
    %15 = arith.addf %14, %11 : vector<8x512xf32>
    %16 = vector.extract_strided_slice %15 {offsets = [0, 0], sizes = [8, 384], strides = [1, 1]} : vector<8x512xf32> to vector<8x384xf32>
    %17 = arith.negf %16 : vector<8x384xf32>
    %18 = math.exp %17 : vector<8x384xf32>
    %cst_11 = arith.constant 1.000000e+00 : f32
    %19 = vector.broadcast %cst_11 : f32 to vector<8x384xf32>
    %20 = arith.addf %19, %18 : vector<8x384xf32>
    %21 = arith.divf %19, %20 : vector<8x384xf32>
    %22 = vector.extract_strided_slice %15 {offsets = [0, 384], sizes = [8, 128], strides = [1, 1]} : vector<8x512xf32> to vector<8x128xf32>
    %23 = math.tanh %22 : vector<8x128xf32>
    %24 = vector.extract_strided_slice %21 {offsets = [0, 0], sizes = [8, 128], strides = [1, 1]} : vector<8x384xf32> to vector<8x128xf32>
    %25 = vector.extract_strided_slice %21 {offsets = [0, 128], sizes = [8, 128], strides = [1, 1]} : vector<8x384xf32> to vector<8x128xf32>
    %26 = vector.extract_strided_slice %21 {offsets = [0, 256], sizes = [8, 128], strides = [1, 1]} : vector<8x384xf32> to vector<8x128xf32>
    %c0_12 = arith.constant 0 : index
    %c0_13 = arith.constant 0 : index
    %c0_14 = arith.constant 0 : index
    %27 = vector.load %arg8[%c0_12, %c0_13, %c0_14] : memref<2x8x128xf32, #tpu.memory_space<vmem>>, vector<1x8x128xf32>
    %28 = vector.shape_cast %27 : vector<1x8x128xf32> to vector<8x128xf32>
    %29 = arith.mulf %25, %28 : vector<8x128xf32>
    %30 = arith.mulf %24, %23 : vector<8x128xf32>
    %31 = arith.addf %29, %30 : vector<8x128xf32>
    %32 = math.tanh %31 : vector<8x128xf32>
    %33 = arith.mulf %26, %32 : vector<8x128xf32>
    %c0_15 = arith.constant 0 : index
    %c0_16 = arith.constant 0 : index
    %c0_17 = arith.constant 0 : index
    %34 = vector.load %arg7[%c0_15, %c0_16, %c0_17] : memref<2x8x128xf32, #tpu.memory_space<vmem>>, vector<1x8x128xf32>
    %35 = vector.shape_cast %34 : vector<1x8x128xf32> to vector<8x128xf32>
    %36 = vector.shape_cast %33 : vector<8x128xf32> to vector<1x8x128xf32>
    tpu.vector_store %arg7[%c0_15, %c0_16, %c0_17], %36 {strides = array<i32>} : memref<2x8x128xf32, #tpu.memory_space<vmem>>, vector<1x8x128xf32>,
    %c0_18 = arith.constant 0 : index
    %c0_19 = arith.constant 0 : index
    %c0_20 = arith.constant 0 : index
    %37 = vector.load %arg8[%c0_18, %c0_19, %c0_20] : memref<2x8x128xf32, #tpu.memory_space<vmem>>, vector<1x8x128xf32>
    %38 = vector.shape_cast %37 : vector<1x8x128xf32> to vector<8x128xf32>
    %39 = vector.shape_cast %31 : vector<8x128xf32> to vector<1x8x128xf32>
    tpu.vector_store %arg8[%c0_18, %c0_19, %c0_20], %39 {strides = array<i32>} : memref<2x8x128xf32, #tpu.memory_space<vmem>>, vector<1x8x128xf32>,
    %c1_21 = arith.constant 1 : index
    %c0_22 = arith.constant 0 : index
    %c0_23 = arith.constant 0 : index
    %40 = vector.load %arg7[%c1_21, %c0_22, %c0_23] : memref<2x8x128xf32, #tpu.memory_space<vmem>>, vector<1x8x128xf32>
    %41 = vector.shape_cast %40 : vector<1x8x128xf32> to vector<8x128xf32>
    %c1_24 = arith.constant 1 : index
    %c0_25 = arith.constant 0 : index
    %c0_26 = arith.constant 0 : index
    %42 = vector.load %arg4[%c1_24, %c0_25, %c0_26] : memref<2x128x512xf32, #tpu.memory_space<vmem>>, vector<1x128x512xf32>
    %43 = vector.shape_cast %42 : vector<1x128x512xf32> to vector<128x512xf32>
    %cst_27 = arith.constant dense<0.000000e+00> : vector<8x512xf32>
    %44 = tpu.matmul %41, %43, %cst_27 {dimension_numbers = #tpu.dot_dimension_numbers<[1], [0], [0], [1], [0, 0, 1, 1], [], []>} : vector<8x128xf32>, vector<128x512xf32>, vector<8x512xf32> -> vector<8x512xf32>
    %c1_28 = arith.constant 1 : index
    %c0_29 = arith.constant 0 : index
    %c0_30 = arith.constant 0 : index
    %45 = vector.load %arg3[%c1_28, %c0_29, %c0_30] : memref<2x128x512xf32, #tpu.memory_space<vmem>>, vector<1x128x512xf32>
    %46 = vector.shape_cast %45 : vector<1x128x512xf32> to vector<128x512xf32>
    %cst_31 = arith.constant dense<0.000000e+00> : vector<8x512xf32>
    %47 = tpu.matmul %33, %46, %cst_31 {dimension_numbers = #tpu.dot_dimension_numbers<[1], [0], [0], [1], [0, 0, 1, 1], [], []>} : vector<8x128xf32>, vector<128x512xf32>, vector<8x512xf32> -> vector<8x512xf32>
    %48 = arith.addf %47, %44 : vector<8x512xf32>
    %49 = arith.addf %48, %6 : vector<8x512xf32>
    %50 = vector.extract_strided_slice %49 {offsets = [0, 0], sizes = [8, 384], strides = [1, 1]} : vector<8x512xf32> to vector<8x384xf32>
    %51 = arith.negf %50 : vector<8x384xf32>
    %52 = math.exp %51 : vector<8x384xf32>
    %cst_32 = arith.constant 1.000000e+00 : f32
    %53 = vector.broadcast %cst_32 : f32 to vector<8x384xf32>
    %54 = arith.addf %53, %52 : vector<8x384xf32>
    %55 = arith.divf %53, %54 : vector<8x384xf32>
    %56 = vector.extract_strided_slice %49 {offsets = [0, 384], sizes = [8, 128], strides = [1, 1]} : vector<8x512xf32> to vector<8x128xf32>
    %57 = math.tanh %56 : vector<8x128xf32>
    %58 = vector.extract_strided_slice %55 {offsets = [0, 0], sizes = [8, 128], strides = [1, 1]} : vector<8x384xf32> to vector<8x128xf32>
    %59 = vector.extract_strided_slice %55 {offsets = [0, 128], sizes = [8, 128], strides = [1, 1]} : vector<8x384xf32> to vector<8x128xf32>
    %60 = vector.extract_strided_slice %55 {offsets = [0, 256], sizes = [8, 128], strides = [1, 1]} : vector<8x384xf32> to vector<8x128xf32>
    %c1_33 = arith.constant 1 : index
    %c0_34 = arith.constant 0 : index
    %c0_35 = arith.constant 0 : index
    %61 = vector.load %arg8[%c1_33, %c0_34, %c0_35] : memref<2x8x128xf32, #tpu.memory_space<vmem>>, vector<1x8x128xf32>
    %62 = vector.shape_cast %61 : vector<1x8x128xf32> to vector<8x128xf32>
    %63 = arith.mulf %59, %62 : vector<8x128xf32>
    %64 = arith.mulf %58, %57 : vector<8x128xf32>
    %65 = arith.addf %63, %64 : vector<8x128xf32>
    %66 = math.tanh %65 : vector<8x128xf32>
    %67 = arith.mulf %60, %66 : vector<8x128xf32>
    %c1_36 = arith.constant 1 : index
    %c0_37 = arith.constant 0 : index
    %c0_38 = arith.constant 0 : index
    %68 = vector.load %arg7[%c1_36, %c0_37, %c0_38] : memref<2x8x128xf32, #tpu.memory_space<vmem>>, vector<1x8x128xf32>
    %69 = vector.shape_cast %68 : vector<1x8x128xf32> to vector<8x128xf32>
    %70 = vector.shape_cast %67 : vector<8x128xf32> to vector<1x8x128xf32>
    tpu.vector_store %arg7[%c1_36, %c0_37, %c0_38], %70 {strides = array<i32>} : memref<2x8x128xf32, #tpu.memory_space<vmem>>, vector<1x8x128xf32>,
    %c1_39 = arith.constant 1 : index
    %c0_40 = arith.constant 0 : index
    %c0_41 = arith.constant 0 : index
    %71 = vector.load %arg8[%c1_39, %c0_40, %c0_41] : memref<2x8x128xf32, #tpu.memory_space<vmem>>, vector<1x8x128xf32>
    %72 = vector.shape_cast %71 : vector<1x8x128xf32> to vector<8x128xf32>
    %73 = vector.shape_cast %65 : vector<8x128xf32> to vector<1x8x128xf32>
    tpu.vector_store %arg8[%c1_39, %c0_40, %c0_41], %73 {strides = array<i32>} : memref<2x8x128xf32, #tpu.memory_space<vmem>>, vector<1x8x128xf32>,
    %74 = arith.index_cast %c0_i32_2 : i32 to index
    %c0_42 = arith.constant 0 : index
    %c0_43 = arith.constant 0 : index
    %75 = vector.load %arg6[%74, %c0_42, %c0_43] : memref<8x8x128xf32, #tpu.memory_space<vmem>>, vector<1x8x128xf32>
    %76 = vector.shape_cast %75 : vector<1x8x128xf32> to vector<8x128xf32>
    %77 = vector.shape_cast %67 : vector<8x128xf32> to vector<1x8x128xf32>
    tpu.vector_store %arg6[%74, %c0_42, %c0_43], %77 {strides = array<i32>} : memref<8x8x128xf32, #tpu.memory_space<vmem>>, vector<1x8x128xf32>,
    %c1_i32 = arith.constant 1 : i32
    %c0_44 = arith.constant 0 : index
    %c0_45 = arith.constant 0 : index
    %c0_46 = arith.constant 0 : index
    %78 = vector.load %arg7[%c0_44, %c0_45, %c0_46] : memref<2x8x128xf32, #tpu.memory_space<vmem>>, vector<1x8x128xf32>
    %79 = vector.shape_cast %78 : vector<1x8x128xf32> to vector<8x128xf32>
    %c0_47 = arith.constant 0 : index
    %c0_48 = arith.constant 0 : index
    %c0_49 = arith.constant 0 : index
    %80 = vector.load %arg4[%c0_47, %c0_48, %c0_49] : memref<2x128x512xf32, #tpu.memory_space<vmem>>, vector<1x128x512xf32>
    %81 = vector.shape_cast %80 : vector<1x128x512xf32> to vector<128x512xf32>
    %cst_50 = arith.constant dense<0.000000e+00> : vector<8x512xf32>
    %82 = tpu.matmul %79, %81, %cst_50 {dimension_numbers = #tpu.dot_dimension_numbers<[1], [0], [0], [1], [0, 0, 1, 1], [], []>} : vector<8x128xf32>, vector<128x512xf32>, vector<8x512xf32> -> vector<8x512xf32>
    %83 = arith.index_cast %c1_i32 : i32 to index
    %c0_51 = arith.constant 0 : index
    %c0_52 = arith.constant 0 : index
    %84 = vector.load %arg2[%83, %c0_51, %c0_52] : memref<8x8x512xf32, #tpu.memory_space<vmem>>, vector<1x8x512xf32>
    %85 = vector.shape_cast %84 : vector<1x8x512xf32> to vector<8x512xf32>
    %86 = arith.addf %85, %82 : vector<8x512xf32>
    %87 = vector.extract_strided_slice %86 {offsets = [0, 0], sizes = [8, 384], strides = [1, 1]} : vector<8x512xf32> to vector<8x384xf32>
    %88 = arith.negf %87 : vector<8x384xf32>
    %89 = math.exp %88 : vector<8x384xf32>
    %cst_53 = arith.constant 1.000000e+00 : f32
    %90 = vector.broadcast %cst_53 : f32 to vector<8x384xf32>
    %91 = arith.addf %90, %89 : vector<8x384xf32>
    %92 = arith.divf %90, %91 : vector<8x384xf32>
    %93 = vector.extract_strided_slice %86 {offsets = [0, 384], sizes = [8, 128], strides = [1, 1]} : vector<8x512xf32> to vector<8x128xf32>
    %94 = math.tanh %93 : vector<8x128xf32>
    %95 = vector.extract_strided_slice %92 {offsets = [0, 0], sizes = [8, 128], strides = [1, 1]} : vector<8x384xf32> to vector<8x128xf32>
    %96 = vector.extract_strided_slice %92 {offsets = [0, 128], sizes = [8, 128], strides = [1, 1]} : vector<8x384xf32> to vector<8x128xf32>
    %97 = vector.extract_strided_slice %92 {offsets = [0, 256], sizes = [8, 128], strides = [1, 1]} : vector<8x384xf32> to vector<8x128xf32>
    %c0_54 = arith.constant 0 : index
    %c0_55 = arith.constant 0 : index
    %c0_56 = arith.constant 0 : index
    %98 = vector.load %arg8[%c0_54, %c0_55, %c0_56] : memref<2x8x128xf32, #tpu.memory_space<vmem>>, vector<1x8x128xf32>
    %99 = vector.shape_cast %98 : vector<1x8x128xf32> to vector<8x128xf32>
    %100 = arith.mulf %96, %99 : vector<8x128xf32>
    %101 = arith.mulf %95, %94 : vector<8x128xf32>
    %102 = arith.addf %100, %101 : vector<8x128xf32>
    %103 = math.tanh %102 : vector<8x128xf32>
    %104 = arith.mulf %97, %103 : vector<8x128xf32>
    %c0_57 = arith.constant 0 : index
    %c0_58 = arith.constant 0 : index
    %c0_59 = arith.constant 0 : index
    %105 = vector.load %arg7[%c0_57, %c0_58, %c0_59] : memref<2x8x128xf32, #tpu.memory_space<vmem>>, vector<1x8x128xf32>
    %106 = vector.shape_cast %105 : vector<1x8x128xf32> to vector<8x128xf32>
    %107 = vector.shape_cast %104 : vector<8x128xf32> to vector<1x8x128xf32>
    tpu.vector_store %arg7[%c0_57, %c0_58, %c0_59], %107 {strides = array<i32>} : memref<2x8x128xf32, #tpu.memory_space<vmem>>, vector<1x8x128xf32>,
    %c0_60 = arith.constant 0 : index
    %c0_61 = arith.constant 0 : index
    %c0_62 = arith.constant 0 : index
    %108 = vector.load %arg8[%c0_60, %c0_61, %c0_62] : memref<2x8x128xf32, #tpu.memory_space<vmem>>, vector<1x8x128xf32>
    %109 = vector.shape_cast %108 : vector<1x8x128xf32> to vector<8x128xf32>
    %110 = vector.shape_cast %102 : vector<8x128xf32> to vector<1x8x128xf32>
    tpu.vector_store %arg8[%c0_60, %c0_61, %c0_62], %110 {strides = array<i32>} : memref<2x8x128xf32, #tpu.memory_space<vmem>>, vector<1x8x128xf32>,
    %c1_63 = arith.constant 1 : index
    %c0_64 = arith.constant 0 : index
    %c0_65 = arith.constant 0 : index
    %111 = vector.load %arg7[%c1_63, %c0_64, %c0_65] : memref<2x8x128xf32, #tpu.memory_space<vmem>>, vector<1x8x128xf32>
    %112 = vector.shape_cast %111 : vector<1x8x128xf32> to vector<8x128xf32>
    %c1_66 = arith.constant 1 : index
    %c0_67 = arith.constant 0 : index
    %c0_68 = arith.constant 0 : index
    %113 = vector.load %arg4[%c1_66, %c0_67, %c0_68] : memref<2x128x512xf32, #tpu.memory_space<vmem>>, vector<1x128x512xf32>
    %114 = vector.shape_cast %113 : vector<1x128x512xf32> to vector<128x512xf32>
    %cst_69 = arith.constant dense<0.000000e+00> : vector<8x512xf32>
    %115 = tpu.matmul %112, %114, %cst_69 {dimension_numbers = #tpu.dot_dimension_numbers<[1], [0], [0], [1], [0, 0, 1, 1], [], []>} : vector<8x128xf32>, vector<128x512xf32>, vector<8x512xf32> -> vector<8x512xf32>
    %c1_70 = arith.constant 1 : index
    %c0_71 = arith.constant 0 : index
    %c0_72 = arith.constant 0 : index
    %116 = vector.load %arg3[%c1_70, %c0_71, %c0_72] : memref<2x128x512xf32, #tpu.memory_space<vmem>>, vector<1x128x512xf32>
    %117 = vector.shape_cast %116 : vector<1x128x512xf32> to vector<128x512xf32>
    %cst_73 = arith.constant dense<0.000000e+00> : vector<8x512xf32>
    %118 = tpu.matmul %104, %117, %cst_73 {dimension_numbers = #tpu.dot_dimension_numbers<[1], [0], [0], [1], [0, 0, 1, 1], [], []>} : vector<8x128xf32>, vector<128x512xf32>, vector<8x512xf32> -> vector<8x512xf32>
    %119 = arith.addf %118, %115 : vector<8x512xf32>
    %120 = arith.addf %119, %6 : vector<8x512xf32>
    %121 = vector.extract_strided_slice %120 {offsets = [0, 0], sizes = [8, 384], strides = [1, 1]} : vector<8x512xf32> to vector<8x384xf32>
    %122 = arith.negf %121 : vector<8x384xf32>
    %123 = math.exp %122 : vector<8x384xf32>
    %cst_74 = arith.constant 1.000000e+00 : f32
    %124 = vector.broadcast %cst_74 : f32 to vector<8x384xf32>
    %125 = arith.addf %124, %123 : vector<8x384xf32>
    %126 = arith.divf %124, %125 : vector<8x384xf32>
    %127 = vector.extract_strided_slice %120 {offsets = [0, 384], sizes = [8, 128], strides = [1, 1]} : vector<8x512xf32> to vector<8x128xf32>
    %128 = math.tanh %127 : vector<8x128xf32>
    %129 = vector.extract_strided_slice %126 {offsets = [0, 0], sizes = [8, 128], strides = [1, 1]} : vector<8x384xf32> to vector<8x128xf32>
    %130 = vector.extract_strided_slice %126 {offsets = [0, 128], sizes = [8, 128], strides = [1, 1]} : vector<8x384xf32> to vector<8x128xf32>
    %131 = vector.extract_strided_slice %126 {offsets = [0, 256], sizes = [8, 128], strides = [1, 1]} : vector<8x384xf32> to vector<8x128xf32>
    %c1_75 = arith.constant 1 : index
    %c0_76 = arith.constant 0 : index
    %c0_77 = arith.constant 0 : index
    %132 = vector.load %arg8[%c1_75, %c0_76, %c0_77] : memref<2x8x128xf32, #tpu.memory_space<vmem>>, vector<1x8x128xf32>
    %133 = vector.shape_cast %132 : vector<1x8x128xf32> to vector<8x128xf32>
    %134 = arith.mulf %130, %133 : vector<8x128xf32>
    %135 = arith.mulf %129, %128 : vector<8x128xf32>
    %136 = arith.addf %134, %135 : vector<8x128xf32>
    %137 = math.tanh %136 : vector<8x128xf32>
    %138 = arith.mulf %131, %137 : vector<8x128xf32>
    %c1_78 = arith.constant 1 : index
    %c0_79 = arith.constant 0 : index
    %c0_80 = arith.constant 0 : index
    %139 = vector.load %arg7[%c1_78, %c0_79, %c0_80] : memref<2x8x128xf32, #tpu.memory_space<vmem>>, vector<1x8x128xf32>
    %140 = vector.shape_cast %139 : vector<1x8x128xf32> to vector<8x128xf32>
    %141 = vector.shape_cast %138 : vector<8x128xf32> to vector<1x8x128xf32>
    tpu.vector_store %arg7[%c1_78, %c0_79, %c0_80], %141 {strides = array<i32>} : memref<2x8x128xf32, #tpu.memory_space<vmem>>, vector<1x8x128xf32>,
    %c1_81 = arith.constant 1 : index
    %c0_82 = arith.constant 0 : index
    %c0_83 = arith.constant 0 : index
    %142 = vector.load %arg8[%c1_81, %c0_82, %c0_83] : memref<2x8x128xf32, #tpu.memory_space<vmem>>, vector<1x8x128xf32>
    %143 = vector.shape_cast %142 : vector<1x8x128xf32> to vector<8x128xf32>
    %144 = vector.shape_cast %136 : vector<8x128xf32> to vector<1x8x128xf32>
    tpu.vector_store %arg8[%c1_81, %c0_82, %c0_83], %144 {strides = array<i32>} : memref<2x8x128xf32, #tpu.memory_space<vmem>>, vector<1x8x128xf32>,
    %145 = arith.index_cast %c1_i32 : i32 to index
    %c0_84 = arith.constant 0 : index
    %c0_85 = arith.constant 0 : index
    %146 = vector.load %arg6[%145, %c0_84, %c0_85] : memref<8x8x128xf32, #tpu.memory_space<vmem>>, vector<1x8x128xf32>
    %147 = vector.shape_cast %146 : vector<1x8x128xf32> to vector<8x128xf32>
    %148 = vector.shape_cast %138 : vector<8x128xf32> to vector<1x8x128xf32>
    tpu.vector_store %arg6[%145, %c0_84, %c0_85], %148 {strides = array<i32>} : memref<8x8x128xf32, #tpu.memory_space<vmem>>, vector<1x8x128xf32>,
    %c2_i32 = arith.constant 2 : i32
    %c0_86 = arith.constant 0 : index
    %c0_87 = arith.constant 0 : index
    %c0_88 = arith.constant 0 : index
    %149 = vector.load %arg7[%c0_86, %c0_87, %c0_88] : memref<2x8x128xf32, #tpu.memory_space<vmem>>, vector<1x8x128xf32>
    %150 = vector.shape_cast %149 : vector<1x8x128xf32> to vector<8x128xf32>
    %c0_89 = arith.constant 0 : index
    %c0_90 = arith.constant 0 : index
    %c0_91 = arith.constant 0 : index
    %151 = vector.load %arg4[%c0_89, %c0_90, %c0_91] : memref<2x128x512xf32, #tpu.memory_space<vmem>>, vector<1x128x512xf32>
    %152 = vector.shape_cast %151 : vector<1x128x512xf32> to vector<128x512xf32>
    %cst_92 = arith.constant dense<0.000000e+00> : vector<8x512xf32>
    %153 = tpu.matmul %150, %152, %cst_92 {dimension_numbers = #tpu.dot_dimension_numbers<[1], [0], [0], [1], [0, 0, 1, 1], [], []>} : vector<8x128xf32>, vector<128x512xf32>, vector<8x512xf32> -> vector<8x512xf32>
    %154 = arith.index_cast %c2_i32 : i32 to index
    %c0_93 = arith.constant 0 : index
    %c0_94 = arith.constant 0 : index
    %155 = vector.load %arg2[%154, %c0_93, %c0_94] : memref<8x8x512xf32, #tpu.memory_space<vmem>>, vector<1x8x512xf32>
    %156 = vector.shape_cast %155 : vector<1x8x512xf32> to vector<8x512xf32>
    %157 = arith.addf %156, %153 : vector<8x512xf32>
    %158 = vector.extract_strided_slice %157 {offsets = [0, 0], sizes = [8, 384], strides = [1, 1]} : vector<8x512xf32> to vector<8x384xf32>
    %159 = arith.negf %158 : vector<8x384xf32>
    %160 = math.exp %159 : vector<8x384xf32>
    %cst_95 = arith.constant 1.000000e+00 : f32
    %161 = vector.broadcast %cst_95 : f32 to vector<8x384xf32>
    %162 = arith.addf %161, %160 : vector<8x384xf32>
    %163 = arith.divf %161, %162 : vector<8x384xf32>
    %164 = vector.extract_strided_slice %157 {offsets = [0, 384], sizes = [8, 128], strides = [1, 1]} : vector<8x512xf32> to vector<8x128xf32>
    %165 = math.tanh %164 : vector<8x128xf32>
    %166 = vector.extract_strided_slice %163 {offsets = [0, 0], sizes = [8, 128], strides = [1, 1]} : vector<8x384xf32> to vector<8x128xf32>
    %167 = vector.extract_strided_slice %163 {offsets = [0, 128], sizes = [8, 128], strides = [1, 1]} : vector<8x384xf32> to vector<8x128xf32>
    %168 = vector.extract_strided_slice %163 {offsets = [0, 256], sizes = [8, 128], strides = [1, 1]} : vector<8x384xf32> to vector<8x128xf32>
    %c0_96 = arith.constant 0 : index
    %c0_97 = arith.constant 0 : index
    %c0_98 = arith.constant 0 : index
    %169 = vector.load %arg8[%c0_96, %c0_97, %c0_98] : memref<2x8x128xf32, #tpu.memory_space<vmem>>, vector<1x8x128xf32>
    %170 = vector.shape_cast %169 : vector<1x8x128xf32> to vector<8x128xf32>
    %171 = arith.mulf %167, %170 : vector<8x128xf32>
    %172 = arith.mulf %166, %165 : vector<8x128xf32>
    %173 = arith.addf %171, %172 : vector<8x128xf32>
    %174 = math.tanh %173 : vector<8x128xf32>
    %175 = arith.mulf %168, %174 : vector<8x128xf32>
    %c0_99 = arith.constant 0 : index
    %c0_100 = arith.constant 0 : index
    %c0_101 = arith.constant 0 : index
    %176 = vector.load %arg7[%c0_99, %c0_100, %c0_101] : memref<2x8x128xf32, #tpu.memory_space<vmem>>, vector<1x8x128xf32>
    %177 = vector.shape_cast %176 : vector<1x8x128xf32> to vector<8x128xf32>
    %178 = vector.shape_cast %175 : vector<8x128xf32> to vector<1x8x128xf32>
    tpu.vector_store %arg7[%c0_99, %c0_100, %c0_101], %178 {strides = array<i32>} : memref<2x8x128xf32, #tpu.memory_space<vmem>>, vector<1x8x128xf32>,
    %c0_102 = arith.constant 0 : index
    %c0_103 = arith.constant 0 : index
    %c0_104 = arith.constant 0 : index
    %179 = vector.load %arg8[%c0_102, %c0_103, %c0_104] : memref<2x8x128xf32, #tpu.memory_space<vmem>>, vector<1x8x128xf32>
    %180 = vector.shape_cast %179 : vector<1x8x128xf32> to vector<8x128xf32>
    %181 = vector.shape_cast %173 : vector<8x128xf32> to vector<1x8x128xf32>
    tpu.vector_store %arg8[%c0_102, %c0_103, %c0_104], %181 {strides = array<i32>} : memref<2x8x128xf32, #tpu.memory_space<vmem>>, vector<1x8x128xf32>,
    %c1_105 = arith.constant 1 : index
    %c0_106 = arith.constant 0 : index
    %c0_107 = arith.constant 0 : index
    %182 = vector.load %arg7[%c1_105, %c0_106, %c0_107] : memref<2x8x128xf32, #tpu.memory_space<vmem>>, vector<1x8x128xf32>
    %183 = vector.shape_cast %182 : vector<1x8x128xf32> to vector<8x128xf32>
    %c1_108 = arith.constant 1 : index
    %c0_109 = arith.constant 0 : index
    %c0_110 = arith.constant 0 : index
    %184 = vector.load %arg4[%c1_108, %c0_109, %c0_110] : memref<2x128x512xf32, #tpu.memory_space<vmem>>, vector<1x128x512xf32>
    %185 = vector.shape_cast %184 : vector<1x128x512xf32> to vector<128x512xf32>
    %cst_111 = arith.constant dense<0.000000e+00> : vector<8x512xf32>
    %186 = tpu.matmul %183, %185, %cst_111 {dimension_numbers = #tpu.dot_dimension_numbers<[1], [0], [0], [1], [0, 0, 1, 1], [], []>} : vector<8x128xf32>, vector<128x512xf32>, vector<8x512xf32> -> vector<8x512xf32>
    %c1_112 = arith.constant 1 : index
    %c0_113 = arith.constant 0 : index
    %c0_114 = arith.constant 0 : index
    %187 = vector.load %arg3[%c1_112, %c0_113, %c0_114] : memref<2x128x512xf32, #tpu.memory_space<vmem>>, vector<1x128x512xf32>
    %188 = vector.shape_cast %187 : vector<1x128x512xf32> to vector<128x512xf32>
    %cst_115 = arith.constant dense<0.000000e+00> : vector<8x512xf32>
    %189 = tpu.matmul %175, %188, %cst_115 {dimension_numbers = #tpu.dot_dimension_numbers<[1], [0], [0], [1], [0, 0, 1, 1], [], []>} : vector<8x128xf32>, vector<128x512xf32>, vector<8x512xf32> -> vector<8x512xf32>
    %190 = arith.addf %189, %186 : vector<8x512xf32>
    %191 = arith.addf %190, %6 : vector<8x512xf32>
    %192 = vector.extract_strided_slice %191 {offsets = [0, 0], sizes = [8, 384], strides = [1, 1]} : vector<8x512xf32> to vector<8x384xf32>
    %193 = arith.negf %192 : vector<8x384xf32>
    %194 = math.exp %193 : vector<8x384xf32>
    %cst_116 = arith.constant 1.000000e+00 : f32
    %195 = vector.broadcast %cst_116 : f32 to vector<8x384xf32>
    %196 = arith.addf %195, %194 : vector<8x384xf32>
    %197 = arith.divf %195, %196 : vector<8x384xf32>
    %198 = vector.extract_strided_slice %191 {offsets = [0, 384], sizes = [8, 128], strides = [1, 1]} : vector<8x512xf32> to vector<8x128xf32>
    %199 = math.tanh %198 : vector<8x128xf32>
    %200 = vector.extract_strided_slice %197 {offsets = [0, 0], sizes = [8, 128], strides = [1, 1]} : vector<8x384xf32> to vector<8x128xf32>
    %201 = vector.extract_strided_slice %197 {offsets = [0, 128], sizes = [8, 128], strides = [1, 1]} : vector<8x384xf32> to vector<8x128xf32>
    %202 = vector.extract_strided_slice %197 {offsets = [0, 256], sizes = [8, 128], strides = [1, 1]} : vector<8x384xf32> to vector<8x128xf32>
    %c1_117 = arith.constant 1 : index
    %c0_118 = arith.constant 0 : index
    %c0_119 = arith.constant 0 : index
    %203 = vector.load %arg8[%c1_117, %c0_118, %c0_119] : memref<2x8x128xf32, #tpu.memory_space<vmem>>, vector<1x8x128xf32>
    %204 = vector.shape_cast %203 : vector<1x8x128xf32> to vector<8x128xf32>
    %205 = arith.mulf %201, %204 : vector<8x128xf32>
    %206 = arith.mulf %200, %199 : vector<8x128xf32>
    %207 = arith.addf %205, %206 : vector<8x128xf32>
    %208 = math.tanh %207 : vector<8x128xf32>
    %209 = arith.mulf %202, %208 : vector<8x128xf32>
    %c1_120 = arith.constant 1 : index
    %c0_121 = arith.constant 0 : index
    %c0_122 = arith.constant 0 : index
    %210 = vector.load %arg7[%c1_120, %c0_121, %c0_122] : memref<2x8x128xf32, #tpu.memory_space<vmem>>, vector<1x8x128xf32>
    %211 = vector.shape_cast %210 : vector<1x8x128xf32> to vector<8x128xf32>
    %212 = vector.shape_cast %209 : vector<8x128xf32> to vector<1x8x128xf32>
    tpu.vector_store %arg7[%c1_120, %c0_121, %c0_122], %212 {strides = array<i32>} : memref<2x8x128xf32, #tpu.memory_space<vmem>>, vector<1x8x128xf32>,
    %c1_123 = arith.constant 1 : index
    %c0_124 = arith.constant 0 : index
    %c0_125 = arith.constant 0 : index
    %213 = vector.load %arg8[%c1_123, %c0_124, %c0_125] : memref<2x8x128xf32, #tpu.memory_space<vmem>>, vector<1x8x128xf32>
    %214 = vector.shape_cast %213 : vector<1x8x128xf32> to vector<8x128xf32>
    %215 = vector.shape_cast %207 : vector<8x128xf32> to vector<1x8x128xf32>
    tpu.vector_store %arg8[%c1_123, %c0_124, %c0_125], %215 {strides = array<i32>} : memref<2x8x128xf32, #tpu.memory_space<vmem>>, vector<1x8x128xf32>,
    %216 = arith.index_cast %c2_i32 : i32 to index
    %c0_126 = arith.constant 0 : index
    %c0_127 = arith.constant 0 : index
    %217 = vector.load %arg6[%216, %c0_126, %c0_127] : memref<8x8x128xf32, #tpu.memory_space<vmem>>, vector<1x8x128xf32>
    %218 = vector.shape_cast %217 : vector<1x8x128xf32> to vector<8x128xf32>
    %219 = vector.shape_cast %209 : vector<8x128xf32> to vector<1x8x128xf32>
    tpu.vector_store %arg6[%216, %c0_126, %c0_127], %219 {strides = array<i32>} : memref<8x8x128xf32, #tpu.memory_space<vmem>>, vector<1x8x128xf32>,
    %c3_i32 = arith.constant 3 : i32
    %c0_128 = arith.constant 0 : index
    %c0_129 = arith.constant 0 : index
    %c0_130 = arith.constant 0 : index
    %220 = vector.load %arg7[%c0_128, %c0_129, %c0_130] : memref<2x8x128xf32, #tpu.memory_space<vmem>>, vector<1x8x128xf32>
    %221 = vector.shape_cast %220 : vector<1x8x128xf32> to vector<8x128xf32>
    %c0_131 = arith.constant 0 : index
    %c0_132 = arith.constant 0 : index
    %c0_133 = arith.constant 0 : index
    %222 = vector.load %arg4[%c0_131, %c0_132, %c0_133] : memref<2x128x512xf32, #tpu.memory_space<vmem>>, vector<1x128x512xf32>
    %223 = vector.shape_cast %222 : vector<1x128x512xf32> to vector<128x512xf32>
    %cst_134 = arith.constant dense<0.000000e+00> : vector<8x512xf32>
    %224 = tpu.matmul %221, %223, %cst_134 {dimension_numbers = #tpu.dot_dimension_numbers<[1], [0], [0], [1], [0, 0, 1, 1], [], []>} : vector<8x128xf32>, vector<128x512xf32>, vector<8x512xf32> -> vector<8x512xf32>
    %225 = arith.index_cast %c3_i32 : i32 to index
    %c0_135 = arith.constant 0 : index
    %c0_136 = arith.constant 0 : index
    %226 = vector.load %arg2[%225, %c0_135, %c0_136] : memref<8x8x512xf32, #tpu.memory_space<vmem>>, vector<1x8x512xf32>
    %227 = vector.shape_cast %226 : vector<1x8x512xf32> to vector<8x512xf32>
    %228 = arith.addf %227, %224 : vector<8x512xf32>
    %229 = vector.extract_strided_slice %228 {offsets = [0, 0], sizes = [8, 384], strides = [1, 1]} : vector<8x512xf32> to vector<8x384xf32>
    %230 = arith.negf %229 : vector<8x384xf32>
    %231 = math.exp %230 : vector<8x384xf32>
    %cst_137 = arith.constant 1.000000e+00 : f32
    %232 = vector.broadcast %cst_137 : f32 to vector<8x384xf32>
    %233 = arith.addf %232, %231 : vector<8x384xf32>
    %234 = arith.divf %232, %233 : vector<8x384xf32>
    %235 = vector.extract_strided_slice %228 {offsets = [0, 384], sizes = [8, 128], strides = [1, 1]} : vector<8x512xf32> to vector<8x128xf32>
    %236 = math.tanh %235 : vector<8x128xf32>
    %237 = vector.extract_strided_slice %234 {offsets = [0, 0], sizes = [8, 128], strides = [1, 1]} : vector<8x384xf32> to vector<8x128xf32>
    %238 = vector.extract_strided_slice %234 {offsets = [0, 128], sizes = [8, 128], strides = [1, 1]} : vector<8x384xf32> to vector<8x128xf32>
    %239 = vector.extract_strided_slice %234 {offsets = [0, 256], sizes = [8, 128], strides = [1, 1]} : vector<8x384xf32> to vector<8x128xf32>
    %c0_138 = arith.constant 0 : index
    %c0_139 = arith.constant 0 : index
    %c0_140 = arith.constant 0 : index
    %240 = vector.load %arg8[%c0_138, %c0_139, %c0_140] : memref<2x8x128xf32, #tpu.memory_space<vmem>>, vector<1x8x128xf32>
    %241 = vector.shape_cast %240 : vector<1x8x128xf32> to vector<8x128xf32>
    %242 = arith.mulf %238, %241 : vector<8x128xf32>
    %243 = arith.mulf %237, %236 : vector<8x128xf32>
    %244 = arith.addf %242, %243 : vector<8x128xf32>
    %245 = math.tanh %244 : vector<8x128xf32>
    %246 = arith.mulf %239, %245 : vector<8x128xf32>
    %c0_141 = arith.constant 0 : index
    %c0_142 = arith.constant 0 : index
    %c0_143 = arith.constant 0 : index
    %247 = vector.load %arg7[%c0_141, %c0_142, %c0_143] : memref<2x8x128xf32, #tpu.memory_space<vmem>>, vector<1x8x128xf32>
    %248 = vector.shape_cast %247 : vector<1x8x128xf32> to vector<8x128xf32>
    %249 = vector.shape_cast %246 : vector<8x128xf32> to vector<1x8x128xf32>
    tpu.vector_store %arg7[%c0_141, %c0_142, %c0_143], %249 {strides = array<i32>} : memref<2x8x128xf32, #tpu.memory_space<vmem>>, vector<1x8x128xf32>,
    %c0_144 = arith.constant 0 : index
    %c0_145 = arith.constant 0 : index
    %c0_146 = arith.constant 0 : index
    %250 = vector.load %arg8[%c0_144, %c0_145, %c0_146] : memref<2x8x128xf32, #tpu.memory_space<vmem>>, vector<1x8x128xf32>
    %251 = vector.shape_cast %250 : vector<1x8x128xf32> to vector<8x128xf32>
    %252 = vector.shape_cast %244 : vector<8x128xf32> to vector<1x8x128xf32>
    tpu.vector_store %arg8[%c0_144, %c0_145, %c0_146], %252 {strides = array<i32>} : memref<2x8x128xf32, #tpu.memory_space<vmem>>, vector<1x8x128xf32>,
    %c1_147 = arith.constant 1 : index
    %c0_148 = arith.constant 0 : index
    %c0_149 = arith.constant 0 : index
    %253 = vector.load %arg7[%c1_147, %c0_148, %c0_149] : memref<2x8x128xf32, #tpu.memory_space<vmem>>, vector<1x8x128xf32>
    %254 = vector.shape_cast %253 : vector<1x8x128xf32> to vector<8x128xf32>
    %c1_150 = arith.constant 1 : index
    %c0_151 = arith.constant 0 : index
    %c0_152 = arith.constant 0 : index
    %255 = vector.load %arg4[%c1_150, %c0_151, %c0_152] : memref<2x128x512xf32, #tpu.memory_space<vmem>>, vector<1x128x512xf32>
    %256 = vector.shape_cast %255 : vector<1x128x512xf32> to vector<128x512xf32>
    %cst_153 = arith.constant dense<0.000000e+00> : vector<8x512xf32>
    %257 = tpu.matmul %254, %256, %cst_153 {dimension_numbers = #tpu.dot_dimension_numbers<[1], [0], [0], [1], [0, 0, 1, 1], [], []>} : vector<8x128xf32>, vector<128x512xf32>, vector<8x512xf32> -> vector<8x512xf32>
    %c1_154 = arith.constant 1 : index
    %c0_155 = arith.constant 0 : index
    %c0_156 = arith.constant 0 : index
    %258 = vector.load %arg3[%c1_154, %c0_155, %c0_156] : memref<2x128x512xf32, #tpu.memory_space<vmem>>, vector<1x128x512xf32>
    %259 = vector.shape_cast %258 : vector<1x128x512xf32> to vector<128x512xf32>
    %cst_157 = arith.constant dense<0.000000e+00> : vector<8x512xf32>
    %260 = tpu.matmul %246, %259, %cst_157 {dimension_numbers = #tpu.dot_dimension_numbers<[1], [0], [0], [1], [0, 0, 1, 1], [], []>} : vector<8x128xf32>, vector<128x512xf32>, vector<8x512xf32> -> vector<8x512xf32>
    %261 = arith.addf %260, %257 : vector<8x512xf32>
    %262 = arith.addf %261, %6 : vector<8x512xf32>
    %263 = vector.extract_strided_slice %262 {offsets = [0, 0], sizes = [8, 384], strides = [1, 1]} : vector<8x512xf32> to vector<8x384xf32>
    %264 = arith.negf %263 : vector<8x384xf32>
    %265 = math.exp %264 : vector<8x384xf32>
    %cst_158 = arith.constant 1.000000e+00 : f32
    %266 = vector.broadcast %cst_158 : f32 to vector<8x384xf32>
    %267 = arith.addf %266, %265 : vector<8x384xf32>
    %268 = arith.divf %266, %267 : vector<8x384xf32>
    %269 = vector.extract_strided_slice %262 {offsets = [0, 384], sizes = [8, 128], strides = [1, 1]} : vector<8x512xf32> to vector<8x128xf32>
    %270 = math.tanh %269 : vector<8x128xf32>
    %271 = vector.extract_strided_slice %268 {offsets = [0, 0], sizes = [8, 128], strides = [1, 1]} : vector<8x384xf32> to vector<8x128xf32>
    %272 = vector.extract_strided_slice %268 {offsets = [0, 128], sizes = [8, 128], strides = [1, 1]} : vector<8x384xf32> to vector<8x128xf32>
    %273 = vector.extract_strided_slice %268 {offsets = [0, 256], sizes = [8, 128], strides = [1, 1]} : vector<8x384xf32> to vector<8x128xf32>
    %c1_159 = arith.constant 1 : index
    %c0_160 = arith.constant 0 : index
    %c0_161 = arith.constant 0 : index
    %274 = vector.load %arg8[%c1_159, %c0_160, %c0_161] : memref<2x8x128xf32, #tpu.memory_space<vmem>>, vector<1x8x128xf32>
    %275 = vector.shape_cast %274 : vector<1x8x128xf32> to vector<8x128xf32>
    %276 = arith.mulf %272, %275 : vector<8x128xf32>
    %277 = arith.mulf %271, %270 : vector<8x128xf32>
    %278 = arith.addf %276, %277 : vector<8x128xf32>
    %279 = math.tanh %278 : vector<8x128xf32>
    %280 = arith.mulf %273, %279 : vector<8x128xf32>
    %c1_162 = arith.constant 1 : index
    %c0_163 = arith.constant 0 : index
    %c0_164 = arith.constant 0 : index
    %281 = vector.load %arg7[%c1_162, %c0_163, %c0_164] : memref<2x8x128xf32, #tpu.memory_space<vmem>>, vector<1x8x128xf32>
    %282 = vector.shape_cast %281 : vector<1x8x128xf32> to vector<8x128xf32>
    %283 = vector.shape_cast %280 : vector<8x128xf32> to vector<1x8x128xf32>
    tpu.vector_store %arg7[%c1_162, %c0_163, %c0_164], %283 {strides = array<i32>} : memref<2x8x128xf32, #tpu.memory_space<vmem>>, vector<1x8x128xf32>,
    %c1_165 = arith.constant 1 : index
    %c0_166 = arith.constant 0 : index
    %c0_167 = arith.constant 0 : index
    %284 = vector.load %arg8[%c1_165, %c0_166, %c0_167] : memref<2x8x128xf32, #tpu.memory_space<vmem>>, vector<1x8x128xf32>
    %285 = vector.shape_cast %284 : vector<1x8x128xf32> to vector<8x128xf32>
    %286 = vector.shape_cast %278 : vector<8x128xf32> to vector<1x8x128xf32>
    tpu.vector_store %arg8[%c1_165, %c0_166, %c0_167], %286 {strides = array<i32>} : memref<2x8x128xf32, #tpu.memory_space<vmem>>, vector<1x8x128xf32>,
    %287 = arith.index_cast %c3_i32 : i32 to index
    %c0_168 = arith.constant 0 : index
    %c0_169 = arith.constant 0 : index
    %288 = vector.load %arg6[%287, %c0_168, %c0_169] : memref<8x8x128xf32, #tpu.memory_space<vmem>>, vector<1x8x128xf32>
    %289 = vector.shape_cast %288 : vector<1x8x128xf32> to vector<8x128xf32>
    %290 = vector.shape_cast %280 : vector<8x128xf32> to vector<1x8x128xf32>
    tpu.vector_store %arg6[%287, %c0_168, %c0_169], %290 {strides = array<i32>} : memref<8x8x128xf32, #tpu.memory_space<vmem>>, vector<1x8x128xf32>,
    %c4_i32 = arith.constant 4 : i32
    %c0_170 = arith.constant 0 : index
    %c0_171 = arith.constant 0 : index
    %c0_172 = arith.constant 0 : index
    %291 = vector.load %arg7[%c0_170, %c0_171, %c0_172] : memref<2x8x128xf32, #tpu.memory_space<vmem>>, vector<1x8x128xf32>
    %292 = vector.shape_cast %291 : vector<1x8x128xf32> to vector<8x128xf32>
    %c0_173 = arith.constant 0 : index
    %c0_174 = arith.constant 0 : index
    %c0_175 = arith.constant 0 : index
    %293 = vector.load %arg4[%c0_173, %c0_174, %c0_175] : memref<2x128x512xf32, #tpu.memory_space<vmem>>, vector<1x128x512xf32>
    %294 = vector.shape_cast %293 : vector<1x128x512xf32> to vector<128x512xf32>
    %cst_176 = arith.constant dense<0.000000e+00> : vector<8x512xf32>
    %295 = tpu.matmul %292, %294, %cst_176 {dimension_numbers = #tpu.dot_dimension_numbers<[1], [0], [0], [1], [0, 0, 1, 1], [], []>} : vector<8x128xf32>, vector<128x512xf32>, vector<8x512xf32> -> vector<8x512xf32>
    %296 = arith.index_cast %c4_i32 : i32 to index
    %c0_177 = arith.constant 0 : index
    %c0_178 = arith.constant 0 : index
    %297 = vector.load %arg2[%296, %c0_177, %c0_178] : memref<8x8x512xf32, #tpu.memory_space<vmem>>, vector<1x8x512xf32>
    %298 = vector.shape_cast %297 : vector<1x8x512xf32> to vector<8x512xf32>
    %299 = arith.addf %298, %295 : vector<8x512xf32>
    %300 = vector.extract_strided_slice %299 {offsets = [0, 0], sizes = [8, 384], strides = [1, 1]} : vector<8x512xf32> to vector<8x384xf32>
    %301 = arith.negf %300 : vector<8x384xf32>
    %302 = math.exp %301 : vector<8x384xf32>
    %cst_179 = arith.constant 1.000000e+00 : f32
    %303 = vector.broadcast %cst_179 : f32 to vector<8x384xf32>
    %304 = arith.addf %303, %302 : vector<8x384xf32>
    %305 = arith.divf %303, %304 : vector<8x384xf32>
    %306 = vector.extract_strided_slice %299 {offsets = [0, 384], sizes = [8, 128], strides = [1, 1]} : vector<8x512xf32> to vector<8x128xf32>
    %307 = math.tanh %306 : vector<8x128xf32>
    %308 = vector.extract_strided_slice %305 {offsets = [0, 0], sizes = [8, 128], strides = [1, 1]} : vector<8x384xf32> to vector<8x128xf32>
    %309 = vector.extract_strided_slice %305 {offsets = [0, 128], sizes = [8, 128], strides = [1, 1]} : vector<8x384xf32> to vector<8x128xf32>
    %310 = vector.extract_strided_slice %305 {offsets = [0, 256], sizes = [8, 128], strides = [1, 1]} : vector<8x384xf32> to vector<8x128xf32>
    %c0_180 = arith.constant 0 : index
    %c0_181 = arith.constant 0 : index
    %c0_182 = arith.constant 0 : index
    %311 = vector.load %arg8[%c0_180, %c0_181, %c0_182] : memref<2x8x128xf32, #tpu.memory_space<vmem>>, vector<1x8x128xf32>
    %312 = vector.shape_cast %311 : vector<1x8x128xf32> to vector<8x128xf32>
    %313 = arith.mulf %309, %312 : vector<8x128xf32>
    %314 = arith.mulf %308, %307 : vector<8x128xf32>
    %315 = arith.addf %313, %314 : vector<8x128xf32>
    %316 = math.tanh %315 : vector<8x128xf32>
    %317 = arith.mulf %310, %316 : vector<8x128xf32>
    %c0_183 = arith.constant 0 : index
    %c0_184 = arith.constant 0 : index
    %c0_185 = arith.constant 0 : index
    %318 = vector.load %arg7[%c0_183, %c0_184, %c0_185] : memref<2x8x128xf32, #tpu.memory_space<vmem>>, vector<1x8x128xf32>
    %319 = vector.shape_cast %318 : vector<1x8x128xf32> to vector<8x128xf32>
    %320 = vector.shape_cast %317 : vector<8x128xf32> to vector<1x8x128xf32>
    tpu.vector_store %arg7[%c0_183, %c0_184, %c0_185], %320 {strides = array<i32>} : memref<2x8x128xf32, #tpu.memory_space<vmem>>, vector<1x8x128xf32>,
    %c0_186 = arith.constant 0 : index
    %c0_187 = arith.constant 0 : index
    %c0_188 = arith.constant 0 : index
    %321 = vector.load %arg8[%c0_186, %c0_187, %c0_188] : memref<2x8x128xf32, #tpu.memory_space<vmem>>, vector<1x8x128xf32>
    %322 = vector.shape_cast %321 : vector<1x8x128xf32> to vector<8x128xf32>
    %323 = vector.shape_cast %315 : vector<8x128xf32> to vector<1x8x128xf32>
    tpu.vector_store %arg8[%c0_186, %c0_187, %c0_188], %323 {strides = array<i32>} : memref<2x8x128xf32, #tpu.memory_space<vmem>>, vector<1x8x128xf32>,
    %c1_189 = arith.constant 1 : index
    %c0_190 = arith.constant 0 : index
    %c0_191 = arith.constant 0 : index
    %324 = vector.load %arg7[%c1_189, %c0_190, %c0_191] : memref<2x8x128xf32, #tpu.memory_space<vmem>>, vector<1x8x128xf32>
    %325 = vector.shape_cast %324 : vector<1x8x128xf32> to vector<8x128xf32>
    %c1_192 = arith.constant 1 : index
    %c0_193 = arith.constant 0 : index
    %c0_194 = arith.constant 0 : index
    %326 = vector.load %arg4[%c1_192, %c0_193, %c0_194] : memref<2x128x512xf32, #tpu.memory_space<vmem>>, vector<1x128x512xf32>
    %327 = vector.shape_cast %326 : vector<1x128x512xf32> to vector<128x512xf32>
    %cst_195 = arith.constant dense<0.000000e+00> : vector<8x512xf32>
    %328 = tpu.matmul %325, %327, %cst_195 {dimension_numbers = #tpu.dot_dimension_numbers<[1], [0], [0], [1], [0, 0, 1, 1], [], []>} : vector<8x128xf32>, vector<128x512xf32>, vector<8x512xf32> -> vector<8x512xf32>
    %c1_196 = arith.constant 1 : index
    %c0_197 = arith.constant 0 : index
    %c0_198 = arith.constant 0 : index
    %329 = vector.load %arg3[%c1_196, %c0_197, %c0_198] : memref<2x128x512xf32, #tpu.memory_space<vmem>>, vector<1x128x512xf32>
    %330 = vector.shape_cast %329 : vector<1x128x512xf32> to vector<128x512xf32>
    %cst_199 = arith.constant dense<0.000000e+00> : vector<8x512xf32>
    %331 = tpu.matmul %317, %330, %cst_199 {dimension_numbers = #tpu.dot_dimension_numbers<[1], [0], [0], [1], [0, 0, 1, 1], [], []>} : vector<8x128xf32>, vector<128x512xf32>, vector<8x512xf32> -> vector<8x512xf32>
    %332 = arith.addf %331, %328 : vector<8x512xf32>
    %333 = arith.addf %332, %6 : vector<8x512xf32>
    %334 = vector.extract_strided_slice %333 {offsets = [0, 0], sizes = [8, 384], strides = [1, 1]} : vector<8x512xf32> to vector<8x384xf32>
    %335 = arith.negf %334 : vector<8x384xf32>
    %336 = math.exp %335 : vector<8x384xf32>
    %cst_200 = arith.constant 1.000000e+00 : f32
    %337 = vector.broadcast %cst_200 : f32 to vector<8x384xf32>
    %338 = arith.addf %337, %336 : vector<8x384xf32>
    %339 = arith.divf %337, %338 : vector<8x384xf32>
    %340 = vector.extract_strided_slice %333 {offsets = [0, 384], sizes = [8, 128], strides = [1, 1]} : vector<8x512xf32> to vector<8x128xf32>
    %341 = math.tanh %340 : vector<8x128xf32>
    %342 = vector.extract_strided_slice %339 {offsets = [0, 0], sizes = [8, 128], strides = [1, 1]} : vector<8x384xf32> to vector<8x128xf32>
    %343 = vector.extract_strided_slice %339 {offsets = [0, 128], sizes = [8, 128], strides = [1, 1]} : vector<8x384xf32> to vector<8x128xf32>
    %344 = vector.extract_strided_slice %339 {offsets = [0, 256], sizes = [8, 128], strides = [1, 1]} : vector<8x384xf32> to vector<8x128xf32>
    %c1_201 = arith.constant 1 : index
    %c0_202 = arith.constant 0 : index
    %c0_203 = arith.constant 0 : index
    %345 = vector.load %arg8[%c1_201, %c0_202, %c0_203] : memref<2x8x128xf32, #tpu.memory_space<vmem>>, vector<1x8x128xf32>
    %346 = vector.shape_cast %345 : vector<1x8x128xf32> to vector<8x128xf32>
    %347 = arith.mulf %343, %346 : vector<8x128xf32>
    %348 = arith.mulf %342, %341 : vector<8x128xf32>
    %349 = arith.addf %347, %348 : vector<8x128xf32>
    %350 = math.tanh %349 : vector<8x128xf32>
    %351 = arith.mulf %344, %350 : vector<8x128xf32>
    %c1_204 = arith.constant 1 : index
    %c0_205 = arith.constant 0 : index
    %c0_206 = arith.constant 0 : index
    %352 = vector.load %arg7[%c1_204, %c0_205, %c0_206] : memref<2x8x128xf32, #tpu.memory_space<vmem>>, vector<1x8x128xf32>
    %353 = vector.shape_cast %352 : vector<1x8x128xf32> to vector<8x128xf32>
    %354 = vector.shape_cast %351 : vector<8x128xf32> to vector<1x8x128xf32>
    tpu.vector_store %arg7[%c1_204, %c0_205, %c0_206], %354 {strides = array<i32>} : memref<2x8x128xf32, #tpu.memory_space<vmem>>, vector<1x8x128xf32>,
    %c1_207 = arith.constant 1 : index
    %c0_208 = arith.constant 0 : index
    %c0_209 = arith.constant 0 : index
    %355 = vector.load %arg8[%c1_207, %c0_208, %c0_209] : memref<2x8x128xf32, #tpu.memory_space<vmem>>, vector<1x8x128xf32>
    %356 = vector.shape_cast %355 : vector<1x8x128xf32> to vector<8x128xf32>
    %357 = vector.shape_cast %349 : vector<8x128xf32> to vector<1x8x128xf32>
    tpu.vector_store %arg8[%c1_207, %c0_208, %c0_209], %357 {strides = array<i32>} : memref<2x8x128xf32, #tpu.memory_space<vmem>>, vector<1x8x128xf32>,
    %358 = arith.index_cast %c4_i32 : i32 to index
    %c0_210 = arith.constant 0 : index
    %c0_211 = arith.constant 0 : index
    %359 = vector.load %arg6[%358, %c0_210, %c0_211] : memref<8x8x128xf32, #tpu.memory_space<vmem>>, vector<1x8x128xf32>
    %360 = vector.shape_cast %359 : vector<1x8x128xf32> to vector<8x128xf32>
    %361 = vector.shape_cast %351 : vector<8x128xf32> to vector<1x8x128xf32>
    tpu.vector_store %arg6[%358, %c0_210, %c0_211], %361 {strides = array<i32>} : memref<8x8x128xf32, #tpu.memory_space<vmem>>, vector<1x8x128xf32>,
    %c5_i32 = arith.constant 5 : i32
    %c0_212 = arith.constant 0 : index
    %c0_213 = arith.constant 0 : index
    %c0_214 = arith.constant 0 : index
    %362 = vector.load %arg7[%c0_212, %c0_213, %c0_214] : memref<2x8x128xf32, #tpu.memory_space<vmem>>, vector<1x8x128xf32>
    %363 = vector.shape_cast %362 : vector<1x8x128xf32> to vector<8x128xf32>
    %c0_215 = arith.constant 0 : index
    %c0_216 = arith.constant 0 : index
    %c0_217 = arith.constant 0 : index
    %364 = vector.load %arg4[%c0_215, %c0_216, %c0_217] : memref<2x128x512xf32, #tpu.memory_space<vmem>>, vector<1x128x512xf32>
    %365 = vector.shape_cast %364 : vector<1x128x512xf32> to vector<128x512xf32>
    %cst_218 = arith.constant dense<0.000000e+00> : vector<8x512xf32>
    %366 = tpu.matmul %363, %365, %cst_218 {dimension_numbers = #tpu.dot_dimension_numbers<[1], [0], [0], [1], [0, 0, 1, 1], [], []>} : vector<8x128xf32>, vector<128x512xf32>, vector<8x512xf32> -> vector<8x512xf32>
    %367 = arith.index_cast %c5_i32 : i32 to index
    %c0_219 = arith.constant 0 : index
    %c0_220 = arith.constant 0 : index
    %368 = vector.load %arg2[%367, %c0_219, %c0_220] : memref<8x8x512xf32, #tpu.memory_space<vmem>>, vector<1x8x512xf32>
    %369 = vector.shape_cast %368 : vector<1x8x512xf32> to vector<8x512xf32>
    %370 = arith.addf %369, %366 : vector<8x512xf32>
    %371 = vector.extract_strided_slice %370 {offsets = [0, 0], sizes = [8, 384], strides = [1, 1]} : vector<8x512xf32> to vector<8x384xf32>
    %372 = arith.negf %371 : vector<8x384xf32>
    %373 = math.exp %372 : vector<8x384xf32>
    %cst_221 = arith.constant 1.000000e+00 : f32
    %374 = vector.broadcast %cst_221 : f32 to vector<8x384xf32>
    %375 = arith.addf %374, %373 : vector<8x384xf32>
    %376 = arith.divf %374, %375 : vector<8x384xf32>
    %377 = vector.extract_strided_slice %370 {offsets = [0, 384], sizes = [8, 128], strides = [1, 1]} : vector<8x512xf32> to vector<8x128xf32>
    %378 = math.tanh %377 : vector<8x128xf32>
    %379 = vector.extract_strided_slice %376 {offsets = [0, 0], sizes = [8, 128], strides = [1, 1]} : vector<8x384xf32> to vector<8x128xf32>
    %380 = vector.extract_strided_slice %376 {offsets = [0, 128], sizes = [8, 128], strides = [1, 1]} : vector<8x384xf32> to vector<8x128xf32>
    %381 = vector.extract_strided_slice %376 {offsets = [0, 256], sizes = [8, 128], strides = [1, 1]} : vector<8x384xf32> to vector<8x128xf32>
    %c0_222 = arith.constant 0 : index
    %c0_223 = arith.constant 0 : index
    %c0_224 = arith.constant 0 : index
    %382 = vector.load %arg8[%c0_222, %c0_223, %c0_224] : memref<2x8x128xf32, #tpu.memory_space<vmem>>, vector<1x8x128xf32>
    %383 = vector.shape_cast %382 : vector<1x8x128xf32> to vector<8x128xf32>
    %384 = arith.mulf %380, %383 : vector<8x128xf32>
    %385 = arith.mulf %379, %378 : vector<8x128xf32>
    %386 = arith.addf %384, %385 : vector<8x128xf32>
    %387 = math.tanh %386 : vector<8x128xf32>
    %388 = arith.mulf %381, %387 : vector<8x128xf32>
    %c0_225 = arith.constant 0 : index
    %c0_226 = arith.constant 0 : index
    %c0_227 = arith.constant 0 : index
    %389 = vector.load %arg7[%c0_225, %c0_226, %c0_227] : memref<2x8x128xf32, #tpu.memory_space<vmem>>, vector<1x8x128xf32>
    %390 = vector.shape_cast %389 : vector<1x8x128xf32> to vector<8x128xf32>
    %391 = vector.shape_cast %388 : vector<8x128xf32> to vector<1x8x128xf32>
    tpu.vector_store %arg7[%c0_225, %c0_226, %c0_227], %391 {strides = array<i32>} : memref<2x8x128xf32, #tpu.memory_space<vmem>>, vector<1x8x128xf32>,
    %c0_228 = arith.constant 0 : index
    %c0_229 = arith.constant 0 : index
    %c0_230 = arith.constant 0 : index
    %392 = vector.load %arg8[%c0_228, %c0_229, %c0_230] : memref<2x8x128xf32, #tpu.memory_space<vmem>>, vector<1x8x128xf32>
    %393 = vector.shape_cast %392 : vector<1x8x128xf32> to vector<8x128xf32>
    %394 = vector.shape_cast %386 : vector<8x128xf32> to vector<1x8x128xf32>
    tpu.vector_store %arg8[%c0_228, %c0_229, %c0_230], %394 {strides = array<i32>} : memref<2x8x128xf32, #tpu.memory_space<vmem>>, vector<1x8x128xf32>,
    %c1_231 = arith.constant 1 : index
    %c0_232 = arith.constant 0 : index
    %c0_233 = arith.constant 0 : index
    %395 = vector.load %arg7[%c1_231, %c0_232, %c0_233] : memref<2x8x128xf32, #tpu.memory_space<vmem>>, vector<1x8x128xf32>
    %396 = vector.shape_cast %395 : vector<1x8x128xf32> to vector<8x128xf32>
    %c1_234 = arith.constant 1 : index
    %c0_235 = arith.constant 0 : index
    %c0_236 = arith.constant 0 : index
    %397 = vector.load %arg4[%c1_234, %c0_235, %c0_236] : memref<2x128x512xf32, #tpu.memory_space<vmem>>, vector<1x128x512xf32>
    %398 = vector.shape_cast %397 : vector<1x128x512xf32> to vector<128x512xf32>
    %cst_237 = arith.constant dense<0.000000e+00> : vector<8x512xf32>
    %399 = tpu.matmul %396, %398, %cst_237 {dimension_numbers = #tpu.dot_dimension_numbers<[1], [0], [0], [1], [0, 0, 1, 1], [], []>} : vector<8x128xf32>, vector<128x512xf32>, vector<8x512xf32> -> vector<8x512xf32>
    %c1_238 = arith.constant 1 : index
    %c0_239 = arith.constant 0 : index
    %c0_240 = arith.constant 0 : index
    %400 = vector.load %arg3[%c1_238, %c0_239, %c0_240] : memref<2x128x512xf32, #tpu.memory_space<vmem>>, vector<1x128x512xf32>
    %401 = vector.shape_cast %400 : vector<1x128x512xf32> to vector<128x512xf32>
    %cst_241 = arith.constant dense<0.000000e+00> : vector<8x512xf32>
    %402 = tpu.matmul %388, %401, %cst_241 {dimension_numbers = #tpu.dot_dimension_numbers<[1], [0], [0], [1], [0, 0, 1, 1], [], []>} : vector<8x128xf32>, vector<128x512xf32>, vector<8x512xf32> -> vector<8x512xf32>
    %403 = arith.addf %402, %399 : vector<8x512xf32>
    %404 = arith.addf %403, %6 : vector<8x512xf32>
    %405 = vector.extract_strided_slice %404 {offsets = [0, 0], sizes = [8, 384], strides = [1, 1]} : vector<8x512xf32> to vector<8x384xf32>
    %406 = arith.negf %405 : vector<8x384xf32>
    %407 = math.exp %406 : vector<8x384xf32>
    %cst_242 = arith.constant 1.000000e+00 : f32
    %408 = vector.broadcast %cst_242 : f32 to vector<8x384xf32>
    %409 = arith.addf %408, %407 : vector<8x384xf32>
    %410 = arith.divf %408, %409 : vector<8x384xf32>
    %411 = vector.extract_strided_slice %404 {offsets = [0, 384], sizes = [8, 128], strides = [1, 1]} : vector<8x512xf32> to vector<8x128xf32>
    %412 = math.tanh %411 : vector<8x128xf32>
    %413 = vector.extract_strided_slice %410 {offsets = [0, 0], sizes = [8, 128], strides = [1, 1]} : vector<8x384xf32> to vector<8x128xf32>
    %414 = vector.extract_strided_slice %410 {offsets = [0, 128], sizes = [8, 128], strides = [1, 1]} : vector<8x384xf32> to vector<8x128xf32>
    %415 = vector.extract_strided_slice %410 {offsets = [0, 256], sizes = [8, 128], strides = [1, 1]} : vector<8x384xf32> to vector<8x128xf32>
    %c1_243 = arith.constant 1 : index
    %c0_244 = arith.constant 0 : index
    %c0_245 = arith.constant 0 : index
    %416 = vector.load %arg8[%c1_243, %c0_244, %c0_245] : memref<2x8x128xf32, #tpu.memory_space<vmem>>, vector<1x8x128xf32>
    %417 = vector.shape_cast %416 : vector<1x8x128xf32> to vector<8x128xf32>
    %418 = arith.mulf %414, %417 : vector<8x128xf32>
    %419 = arith.mulf %413, %412 : vector<8x128xf32>
    %420 = arith.addf %418, %419 : vector<8x128xf32>
    %421 = math.tanh %420 : vector<8x128xf32>
    %422 = arith.mulf %415, %421 : vector<8x128xf32>
    %c1_246 = arith.constant 1 : index
    %c0_247 = arith.constant 0 : index
    %c0_248 = arith.constant 0 : index
    %423 = vector.load %arg7[%c1_246, %c0_247, %c0_248] : memref<2x8x128xf32, #tpu.memory_space<vmem>>, vector<1x8x128xf32>
    %424 = vector.shape_cast %423 : vector<1x8x128xf32> to vector<8x128xf32>
    %425 = vector.shape_cast %422 : vector<8x128xf32> to vector<1x8x128xf32>
    tpu.vector_store %arg7[%c1_246, %c0_247, %c0_248], %425 {strides = array<i32>} : memref<2x8x128xf32, #tpu.memory_space<vmem>>, vector<1x8x128xf32>,
    %c1_249 = arith.constant 1 : index
    %c0_250 = arith.constant 0 : index
    %c0_251 = arith.constant 0 : index
    %426 = vector.load %arg8[%c1_249, %c0_250, %c0_251] : memref<2x8x128xf32, #tpu.memory_space<vmem>>, vector<1x8x128xf32>
    %427 = vector.shape_cast %426 : vector<1x8x128xf32> to vector<8x128xf32>
    %428 = vector.shape_cast %420 : vector<8x128xf32> to vector<1x8x128xf32>
    tpu.vector_store %arg8[%c1_249, %c0_250, %c0_251], %428 {strides = array<i32>} : memref<2x8x128xf32, #tpu.memory_space<vmem>>, vector<1x8x128xf32>,
    %429 = arith.index_cast %c5_i32 : i32 to index
    %c0_252 = arith.constant 0 : index
    %c0_253 = arith.constant 0 : index
    %430 = vector.load %arg6[%429, %c0_252, %c0_253] : memref<8x8x128xf32, #tpu.memory_space<vmem>>, vector<1x8x128xf32>
    %431 = vector.shape_cast %430 : vector<1x8x128xf32> to vector<8x128xf32>
    %432 = vector.shape_cast %422 : vector<8x128xf32> to vector<1x8x128xf32>
    tpu.vector_store %arg6[%429, %c0_252, %c0_253], %432 {strides = array<i32>} : memref<8x8x128xf32, #tpu.memory_space<vmem>>, vector<1x8x128xf32>,
    %c6_i32 = arith.constant 6 : i32
    %c0_254 = arith.constant 0 : index
    %c0_255 = arith.constant 0 : index
    %c0_256 = arith.constant 0 : index
    %433 = vector.load %arg7[%c0_254, %c0_255, %c0_256] : memref<2x8x128xf32, #tpu.memory_space<vmem>>, vector<1x8x128xf32>
    %434 = vector.shape_cast %433 : vector<1x8x128xf32> to vector<8x128xf32>
    %c0_257 = arith.constant 0 : index
    %c0_258 = arith.constant 0 : index
    %c0_259 = arith.constant 0 : index
    %435 = vector.load %arg4[%c0_257, %c0_258, %c0_259] : memref<2x128x512xf32, #tpu.memory_space<vmem>>, vector<1x128x512xf32>
    %436 = vector.shape_cast %435 : vector<1x128x512xf32> to vector<128x512xf32>
    %cst_260 = arith.constant dense<0.000000e+00> : vector<8x512xf32>
    %437 = tpu.matmul %434, %436, %cst_260 {dimension_numbers = #tpu.dot_dimension_numbers<[1], [0], [0], [1], [0, 0, 1, 1], [], []>} : vector<8x128xf32>, vector<128x512xf32>, vector<8x512xf32> -> vector<8x512xf32>
    %438 = arith.index_cast %c6_i32 : i32 to index
    %c0_261 = arith.constant 0 : index
    %c0_262 = arith.constant 0 : index
    %439 = vector.load %arg2[%438, %c0_261, %c0_262] : memref<8x8x512xf32, #tpu.memory_space<vmem>>, vector<1x8x512xf32>
    %440 = vector.shape_cast %439 : vector<1x8x512xf32> to vector<8x512xf32>
    %441 = arith.addf %440, %437 : vector<8x512xf32>
    %442 = vector.extract_strided_slice %441 {offsets = [0, 0], sizes = [8, 384], strides = [1, 1]} : vector<8x512xf32> to vector<8x384xf32>
    %443 = arith.negf %442 : vector<8x384xf32>
    %444 = math.exp %443 : vector<8x384xf32>
    %cst_263 = arith.constant 1.000000e+00 : f32
    %445 = vector.broadcast %cst_263 : f32 to vector<8x384xf32>
    %446 = arith.addf %445, %444 : vector<8x384xf32>
    %447 = arith.divf %445, %446 : vector<8x384xf32>
    %448 = vector.extract_strided_slice %441 {offsets = [0, 384], sizes = [8, 128], strides = [1, 1]} : vector<8x512xf32> to vector<8x128xf32>
    %449 = math.tanh %448 : vector<8x128xf32>
    %450 = vector.extract_strided_slice %447 {offsets = [0, 0], sizes = [8, 128], strides = [1, 1]} : vector<8x384xf32> to vector<8x128xf32>
    %451 = vector.extract_strided_slice %447 {offsets = [0, 128], sizes = [8, 128], strides = [1, 1]} : vector<8x384xf32> to vector<8x128xf32>
    %452 = vector.extract_strided_slice %447 {offsets = [0, 256], sizes = [8, 128], strides = [1, 1]} : vector<8x384xf32> to vector<8x128xf32>
    %c0_264 = arith.constant 0 : index
    %c0_265 = arith.constant 0 : index
    %c0_266 = arith.constant 0 : index
    %453 = vector.load %arg8[%c0_264, %c0_265, %c0_266] : memref<2x8x128xf32, #tpu.memory_space<vmem>>, vector<1x8x128xf32>
    %454 = vector.shape_cast %453 : vector<1x8x128xf32> to vector<8x128xf32>
    %455 = arith.mulf %451, %454 : vector<8x128xf32>
    %456 = arith.mulf %450, %449 : vector<8x128xf32>
    %457 = arith.addf %455, %456 : vector<8x128xf32>
    %458 = math.tanh %457 : vector<8x128xf32>
    %459 = arith.mulf %452, %458 : vector<8x128xf32>
    %c0_267 = arith.constant 0 : index
    %c0_268 = arith.constant 0 : index
    %c0_269 = arith.constant 0 : index
    %460 = vector.load %arg7[%c0_267, %c0_268, %c0_269] : memref<2x8x128xf32, #tpu.memory_space<vmem>>, vector<1x8x128xf32>
    %461 = vector.shape_cast %460 : vector<1x8x128xf32> to vector<8x128xf32>
    %462 = vector.shape_cast %459 : vector<8x128xf32> to vector<1x8x128xf32>
    tpu.vector_store %arg7[%c0_267, %c0_268, %c0_269], %462 {strides = array<i32>} : memref<2x8x128xf32, #tpu.memory_space<vmem>>, vector<1x8x128xf32>,
    %c0_270 = arith.constant 0 : index
    %c0_271 = arith.constant 0 : index
    %c0_272 = arith.constant 0 : index
    %463 = vector.load %arg8[%c0_270, %c0_271, %c0_272] : memref<2x8x128xf32, #tpu.memory_space<vmem>>, vector<1x8x128xf32>
    %464 = vector.shape_cast %463 : vector<1x8x128xf32> to vector<8x128xf32>
    %465 = vector.shape_cast %457 : vector<8x128xf32> to vector<1x8x128xf32>
    tpu.vector_store %arg8[%c0_270, %c0_271, %c0_272], %465 {strides = array<i32>} : memref<2x8x128xf32, #tpu.memory_space<vmem>>, vector<1x8x128xf32>,
    %c1_273 = arith.constant 1 : index
    %c0_274 = arith.constant 0 : index
    %c0_275 = arith.constant 0 : index
    %466 = vector.load %arg7[%c1_273, %c0_274, %c0_275] : memref<2x8x128xf32, #tpu.memory_space<vmem>>, vector<1x8x128xf32>
    %467 = vector.shape_cast %466 : vector<1x8x128xf32> to vector<8x128xf32>
    %c1_276 = arith.constant 1 : index
    %c0_277 = arith.constant 0 : index
    %c0_278 = arith.constant 0 : index
    %468 = vector.load %arg4[%c1_276, %c0_277, %c0_278] : memref<2x128x512xf32, #tpu.memory_space<vmem>>, vector<1x128x512xf32>
    %469 = vector.shape_cast %468 : vector<1x128x512xf32> to vector<128x512xf32>
    %cst_279 = arith.constant dense<0.000000e+00> : vector<8x512xf32>
    %470 = tpu.matmul %467, %469, %cst_279 {dimension_numbers = #tpu.dot_dimension_numbers<[1], [0], [0], [1], [0, 0, 1, 1], [], []>} : vector<8x128xf32>, vector<128x512xf32>, vector<8x512xf32> -> vector<8x512xf32>
    %c1_280 = arith.constant 1 : index
    %c0_281 = arith.constant 0 : index
    %c0_282 = arith.constant 0 : index
    %471 = vector.load %arg3[%c1_280, %c0_281, %c0_282] : memref<2x128x512xf32, #tpu.memory_space<vmem>>, vector<1x128x512xf32>
    %472 = vector.shape_cast %471 : vector<1x128x512xf32> to vector<128x512xf32>
    %cst_283 = arith.constant dense<0.000000e+00> : vector<8x512xf32>
    %473 = tpu.matmul %459, %472, %cst_283 {dimension_numbers = #tpu.dot_dimension_numbers<[1], [0], [0], [1], [0, 0, 1, 1], [], []>} : vector<8x128xf32>, vector<128x512xf32>, vector<8x512xf32> -> vector<8x512xf32>
    %474 = arith.addf %473, %470 : vector<8x512xf32>
    %475 = arith.addf %474, %6 : vector<8x512xf32>
    %476 = vector.extract_strided_slice %475 {offsets = [0, 0], sizes = [8, 384], strides = [1, 1]} : vector<8x512xf32> to vector<8x384xf32>
    %477 = arith.negf %476 : vector<8x384xf32>
    %478 = math.exp %477 : vector<8x384xf32>
    %cst_284 = arith.constant 1.000000e+00 : f32
    %479 = vector.broadcast %cst_284 : f32 to vector<8x384xf32>
    %480 = arith.addf %479, %478 : vector<8x384xf32>
    %481 = arith.divf %479, %480 : vector<8x384xf32>
    %482 = vector.extract_strided_slice %475 {offsets = [0, 384], sizes = [8, 128], strides = [1, 1]} : vector<8x512xf32> to vector<8x128xf32>
    %483 = math.tanh %482 : vector<8x128xf32>
    %484 = vector.extract_strided_slice %481 {offsets = [0, 0], sizes = [8, 128], strides = [1, 1]} : vector<8x384xf32> to vector<8x128xf32>
    %485 = vector.extract_strided_slice %481 {offsets = [0, 128], sizes = [8, 128], strides = [1, 1]} : vector<8x384xf32> to vector<8x128xf32>
    %486 = vector.extract_strided_slice %481 {offsets = [0, 256], sizes = [8, 128], strides = [1, 1]} : vector<8x384xf32> to vector<8x128xf32>
    %c1_285 = arith.constant 1 : index
    %c0_286 = arith.constant 0 : index
    %c0_287 = arith.constant 0 : index
    %487 = vector.load %arg8[%c1_285, %c0_286, %c0_287] : memref<2x8x128xf32, #tpu.memory_space<vmem>>, vector<1x8x128xf32>
    %488 = vector.shape_cast %487 : vector<1x8x128xf32> to vector<8x128xf32>
    %489 = arith.mulf %485, %488 : vector<8x128xf32>
    %490 = arith.mulf %484, %483 : vector<8x128xf32>
    %491 = arith.addf %489, %490 : vector<8x128xf32>
    %492 = math.tanh %491 : vector<8x128xf32>
    %493 = arith.mulf %486, %492 : vector<8x128xf32>
    %c1_288 = arith.constant 1 : index
    %c0_289 = arith.constant 0 : index
    %c0_290 = arith.constant 0 : index
    %494 = vector.load %arg7[%c1_288, %c0_289, %c0_290] : memref<2x8x128xf32, #tpu.memory_space<vmem>>, vector<1x8x128xf32>
    %495 = vector.shape_cast %494 : vector<1x8x128xf32> to vector<8x128xf32>
    %496 = vector.shape_cast %493 : vector<8x128xf32> to vector<1x8x128xf32>
    tpu.vector_store %arg7[%c1_288, %c0_289, %c0_290], %496 {strides = array<i32>} : memref<2x8x128xf32, #tpu.memory_space<vmem>>, vector<1x8x128xf32>,
    %c1_291 = arith.constant 1 : index
    %c0_292 = arith.constant 0 : index
    %c0_293 = arith.constant 0 : index
    %497 = vector.load %arg8[%c1_291, %c0_292, %c0_293] : memref<2x8x128xf32, #tpu.memory_space<vmem>>, vector<1x8x128xf32>
    %498 = vector.shape_cast %497 : vector<1x8x128xf32> to vector<8x128xf32>
    %499 = vector.shape_cast %491 : vector<8x128xf32> to vector<1x8x128xf32>
    tpu.vector_store %arg8[%c1_291, %c0_292, %c0_293], %499 {strides = array<i32>} : memref<2x8x128xf32, #tpu.memory_space<vmem>>, vector<1x8x128xf32>,
    %500 = arith.index_cast %c6_i32 : i32 to index
    %c0_294 = arith.constant 0 : index
    %c0_295 = arith.constant 0 : index
    %501 = vector.load %arg6[%500, %c0_294, %c0_295] : memref<8x8x128xf32, #tpu.memory_space<vmem>>, vector<1x8x128xf32>
    %502 = vector.shape_cast %501 : vector<1x8x128xf32> to vector<8x128xf32>
    %503 = vector.shape_cast %493 : vector<8x128xf32> to vector<1x8x128xf32>
    tpu.vector_store %arg6[%500, %c0_294, %c0_295], %503 {strides = array<i32>} : memref<8x8x128xf32, #tpu.memory_space<vmem>>, vector<1x8x128xf32>,
    %c7_i32 = arith.constant 7 : i32
    %c0_296 = arith.constant 0 : index
    %c0_297 = arith.constant 0 : index
    %c0_298 = arith.constant 0 : index
    %504 = vector.load %arg7[%c0_296, %c0_297, %c0_298] : memref<2x8x128xf32, #tpu.memory_space<vmem>>, vector<1x8x128xf32>
    %505 = vector.shape_cast %504 : vector<1x8x128xf32> to vector<8x128xf32>
    %c0_299 = arith.constant 0 : index
    %c0_300 = arith.constant 0 : index
    %c0_301 = arith.constant 0 : index
    %506 = vector.load %arg4[%c0_299, %c0_300, %c0_301] : memref<2x128x512xf32, #tpu.memory_space<vmem>>, vector<1x128x512xf32>
    %507 = vector.shape_cast %506 : vector<1x128x512xf32> to vector<128x512xf32>
    %cst_302 = arith.constant dense<0.000000e+00> : vector<8x512xf32>
    %508 = tpu.matmul %505, %507, %cst_302 {dimension_numbers = #tpu.dot_dimension_numbers<[1], [0], [0], [1], [0, 0, 1, 1], [], []>} : vector<8x128xf32>, vector<128x512xf32>, vector<8x512xf32> -> vector<8x512xf32>
    %509 = arith.index_cast %c7_i32 : i32 to index
    %c0_303 = arith.constant 0 : index
    %c0_304 = arith.constant 0 : index
    %510 = vector.load %arg2[%509, %c0_303, %c0_304] : memref<8x8x512xf32, #tpu.memory_space<vmem>>, vector<1x8x512xf32>
    %511 = vector.shape_cast %510 : vector<1x8x512xf32> to vector<8x512xf32>
    %512 = arith.addf %511, %508 : vector<8x512xf32>
    %513 = vector.extract_strided_slice %512 {offsets = [0, 0], sizes = [8, 384], strides = [1, 1]} : vector<8x512xf32> to vector<8x384xf32>
    %514 = arith.negf %513 : vector<8x384xf32>
    %515 = math.exp %514 : vector<8x384xf32>
    %cst_305 = arith.constant 1.000000e+00 : f32
    %516 = vector.broadcast %cst_305 : f32 to vector<8x384xf32>
    %517 = arith.addf %516, %515 : vector<8x384xf32>
    %518 = arith.divf %516, %517 : vector<8x384xf32>
    %519 = vector.extract_strided_slice %512 {offsets = [0, 384], sizes = [8, 128], strides = [1, 1]} : vector<8x512xf32> to vector<8x128xf32>
    %520 = math.tanh %519 : vector<8x128xf32>
    %521 = vector.extract_strided_slice %518 {offsets = [0, 0], sizes = [8, 128], strides = [1, 1]} : vector<8x384xf32> to vector<8x128xf32>
    %522 = vector.extract_strided_slice %518 {offsets = [0, 128], sizes = [8, 128], strides = [1, 1]} : vector<8x384xf32> to vector<8x128xf32>
    %523 = vector.extract_strided_slice %518 {offsets = [0, 256], sizes = [8, 128], strides = [1, 1]} : vector<8x384xf32> to vector<8x128xf32>
    %c0_306 = arith.constant 0 : index
    %c0_307 = arith.constant 0 : index
    %c0_308 = arith.constant 0 : index
    %524 = vector.load %arg8[%c0_306, %c0_307, %c0_308] : memref<2x8x128xf32, #tpu.memory_space<vmem>>, vector<1x8x128xf32>
    %525 = vector.shape_cast %524 : vector<1x8x128xf32> to vector<8x128xf32>
    %526 = arith.mulf %522, %525 : vector<8x128xf32>
    %527 = arith.mulf %521, %520 : vector<8x128xf32>
    %528 = arith.addf %526, %527 : vector<8x128xf32>
    %529 = math.tanh %528 : vector<8x128xf32>
    %530 = arith.mulf %523, %529 : vector<8x128xf32>
    %c0_309 = arith.constant 0 : index
    %c0_310 = arith.constant 0 : index
    %c0_311 = arith.constant 0 : index
    %531 = vector.load %arg7[%c0_309, %c0_310, %c0_311] : memref<2x8x128xf32, #tpu.memory_space<vmem>>, vector<1x8x128xf32>
    %532 = vector.shape_cast %531 : vector<1x8x128xf32> to vector<8x128xf32>
    %533 = vector.shape_cast %530 : vector<8x128xf32> to vector<1x8x128xf32>
    tpu.vector_store %arg7[%c0_309, %c0_310, %c0_311], %533 {strides = array<i32>} : memref<2x8x128xf32, #tpu.memory_space<vmem>>, vector<1x8x128xf32>,
    %c0_312 = arith.constant 0 : index
    %c0_313 = arith.constant 0 : index
    %c0_314 = arith.constant 0 : index
    %534 = vector.load %arg8[%c0_312, %c0_313, %c0_314] : memref<2x8x128xf32, #tpu.memory_space<vmem>>, vector<1x8x128xf32>
    %535 = vector.shape_cast %534 : vector<1x8x128xf32> to vector<8x128xf32>
    %536 = vector.shape_cast %528 : vector<8x128xf32> to vector<1x8x128xf32>
    tpu.vector_store %arg8[%c0_312, %c0_313, %c0_314], %536 {strides = array<i32>} : memref<2x8x128xf32, #tpu.memory_space<vmem>>, vector<1x8x128xf32>,
    %c1_315 = arith.constant 1 : index
    %c0_316 = arith.constant 0 : index
    %c0_317 = arith.constant 0 : index
    %537 = vector.load %arg7[%c1_315, %c0_316, %c0_317] : memref<2x8x128xf32, #tpu.memory_space<vmem>>, vector<1x8x128xf32>
    %538 = vector.shape_cast %537 : vector<1x8x128xf32> to vector<8x128xf32>
    %c1_318 = arith.constant 1 : index
    %c0_319 = arith.constant 0 : index
    %c0_320 = arith.constant 0 : index
    %539 = vector.load %arg4[%c1_318, %c0_319, %c0_320] : memref<2x128x512xf32, #tpu.memory_space<vmem>>, vector<1x128x512xf32>
    %540 = vector.shape_cast %539 : vector<1x128x512xf32> to vector<128x512xf32>
    %cst_321 = arith.constant dense<0.000000e+00> : vector<8x512xf32>
    %541 = tpu.matmul %538, %540, %cst_321 {dimension_numbers = #tpu.dot_dimension_numbers<[1], [0], [0], [1], [0, 0, 1, 1], [], []>} : vector<8x128xf32>, vector<128x512xf32>, vector<8x512xf32> -> vector<8x512xf32>
    %c1_322 = arith.constant 1 : index
    %c0_323 = arith.constant 0 : index
    %c0_324 = arith.constant 0 : index
    %542 = vector.load %arg3[%c1_322, %c0_323, %c0_324] : memref<2x128x512xf32, #tpu.memory_space<vmem>>, vector<1x128x512xf32>
    %543 = vector.shape_cast %542 : vector<1x128x512xf32> to vector<128x512xf32>
    %cst_325 = arith.constant dense<0.000000e+00> : vector<8x512xf32>
    %544 = tpu.matmul %530, %543, %cst_325 {dimension_numbers = #tpu.dot_dimension_numbers<[1], [0], [0], [1], [0, 0, 1, 1], [], []>} : vector<8x128xf32>, vector<128x512xf32>, vector<8x512xf32> -> vector<8x512xf32>
    %545 = arith.addf %544, %541 : vector<8x512xf32>
    %546 = arith.addf %545, %6 : vector<8x512xf32>
    %547 = vector.extract_strided_slice %546 {offsets = [0, 0], sizes = [8, 384], strides = [1, 1]} : vector<8x512xf32> to vector<8x384xf32>
    %548 = arith.negf %547 : vector<8x384xf32>
    %549 = math.exp %548 : vector<8x384xf32>
    %cst_326 = arith.constant 1.000000e+00 : f32
    %550 = vector.broadcast %cst_326 : f32 to vector<8x384xf32>
    %551 = arith.addf %550, %549 : vector<8x384xf32>
    %552 = arith.divf %550, %551 : vector<8x384xf32>
    %553 = vector.extract_strided_slice %546 {offsets = [0, 384], sizes = [8, 128], strides = [1, 1]} : vector<8x512xf32> to vector<8x128xf32>
    %554 = math.tanh %553 : vector<8x128xf32>
    %555 = vector.extract_strided_slice %552 {offsets = [0, 0], sizes = [8, 128], strides = [1, 1]} : vector<8x384xf32> to vector<8x128xf32>
    %556 = vector.extract_strided_slice %552 {offsets = [0, 128], sizes = [8, 128], strides = [1, 1]} : vector<8x384xf32> to vector<8x128xf32>
    %557 = vector.extract_strided_slice %552 {offsets = [0, 256], sizes = [8, 128], strides = [1, 1]} : vector<8x384xf32> to vector<8x128xf32>
    %c1_327 = arith.constant 1 : index
    %c0_328 = arith.constant 0 : index
    %c0_329 = arith.constant 0 : index
    %558 = vector.load %arg8[%c1_327, %c0_328, %c0_329] : memref<2x8x128xf32, #tpu.memory_space<vmem>>, vector<1x8x128xf32>
    %559 = vector.shape_cast %558 : vector<1x8x128xf32> to vector<8x128xf32>
    %560 = arith.mulf %556, %559 : vector<8x128xf32>
    %561 = arith.mulf %555, %554 : vector<8x128xf32>
    %562 = arith.addf %560, %561 : vector<8x128xf32>
    %563 = math.tanh %562 : vector<8x128xf32>
    %564 = arith.mulf %557, %563 : vector<8x128xf32>
    %c1_330 = arith.constant 1 : index
    %c0_331 = arith.constant 0 : index
    %c0_332 = arith.constant 0 : index
    %565 = vector.load %arg7[%c1_330, %c0_331, %c0_332] : memref<2x8x128xf32, #tpu.memory_space<vmem>>, vector<1x8x128xf32>
    %566 = vector.shape_cast %565 : vector<1x8x128xf32> to vector<8x128xf32>
    %567 = vector.shape_cast %564 : vector<8x128xf32> to vector<1x8x128xf32>
    tpu.vector_store %arg7[%c1_330, %c0_331, %c0_332], %567 {strides = array<i32>} : memref<2x8x128xf32, #tpu.memory_space<vmem>>, vector<1x8x128xf32>,
    %c1_333 = arith.constant 1 : index
    %c0_334 = arith.constant 0 : index
    %c0_335 = arith.constant 0 : index
    %568 = vector.load %arg8[%c1_333, %c0_334, %c0_335] : memref<2x8x128xf32, #tpu.memory_space<vmem>>, vector<1x8x128xf32>
    %569 = vector.shape_cast %568 : vector<1x8x128xf32> to vector<8x128xf32>
    %570 = vector.shape_cast %562 : vector<8x128xf32> to vector<1x8x128xf32>
    tpu.vector_store %arg8[%c1_333, %c0_334, %c0_335], %570 {strides = array<i32>} : memref<2x8x128xf32, #tpu.memory_space<vmem>>, vector<1x8x128xf32>,
    %571 = arith.index_cast %c7_i32 : i32 to index
    %c0_336 = arith.constant 0 : index
    %c0_337 = arith.constant 0 : index
    %572 = vector.load %arg6[%571, %c0_336, %c0_337] : memref<8x8x128xf32, #tpu.memory_space<vmem>>, vector<1x8x128xf32>
    %573 = vector.shape_cast %572 : vector<1x8x128xf32> to vector<8x128xf32>
    %574 = vector.shape_cast %564 : vector<8x128xf32> to vector<1x8x128xf32>
    tpu.vector_store %arg6[%571, %c0_336, %c0_337], %574 {strides = array<i32>} : memref<8x8x128xf32, #tpu.memory_space<vmem>>, vector<1x8x128xf32>,
    %c8_i32 = arith.constant 8 : i32
    return
  }
  func.func @transform_0(%arg0: i32, %arg1: i32) -> (i32, i32, i32) {
    %c0_i32 = arith.constant 0 : i32
    %c0_i32_0 = arith.constant 0 : i32
    return %arg1, %arg0, %c0_i32 : i32, i32, i32
  }
  func.func @transform_1(%arg0: i32, %arg1: i32) -> (i32, i32, i32) {
    %c0_i32 = arith.constant 0 : i32
    %c0_i32_0 = arith.constant 0 : i32
    %c0_i32_1 = arith.constant 0 : i32
    %c0_i32_2 = arith.constant 0 : i32
    return %c0_i32, %c0_i32_0, %c0_i32_1 : i32, i32, i32
  }
  func.func @transform_2(%arg0: i32, %arg1: i32) -> (i32, i32, i32) {
    %c0_i32 = arith.constant 0 : i32
    %c0_i32_0 = arith.constant 0 : i32
    %c0_i32_1 = arith.constant 0 : i32
    %c0_i32_2 = arith.constant 0 : i32
    return %c0_i32, %c0_i32_0, %c0_i32_1 : i32, i32, i32
  }
  func.func @transform_3(%arg0: i32, %arg1: i32) -> (i32, i32, i32) {
    %c0_i32 = arith.constant 0 : i32
    %c0_i32_0 = arith.constant 0 : i32
    %c0_i32_1 = arith.constant 0 : i32
    %c0_i32_2 = arith.constant 0 : i32
    return %c0_i32, %c0_i32_0, %c0_i32_1 : i32, i32, i32
  }
  func.func @transform_4(%arg0: i32, %arg1: i32) -> (i32, i32, i32) {
    %c0_i32 = arith.constant 0 : i32
    %c0_i32_0 = arith.constant 0 : i32
    return %arg1, %arg0, %c0_i32 : i32, i32, i32
  }
}

</mosaic_0001>

<llo_original>
// kernel: custom_lstm_forward.4
$region0: #{custom_lstm_forward.4}
  #allocation0 [shape = 'u32[]', space=smem, size = 0x4, offset = 0x4, fixed_abs, tag = 'smem constant byte address 0x4 - core index']
  #allocation1 [shape = 'u32[144,128]{1,0:T(1,128)}', space=vmem, size = 0x12000, scoped, tag = 'internal scratch']
  %s0 = inlined_call_operand.vmem [shape: f32[96,16], index: 0, kind: input, shape index: {}]
  %s1 = inlined_call_operand.vmem [shape: f32[16,128], index: 1, kind: input, shape index: {}]
  %s2 = inlined_call_operand.vmem [shape: f32[1,128], index: 2, kind: input, shape index: {}]
  %s3 = inlined_call_operand.vmem [shape: f32[96,128], index: 3, kind: output, shape index: {}]
  %s4 = sld [smem:[#allocation0]]
  $region22: #{custom_lstm_forward.4} parent=0
    _
  %s6 = ssub.s32 1, %s4
  %s7 = scalar_select 0, %s6, %s4
  // Predicated region
  $region2: #{custom_lstm_forward.4} parent=0 // pred_check
    _
  $region3: #{custom_lstm_forward.4} parent=0 // pred_check_branch
    %9 = sbr.rel (0) target = $region5
  $region4: #{custom_lstm_forward.4} parent=0 // pred_region
    _
  $region5: #{custom_lstm_forward.4} parent=0 // pred_fallthru
    _
  // Predicated region
  $region6: #{custom_lstm_forward.4} parent=0 // pred_check
    _
  $region7: #{custom_lstm_forward.4} parent=0 // pred_check_branch
    %11 = sbr.rel (0) target = $region9
  $region8: #{custom_lstm_forward.4} parent=0 // pred_region
    _
  $region9: #{custom_lstm_forward.4} parent=0 // pred_fallthru
    _
  // Predicated region
  $region10: #{custom_lstm_forward.4} parent=0 // pred_check
    _
  $region11: #{custom_lstm_forward.4} parent=0 // pred_check_branch
    %13 = sbr.rel (0) target = $region13
  $region12: #{custom_lstm_forward.4} parent=0 // pred_region
    _
  $region13: #{custom_lstm_forward.4} parent=0 // pred_fallthru
    _
  %v14 = vld [vmem:[%s0] sm:$0xff]
  %v15 = vld [vmem:[%s0 + $0x8] sm:$0xff]
  %v16 = vld [vmem:[%s0 + $0x10] sm:$0xff]
  %v17 = vld [vmem:[%s0 + $0x18] sm:$0xff]
  %v18 = vld [vmem:[%s0 + $0x20] sm:$0xff]
  %v19 = vld [vmem:[%s0 + $0x28] sm:$0xff]
  %v20 = vld [vmem:[%s0 + $0x30] sm:$0xff]
  %v21 = vld [vmem:[%s0 + $0x38] sm:$0xff]
  %v22 = vld [vmem:[%s0 + $0x40] sm:$0xff]
  %v23 = vld [vmem:[%s0 + $0x48] sm:$0xff]
  %v24 = vld [vmem:[%s0 + $0x50] sm:$0xff]
  %v25 = vld [vmem:[%s0 + $0x58] sm:$0xff]
  %v26 = vld [vmem:[%s1] sm:$0xff]
  %v27 = vld [vmem:[%s1 + $0x8] sm:$0xff]
  %v28 = vld [vmem:[%s2] sm:$0x1]
  %v30 = vlaneseq
  %v31 = vshrl.u32 %v30, 7
  %v32 = vsub.s32 0, %v31
  %v33 = vrot.slane %v28, %v32
  %vm35 = vcmask 130048
  %v37 = vsel %vm35, %v14, 0
  %v40 = vsel %vm35, %v15, 0
  %v43 = vsel %vm35, %v16, 0
  %v46 = vsel %vm35, %v17, 0
  %v49 = vsel %vm35, %v18, 0
  %v52 = vsel %vm35, %v19, 0
  %v55 = vsel %vm35, %v20, 0
  %v58 = vsel %vm35, %v21, 0
  %v61 = vsel %vm35, %v22, 0
  %v64 = vsel %vm35, %v23, 0
  %v67 = vsel %vm35, %v24, 0
  %v70 = vsel %vm35, %v25, 0
  %72 = vmatprep.subr.mxu0 0.0
  %73 = vmatpush1.msra.mxu0 %v26
  %74 = vmatprep.subr.mxu0 0.0
  %75 = vmatpush1.msra.mxu0 %v27
  %76 = vmatprep.subr.mxu0 0.0
  %77 = vmatpush1.msra.mxu0 0.0
  %78 = vmatprep.subr.mxu0 0.0
  %79 = vmatpush1.msra.mxu0 0.0
  %80 = vmatprep.subr.mxu0 0.0
  %81 = vmatpush1.msra.mxu0 0.0
  %82 = vmatprep.subr.mxu0 0.0
  %83 = vmatpush1.msra.mxu0 0.0
  %84 = vmatprep.subr.mxu0 0.0
  %85 = vmatpush1.msra.mxu0 0.0
  %86 = vmatprep.subr.mxu0 0.0
  %87 = vmatpush1.msra.mxu0 0.0
  %88 = vmatprep.subr.mxu0 0.0
  %89 = vmatpush1.msra.mxu0 0.0
  %90 = vmatprep.subr.mxu0 0.0
  %91 = vmatpush1.msra.mxu0 0.0
  %92 = vmatprep.subr.mxu0 0.0
  %93 = vmatpush1.msra.mxu0 0.0
  %94 = vmatprep.subr.mxu0 0.0
  %95 = vmatpush1.msra.mxu0 0.0
  %96 = vmatprep.subr.mxu0 0.0
  %97 = vmatpush1.msra.mxu0 0.0
  %98 = vmatprep.subr.mxu0 0.0
  %99 = vmatpush1.msra.mxu0 0.0
  %100 = vmatprep.subr.mxu0 0.0
  %101 = vmatpush1.msra.mxu0 0.0
  %102 = vmatprep.subr.mxu0 0.0
  %103 = vmatpush1.msra.mxu0 0.0
  %104 = vmatprep.subr.mxu0 0.0
  %105 = vmatpush1.msra.mxu0 0.0
  %106 = vmatprep.subr.mxu0 0.0
  %107 = vmatpush1.msra.mxu0 0.0
  %108 = vmatprep.subr.mxu0 0.0
  %109 = vmatpush1.msra.mxu0 0.0
  %110 = vmatprep.subr.mxu0 0.0
  %111 = vmatpush1.msra.mxu0 0.0
  %112 = vmatprep.subr.mxu0 0.0
  %113 = vmatpush1.msra.mxu0 0.0
  %114 = vmatprep.subr.mxu0 0.0
  %115 = vmatpush1.msra.mxu0 0.0
  %116 = vmatprep.subr.mxu0 0.0
  %117 = vmatpush1.msra.mxu0 0.0
  %118 = vmatprep.subr.mxu0 0.0
  %119 = vmatpush1.msra.mxu0 0.0
  %120 = vmatprep.subr.mxu0 0.0
  %121 = vmatpush1.msra.mxu0 0.0
  %122 = vmatprep.subr.mxu0 0.0
  %123 = vmatpush1.msra.mxu0 0.0
  %124 = vmatprep.subr.mxu0 0.0
  %125 = vmatpush1.msra.mxu0 0.0
  %126 = vmatprep.subr.mxu0 0.0
  %127 = vmatpush1.msra.mxu0 0.0
  %128 = vmatprep.subr.mxu0 0.0
  %129 = vmatpush1.msra.mxu0 0.0
  %130 = vmatprep.subr.mxu0 0.0
  %131 = vmatpush1.msra.mxu0 0.0
  %132 = vmatprep.subr.mxu0 0.0
  %133 = vmatpush1.msra.mxu0 0.0
  %134 = vmatprep.subr.mxu0 0.0
  %135 = vmatpush1.msra.mxu0 0.0
  %136 = vmatprep.mubr.f32.mxu0 0.0
  %137 = vmatmul.mubr.f32.gmra.mrb[0].mxu0 %v37
  %v138 = vpop.f32.mrb[0].mxu0
  %v139 = vadd.f32 %v33, %v138
  %v140 = vpop.f32.mrb[0].mxu0
  %141 = vmatprep.mubr.f32.mxu0 0.0
  %142 = vmatmul.mubr.f32.gmra.mrb[0].mxu0 %v40
  %v143 = vpop.f32.mrb[0].mxu0
  %v144 = vadd.f32 %v33, %v143
  %v145 = vpop.f32.mrb[0].mxu0
  %146 = vmatprep.mubr.f32.mxu0 0.0
  %147 = vmatmul.mubr.f32.gmra.mrb[0].mxu0 %v43
  %v148 = vpop.f32.mrb[0].mxu0
  %v149 = vadd.f32 %v33, %v148
  %v150 = vpop.f32.mrb[0].mxu0
  %151 = vmatprep.mubr.f32.mxu0 0.0
  %152 = vmatmul.mubr.f32.gmra.mrb[0].mxu0 %v46
  %v153 = vpop.f32.mrb[0].mxu0
  %v154 = vadd.f32 %v33, %v153
  %v155 = vpop.f32.mrb[0].mxu0
  %156 = vmatprep.mubr.f32.mxu0 0.0
  %157 = vmatmul.mubr.f32.gmra.mrb[0].mxu0 %v49
  %v158 = vpop.f32.mrb[0].mxu0
  %v159 = vadd.f32 %v33, %v158
  %v160 = vpop.f32.mrb[0].mxu0
  %161 = vmatprep.mubr.f32.mxu0 0.0
  %162 = vmatmul.mubr.f32.gmra.mrb[0].mxu0 %v52
  %v163 = vpop.f32.mrb[0].mxu0
  %v164 = vadd.f32 %v33, %v163
  %v165 = vpop.f32.mrb[0].mxu0
  %166 = vmatprep.mubr.f32.mxu0 0.0
  %167 = vmatmul.mubr.f32.gmra.mrb[0].mxu0 %v55
  %v168 = vpop.f32.mrb[0].mxu0
  %v169 = vadd.f32 %v33, %v168
  %v170 = vpop.f32.mrb[0].mxu0
  %171 = vmatprep.mubr.f32.mxu0 0.0
  %172 = vmatmul.mubr.f32.gmra.mrb[0].mxu0 %v58
  %v173 = vpop.f32.mrb[0].mxu0
  %v174 = vadd.f32 %v33, %v173
  %v175 = vpop.f32.mrb[0].mxu0
  %176 = vmatprep.mubr.f32.mxu0 0.0
  %177 = vmatmul.mubr.f32.gmra.mrb[0].mxu0 %v61
  %v178 = vpop.f32.mrb[0].mxu0
  %v179 = vadd.f32 %v33, %v178
  %v180 = vpop.f32.mrb[0].mxu0
  %181 = vmatprep.mubr.f32.mxu0 0.0
  %182 = vmatmul.mubr.f32.gmra.mrb[0].mxu0 %v64
  %v183 = vpop.f32.mrb[0].mxu0
  %v184 = vadd.f32 %v33, %v183
  %v185 = vpop.f32.mrb[0].mxu0
  %186 = vmatprep.mubr.f32.mxu0 0.0
  %187 = vmatmul.mubr.f32.gmra.mrb[0].mxu0 %v67
  %v188 = vpop.f32.mrb[0].mxu0
  %v189 = vadd.f32 %v33, %v188
  %v190 = vpop.f32.mrb[0].mxu0
  %191 = vmatprep.mubr.f32.mxu0 0.0
  %192 = vmatmul.mubr.f32.gmra.mrb[0].mxu0 %v70
  %v193 = vpop.f32.mrb[0].mxu0
  %v194 = vadd.f32 %v33, %v193
  %v195 = vpop.f32.mrb[0].mxu0
  %196 = vdwg.mxu0
  %197 = vst [vmem:[%s3] sm:$0xff] %v139
  %198 = vst [vmem:[%s3 + $0x8] sm:$0xff] %v144
  %199 = vst [vmem:[%s3 + $0x10] sm:$0xff] %v149
  %200 = vst [vmem:[%s3 + $0x18] sm:$0xff] %v154
  %201 = vst [vmem:[%s3 + $0x20] sm:$0xff] %v159
  %202 = vst [vmem:[%s3 + $0x28] sm:$0xff] %v164
  %203 = vst [vmem:[%s3 + $0x30] sm:$0xff] %v169
  %204 = vst [vmem:[%s3 + $0x38] sm:$0xff] %v174
  %205 = vst [vmem:[%s3 + $0x40] sm:$0xff] %v179
  %206 = vst [vmem:[%s3 + $0x48] sm:$0xff] %v184
  %207 = vst [vmem:[%s3 + $0x50] sm:$0xff] %v189
  %208 = vst [vmem:[%s3 + $0x58] sm:$0xff] %v194
  // Predicated region
  $region14: #{custom_lstm_forward.4} parent=0 // pred_check
    _
  $region15: #{custom_lstm_forward.4} parent=0 // pred_check_branch
    %210 = sbr.rel (0) target = $region17
  $region16: #{custom_lstm_forward.4} parent=0 // pred_region
    _
  $region17: #{custom_lstm_forward.4} parent=0 // pred_fallthru
    _
  // Predicated region
  $region18: #{custom_lstm_forward.4} parent=0 // pred_check
    _
  $region19: #{custom_lstm_forward.4} parent=0 // pred_check_branch
    %212 = sbr.rel (0) target = $region21
  $region20: #{custom_lstm_forward.4} parent=0 // pred_region
    _
  $region21: #{custom_lstm_forward.4} parent=0 // pred_fallthru
    _

// kernel: custom_lstm_forward.5
$region0: #{custom_lstm_forward.5}
  #allocation0 [shape = 'u32[]', space=smem, size = 0x4, offset = 0x4, fixed_abs, tag = 'smem constant byte address 0x4 - core index']
  #allocation1 [shape = 'u32[144,128]{1,0:T(1,128)}', space=vmem, size = 0x12000, scoped, tag = 'internal scratch']
  %s0 = inlined_call_operand.vmem [shape: f32[96,128], index: 0, kind: input, shape index: {}]
  %s1 = inlined_call_operand.vmem [shape: f32[128,512], index: 1, kind: input, shape index: {}]
  %s2 = inlined_call_operand.vmem [shape: f32[1,512], index: 2, kind: input, shape index: {}]
  %s3 = inlined_call_operand.vmem [shape: f32[96,512], index: 3, kind: output, shape index: {}]
  %s4 = sld [smem:[#allocation0]]
  $region22: #{custom_lstm_forward.5} parent=0
    _
  %s6 = ssub.s32 1, %s4
  %s7 = scalar_select 0, %s6, %s4
  // Predicated region
  $region2: #{custom_lstm_forward.5} parent=0 // pred_check
    _
  $region3: #{custom_lstm_forward.5} parent=0 // pred_check_branch
    %9 = sbr.rel (0) target = $region5
  $region4: #{custom_lstm_forward.5} parent=0 // pred_region
    _
  $region5: #{custom_lstm_forward.5} parent=0 // pred_fallthru
    _
  // Predicated region
  $region6: #{custom_lstm_forward.5} parent=0 // pred_check
    _
  $region7: #{custom_lstm_forward.5} parent=0 // pred_check_branch
    %11 = sbr.rel (0) target = $region9
  $region8: #{custom_lstm_forward.5} parent=0 // pred_region
    _
  $region9: #{custom_lstm_forward.5} parent=0 // pred_fallthru
    _
  // Predicated region
  $region10: #{custom_lstm_forward.5} parent=0 // pred_check
    _
  $region11: #{custom_lstm_forward.5} parent=0 // pred_check_branch
    %13 = sbr.rel (0) target = $region13
  $region12: #{custom_lstm_forward.5} parent=0 // pred_region
    _
  $region13: #{custom_lstm_forward.5} parent=0 // pred_fallthru
    _
  %v14 = vld [vmem:[%s0] sm:$0xff]
  %v15 = vld [vmem:[%s0 + $0x8] sm:$0xff]
  %v16 = vld [vmem:[%s0 + $0x10] sm:$0xff]
  %v17 = vld [vmem:[%s0 + $0x18] sm:$0xff]
  %v18 = vld [vmem:[%s0 + $0x20] sm:$0xff]
  %v19 = vld [vmem:[%s0 + $0x28] sm:$0xff]
  %v20 = vld [vmem:[%s0 + $0x30] sm:$0xff]
  %v21 = vld [vmem:[%s0 + $0x38] sm:$0xff]
  %v22 = vld [vmem:[%s0 + $0x40] sm:$0xff]
  %v23 = vld [vmem:[%s0 + $0x48] sm:$0xff]
  %v24 = vld [vmem:[%s0 + $0x50] sm:$0xff]
  %v25 = vld [vmem:[%s0 + $0x58] sm:$0xff]
  %v26 = vld [vmem:[%s1] sm:$0xff]
  %v27 = vld [vmem:[%s1 + $0x8] sm:$0xff]
  %v28 = vld [vmem:[%s1 + $0x10] sm:$0xff]
  %v29 = vld [vmem:[%s1 + $0x18] sm:$0xff]
  %v30 = vld [vmem:[%s1 + $0x20] sm:$0xff]
  %v31 = vld [vmem:[%s1 + $0x28] sm:$0xff]
  %v32 = vld [vmem:[%s1 + $0x30] sm:$0xff]
  %v33 = vld [vmem:[%s1 + $0x38] sm:$0xff]
  %v34 = vld [vmem:[%s1 + $0x40] sm:$0xff]
  %v35 = vld [vmem:[%s1 + $0x48] sm:$0xff]
  %v36 = vld [vmem:[%s1 + $0x50] sm:$0xff]
  %v37 = vld [vmem:[%s1 + $0x58] sm:$0xff]
  %v38 = vld [vmem:[%s1 + $0x60] sm:$0xff]
  %v39 = vld [vmem:[%s1 + $0x68] sm:$0xff]
  %v40 = vld [vmem:[%s1 + $0x70] sm:$0xff]
  %v41 = vld [vmem:[%s1 + $0x78] sm:$0xff]
  %v42 = vld [vmem:[%s1 + $0x80] sm:$0xff]
  %v43 = vld [vmem:[%s1 + $0x88] sm:$0xff]
  %v44 = vld [vmem:[%s1 + $0x90] sm:$0xff]
  %v45 = vld [vmem:[%s1 + $0x98] sm:$0xff]
  %v46 = vld [vmem:[%s1 + $0xa0] sm:$0xff]
  %v47 = vld [vmem:[%s1 + $0xa8] sm:$0xff]
  %v48 = vld [vmem:[%s1 + $0xb0] sm:$0xff]
  %v49 = vld [vmem:[%s1 + $0xb8] sm:$0xff]
  %v50 = vld [vmem:[%s1 + $0xc0] sm:$0xff]
  %v51 = vld [vmem:[%s1 + $0xc8] sm:$0xff]
  %v52 = vld [vmem:[%s1 + $0xd0] sm:$0xff]
  %v53 = vld [vmem:[%s1 + $0xd8] sm:$0xff]
  %v54 = vld [vmem:[%s1 + $0xe0] sm:$0xff]
  %v55 = vld [vmem:[%s1 + $0xe8] sm:$0xff]
  %v56 = vld [vmem:[%s1 + $0xf0] sm:$0xff]
  %v57 = vld [vmem:[%s1 + $0xf8] sm:$0xff]
  %v58 = vld [vmem:[%s1 + $0x100] sm:$0xff]
  %v59 = vld [vmem:[%s1 + $0x108] sm:$0xff]
  %v60 = vld [vmem:[%s1 + $0x110] sm:$0xff]
  %v61 = vld [vmem:[%s1 + $0x118] sm:$0xff]
  %v62 = vld [vmem:[%s1 + $0x120] sm:$0xff]
  %v63 = vld [vmem:[%s1 + $0x128] sm:$0xff]
  %v64 = vld [vmem:[%s1 + $0x130] sm:$0xff]
  %v65 = vld [vmem:[%s1 + $0x138] sm:$0xff]
  %v66 = vld [vmem:[%s1 + $0x140] sm:$0xff]
  %v67 = vld [vmem:[%s1 + $0x148] sm:$0xff]
  %v68 = vld [vmem:[%s1 + $0x150] sm:$0xff]
  %v69 = vld [vmem:[%s1 + $0x158] sm:$0xff]
  %v70 = vld [vmem:[%s1 + $0x160] sm:$0xff]
  %v71 = vld [vmem:[%s1 + $0x168] sm:$0xff]
  %v72 = vld [vmem:[%s1 + $0x170] sm:$0xff]
  %v73 = vld [vmem:[%s1 + $0x178] sm:$0xff]
  %v74 = vld [vmem:[%s1 + $0x180] sm:$0xff]
  %v75 = vld [vmem:[%s1 + $0x188] sm:$0xff]
  %v76 = vld [vmem:[%s1 + $0x190] sm:$0xff]
  %v77 = vld [vmem:[%s1 + $0x198] sm:$0xff]
  %v78 = vld [vmem:[%s1 + $0x1a0] sm:$0xff]
  %v79 = vld [vmem:[%s1 + $0x1a8] sm:$0xff]
  %v80 = vld [vmem:[%s1 + $0x1b0] sm:$0xff]
  %v81 = vld [vmem:[%s1 + $0x1b8] sm:$0xff]
  %v82 = vld [vmem:[%s1 + $0x1c0] sm:$0xff]
  %v83 = vld [vmem:[%s1 + $0x1c8] sm:$0xff]
  %v84 = vld [vmem:[%s1 + $0x1d0] sm:$0xff]
  %v85 = vld [vmem:[%s1 + $0x1d8] sm:$0xff]
  %v86 = vld [vmem:[%s1 + $0x1e0] sm:$0xff]
  %v87 = vld [vmem:[%s1 + $0x1e8] sm:$0xff]
  %v88 = vld [vmem:[%s1 + $0x1f0] sm:$0xff]
  %v89 = vld [vmem:[%s1 + $0x1f8] sm:$0xff]
  %v90 = vld [vmem:[%s2] sm:$0xf]
  %v92 = vlaneseq
  %v93 = vshrl.u32 %v92, 7
  %v94 = vsub.s32 0, %v93
  %v95 = vrot.slane %v90, %v94
  %v96 = vlaneseq
  %v97 = vshrl.u32 %v96, 7
  %v98 = vsub.s32 1, %v97
  %v99 = vrot.slane %v90, %v98
  %v100 = vlaneseq
  %v101 = vshrl.u32 %v100, 7
  %v102 = vsub.s32 2, %v101
  %v103 = vrot.slane %v90, %v102
  %v104 = vlaneseq
  %v105 = vshrl.u32 %v104, 7
  %v106 = vsub.s32 3, %v105
  %v107 = vrot.slane %v90, %v106
  %112 = vmatprep.subr.mxu0 %v27
  %113 = vmatpush1.msra.mxu0 %v26
  %114 = vmatprep.subr.mxu0 %v31
  %115 = vmatpush1.msra.mxu0 %v30
  %116 = vmatprep.subr.mxu0 %v35
  %117 = vmatpush1.msra.mxu0 %v34
  %118 = vmatprep.subr.mxu0 %v39
  %119 = vmatpush1.msra.mxu0 %v38
  %120 = vmatprep.subr.mxu0 %v43
  %121 = vmatpush1.msra.mxu0 %v42
  %122 = vmatprep.subr.mxu0 %v47
  %123 = vmatpush1.msra.mxu0 %v46
  %124 = vmatprep.subr.mxu0 %v51
  %125 = vmatpush1.msra.mxu0 %v50
  %126 = vmatprep.subr.mxu0 %v55
  %127 = vmatpush1.msra.mxu0 %v54
  %128 = vmatprep.subr.mxu0 %v59
  %129 = vmatpush1.msra.mxu0 %v58
  %130 = vmatprep.subr.mxu0 %v63
  %131 = vmatpush1.msra.mxu0 %v62
  %132 = vmatprep.subr.mxu0 %v67
  %133 = vmatpush1.msra.mxu0 %v66
  %134 = vmatprep.subr.mxu0 %v71
  %135 = vmatpush1.msra.mxu0 %v70
  %136 = vmatprep.subr.mxu0 %v75
  %137 = vmatpush1.msra.mxu0 %v74
  %138 = vmatprep.subr.mxu0 %v79
  %139 = vmatpush1.msra.mxu0 %v78
  %140 = vmatprep.subr.mxu0 %v83
  %141 = vmatpush1.msra.mxu0 %v82
  %142 = vmatprep.subr.mxu0 %v87
  %143 = vmatpush1.msra.mxu0 %v86
  %144 = vmatprep.subr.mxu0 0.0
  %145 = vmatpush1.msra.mxu0 0.0
  %146 = vmatprep.subr.mxu0 0.0
  %147 = vmatpush1.msra.mxu0 0.0
  %148 = vmatprep.subr.mxu0 0.0
  %149 = vmatpush1.msra.mxu0 0.0
  %150 = vmatprep.subr.mxu0 0.0
  %151 = vmatpush1.msra.mxu0 0.0
  %152 = vmatprep.subr.mxu0 0.0
  %153 = vmatpush1.msra.mxu0 0.0
  %154 = vmatprep.subr.mxu0 0.0
  %155 = vmatpush1.msra.mxu0 0.0
  %156 = vmatprep.subr.mxu0 0.0
  %157 = vmatpush1.msra.mxu0 0.0
  %158 = vmatprep.subr.mxu0 0.0
  %159 = vmatpush1.msra.mxu0 0.0
  %160 = vmatprep.subr.mxu0 0.0
  %161 = vmatpush1.msra.mxu0 0.0
  %162 = vmatprep.subr.mxu0 0.0
  %163 = vmatpush1.msra.mxu0 0.0
  %164 = vmatprep.subr.mxu0 0.0
  %165 = vmatpush1.msra.mxu0 0.0
  %166 = vmatprep.subr.mxu0 0.0
  %167 = vmatpush1.msra.mxu0 0.0
  %168 = vmatprep.subr.mxu0 0.0
  %169 = vmatpush1.msra.mxu0 0.0
  %170 = vmatprep.subr.mxu0 0.0
  %171 = vmatpush1.msra.mxu0 0.0
  %172 = vmatprep.subr.mxu0 0.0
  %173 = vmatpush1.msra.mxu0 0.0
  %174 = vmatprep.subr.mxu0 0.0
  %175 = vmatpush1.msra.mxu0 0.0
  %176 = vmatprep.mubr.f32.mxu0 0.0
  %177 = vmatmul.mubr.f32.gmra.mrb[0].mxu0 %v14
  %v178 = vpop.f32.mrb[0].mxu0
  %v179 = vadd.f32 %v95, %v178
  %v180 = vpop.f32.mrb[0].mxu0
  %v181 = vadd.f32 %v99, %v180
  %182 = vmatprep.mubr.f32.mxu0 0.0
  %183 = vmatmul.mubr.f32.gmra.mrb[0].mxu0 %v15
  %v184 = vpop.f32.mrb[0].mxu0
  %v185 = vadd.f32 %v95, %v184
  %v186 = vpop.f32.mrb[0].mxu0
  %v187 = vadd.f32 %v99, %v186
  %188 = vmatprep.mubr.f32.mxu0 0.0
  %189 = vmatmul.mubr.f32.gmra.mrb[0].mxu0 %v16
  %v190 = vpop.f32.mrb[0].mxu0
  %v191 = vadd.f32 %v95, %v190
  %v192 = vpop.f32.mrb[0].mxu0
  %v193 = vadd.f32 %v99, %v192
  %194 = vmatprep.mubr.f32.mxu0 0.0
  %195 = vmatmul.mubr.f32.gmra.mrb[0].mxu0 %v17
  %v196 = vpop.f32.mrb[0].mxu0
  %v197 = vadd.f32 %v95, %v196
  %v198 = vpop.f32.mrb[0].mxu0
  %v199 = vadd.f32 %v99, %v198
  %200 = vmatprep.mubr.f32.mxu0 0.0
  %201 = vmatmul.mubr.f32.gmra.mrb[0].mxu0 %v18
  %v202 = vpop.f32.mrb[0].mxu0
  %v203 = vadd.f32 %v95, %v202
  %v204 = vpop.f32.mrb[0].mxu0
  %v205 = vadd.f32 %v99, %v204
  %206 = vmatprep.mubr.f32.mxu0 0.0
  %207 = vmatmul.mubr.f32.gmra.mrb[0].mxu0 %v19
  %v208 = vpop.f32.mrb[0].mxu0
  %v209 = vadd.f32 %v95, %v208
  %v210 = vpop.f32.mrb[0].mxu0
  %v211 = vadd.f32 %v99, %v210
  %212 = vmatprep.mubr.f32.mxu0 0.0
  %213 = vmatmul.mubr.f32.gmra.mrb[0].mxu0 %v20
  %v214 = vpop.f32.mrb[0].mxu0
  %v215 = vadd.f32 %v95, %v214
  %v216 = vpop.f32.mrb[0].mxu0
  %v217 = vadd.f32 %v99, %v216
  %218 = vmatprep.mubr.f32.mxu0 0.0
  %219 = vmatmul.mubr.f32.gmra.mrb[0].mxu0 %v21
  %v220 = vpop.f32.mrb[0].mxu0
  %v221 = vadd.f32 %v95, %v220
  %v222 = vpop.f32.mrb[0].mxu0
  %v223 = vadd.f32 %v99, %v222
  %224 = vmatprep.mubr.f32.mxu0 0.0
  %225 = vmatmul.mubr.f32.gmra.mrb[0].mxu0 %v22
  %v226 = vpop.f32.mrb[0].mxu0
  %v227 = vadd.f32 %v95, %v226
  %v228 = vpop.f32.mrb[0].mxu0
  %v229 = vadd.f32 %v99, %v228
  %230 = vmatprep.mubr.f32.mxu0 0.0
  %231 = vmatmul.mubr.f32.gmra.mrb[0].mxu0 %v23
  %v232 = vpop.f32.mrb[0].mxu0
  %v233 = vadd.f32 %v95, %v232
  %v234 = vpop.f32.mrb[0].mxu0
  %v235 = vadd.f32 %v99, %v234
  %236 = vmatprep.mubr.f32.mxu0 0.0
  %237 = vmatmul.mubr.f32.gmra.mrb[0].mxu0 %v24
  %v238 = vpop.f32.mrb[0].mxu0
  %v239 = vadd.f32 %v95, %v238
  %v240 = vpop.f32.mrb[0].mxu0
  %v241 = vadd.f32 %v99, %v240
  %242 = vmatprep.mubr.f32.mxu0 0.0
  %243 = vmatmul.mubr.f32.gmra.mrb[0].mxu0 %v25
  %v244 = vpop.f32.mrb[0].mxu0
  %v245 = vadd.f32 %v95, %v244
  %v246 = vpop.f32.mrb[0].mxu0
  %v247 = vadd.f32 %v99, %v246
  %248 = vdwg.mxu0
  %249 = vmatprep.subr.mxu0 %v29
  %250 = vmatpush1.msra.mxu0 %v28
  %251 = vmatprep.subr.mxu0 %v33
  %252 = vmatpush1.msra.mxu0 %v32
  %253 = vmatprep.subr.mxu0 %v37
  %254 = vmatpush1.msra.mxu0 %v36
  %255 = vmatprep.subr.mxu0 %v41
  %256 = vmatpush1.msra.mxu0 %v40
  %257 = vmatprep.subr.mxu0 %v45
  %258 = vmatpush1.msra.mxu0 %v44
  %259 = vmatprep.subr.mxu0 %v49
  %260 = vmatpush1.msra.mxu0 %v48
  %261 = vmatprep.subr.mxu0 %v53
  %262 = vmatpush1.msra.mxu0 %v52
  %263 = vmatprep.subr.mxu0 %v57
  %264 = vmatpush1.msra.mxu0 %v56
  %265 = vmatprep.subr.mxu0 %v61
  %266 = vmatpush1.msra.mxu0 %v60
  %267 = vmatprep.subr.mxu0 %v65
  %268 = vmatpush1.msra.mxu0 %v64
  %269 = vmatprep.subr.mxu0 %v69
  %270 = vmatpush1.msra.mxu0 %v68
  %271 = vmatprep.subr.mxu0 %v73
  %272 = vmatpush1.msra.mxu0 %v72
  %273 = vmatprep.subr.mxu0 %v77
  %274 = vmatpush1.msra.mxu0 %v76
  %275 = vmatprep.subr.mxu0 %v81
  %276 = vmatpush1.msra.mxu0 %v80
  %277 = vmatprep.subr.mxu0 %v85
  %278 = vmatpush1.msra.mxu0 %v84
  %279 = vmatprep.subr.mxu0 %v89
  %280 = vmatpush1.msra.mxu0 %v88
  %281 = vmatprep.subr.mxu0 0.0
  %282 = vmatpush1.msra.mxu0 0.0
  %283 = vmatprep.subr.mxu0 0.0
  %284 = vmatpush1.msra.mxu0 0.0
  %285 = vmatprep.subr.mxu0 0.0
  %286 = vmatpush1.msra.mxu0 0.0
  %287 = vmatprep.subr.mxu0 0.0
  %288 = vmatpush1.msra.mxu0 0.0
  %289 = vmatprep.subr.mxu0 0.0
  %290 = vmatpush1.msra.mxu0 0.0
  %291 = vmatprep.subr.mxu0 0.0
  %292 = vmatpush1.msra.mxu0 0.0
  %293 = vmatprep.subr.mxu0 0.0
  %294 = vmatpush1.msra.mxu0 0.0
  %295 = vmatprep.subr.mxu0 0.0
  %296 = vmatpush1.msra.mxu0 0.0
  %297 = vmatprep.subr.mxu0 0.0
  %298 = vmatpush1.msra.mxu0 0.0
  %299 = vmatprep.subr.mxu0 0.0
  %300 = vmatpush1.msra.mxu0 0.0
  %301 = vmatprep.subr.mxu0 0.0
  %302 = vmatpush1.msra.mxu0 0.0
  %303 = vmatprep.subr.mxu0 0.0
  %304 = vmatpush1.msra.mxu0 0.0
  %305 = vmatprep.subr.mxu0 0.0
  %306 = vmatpush1.msra.mxu0 0.0
  %307 = vmatprep.subr.mxu0 0.0
  %308 = vmatpush1.msra.mxu0 0.0
  %309 = vmatprep.subr.mxu0 0.0
  %310 = vmatpush1.msra.mxu0 0.0
  %311 = vmatprep.subr.mxu0 0.0
  %312 = vmatpush1.msra.mxu0 0.0
  %313 = vmatprep.mubr.f32.mxu0 0.0
  %314 = vmatmul.mubr.f32.gmra.mrb[0].mxu0 %v14
  %v315 = vpop.f32.mrb[0].mxu0
  %v316 = vadd.f32 %v103, %v315
  %v317 = vpop.f32.mrb[0].mxu0
  %v318 = vadd.f32 %v107, %v317
  %319 = vmatprep.mubr.f32.mxu0 0.0
  %320 = vmatmul.mubr.f32.gmra.mrb[0].mxu0 %v15
  %v321 = vpop.f32.mrb[0].mxu0
  %v322 = vadd.f32 %v103, %v321
  %v323 = vpop.f32.mrb[0].mxu0
  %v324 = vadd.f32 %v107, %v323
  %325 = vmatprep.mubr.f32.mxu0 0.0
  %326 = vmatmul.mubr.f32.gmra.mrb[0].mxu0 %v16
  %v327 = vpop.f32.mrb[0].mxu0
  %v328 = vadd.f32 %v103, %v327
  %v329 = vpop.f32.mrb[0].mxu0
  %v330 = vadd.f32 %v107, %v329
  %331 = vmatprep.mubr.f32.mxu0 0.0
  %332 = vmatmul.mubr.f32.gmra.mrb[0].mxu0 %v17
  %v333 = vpop.f32.mrb[0].mxu0
  %v334 = vadd.f32 %v103, %v333
  %v335 = vpop.f32.mrb[0].mxu0
  %v336 = vadd.f32 %v107, %v335
  %337 = vmatprep.mubr.f32.mxu0 0.0
  %338 = vmatmul.mubr.f32.gmra.mrb[0].mxu0 %v18
  %v339 = vpop.f32.mrb[0].mxu0
  %v340 = vadd.f32 %v103, %v339
  %v341 = vpop.f32.mrb[0].mxu0
  %v342 = vadd.f32 %v107, %v341
  %343 = vmatprep.mubr.f32.mxu0 0.0
  %344 = vmatmul.mubr.f32.gmra.mrb[0].mxu0 %v19
  %v345 = vpop.f32.mrb[0].mxu0
  %v346 = vadd.f32 %v103, %v345
  %v347 = vpop.f32.mrb[0].mxu0
  %v348 = vadd.f32 %v107, %v347
  %349 = vmatprep.mubr.f32.mxu0 0.0
  %350 = vmatmul.mubr.f32.gmra.mrb[0].mxu0 %v20
  %v351 = vpop.f32.mrb[0].mxu0
  %v352 = vadd.f32 %v103, %v351
  %v353 = vpop.f32.mrb[0].mxu0
  %v354 = vadd.f32 %v107, %v353
  %355 = vmatprep.mubr.f32.mxu0 0.0
  %356 = vmatmul.mubr.f32.gmra.mrb[0].mxu0 %v21
  %v357 = vpop.f32.mrb[0].mxu0
  %v358 = vadd.f32 %v103, %v357
  %v359 = vpop.f32.mrb[0].mxu0
  %v360 = vadd.f32 %v107, %v359
  %361 = vmatprep.mubr.f32.mxu0 0.0
  %362 = vmatmul.mubr.f32.gmra.mrb[0].mxu0 %v22
  %v363 = vpop.f32.mrb[0].mxu0
  %v364 = vadd.f32 %v103, %v363
  %v365 = vpop.f32.mrb[0].mxu0
  %v366 = vadd.f32 %v107, %v365
  %367 = vmatprep.mubr.f32.mxu0 0.0
  %368 = vmatmul.mubr.f32.gmra.mrb[0].mxu0 %v23
  %v369 = vpop.f32.mrb[0].mxu0
  %v370 = vadd.f32 %v103, %v369
  %v371 = vpop.f32.mrb[0].mxu0
  %v372 = vadd.f32 %v107, %v371
  %373 = vmatprep.mubr.f32.mxu0 0.0
  %374 = vmatmul.mubr.f32.gmra.mrb[0].mxu0 %v24
  %v375 = vpop.f32.mrb[0].mxu0
  %v376 = vadd.f32 %v103, %v375
  %v377 = vpop.f32.mrb[0].mxu0
  %v378 = vadd.f32 %v107, %v377
  %379 = vmatprep.mubr.f32.mxu0 0.0
  %380 = vmatmul.mubr.f32.gmra.mrb[0].mxu0 %v25
  %v381 = vpop.f32.mrb[0].mxu0
  %v382 = vadd.f32 %v103, %v381
  %v383 = vpop.f32.mrb[0].mxu0
  %v384 = vadd.f32 %v107, %v383
  %385 = vdwg.mxu0
  %386 = vst [vmem:[%s3] sm:$0xff] %v179
  %387 = vst [vmem:[%s3 + $0x8] sm:$0xff] %v181
  %388 = vst [vmem:[%s3 + $0x10] sm:$0xff] %v316
  %389 = vst [vmem:[%s3 + $0x18] sm:$0xff] %v318
  %390 = vst [vmem:[%s3 + $0x20] sm:$0xff] %v185
  %391 = vst [vmem:[%s3 + $0x28] sm:$0xff] %v187
  %392 = vst [vmem:[%s3 + $0x30] sm:$0xff] %v322
  %393 = vst [vmem:[%s3 + $0x38] sm:$0xff] %v324
  %394 = vst [vmem:[%s3 + $0x40] sm:$0xff] %v191
  %395 = vst [vmem:[%s3 + $0x48] sm:$0xff] %v193
  %396 = vst [vmem:[%s3 + $0x50] sm:$0xff] %v328
  %397 = vst [vmem:[%s3 + $0x58] sm:$0xff] %v330
  %398 = vst [vmem:[%s3 + $0x60] sm:$0xff] %v197
  %399 = vst [vmem:[%s3 + $0x68] sm:$0xff] %v199
  %400 = vst [vmem:[%s3 + $0x70] sm:$0xff] %v334
  %401 = vst [vmem:[%s3 + $0x78] sm:$0xff] %v336
  %402 = vst [vmem:[%s3 + $0x80] sm:$0xff] %v203
  %403 = vst [vmem:[%s3 + $0x88] sm:$0xff] %v205
  %404 = vst [vmem:[%s3 + $0x90] sm:$0xff] %v340
  %405 = vst [vmem:[%s3 + $0x98] sm:$0xff] %v342
  %406 = vst [vmem:[%s3 + $0xa0] sm:$0xff] %v209
  %407 = vst [vmem:[%s3 + $0xa8] sm:$0xff] %v211
  %408 = vst [vmem:[%s3 + $0xb0] sm:$0xff] %v346
  %409 = vst [vmem:[%s3 + $0xb8] sm:$0xff] %v348
  %410 = vst [vmem:[%s3 + $0xc0] sm:$0xff] %v215
  %411 = vst [vmem:[%s3 + $0xc8] sm:$0xff] %v217
  %412 = vst [vmem:[%s3 + $0xd0] sm:$0xff] %v352
  %413 = vst [vmem:[%s3 + $0xd8] sm:$0xff] %v354
  %414 = vst [vmem:[%s3 + $0xe0] sm:$0xff] %v221
  %415 = vst [vmem:[%s3 + $0xe8] sm:$0xff] %v223
  %416 = vst [vmem:[%s3 + $0xf0] sm:$0xff] %v358
  %417 = vst [vmem:[%s3 + $0xf8] sm:$0xff] %v360
  %418 = vst [vmem:[%s3 + $0x100] sm:$0xff] %v227
  %419 = vst [vmem:[%s3 + $0x108] sm:$0xff] %v229
  %420 = vst [vmem:[%s3 + $0x110] sm:$0xff] %v364
  %421 = vst [vmem:[%s3 + $0x118] sm:$0xff] %v366
  %422 = vst [vmem:[%s3 + $0x120] sm:$0xff] %v233
  %423 = vst [vmem:[%s3 + $0x128] sm:$0xff] %v235
  %424 = vst [vmem:[%s3 + $0x130] sm:$0xff] %v370
  %425 = vst [vmem:[%s3 + $0x138] sm:$0xff] %v372
  %426 = vst [vmem:[%s3 + $0x140] sm:$0xff] %v239
  %427 = vst [vmem:[%s3 + $0x148] sm:$0xff] %v241
  %428 = vst [vmem:[%s3 + $0x150] sm:$0xff] %v376
  %429 = vst [vmem:[%s3 + $0x158] sm:$0xff] %v378
  %430 = vst [vmem:[%s3 + $0x160] sm:$0xff] %v245
  %431 = vst [vmem:[%s3 + $0x168] sm:$0xff] %v247
  %432 = vst [vmem:[%s3 + $0x170] sm:$0xff] %v382
  %433 = vst [vmem:[%s3 + $0x178] sm:$0xff] %v384
  // Predicated region
  $region14: #{custom_lstm_forward.5} parent=0 // pred_check
    _
  $region15: #{custom_lstm_forward.5} parent=0 // pred_check_branch
    %435 = sbr.rel (0) target = $region17
  $region16: #{custom_lstm_forward.5} parent=0 // pred_region
    _
  $region17: #{custom_lstm_forward.5} parent=0 // pred_fallthru
    _
  // Predicated region
  $region18: #{custom_lstm_forward.5} parent=0 // pred_check
    _
  $region19: #{custom_lstm_forward.5} parent=0 // pred_check_branch
    %437 = sbr.rel (0) target = $region21
  $region20: #{custom_lstm_forward.5} parent=0 // pred_region
    _
  $region21: #{custom_lstm_forward.5} parent=0 // pred_fallthru
    _

// kernel: custom_lstm_forward.7
$region0: #{custom_lstm_forward.7}
  #allocation0 [shape = 'u32[]', space=smem, size = 0x4, offset = 0x4, fixed_abs, tag = 'smem constant byte address 0x4 - core index']
  #allocation1 [shape = 'u32[144,128]{1,0:T(1,128)}', space=vmem, size = 0x12000, scoped, tag = 'internal scratch']
  %s0 = inlined_call_operand.vmem [shape: f32[96,128], index: 0, kind: input, shape index: {}]
  %s1 = inlined_call_operand.vmem [shape: f32[128,128], index: 1, kind: input, shape index: {}]
  %s2 = inlined_call_operand.vmem [shape: f32[1,128], index: 2, kind: input, shape index: {}]
  %s3 = inlined_call_operand.vmem [shape: f32[96,128], index: 3, kind: output, shape index: {}]
  %s4 = sld [smem:[#allocation0]]
  $region22: #{custom_lstm_forward.7} parent=0
    _
  %s6 = ssub.s32 1, %s4
  %s7 = scalar_select 0, %s6, %s4
  // Predicated region
  $region2: #{custom_lstm_forward.7} parent=0 // pred_check
    _
  $region3: #{custom_lstm_forward.7} parent=0 // pred_check_branch
    %9 = sbr.rel (0) target = $region5
  $region4: #{custom_lstm_forward.7} parent=0 // pred_region
    _
  $region5: #{custom_lstm_forward.7} parent=0 // pred_fallthru
    _
  // Predicated region
  $region6: #{custom_lstm_forward.7} parent=0 // pred_check
    _
  $region7: #{custom_lstm_forward.7} parent=0 // pred_check_branch
    %11 = sbr.rel (0) target = $region9
  $region8: #{custom_lstm_forward.7} parent=0 // pred_region
    _
  $region9: #{custom_lstm_forward.7} parent=0 // pred_fallthru
    _
  // Predicated region
  $region10: #{custom_lstm_forward.7} parent=0 // pred_check
    _
  $region11: #{custom_lstm_forward.7} parent=0 // pred_check_branch
    %13 = sbr.rel (0) target = $region13
  $region12: #{custom_lstm_forward.7} parent=0 // pred_region
    _
  $region13: #{custom_lstm_forward.7} parent=0 // pred_fallthru
    _
  %v14 = vld [vmem:[%s0] sm:$0xff]
  %v15 = vld [vmem:[%s0 + $0x8] sm:$0xff]
  %v16 = vld [vmem:[%s0 + $0x10] sm:$0xff]
  %v17 = vld [vmem:[%s0 + $0x18] sm:$0xff]
  %v18 = vld [vmem:[%s0 + $0x20] sm:$0xff]
  %v19 = vld [vmem:[%s0 + $0x28] sm:$0xff]
  %v20 = vld [vmem:[%s0 + $0x30] sm:$0xff]
  %v21 = vld [vmem:[%s0 + $0x38] sm:$0xff]
  %v22 = vld [vmem:[%s0 + $0x40] sm:$0xff]
  %v23 = vld [vmem:[%s0 + $0x48] sm:$0xff]
  %v24 = vld [vmem:[%s0 + $0x50] sm:$0xff]
  %v25 = vld [vmem:[%s0 + $0x58] sm:$0xff]
  %v26 = vld [vmem:[%s1] sm:$0xff]
  %v27 = vld [vmem:[%s1 + $0x8] sm:$0xff]
  %v28 = vld [vmem:[%s1 + $0x10] sm:$0xff]
  %v29 = vld [vmem:[%s1 + $0x18] sm:$0xff]
  %v30 = vld [vmem:[%s1 + $0x20] sm:$0xff]
  %v31 = vld [vmem:[%s1 + $0x28] sm:$0xff]
  %v32 = vld [vmem:[%s1 + $0x30] sm:$0xff]
  %v33 = vld [vmem:[%s1 + $0x38] sm:$0xff]
  %v34 = vld [vmem:[%s1 + $0x40] sm:$0xff]
  %v35 = vld [vmem:[%s1 + $0x48] sm:$0xff]
  %v36 = vld [vmem:[%s1 + $0x50] sm:$0xff]
  %v37 = vld [vmem:[%s1 + $0x58] sm:$0xff]
  %v38 = vld [vmem:[%s1 + $0x60] sm:$0xff]
  %v39 = vld [vmem:[%s1 + $0x68] sm:$0xff]
  %v40 = vld [vmem:[%s1 + $0x70] sm:$0xff]
  %v41 = vld [vmem:[%s1 + $0x78] sm:$0xff]
  %v42 = vld [vmem:[%s2] sm:$0x1]
  %v44 = vlaneseq
  %v45 = vshrl.u32 %v44, 7
  %v46 = vsub.s32 0, %v45
  %v47 = vrot.slane %v42, %v46
  %49 = vmatprep.subr.mxu0 0.0
  %50 = vmatpush1.msra.mxu0 %v26
  %51 = vmatprep.subr.mxu0 0.0
  %52 = vmatpush1.msra.mxu0 %v27
  %53 = vmatprep.subr.mxu0 0.0
  %54 = vmatpush1.msra.mxu0 %v28
  %55 = vmatprep.subr.mxu0 0.0
  %56 = vmatpush1.msra.mxu0 %v29
  %57 = vmatprep.subr.mxu0 0.0
  %58 = vmatpush1.msra.mxu0 %v30
  %59 = vmatprep.subr.mxu0 0.0
  %60 = vmatpush1.msra.mxu0 %v31
  %61 = vmatprep.subr.mxu0 0.0
  %62 = vmatpush1.msra.mxu0 %v32
  %63 = vmatprep.subr.mxu0 0.0
  %64 = vmatpush1.msra.mxu0 %v33
  %65 = vmatprep.subr.mxu0 0.0
  %66 = vmatpush1.msra.mxu0 %v34
  %67 = vmatprep.subr.mxu0 0.0
  %68 = vmatpush1.msra.mxu0 %v35
  %69 = vmatprep.subr.mxu0 0.0
  %70 = vmatpush1.msra.mxu0 %v36
  %71 = vmatprep.subr.mxu0 0.0
  %72 = vmatpush1.msra.mxu0 %v37
  %73 = vmatprep.subr.mxu0 0.0
  %74 = vmatpush1.msra.mxu0 %v38
  %75 = vmatprep.subr.mxu0 0.0
  %76 = vmatpush1.msra.mxu0 %v39
  %77 = vmatprep.subr.mxu0 0.0
  %78 = vmatpush1.msra.mxu0 %v40
  %79 = vmatprep.subr.mxu0 0.0
  %80 = vmatpush1.msra.mxu0 %v41
  %81 = vmatprep.subr.mxu0 0.0
  %82 = vmatpush1.msra.mxu0 0.0
  %83 = vmatprep.subr.mxu0 0.0
  %84 = vmatpush1.msra.mxu0 0.0
  %85 = vmatprep.subr.mxu0 0.0
  %86 = vmatpush1.msra.mxu0 0.0
  %87 = vmatprep.subr.mxu0 0.0
  %88 = vmatpush1.msra.mxu0 0.0
  %89 = vmatprep.subr.mxu0 0.0
  %90 = vmatpush1.msra.mxu0 0.0
  %91 = vmatprep.subr.mxu0 0.0
  %92 = vmatpush1.msra.mxu0 0.0
  %93 = vmatprep.subr.mxu0 0.0
  %94 = vmatpush1.msra.mxu0 0.0
  %95 = vmatprep.subr.mxu0 0.0
  %96 = vmatpush1.msra.mxu0 0.0
  %97 = vmatprep.subr.mxu0 0.0
  %98 = vmatpush1.msra.mxu0 0.0
  %99 = vmatprep.subr.mxu0 0.0
  %100 = vmatpush1.msra.mxu0 0.0
  %101 = vmatprep.subr.mxu0 0.0
  %102 = vmatpush1.msra.mxu0 0.0
  %103 = vmatprep.subr.mxu0 0.0
  %104 = vmatpush1.msra.mxu0 0.0
  %105 = vmatprep.subr.mxu0 0.0
  %106 = vmatpush1.msra.mxu0 0.0
  %107 = vmatprep.subr.mxu0 0.0
  %108 = vmatpush1.msra.mxu0 0.0
  %109 = vmatprep.subr.mxu0 0.0
  %110 = vmatpush1.msra.mxu0 0.0
  %111 = vmatprep.subr.mxu0 0.0
  %112 = vmatpush1.msra.mxu0 0.0
  %113 = vmatprep.mubr.f32.mxu0 0.0
  %114 = vmatmul.mubr.f32.gmra.mrb[0].mxu0 %v14
  %v115 = vpop.f32.mrb[0].mxu0
  %v116 = vadd.f32 %v47, %v115
  %v117 = vpop.f32.mrb[0].mxu0
  %118 = vmatprep.mubr.f32.mxu0 0.0
  %119 = vmatmul.mubr.f32.gmra.mrb[0].mxu0 %v15
  %v120 = vpop.f32.mrb[0].mxu0
  %v121 = vadd.f32 %v47, %v120
  %v122 = vpop.f32.mrb[0].mxu0
  %123 = vmatprep.mubr.f32.mxu0 0.0
  %124 = vmatmul.mubr.f32.gmra.mrb[0].mxu0 %v16
  %v125 = vpop.f32.mrb[0].mxu0
  %v126 = vadd.f32 %v47, %v125
  %v127 = vpop.f32.mrb[0].mxu0
  %128 = vmatprep.mubr.f32.mxu0 0.0
  %129 = vmatmul.mubr.f32.gmra.mrb[0].mxu0 %v17
  %v130 = vpop.f32.mrb[0].mxu0
  %v131 = vadd.f32 %v47, %v130
  %v132 = vpop.f32.mrb[0].mxu0
  %133 = vmatprep.mubr.f32.mxu0 0.0
  %134 = vmatmul.mubr.f32.gmra.mrb[0].mxu0 %v18
  %v135 = vpop.f32.mrb[0].mxu0
  %v136 = vadd.f32 %v47, %v135
  %v137 = vpop.f32.mrb[0].mxu0
  %138 = vmatprep.mubr.f32.mxu0 0.0
  %139 = vmatmul.mubr.f32.gmra.mrb[0].mxu0 %v19
  %v140 = vpop.f32.mrb[0].mxu0
  %v141 = vadd.f32 %v47, %v140
  %v142 = vpop.f32.mrb[0].mxu0
  %143 = vmatprep.mubr.f32.mxu0 0.0
  %144 = vmatmul.mubr.f32.gmra.mrb[0].mxu0 %v20
  %v145 = vpop.f32.mrb[0].mxu0
  %v146 = vadd.f32 %v47, %v145
  %v147 = vpop.f32.mrb[0].mxu0
  %148 = vmatprep.mubr.f32.mxu0 0.0
  %149 = vmatmul.mubr.f32.gmra.mrb[0].mxu0 %v21
  %v150 = vpop.f32.mrb[0].mxu0
  %v151 = vadd.f32 %v47, %v150
  %v152 = vpop.f32.mrb[0].mxu0
  %153 = vmatprep.mubr.f32.mxu0 0.0
  %154 = vmatmul.mubr.f32.gmra.mrb[0].mxu0 %v22
  %v155 = vpop.f32.mrb[0].mxu0
  %v156 = vadd.f32 %v47, %v155
  %v157 = vpop.f32.mrb[0].mxu0
  %158 = vmatprep.mubr.f32.mxu0 0.0
  %159 = vmatmul.mubr.f32.gmra.mrb[0].mxu0 %v23
  %v160 = vpop.f32.mrb[0].mxu0
  %v161 = vadd.f32 %v47, %v160
  %v162 = vpop.f32.mrb[0].mxu0
  %163 = vmatprep.mubr.f32.mxu0 0.0
  %164 = vmatmul.mubr.f32.gmra.mrb[0].mxu0 %v24
  %v165 = vpop.f32.mrb[0].mxu0
  %v166 = vadd.f32 %v47, %v165
  %v167 = vpop.f32.mrb[0].mxu0
  %168 = vmatprep.mubr.f32.mxu0 0.0
  %169 = vmatmul.mubr.f32.gmra.mrb[0].mxu0 %v25
  %v170 = vpop.f32.mrb[0].mxu0
  %v171 = vadd.f32 %v47, %v170
  %v172 = vpop.f32.mrb[0].mxu0
  %173 = vdwg.mxu0
  %174 = vst [vmem:[%s3] sm:$0xff] %v116
  %175 = vst [vmem:[%s3 + $0x8] sm:$0xff] %v121
  %176 = vst [vmem:[%s3 + $0x10] sm:$0xff] %v126
  %177 = vst [vmem:[%s3 + $0x18] sm:$0xff] %v131
  %178 = vst [vmem:[%s3 + $0x20] sm:$0xff] %v136
  %179 = vst [vmem:[%s3 + $0x28] sm:$0xff] %v141
  %180 = vst [vmem:[%s3 + $0x30] sm:$0xff] %v146
  %181 = vst [vmem:[%s3 + $0x38] sm:$0xff] %v151
  %182 = vst [vmem:[%s3 + $0x40] sm:$0xff] %v156
  %183 = vst [vmem:[%s3 + $0x48] sm:$0xff] %v161
  %184 = vst [vmem:[%s3 + $0x50] sm:$0xff] %v166
  %185 = vst [vmem:[%s3 + $0x58] sm:$0xff] %v171
  // Predicated region
  $region14: #{custom_lstm_forward.7} parent=0 // pred_check
    _
  $region15: #{custom_lstm_forward.7} parent=0 // pred_check_branch
    %187 = sbr.rel (0) target = $region17
  $region16: #{custom_lstm_forward.7} parent=0 // pred_region
    _
  $region17: #{custom_lstm_forward.7} parent=0 // pred_fallthru
    _
  // Predicated region
  $region18: #{custom_lstm_forward.7} parent=0 // pred_check
    _
  $region19: #{custom_lstm_forward.7} parent=0 // pred_check_branch
    %189 = sbr.rel (0) target = $region21
  $region20: #{custom_lstm_forward.7} parent=0 // pred_region
    _
  $region21: #{custom_lstm_forward.7} parent=0 // pred_fallthru
    _

// kernel: custom_lstm_forward.6
$region0: #{custom_lstm_forward.6}
  #allocation0 [shape = 'u32[]', space=smem, size = 0x4, offset = 0x4, fixed_abs, tag = 'smem constant byte address 0x4 - core index']
  #allocation1 [shape = 'u32[144,128]{1,0:T(1,128)}', space=vmem, size = 0x12000, scoped, tag = 'internal scratch']
  #allocation2 [shape = 'f32[2,8,128]{2,1,0:T(8,128)}', space=vmem, size = 0x2000, scoped, tag = 'scratch operand']
  #allocation3 [shape = 'f32[2,8,128]{2,1,0:T(8,128)}', space=vmem, size = 0x2000, scoped, tag = 'scratch operand']
  %s0 = inlined_call_operand.vmem [shape: f32[16,8,512], index: 0, kind: input, shape index: {}]
  %s1 = inlined_call_operand.vmem [shape: f32[2,128,512], index: 1, kind: input, shape index: {}]
  %s2 = inlined_call_operand.vmem [shape: f32[2,128,512], index: 2, kind: input, shape index: {}]
  %s3 = inlined_call_operand.vmem [shape: f32[2,1,512], index: 3, kind: input, shape index: {}]
  %s4 = inlined_call_operand.vmem [shape: f32[16,8,128], index: 4, kind: output, shape index: {}]
  %s5 = sld [smem:[#allocation0]]
  $region53: #{custom_lstm_forward.6} parent=0
    _
  %s7 = ssub.s32 1, %s5
  %s8 = scalar_select 0, %s7, %s5
  loop: start=0, step=1, limit=4
  $region2: #{custom_lstm_forward.6} parent=0 // loop_pre_header
    _
  $region3: #{custom_lstm_forward.6} parent=0 // loop_header
    %s10 = sphi 0, %s14
    %p11 = scmp.ge.s32.totalorder %s10, 4
    %s17 = sphi 0, %s29
    %s18 = sphi 0, %s25
    %s19 = sphi 0, %s17
    %s20 = sphi 0, %s18
    %s21 = sphi 0, %s19
    %s22 = sphi 0, %s20
    %s34 = sphi 0, %s36
    %s37 = sphi 0, %s34
    %s38 = sphi 0, %s37
    %s54 = sphi 0, %s38
    %s58 = sphi 0, %s58
    %s60 = sphi 0, %s58
    %s61 = sphi 0, %s60
    %s75 = sphi 0, %s61
    %s79 = sphi 0, %s79
    %s81 = sphi 0, %s79
    %s82 = sphi 0, %s81
    %s96 = sphi 0, %s82
    %s100 = sphi 0, %s100
    %s102 = sphi 0, %s100
    %s103 = sphi 0, %s102
    %s117 = sphi 0, %s103
    %s125 = sphi 0, %s127
    %s128 = sphi 0, %s125
    %s129 = sphi 0, %s128
    %s145 = sphi 0, %s129
  $region4: #{custom_lstm_forward.6} parent=0 // loop_header_branch
    %13 = sbr.rel (%p11) target = $region8
  $region5: #{custom_lstm_forward.6} parent=0 // loop_body
    %s15 = ssub.s32 %s10, 1
    %s16 = ssub.s32 %s10, 2
    %s23 = sadd.s32 1, %s18
    %p24 = scmp.ge.s32.totalorder %s23, 2
    %s25 = scalar_select %p24, 0, %s23
    %s26 = sadd.s32 1, %s17
    %s27 = scalar_select %p24, %s26, %s17
    %p28 = scmp.ge.s32.totalorder %s27, 1
    %s29 = scalar_select %p28, 0, %s27
    %s30 = ssub.s32 %s18, %s25
    %s31 = ssub.s32 %s17, %s29
    %s32 = sor.u32 %s30, %s31
    %p33 = scmp.eq.s32.totalorder %s32, 0
    %s35 = sadd.s32 %s34, 1
    %s36 = scalar_select %p33, %s34, %s35
    %p39 = pneg %p33
    %p40 = scmp.eq.s32.totalorder %s10, 1
    %p41 = por %p39, %p40
    %p42 = scmp.ne.s32.totalorder %s34, %s37
    %p43 = scmp.eq.s32.totalorder %s10, 0
    %p44 = por %p42, %p43
    %p45 = scmp.ne.s32.totalorder %s34, %s37
    %p46 = scmp.eq.s32.totalorder %s15, 1
    %p47 = por %p45, %p46
    %p48 = scmp.ne.s32.totalorder %s37, %s38
    %p49 = scmp.eq.s32.totalorder %s15, 0
    %p50 = por %p48, %p49
    %p51 = scmp.ne.s32.totalorder %s37, %s38
    %p52 = scmp.eq.s32.totalorder %s16, 1
    %p53 = por %p51, %p52
    %p55 = scmp.ne.s32.totalorder %s38, %s54
    %p56 = scmp.eq.s32.totalorder %s16, 0
    %p57 = por %p55, %p56
    %s59 = sadd.s32 %s58, 1
    %p62 = scmp.eq.s32.totalorder %s10, 1
    %p63 = scmp.ne.s32.totalorder %s58, %s60
    %p64 = scmp.eq.s32.totalorder %s10, 0
    %p65 = por %p63, %p64
    %p66 = scmp.ne.s32.totalorder %s58, %s60
    %p67 = scmp.eq.s32.totalorder %s15, 1
    %p68 = por %p66, %p67
    %p69 = scmp.ne.s32.totalorder %s60, %s61
    %p70 = scmp.eq.s32.totalorder %s15, 0
    %p71 = por %p69, %p70
    %p72 = scmp.ne.s32.totalorder %s60, %s61
    %p73 = scmp.eq.s32.totalorder %s16, 1
    %p74 = por %p72, %p73
    %p76 = scmp.ne.s32.totalorder %s61, %s75
    %p77 = scmp.eq.s32.totalorder %s16, 0
    %p78 = por %p76, %p77
    %s80 = sadd.s32 %s79, 1
    %p83 = scmp.eq.s32.totalorder %s10, 1
    %p84 = scmp.ne.s32.totalorder %s79, %s81
    %p85 = scmp.eq.s32.totalorder %s10, 0
    %p86 = por %p84, %p85
    %p87 = scmp.ne.s32.totalorder %s79, %s81
    %p88 = scmp.eq.s32.totalorder %s15, 1
    %p89 = por %p87, %p88
    %p90 = scmp.ne.s32.totalorder %s81, %s82
    %p91 = scmp.eq.s32.totalorder %s15, 0
    %p92 = por %p90, %p91
    %p93 = scmp.ne.s32.totalorder %s81, %s82
    %p94 = scmp.eq.s32.totalorder %s16, 1
    %p95 = por %p93, %p94
    %p97 = scmp.ne.s32.totalorder %s82, %s96
    %p98 = scmp.eq.s32.totalorder %s16, 0
    %p99 = por %p97, %p98
    %s101 = sadd.s32 %s100, 1
    %p104 = scmp.eq.s32.totalorder %s10, 1
    %p105 = scmp.ne.s32.totalorder %s100, %s102
    %p106 = scmp.eq.s32.totalorder %s10, 0
    %p107 = por %p105, %p106
    %p108 = scmp.ne.s32.totalorder %s100, %s102
    %p109 = scmp.eq.s32.totalorder %s15, 1
    %p110 = por %p108, %p109
    %p111 = scmp.ne.s32.totalorder %s102, %s103
    %p112 = scmp.eq.s32.totalorder %s15, 0
    %p113 = por %p111, %p112
    %p114 = scmp.ne.s32.totalorder %s102, %s103
    %p115 = scmp.eq.s32.totalorder %s16, 1
    %p116 = por %p114, %p115
    %p118 = scmp.ne.s32.totalorder %s103, %s117
    %p119 = scmp.eq.s32.totalorder %s16, 0
    %p120 = por %p118, %p119
    %s121 = ssub.s32 %s18, %s25
    %s122 = ssub.s32 %s17, %s29
    %s123 = sor.u32 %s121, %s122
    %p124 = scmp.eq.s32.totalorder %s123, 0
    %s126 = sadd.s32 %s125, 1
    %s127 = scalar_select %p124, %s125, %s126
    %p130 = pneg %p124
    %p131 = scmp.eq.s32.totalorder %s10, 1
    %p132 = por %p130, %p131
    %p133 = scmp.ne.s32.totalorder %s125, %s128
    %p134 = scmp.eq.s32.totalorder %s10, 0
    %p135 = por %p133, %p134
    %p136 = scmp.ne.s32.totalorder %s125, %s128
    %p137 = scmp.eq.s32.totalorder %s15, 1
    %p138 = por %p136, %p137
    %p139 = scmp.ne.s32.totalorder %s128, %s129
    %p140 = scmp.eq.s32.totalorder %s15, 0
    %p141 = por %p139, %p140
    %p142 = scmp.ne.s32.totalorder %s128, %s129
    %p143 = scmp.eq.s32.totalorder %s16, 1
    %p144 = por %p142, %p143
    %p146 = scmp.ne.s32.totalorder %s129, %s145
    %p147 = scmp.eq.s32.totalorder %s16, 0
    %p148 = por %p146, %p147
    %p149 = scmp.le.s32.totalorder 1, %s10
    %p150 = scmp.lt.s32.totalorder %s10, 3
    %p151 = pnand %p149, %p150
    %p152 = pneg %p151
    // Predicated region
    $region9: #{custom_lstm_forward.6} parent=5 // pred_check
      _
    $region10: #{custom_lstm_forward.6} parent=5 // pred_check_branch
      %154 = sbr.rel (%p151) target = $region12
    $region11: #{custom_lstm_forward.6} parent=5 // pred_region
      %s155 = ssub.s32 %s10, 1
      // Predicated region
      $region13: #{custom_lstm_forward.6} parent=11 // pred_check
        %p156 = pneg %p71
      $region14: #{custom_lstm_forward.6} parent=11 // pred_check_branch
        %158 = sbr.rel (%p156) target = $region16
      $region15: #{custom_lstm_forward.6} parent=11 // pred_region
        _
      $region16: #{custom_lstm_forward.6} parent=11 // pred_fallthru
        _
      // Predicated region
      $region17: #{custom_lstm_forward.6} parent=11 // pred_check
        %p159 = pneg %p92
      $region18: #{custom_lstm_forward.6} parent=11 // pred_check_branch
        %161 = sbr.rel (%p159) target = $region20
      $region19: #{custom_lstm_forward.6} parent=11 // pred_region
        _
      $region20: #{custom_lstm_forward.6} parent=11 // pred_fallthru
        _
      // Predicated region
      $region21: #{custom_lstm_forward.6} parent=11 // pred_check
        %p162 = pneg %p113
      $region22: #{custom_lstm_forward.6} parent=11 // pred_check_branch
        %164 = sbr.rel (%p162) target = $region24
      $region23: #{custom_lstm_forward.6} parent=11 // pred_region
        _
      $region24: #{custom_lstm_forward.6} parent=11 // pred_fallthru
        _
    $region12: #{custom_lstm_forward.6} parent=5 // pred_fallthru
      _
    %p165 = scmp.lt.s32.totalorder %s10, 2
    // Predicated region
    $region25: #{custom_lstm_forward.6} parent=5 // pred_check
      %p166 = pneg %p165
    $region26: #{custom_lstm_forward.6} parent=5 // pred_check_branch
      %168 = sbr.rel (%p166) target = $region28
    $region27: #{custom_lstm_forward.6} parent=5 // pred_region
      // Predicated region
      $region29: #{custom_lstm_forward.6} parent=27 // pred_check
        %p169 = pneg %p44
      $region30: #{custom_lstm_forward.6} parent=27 // pred_check_branch
        %171 = sbr.rel (%p169) target = $region32
      $region31: #{custom_lstm_forward.6} parent=27 // pred_region
        %s172 = smul.u32 8, %s18
        %p173 = scmp.lt.s32.totalorder %s172, 15
        %s174 = scalar_select %p173, %s172, 15
        %p175 = scmp.lt.s32.totalorder %s17, 0
        %s176 = scalar_select %p175, %s17, 0
        %s177 = smul.addr %s176, 4
        %s178 = smul.addr %s174, 4
        %s179 = sadd.s32 %s177, %s178
        %s180 = smul.addr %s179, 8
        %s181 = scalar_lea.vmem %s0, %s180
        %s182 = smul.u32 8, %s18
      $region32: #{custom_lstm_forward.6} parent=27 // pred_fallthru
        _
    $region28: #{custom_lstm_forward.6} parent=5 // pred_fallthru
      _
    %p183 = scmp.le.s32.totalorder 1, %s10
    %p184 = scmp.lt.s32.totalorder %s10, 3
    %p185 = pnand %p183, %p184
    %p186 = pneg %p185
    // Predicated region
    $region33: #{custom_lstm_forward.6} parent=5 // pred_check
      _
    $region34: #{custom_lstm_forward.6} parent=5 // pred_check_branch
      %188 = sbr.rel (%p185) target = $region36
    $region35: #{custom_lstm_forward.6} parent=5 // pred_region
      %s189 = ssub.s32 %s10, 1
      %s190 = smul.u32 8, %s20
      %p191 = scmp.lt.s32.totalorder %s190, 15
      %s192 = scalar_select %p191, %s190, 15
      %p193 = scmp.lt.s32.totalorder %s19, 0
      %s194 = scalar_select %p193, %s19, 0
      %s195 = smul.addr %s194, 4
      %s196 = smul.addr %s192, 4
      %s197 = sadd.s32 %s195, %s196
      %s198 = smul.addr %s197, 8
      %s199 = scalar_lea.vmem %s0, %s198
      %p200 = pneg %p50
      %p201 = pneg %p47
      %p202 = pneg %p71
      %p203 = pneg %p68
      %p204 = pneg %p92
      %p205 = pneg %p89
      %p206 = pneg %p113
      %p207 = pneg %p110
      %p208 = pneg %p141
      %p209 = pneg %p138
      %s210 = smul.u32 8, %s20
      %p211 = scmp.lt.s32.totalorder %s210, 15
      %s212 = scalar_select %p211, %s210, 15
      %p213 = scmp.lt.s32.totalorder %s19, 0
      %s214 = scalar_select %p213, %s19, 0
      %s215 = sadd.s32 %s214, %s212
      %s216 = smul.addr %s215, 8
      %s217 = scalar_lea.vmem %s4, %s216
      %s218 = smul.u32 8, %s20
      %p219 = scmp.lt.s32.totalorder %s218, 15
      %s220 = scalar_select %p219, %s218, 15
      %p221 = scmp.lt.s32.totalorder %s19, 0
      %s222 = scalar_select %p221, %s19, 0
      %s223 = smul.addr %s222, 4
      %s224 = smul.addr %s220, 4
      %s225 = sadd.s32 %s223, %s224
      %s226 = smul.addr %s225, 8
      %s227 = scalar_lea.vmem %s0, %s226
      %s228 = smul.u32 8, %s20
      %s229 = smul.u32 8, %s20
      %p230 = scmp.lt.s32.totalorder %s229, 15
      %s231 = scalar_select %p230, %s229, 15
      %p232 = scmp.lt.s32.totalorder %s19, 0
      %s233 = scalar_select %p232, %s19, 0
      %s234 = sadd.s32 %s233, %s231
      %s235 = smul.addr %s234, 8
      %s236 = scalar_lea.vmem %s4, %s235
      %s237 = smul.u32 8, %s20
      %p238 = scmp.eq.s32.totalorder %s20, 0
      // Predicated region
      $region37: #{custom_lstm_forward.6} parent=35 // pred_check
        %p239 = pneg %p238
      $region38: #{custom_lstm_forward.6} parent=35 // pred_check_branch
        %241 = sbr.rel (%p239) target = $region40
      $region39: #{custom_lstm_forward.6} parent=35 // pred_region
        %242 = vst [vmem:[#allocation2] sm:$0xff] 0.0
        %243 = vst [vmem:[#allocation2 + $0x8] sm:$0xff] 0.0
        %244 = vst [vmem:[#allocation3] sm:$0xff] 0.0
        %245 = vst [vmem:[#allocation3 + $0x8] sm:$0xff] 0.0
      $region40: #{custom_lstm_forward.6} parent=35 // pred_fallthru
        _
      %s246 = scalar_lea.vmem %s3, 4
      %v247 = vld [vmem:[%s246] sm:$0xf]
      %v249 = vlaneseq
      %v250 = vshrl.u32 %v249, 7
      %v251 = vsub.s32 0, %v250
      %v252 = vrot.slane %v247, %v251
      %v253 = vlaneseq
      %v254 = vshrl.u32 %v253, 7
      %v255 = vsub.s32 1, %v254
      %v256 = vrot.slane %v247, %v255
      %v257 = vlaneseq
      %v258 = vshrl.u32 %v257, 7
      %v259 = vsub.s32 2, %v258
      %v260 = vrot.slane %v247, %v259
      %v261 = vlaneseq
      %v262 = vshrl.u32 %v261, 7
      %v263 = vsub.s32 3, %v262
      %v264 = vrot.slane %v247, %v263
      %v269 = vld [vmem:[#allocation2] sm:$0xff]
      %v270 = vld [vmem:[%s2] sm:$0xff]
      %v271 = vld [vmem:[%s2 + $0x8] sm:$0xff]
      %v272 = vld [vmem:[%s2 + $0x10] sm:$0xff]
      %v273 = vld [vmem:[%s2 + $0x18] sm:$0xff]
      %v274 = vld [vmem:[%s2 + $0x20] sm:$0xff]
      %v275 = vld [vmem:[%s2 + $0x28] sm:$0xff]
      %v276 = vld [vmem:[%s2 + $0x30] sm:$0xff]
      %v277 = vld [vmem:[%s2 + $0x38] sm:$0xff]
      %v278 = vld [vmem:[%s2 + $0x40] sm:$0xff]
      %v279 = vld [vmem:[%s2 + $0x48] sm:$0xff]
      %v280 = vld [vmem:[%s2 + $0x50] sm:$0xff]
      %v281 = vld [vmem:[%s2 + $0x58] sm:$0xff]
      %v282 = vld [vmem:[%s2 + $0x60] sm:$0xff]
      %v283 = vld [vmem:[%s2 + $0x68] sm:$0xff]
      %v284 = vld [vmem:[%s2 + $0x70] sm:$0xff]
      %v285 = vld [vmem:[%s2 + $0x78] sm:$0xff]
      %v286 = vld [vmem:[%s2 + $0x80] sm:$0xff]
      %v287 = vld [vmem:[%s2 + $0x88] sm:$0xff]
      %v288 = vld [vmem:[%s2 + $0x90] sm:$0xff]
      %v289 = vld [vmem:[%s2 + $0x98] sm:$0xff]
      %v290 = vld [vmem:[%s2 + $0xa0] sm:$0xff]
      %v291 = vld [vmem:[%s2 + $0xa8] sm:$0xff]
      %v292 = vld [vmem:[%s2 + $0xb0] sm:$0xff]
      %v293 = vld [vmem:[%s2 + $0xb8] sm:$0xff]
      %v294 = vld [vmem:[%s2 + $0xc0] sm:$0xff]
      %v295 = vld [vmem:[%s2 + $0xc8] sm:$0xff]
      %v296 = vld [vmem:[%s2 + $0xd0] sm:$0xff]
      %v297 = vld [vmem:[%s2 + $0xd8] sm:$0xff]
      %v298 = vld [vmem:[%s2 + $0xe0] sm:$0xff]
      %v299 = vld [vmem:[%s2 + $0xe8] sm:$0xff]
      %v300 = vld [vmem:[%s2 + $0xf0] sm:$0xff]
      %v301 = vld [vmem:[%s2 + $0xf8] sm:$0xff]
      %v302 = vld [vmem:[%s2 + $0x100] sm:$0xff]
      %v303 = vld [vmem:[%s2 + $0x108] sm:$0xff]
      %v304 = vld [vmem:[%s2 + $0x110] sm:$0xff]
      %v305 = vld [vmem:[%s2 + $0x118] sm:$0xff]
      %v306 = vld [vmem:[%s2 + $0x120] sm:$0xff]
      %v307 = vld [vmem:[%s2 + $0x128] sm:$0xff]
      %v308 = vld [vmem:[%s2 + $0x130] sm:$0xff]
      %v309 = vld [vmem:[%s2 + $0x138] sm:$0xff]
      %v310 = vld [vmem:[%s2 + $0x140] sm:$0xff]
      %v311 = vld [vmem:[%s2 + $0x148] sm:$0xff]
      %v312 = vld [vmem:[%s2 + $0x150] sm:$0xff]
      %v313 = vld [vmem:[%s2 + $0x158] sm:$0xff]
      %v314 = vld [vmem:[%s2 + $0x160] sm:$0xff]
      %v315 = vld [vmem:[%s2 + $0x168] sm:$0xff]
      %v316 = vld [vmem:[%s2 + $0x170] sm:$0xff]
      %v317 = vld [vmem:[%s2 + $0x178] sm:$0xff]
      %v318 = vld [vmem:[%s2 + $0x180] sm:$0xff]
      %v319 = vld [vmem:[%s2 + $0x188] sm:$0xff]
      %v320 = vld [vmem:[%s2 + $0x190] sm:$0xff]
      %v321 = vld [vmem:[%s2 + $0x198] sm:$0xff]
      %v322 = vld [vmem:[%s2 + $0x1a0] sm:$0xff]
      %v323 = vld [vmem:[%s2 + $0x1a8] sm:$0xff]
      %v324 = vld [vmem:[%s2 + $0x1b0] sm:$0xff]
      %v325 = vld [vmem:[%s2 + $0x1b8] sm:$0xff]
      %v326 = vld [vmem:[%s2 + $0x1c0] sm:$0xff]
      %v327 = vld [vmem:[%s2 + $0x1c8] sm:$0xff]
      %v328 = vld [vmem:[%s2 + $0x1d0] sm:$0xff]
      %v329 = vld [vmem:[%s2 + $0x1d8] sm:$0xff]
      %v330 = vld [vmem:[%s2 + $0x1e0] sm:$0xff]
      %v331 = vld [vmem:[%s2 + $0x1e8] sm:$0xff]
      %v332 = vld [vmem:[%s2 + $0x1f0] sm:$0xff]
      %v333 = vld [vmem:[%s2 + $0x1f8] sm:$0xff]
      %334 = vmatprep.subr.mxu0 %v271
      %335 = vmatpush1.msra.mxu0 %v270
      %336 = vmatprep.subr.mxu0 %v275
      %337 = vmatpush1.msra.mxu0 %v274
      %338 = vmatprep.subr.mxu0 %v279
      %339 = vmatpush1.msra.mxu0 %v278
      %340 = vmatprep.subr.mxu0 %v283
      %341 = vmatpush1.msra.mxu0 %v282
      %342 = vmatprep.subr.mxu0 %v287
      %343 = vmatpush1.msra.mxu0 %v286
      %344 = vmatprep.subr.mxu0 %v291
      %345 = vmatpush1.msra.mxu0 %v290
      %346 = vmatprep.subr.mxu0 %v295
      %347 = vmatpush1.msra.mxu0 %v294
      %348 = vmatprep.subr.mxu0 %v299
      %349 = vmatpush1.msra.mxu0 %v298
      %350 = vmatprep.subr.mxu0 %v303
      %351 = vmatpush1.msra.mxu0 %v302
      %352 = vmatprep.subr.mxu0 %v307
      %353 = vmatpush1.msra.mxu0 %v306
      %354 = vmatprep.subr.mxu0 %v311
      %355 = vmatpush1.msra.mxu0 %v310
      %356 = vmatprep.subr.mxu0 %v315
      %357 = vmatpush1.msra.mxu0 %v314
      %358 = vmatprep.subr.mxu0 %v319
      %359 = vmatpush1.msra.mxu0 %v318
      %360 = vmatprep.subr.mxu0 %v323
      %361 = vmatpush1.msra.mxu0 %v322
      %362 = vmatprep.subr.mxu0 %v327
      %363 = vmatpush1.msra.mxu0 %v326
      %364 = vmatprep.subr.mxu0 %v331
      %365 = vmatpush1.msra.mxu0 %v330
      %366 = vmatprep.subr.mxu0 0.0
      %367 = vmatpush1.msra.mxu0 0.0
      %368 = vmatprep.subr.mxu0 0.0
      %369 = vmatpush1.msra.mxu0 0.0
      %370 = vmatprep.subr.mxu0 0.0
      %371 = vmatpush1.msra.mxu0 0.0
      %372 = vmatprep.subr.mxu0 0.0
      %373 = vmatpush1.msra.mxu0 0.0
      %374 = vmatprep.subr.mxu0 0.0
      %375 = vmatpush1.msra.mxu0 0.0
      %376 = vmatprep.subr.mxu0 0.0
      %377 = vmatpush1.msra.mxu0 0.0
      %378 = vmatprep.subr.mxu0 0.0
      %379 = vmatpush1.msra.mxu0 0.0
      %380 = vmatprep.subr.mxu0 0.0
      %381 = vmatpush1.msra.mxu0 0.0
      %382 = vmatprep.subr.mxu0 0.0
      %383 = vmatpush1.msra.mxu0 0.0
      %384 = vmatprep.subr.mxu0 0.0
      %385 = vmatpush1.msra.mxu0 0.0
      %386 = vmatprep.subr.mxu0 0.0
      %387 = vmatpush1.msra.mxu0 0.0
      %388 = vmatprep.subr.mxu0 0.0
      %389 = vmatpush1.msra.mxu0 0.0
      %390 = vmatprep.subr.mxu0 0.0
      %391 = vmatpush1.msra.mxu0 0.0
      %392 = vmatprep.subr.mxu0 0.0
      %393 = vmatpush1.msra.mxu0 0.0
      %394 = vmatprep.subr.mxu0 0.0
      %395 = vmatpush1.msra.mxu0 0.0
      %396 = vmatprep.subr.mxu0 0.0
      %397 = vmatpush1.msra.mxu0 0.0
      %398 = vmatprep.mubr.f32.mxu0 0.0
      %399 = vmatmul.mubr.f32.gmra.mrb[0].mxu0 %v269
      %v400 = vpop.f32.mrb[0].mxu0
      %v401 = vadd.f32 0.0, %v400
      %v402 = vpop.f32.mrb[0].mxu0
      %v403 = vadd.f32 0.0, %v402
      %404 = vdwg.mxu0
      %405 = vmatprep.subr.mxu0 %v273
      %406 = vmatpush1.msra.mxu0 %v272
      %407 = vmatprep.subr.mxu0 %v277
      %408 = vmatpush1.msra.mxu0 %v276
      %409 = vmatprep.subr.mxu0 %v281
      %410 = vmatpush1.msra.mxu0 %v280
      %411 = vmatprep.subr.mxu0 %v285
      %412 = vmatpush1.msra.mxu0 %v284
      %413 = vmatprep.subr.mxu0 %v289
      %414 = vmatpush1.msra.mxu0 %v288
      %415 = vmatprep.subr.mxu0 %v293
      %416 = vmatpush1.msra.mxu0 %v292
      %417 = vmatprep.subr.mxu0 %v297
      %418 = vmatpush1.msra.mxu0 %v296
      %419 = vmatprep.subr.mxu0 %v301
      %420 = vmatpush1.msra.mxu0 %v300
      %421 = vmatprep.subr.mxu0 %v305
      %422 = vmatpush1.msra.mxu0 %v304
      %423 = vmatprep.subr.mxu0 %v309
      %424 = vmatpush1.msra.mxu0 %v308
      %425 = vmatprep.subr.mxu0 %v313
      %426 = vmatpush1.msra.mxu0 %v312
      %427 = vmatprep.subr.mxu0 %v317
      %428 = vmatpush1.msra.mxu0 %v316
      %429 = vmatprep.subr.mxu0 %v321
      %430 = vmatpush1.msra.mxu0 %v320
      %431 = vmatprep.subr.mxu0 %v325
      %432 = vmatpush1.msra.mxu0 %v324
      %433 = vmatprep.subr.mxu0 %v329
      %434 = vmatpush1.msra.mxu0 %v328
      %435 = vmatprep.subr.mxu0 %v333
      %436 = vmatpush1.msra.mxu0 %v332
      %437 = vmatprep.subr.mxu0 0.0
      %438 = vmatpush1.msra.mxu0 0.0
      %439 = vmatprep.subr.mxu0 0.0
      %440 = vmatpush1.msra.mxu0 0.0
      %441 = vmatprep.subr.mxu0 0.0
      %442 = vmatpush1.msra.mxu0 0.0
      %443 = vmatprep.subr.mxu0 0.0
      %444 = vmatpush1.msra.mxu0 0.0
      %445 = vmatprep.subr.mxu0 0.0
      %446 = vmatpush1.msra.mxu0 0.0
      %447 = vmatprep.subr.mxu0 0.0
      %448 = vmatpush1.msra.mxu0 0.0
      %449 = vmatprep.subr.mxu0 0.0
      %450 = vmatpush1.msra.mxu0 0.0
      %451 = vmatprep.subr.mxu0 0.0
      %452 = vmatpush1.msra.mxu0 0.0
      %453 = vmatprep.subr.mxu0 0.0
      %454 = vmatpush1.msra.mxu0 0.0
      %455 = vmatprep.subr.mxu0 0.0
      %456 = vmatpush1.msra.mxu0 0.0
      %457 = vmatprep.subr.mxu0 0.0
      %458 = vmatpush1.msra.mxu0 0.0
      %459 = vmatprep.subr.mxu0 0.0
      %460 = vmatpush1.msra.mxu0 0.0
      %461 = vmatprep.subr.mxu0 0.0
      %462 = vmatpush1.msra.mxu0 0.0
      %463 = vmatprep.subr.mxu0 0.0
      %464 = vmatpush1.msra.mxu0 0.0
      %465 = vmatprep.subr.mxu0 0.0
      %466 = vmatpush1.msra.mxu0 0.0
      %467 = vmatprep.subr.mxu0 0.0
      %468 = vmatpush1.msra.mxu0 0.0
      %469 = vmatprep.mubr.f32.mxu0 0.0
      %470 = vmatmul.mubr.f32.gmra.mrb[0].mxu0 %v269
      %v471 = vpop.f32.mrb[0].mxu0
      %v472 = vadd.f32 0.0, %v471
      %v473 = vpop.f32.mrb[0].mxu0
      %v474 = vadd.f32 0.0, %v473
      %475 = vdwg.mxu0
      %v476 = vld [vmem:[%s227] sm:$0xff]
      %v477 = vld [vmem:[%s227 + $0x8] sm:$0xff]
      %v478 = vld [vmem:[%s227 + $0x10] sm:$0xff]
      %v479 = vld [vmem:[%s227 + $0x18] sm:$0xff]
      %v480 = vadd.f32 %v476, %v401
      %v481 = vadd.f32 %v477, %v403
      %v482 = vadd.f32 %v478, %v472
      %v483 = vadd.f32 %v479, %v474
      %v484 = vxor.u32 %v480, 2147483648
      %v485 = vxor.u32 %v481, 2147483648
      %v486 = vxor.u32 %v482, 2147483648
      %v487 = vmul.f32 %v484, 1.442695
      %v488 = vpow.pop %v487
      %v489 = vmul.f32 %v485, 1.442695
      %v490 = vpow.pop %v489
      %v491 = vmul.f32 %v486, 1.442695
      %v492 = vpow.pop %v491
      %v493 = vadd.f32 %v488, 1.0
      %v494 = vadd.f32 %v490, 1.0
      %v495 = vadd.f32 %v492, 1.0
      %v496 = vrcp.pop %v493
      %v497 = vmul.f32 1.0, %v496
      %v498 = vrcp.pop %v494
      %v499 = vmul.f32 1.0, %v498
      %v500 = vrcp.pop %v495
      %v501 = vmul.f32 1.0, %v500
      %v502 = vtanh.pop %v483
      %v503 = vld [vmem:[#allocation3] sm:$0xff]
      %v504 = vmul.f32 %v499, %v503
      %v505 = vmul.f32 %v497, %v502
      %v506 = vadd.f32 %v504, %v505
      %v507 = vtanh.pop %v506
      %v508 = vmul.f32 %v501, %v507
      %509 = vst [vmem:[#allocation2] sm:$0xff] %v508
      %510 = vst [vmem:[#allocation3] sm:$0xff] %v506
      %s511 = scalar_lea.vmem [#allocation2], 8
      %v512 = vld [vmem:[%s511] sm:$0xff]
      %s513 = scalar_lea.vmem %s2, 512
      %v514 = vld [vmem:[%s513] sm:$0xff]
      %v515 = vld [vmem:[%s513 + $0x8] sm:$0xff]
      %v516 = vld [vmem:[%s513 + $0x10] sm:$0xff]
      %v517 = vld [vmem:[%s513 + $0x18] sm:$0xff]
      %v518 = vld [vmem:[%s513 + $0x20] sm:$0xff]
      %v519 = vld [vmem:[%s513 + $0x28] sm:$0xff]
      %v520 = vld [vmem:[%s513 + $0x30] sm:$0xff]
      %v521 = vld [vmem:[%s513 + $0x38] sm:$0xff]
      %v522 = vld [vmem:[%s513 + $0x40] sm:$0xff]
      %v523 = vld [vmem:[%s513 + $0x48] sm:$0xff]
      %v524 = vld [vmem:[%s513 + $0x50] sm:$0xff]
      %v525 = vld [vmem:[%s513 + $0x58] sm:$0xff]
      %v526 = vld [vmem:[%s513 + $0x60] sm:$0xff]
      %v527 = vld [vmem:[%s513 + $0x68] sm:$0xff]
      %v528 = vld [vmem:[%s513 + $0x70] sm:$0xff]
      %v529 = vld [vmem:[%s513 + $0x78] sm:$0xff]
      %v530 = vld [vmem:[%s513 + $0x80] sm:$0xff]
      %v531 = vld [vmem:[%s513 + $0x88] sm:$0xff]
      %v532 = vld [vmem:[%s513 + $0x90] sm:$0xff]
      %v533 = vld [vmem:[%s513 + $0x98] sm:$0xff]
      %v534 = vld [vmem:[%s513 + $0xa0] sm:$0xff]
      %v535 = vld [vmem:[%s513 + $0xa8] sm:$0xff]
      %v536 = vld [vmem:[%s513 + $0xb0] sm:$0xff]
      %v537 = vld [vmem:[%s513 + $0xb8] sm:$0xff]
      %v538 = vld [vmem:[%s513 + $0xc0] sm:$0xff]
      %v539 = vld [vmem:[%s513 + $0xc8] sm:$0xff]
      %v540 = vld [vmem:[%s513 + $0xd0] sm:$0xff]
      %v541 = vld [vmem:[%s513 + $0xd8] sm:$0xff]
      %v542 = vld [vmem:[%s513 + $0xe0] sm:$0xff]
      %v543 = vld [vmem:[%s513 + $0xe8] sm:$0xff]
      %v544 = vld [vmem:[%s513 + $0xf0] sm:$0xff]
      %v545 = vld [vmem:[%s513 + $0xf8] sm:$0xff]
      %v546 = vld [vmem:[%s513 + $0x100] sm:$0xff]
      %v547 = vld [vmem:[%s513 + $0x108] sm:$0xff]
      %v548 = vld [vmem:[%s513 + $0x110] sm:$0xff]
      %v549 = vld [vmem:[%s513 + $0x118] sm:$0xff]
      %v550 = vld [vmem:[%s513 + $0x120] sm:$0xff]
      %v551 = vld [vmem:[%s513 + $0x128] sm:$0xff]
      %v552 = vld [vmem:[%s513 + $0x130] sm:$0xff]
      %v553 = vld [vmem:[%s513 + $0x138] sm:$0xff]
      %v554 = vld [vmem:[%s513 + $0x140] sm:$0xff]
      %v555 = vld [vmem:[%s513 + $0x148] sm:$0xff]
      %v556 = vld [vmem:[%s513 + $0x150] sm:$0xff]
      %v557 = vld [vmem:[%s513 + $0x158] sm:$0xff]
      %v558 = vld [vmem:[%s513 + $0x160] sm:$0xff]
      %v559 = vld [vmem:[%s513 + $0x168] sm:$0xff]
      %v560 = vld [vmem:[%s513 + $0x170] sm:$0xff]
      %v561 = vld [vmem:[%s513 + $0x178] sm:$0xff]
      %v562 = vld [vmem:[%s513 + $0x180] sm:$0xff]
      %v563 = vld [vmem:[%s513 + $0x188] sm:$0xff]
      %v564 = vld [vmem:[%s513 + $0x190] sm:$0xff]
      %v565 = vld [vmem:[%s513 + $0x198] sm:$0xff]
      %v566 = vld [vmem:[%s513 + $0x1a0] sm:$0xff]
      %v567 = vld [vmem:[%s513 + $0x1a8] sm:$0xff]
      %v568 = vld [vmem:[%s513 + $0x1b0] sm:$0xff]
      %v569 = vld [vmem:[%s513 + $0x1b8] sm:$0xff]
      %v570 = vld [vmem:[%s513 + $0x1c0] sm:$0xff]
      %v571 = vld [vmem:[%s513 + $0x1c8] sm:$0xff]
      %v572 = vld [vmem:[%s513 + $0x1d0] sm:$0xff]
      %v573 = vld [vmem:[%s513 + $0x1d8] sm:$0xff]
      %v574 = vld [vmem:[%s513 + $0x1e0] sm:$0xff]
      %v575 = vld [vmem:[%s513 + $0x1e8] sm:$0xff]
      %v576 = vld [vmem:[%s513 + $0x1f0] sm:$0xff]
      %v577 = vld [vmem:[%s513 + $0x1f8] sm:$0xff]
      %578 = vmatprep.subr.mxu0 %v515
      %579 = vmatpush1.msra.mxu0 %v514
      %580 = vmatprep.subr.mxu0 %v519
      %581 = vmatpush1.msra.mxu0 %v518
      %582 = vmatprep.subr.mxu0 %v523
      %583 = vmatpush1.msra.mxu0 %v522
      %584 = vmatprep.subr.mxu0 %v527
      %585 = vmatpush1.msra.mxu0 %v526
      %586 = vmatprep.subr.mxu0 %v531
      %587 = vmatpush1.msra.mxu0 %v530
      %588 = vmatprep.subr.mxu0 %v535
      %589 = vmatpush1.msra.mxu0 %v534
      %590 = vmatprep.subr.mxu0 %v539
      %591 = vmatpush1.msra.mxu0 %v538
      %592 = vmatprep.subr.mxu0 %v543
      %593 = vmatpush1.msra.mxu0 %v542
      %594 = vmatprep.subr.mxu0 %v547
      %595 = vmatpush1.msra.mxu0 %v546
      %596 = vmatprep.subr.mxu0 %v551
      %597 = vmatpush1.msra.mxu0 %v550
      %598 = vmatprep.subr.mxu0 %v555
      %599 = vmatpush1.msra.mxu0 %v554
      %600 = vmatprep.subr.mxu0 %v559
      %601 = vmatpush1.msra.mxu0 %v558
      %602 = vmatprep.subr.mxu0 %v563
      %603 = vmatpush1.msra.mxu0 %v562
      %604 = vmatprep.subr.mxu0 %v567
      %605 = vmatpush1.msra.mxu0 %v566
      %606 = vmatprep.subr.mxu0 %v571
      %607 = vmatpush1.msra.mxu0 %v570
      %608 = vmatprep.subr.mxu0 %v575
      %609 = vmatpush1.msra.mxu0 %v574
      %610 = vmatprep.subr.mxu0 0.0
      %611 = vmatpush1.msra.mxu0 0.0
      %612 = vmatprep.subr.mxu0 0.0
      %613 = vmatpush1.msra.mxu0 0.0
      %614 = vmatprep.subr.mxu0 0.0
      %615 = vmatpush1.msra.mxu0 0.0
      %616 = vmatprep.subr.mxu0 0.0
      %617 = vmatpush1.msra.mxu0 0.0
      %618 = vmatprep.subr.mxu0 0.0
      %619 = vmatpush1.msra.mxu0 0.0
      %620 = vmatprep.subr.mxu0 0.0
      %621 = vmatpush1.msra.mxu0 0.0
      %622 = vmatprep.subr.mxu0 0.0
      %623 = vmatpush1.msra.mxu0 0.0
      %624 = vmatprep.subr.mxu0 0.0
      %625 = vmatpush1.msra.mxu0 0.0
      %626 = vmatprep.subr.mxu0 0.0
      %627 = vmatpush1.msra.mxu0 0.0
      %628 = vmatprep.subr.mxu0 0.0
      %629 = vmatpush1.msra.mxu0 0.0
      %630 = vmatprep.subr.mxu0 0.0
      %631 = vmatpush1.msra.mxu0 0.0
      %632 = vmatprep.subr.mxu0 0.0
      %633 = vmatpush1.msra.mxu0 0.0
      %634 = vmatprep.subr.mxu0 0.0
      %635 = vmatpush1.msra.mxu0 0.0
      %636 = vmatprep.subr.mxu0 0.0
      %637 = vmatpush1.msra.mxu0 0.0
      %638 = vmatprep.subr.mxu0 0.0
      %639 = vmatpush1.msra.mxu0 0.0
      %640 = vmatprep.subr.mxu0 0.0
      %641 = vmatpush1.msra.mxu0 0.0
      %642 = vmatprep.mubr.f32.mxu0 0.0
      %643 = vmatmul.mubr.f32.gmra.mrb[0].mxu0 %v512
      %v644 = vpop.f32.mrb[0].mxu0
      %v645 = vadd.f32 0.0, %v644
      %v646 = vpop.f32.mrb[0].mxu0
      %v647 = vadd.f32 0.0, %v646
      %648 = vdwg.mxu0
      %649 = vmatprep.subr.mxu0 %v517
      %650 = vmatpush1.msra.mxu0 %v516
      %651 = vmatprep.subr.mxu0 %v521
      %652 = vmatpush1.msra.mxu0 %v520
      %653 = vmatprep.subr.mxu0 %v525
      %654 = vmatpush1.msra.mxu0 %v524
      %655 = vmatprep.subr.mxu0 %v529
      %656 = vmatpush1.msra.mxu0 %v528
      %657 = vmatprep.subr.mxu0 %v533
      %658 = vmatpush1.msra.mxu0 %v532
      %659 = vmatprep.subr.mxu0 %v537
      %660 = vmatpush1.msra.mxu0 %v536
      %661 = vmatprep.subr.mxu0 %v541
      %662 = vmatpush1.msra.mxu0 %v540
      %663 = vmatprep.subr.mxu0 %v545
      %664 = vmatpush1.msra.mxu0 %v544
      %665 = vmatprep.subr.mxu0 %v549
      %666 = vmatpush1.msra.mxu0 %v548
      %667 = vmatprep.subr.mxu0 %v553
      %668 = vmatpush1.msra.mxu0 %v552
      %669 = vmatprep.subr.mxu0 %v557
      %670 = vmatpush1.msra.mxu0 %v556
      %671 = vmatprep.subr.mxu0 %v561
      %672 = vmatpush1.msra.mxu0 %v560
      %673 = vmatprep.subr.mxu0 %v565
      %674 = vmatpush1.msra.mxu0 %v564
      %675 = vmatprep.subr.mxu0 %v569
      %676 = vmatpush1.msra.mxu0 %v568
      %677 = vmatprep.subr.mxu0 %v573
      %678 = vmatpush1.msra.mxu0 %v572
      %679 = vmatprep.subr.mxu0 %v577
      %680 = vmatpush1.msra.mxu0 %v576
      %681 = vmatprep.subr.mxu0 0.0
      %682 = vmatpush1.msra.mxu0 0.0
      %683 = vmatprep.subr.mxu0 0.0
      %684 = vmatpush1.msra.mxu0 0.0
      %685 = vmatprep.subr.mxu0 0.0
      %686 = vmatpush1.msra.mxu0 0.0
      %687 = vmatprep.subr.mxu0 0.0
      %688 = vmatpush1.msra.mxu0 0.0
      %689 = vmatprep.subr.mxu0 0.0
      %690 = vmatpush1.msra.mxu0 0.0
      %691 = vmatprep.subr.mxu0 0.0
      %692 = vmatpush1.msra.mxu0 0.0
      %693 = vmatprep.subr.mxu0 0.0
      %694 = vmatpush1.msra.mxu0 0.0
      %695 = vmatprep.subr.mxu0 0.0
      %696 = vmatpush1.msra.mxu0 0.0
      %697 = vmatprep.subr.mxu0 0.0
      %698 = vmatpush1.msra.mxu0 0.0
      %699 = vmatprep.subr.mxu0 0.0
      %700 = vmatpush1.msra.mxu0 0.0
      %701 = vmatprep.subr.mxu0 0.0
      %702 = vmatpush1.msra.mxu0 0.0
      %703 = vmatprep.subr.mxu0 0.0
      %704 = vmatpush1.msra.mxu0 0.0
      %705 = vmatprep.subr.mxu0 0.0
      %706 = vmatpush1.msra.mxu0 0.0
      %707 = vmatprep.subr.mxu0 0.0
      %708 = vmatpush1.msra.mxu0 0.0
      %709 = vmatprep.subr.mxu0 0.0
      %710 = vmatpush1.msra.mxu0 0.0
      %711 = vmatprep.subr.mxu0 0.0
      %712 = vmatpush1.msra.mxu0 0.0
      %713 = vmatprep.mubr.f32.mxu0 0.0
      %714 = vmatmul.mubr.f32.gmra.mrb[0].mxu0 %v512
      %v715 = vpop.f32.mrb[0].mxu0
      %v716 = vadd.f32 0.0, %v715
      %v717 = vpop.f32.mrb[0].mxu0
      %v718 = vadd.f32 0.0, %v717
      %719 = vdwg.mxu0
      %s720 = scalar_lea.vmem %s1, 512
      %v721 = vld [vmem:[%s720] sm:$0xff]
      %v722 = vld [vmem:[%s720 + $0x8] sm:$0xff]
      %v723 = vld [vmem:[%s720 + $0x10] sm:$0xff]
      %v724 = vld [vmem:[%s720 + $0x18] sm:$0xff]
      %v725 = vld [vmem:[%s720 + $0x20] sm:$0xff]
      %v726 = vld [vmem:[%s720 + $0x28] sm:$0xff]
      %v727 = vld [vmem:[%s720 + $0x30] sm:$0xff]
      %v728 = vld [vmem:[%s720 + $0x38] sm:$0xff]
      %v729 = vld [vmem:[%s720 + $0x40] sm:$0xff]
      %v730 = vld [vmem:[%s720 + $0x48] sm:$0xff]
      %v731 = vld [vmem:[%s720 + $0x50] sm:$0xff]
      %v732 = vld [vmem:[%s720 + $0x58] sm:$0xff]
      %v733 = vld [vmem:[%s720 + $0x60] sm:$0xff]
      %v734 = vld [vmem:[%s720 + $0x68] sm:$0xff]
      %v735 = vld [vmem:[%s720 + $0x70] sm:$0xff]
      %v736 = vld [vmem:[%s720 + $0x78] sm:$0xff]
      %v737 = vld [vmem:[%s720 + $0x80] sm:$0xff]
      %v738 = vld [vmem:[%s720 + $0x88] sm:$0xff]
      %v739 = vld [vmem:[%s720 + $0x90] sm:$0xff]
      %v740 = vld [vmem:[%s720 + $0x98] sm:$0xff]
      %v741 = vld [vmem:[%s720 + $0xa0] sm:$0xff]
      %v742 = vld [vmem:[%s720 + $0xa8] sm:$0xff]
      %v743 = vld [vmem:[%s720 + $0xb0] sm:$0xff]
      %v744 = vld [vmem:[%s720 + $0xb8] sm:$0xff]
      %v745 = vld [vmem:[%s720 + $0xc0] sm:$0xff]
      %v746 = vld [vmem:[%s720 + $0xc8] sm:$0xff]
      %v747 = vld [vmem:[%s720 + $0xd0] sm:$0xff]
      %v748 = vld [vmem:[%s720 + $0xd8] sm:$0xff]
      %v749 = vld [vmem:[%s720 + $0xe0] sm:$0xff]
      %v750 = vld [vmem:[%s720 + $0xe8] sm:$0xff]
      %v751 = vld [vmem:[%s720 + $0xf0] sm:$0xff]
      %v752 = vld [vmem:[%s720 + $0xf8] sm:$0xff]
      %v753 = vld [vmem:[%s720 + $0x100] sm:$0xff]
      %v754 = vld [vmem:[%s720 + $0x108] sm:$0xff]
      %v755 = vld [vmem:[%s720 + $0x110] sm:$0xff]
      %v756 = vld [vmem:[%s720 + $0x118] sm:$0xff]
      %v757 = vld [vmem:[%s720 + $0x120] sm:$0xff]
      %v758 = vld [vmem:[%s720 + $0x128] sm:$0xff]
      %v759 = vld [vmem:[%s720 + $0x130] sm:$0xff]
      %v760 = vld [vmem:[%s720 + $0x138] sm:$0xff]
      %v761 = vld [vmem:[%s720 + $0x140] sm:$0xff]
      %v762 = vld [vmem:[%s720 + $0x148] sm:$0xff]
      %v763 = vld [vmem:[%s720 + $0x150] sm:$0xff]
      %v764 = vld [vmem:[%s720 + $0x158] sm:$0xff]
      %v765 = vld [vmem:[%s720 + $0x160] sm:$0xff]
      %v766 = vld [vmem:[%s720 + $0x168] sm:$0xff]
      %v767 = vld [vmem:[%s720 + $0x170] sm:$0xff]
      %v768 = vld [vmem:[%s720 + $0x178] sm:$0xff]
      %v769 = vld [vmem:[%s720 + $0x180] sm:$0xff]
      %v770 = vld [vmem:[%s720 + $0x188] sm:$0xff]
      %v771 = vld [vmem:[%s720 + $0x190] sm:$0xff]
      %v772 = vld [vmem:[%s720 + $0x198] sm:$0xff]
      %v773 = vld [vmem:[%s720 + $0x1a0] sm:$0xff]
      %v774 = vld [vmem:[%s720 + $0x1a8] sm:$0xff]
      %v775 = vld [vmem:[%s720 + $0x1b0] sm:$0xff]
      %v776 = vld [vmem:[%s720 + $0x1b8] sm:$0xff]
      %v777 = vld [vmem:[%s720 + $0x1c0] sm:$0xff]
      %v778 = vld [vmem:[%s720 + $0x1c8] sm:$0xff]
      %v779 = vld [vmem:[%s720 + $0x1d0] sm:$0xff]
      %v780 = vld [vmem:[%s720 + $0x1d8] sm:$0xff]
      %v781 = vld [vmem:[%s720 + $0x1e0] sm:$0xff]
      %v782 = vld [vmem:[%s720 + $0x1e8] sm:$0xff]
      %v783 = vld [vmem:[%s720 + $0x1f0] sm:$0xff]
      %v784 = vld [vmem:[%s720 + $0x1f8] sm:$0xff]
      %785 = vmatprep.subr.mxu0 %v722
      %786 = vmatpush1.msra.mxu0 %v721
      %787 = vmatprep.subr.mxu0 %v726
      %788 = vmatpush1.msra.mxu0 %v725
      %789 = vmatprep.subr.mxu0 %v730
      %790 = vmatpush1.msra.mxu0 %v729
      %791 = vmatprep.subr.mxu0 %v734
      %792 = vmatpush1.msra.mxu0 %v733
      %793 = vmatprep.subr.mxu0 %v738
      %794 = vmatpush1.msra.mxu0 %v737
      %795 = vmatprep.subr.mxu0 %v742
      %796 = vmatpush1.msra.mxu0 %v741
      %797 = vmatprep.subr.mxu0 %v746
      %798 = vmatpush1.msra.mxu0 %v745
      %799 = vmatprep.subr.mxu0 %v750
      %800 = vmatpush1.msra.mxu0 %v749
      %801 = vmatprep.subr.mxu0 %v754
      %802 = vmatpush1.msra.mxu0 %v753
      %803 = vmatprep.subr.mxu0 %v758
      %804 = vmatpush1.msra.mxu0 %v757
      %805 = vmatprep.subr.mxu0 %v762
      %806 = vmatpush1.msra.mxu0 %v761
      %807 = vmatprep.subr.mxu0 %v766
      %808 = vmatpush1.msra.mxu0 %v765
      %809 = vmatprep.subr.mxu0 %v770
      %810 = vmatpush1.msra.mxu0 %v769
      %811 = vmatprep.subr.mxu0 %v774
      %812 = vmatpush1.msra.mxu0 %v773
      %813 = vmatprep.subr.mxu0 %v778
      %814 = vmatpush1.msra.mxu0 %v777
      %815 = vmatprep.subr.mxu0 %v782
      %816 = vmatpush1.msra.mxu0 %v781
      %817 = vmatprep.subr.mxu0 0.0
      %818 = vmatpush1.msra.mxu0 0.0
      %819 = vmatprep.subr.mxu0 0.0
      %820 = vmatpush1.msra.mxu0 0.0
      %821 = vmatprep.subr.mxu0 0.0
      %822 = vmatpush1.msra.mxu0 0.0
      %823 = vmatprep.subr.mxu0 0.0
      %824 = vmatpush1.msra.mxu0 0.0
      %825 = vmatprep.subr.mxu0 0.0
      %826 = vmatpush1.msra.mxu0 0.0
      %827 = vmatprep.subr.mxu0 0.0
      %828 = vmatpush1.msra.mxu0 0.0
      %829 = vmatprep.subr.mxu0 0.0
      %830 = vmatpush1.msra.mxu0 0.0
      %831 = vmatprep.subr.mxu0 0.0
      %832 = vmatpush1.msra.mxu0 0.0
      %833 = vmatprep.subr.mxu0 0.0
      %834 = vmatpush1.msra.mxu0 0.0
      %835 = vmatprep.subr.mxu0 0.0
      %836 = vmatpush1.msra.mxu0 0.0
      %837 = vmatprep.subr.mxu0 0.0
      %838 = vmatpush1.msra.mxu0 0.0
      %839 = vmatprep.subr.mxu0 0.0
      %840 = vmatpush1.msra.mxu0 0.0
      %841 = vmatprep.subr.mxu0 0.0
      %842 = vmatpush1.msra.mxu0 0.0
      %843 = vmatprep.subr.mxu0 0.0
      %844 = vmatpush1.msra.mxu0 0.0
      %845 = vmatprep.subr.mxu0 0.0
      %846 = vmatpush1.msra.mxu0 0.0
      %847 = vmatprep.subr.mxu0 0.0
      %848 = vmatpush1.msra.mxu0 0.0
      %849 = vmatprep.mubr.f32.mxu0 0.0
      %850 = vmatmul.mubr.f32.gmra.mrb[0].mxu0 %v508
      %v851 = vpop.f32.mrb[0].mxu0
      %v852 = vadd.f32 %v645, %v851
      %v853 = vpop.f32.mrb[0].mxu0
      %v854 = vadd.f32 %v647, %v853
      %855 = vdwg.mxu0
      %856 = vmatprep.subr.mxu0 %v724
      %857 = vmatpush1.msra.mxu0 %v723
      %858 = vmatprep.subr.mxu0 %v728
      %859 = vmatpush1.msra.mxu0 %v727
      %860 = vmatprep.subr.mxu0 %v732
      %861 = vmatpush1.msra.mxu0 %v731
      %862 = vmatprep.subr.mxu0 %v736
      %863 = vmatpush1.msra.mxu0 %v735
      %864 = vmatprep.subr.mxu0 %v740
      %865 = vmatpush1.msra.mxu0 %v739
      %866 = vmatprep.subr.mxu0 %v744
      %867 = vmatpush1.msra.mxu0 %v743
      %868 = vmatprep.subr.mxu0 %v748
      %869 = vmatpush1.msra.mxu0 %v747
      %870 = vmatprep.subr.mxu0 %v752
      %871 = vmatpush1.msra.mxu0 %v751
      %872 = vmatprep.subr.mxu0 %v756
      %873 = vmatpush1.msra.mxu0 %v755
      %874 = vmatprep.subr.mxu0 %v760
      %875 = vmatpush1.msra.mxu0 %v759
      %876 = vmatprep.subr.mxu0 %v764
      %877 = vmatpush1.msra.mxu0 %v763
      %878 = vmatprep.subr.mxu0 %v768
      %879 = vmatpush1.msra.mxu0 %v767
      %880 = vmatprep.subr.mxu0 %v772
      %881 = vmatpush1.msra.mxu0 %v771
      %882 = vmatprep.subr.mxu0 %v776
      %883 = vmatpush1.msra.mxu0 %v775
      %884 = vmatprep.subr.mxu0 %v780
      %885 = vmatpush1.msra.mxu0 %v779
      %886 = vmatprep.subr.mxu0 %v784
      %887 = vmatpush1.msra.mxu0 %v783
      %888 = vmatprep.subr.mxu0 0.0
      %889 = vmatpush1.msra.mxu0 0.0
      %890 = vmatprep.subr.mxu0 0.0
      %891 = vmatpush1.msra.mxu0 0.0
      %892 = vmatprep.subr.mxu0 0.0
      %893 = vmatpush1.msra.mxu0 0.0
      %894 = vmatprep.subr.mxu0 0.0
      %895 = vmatpush1.msra.mxu0 0.0
      %896 = vmatprep.subr.mxu0 0.0
      %897 = vmatpush1.msra.mxu0 0.0
      %898 = vmatprep.subr.mxu0 0.0
      %899 = vmatpush1.msra.mxu0 0.0
      %900 = vmatprep.subr.mxu0 0.0
      %901 = vmatpush1.msra.mxu0 0.0
      %902 = vmatprep.subr.mxu0 0.0
      %903 = vmatpush1.msra.mxu0 0.0
      %904 = vmatprep.subr.mxu0 0.0
      %905 = vmatpush1.msra.mxu0 0.0
      %906 = vmatprep.subr.mxu0 0.0
      %907 = vmatpush1.msra.mxu0 0.0
      %908 = vmatprep.subr.mxu0 0.0
      %909 = vmatpush1.msra.mxu0 0.0
      %910 = vmatprep.subr.mxu0 0.0
      %911 = vmatpush1.msra.mxu0 0.0
      %912 = vmatprep.subr.mxu0 0.0
      %913 = vmatpush1.msra.mxu0 0.0
      %914 = vmatprep.subr.mxu0 0.0
      %915 = vmatpush1.msra.mxu0 0.0
      %916 = vmatprep.subr.mxu0 0.0
      %917 = vmatpush1.msra.mxu0 0.0
      %918 = vmatprep.subr.mxu0 0.0
      %919 = vmatpush1.msra.mxu0 0.0
      %920 = vmatprep.mubr.f32.mxu0 0.0
      %921 = vmatmul.mubr.f32.gmra.mrb[0].mxu0 %v508
      %v922 = vpop.f32.mrb[0].mxu0
      %v923 = vadd.f32 %v716, %v922
      %v924 = vpop.f32.mrb[0].mxu0
      %v925 = vadd.f32 %v718, %v924
      %926 = vdwg.mxu0
      %v927 = vadd.f32 %v852, %v252
      %v928 = vadd.f32 %v854, %v256
      %v929 = vadd.f32 %v923, %v260
      %v930 = vadd.f32 %v925, %v264
      %v931 = vxor.u32 %v927, 2147483648
      %v932 = vxor.u32 %v928, 2147483648
      %v933 = vxor.u32 %v929, 2147483648
      %v934 = vmul.f32 %v931, 1.442695
      %v935 = vpow.pop %v934
      %v936 = vmul.f32 %v932, 1.442695
      %v937 = vpow.pop %v936
      %v938 = vmul.f32 %v933, 1.442695
      %v939 = vpow.pop %v938
      %v940 = vadd.f32 %v935, 1.0
      %v941 = vadd.f32 %v937, 1.0
      %v942 = vadd.f32 %v939, 1.0
      %v943 = vrcp.pop %v940
      %v944 = vmul.f32 1.0, %v943
      %v945 = vrcp.pop %v941
      %v946 = vmul.f32 1.0, %v945
      %v947 = vrcp.pop %v942
      %v948 = vmul.f32 1.0, %v947
      %v949 = vtanh.pop %v930
      %s950 = scalar_lea.vmem [#allocation3], 8
      %v951 = vld [vmem:[%s950] sm:$0xff]
      %v952 = vmul.f32 %v946, %v951
      %v953 = vmul.f32 %v944, %v949
      %v954 = vadd.f32 %v952, %v953
      %v955 = vtanh.pop %v954
      %v956 = vmul.f32 %v948, %v955
      %957 = vst [vmem:[%s511] sm:$0xff] %v956
      %958 = vst [vmem:[%s950] sm:$0xff] %v954
      %959 = vst [vmem:[%s236] sm:$0xff] %v956
      %v960 = vld [vmem:[#allocation2] sm:$0xff]
      %v961 = vld [vmem:[%s2] sm:$0xff]
      %v962 = vld [vmem:[%s2 + $0x8] sm:$0xff]
      %v963 = vld [vmem:[%s2 + $0x10] sm:$0xff]
      %v964 = vld [vmem:[%s2 + $0x18] sm:$0xff]
      %v965 = vld [vmem:[%s2 + $0x20] sm:$0xff]
      %v966 = vld [vmem:[%s2 + $0x28] sm:$0xff]
      %v967 = vld [vmem:[%s2 + $0x30] sm:$0xff]
      %v968 = vld [vmem:[%s2 + $0x38] sm:$0xff]
      %v969 = vld [vmem:[%s2 + $0x40] sm:$0xff]
      %v970 = vld [vmem:[%s2 + $0x48] sm:$0xff]
      %v971 = vld [vmem:[%s2 + $0x50] sm:$0xff]
      %v972 = vld [vmem:[%s2 + $0x58] sm:$0xff]
      %v973 = vld [vmem:[%s2 + $0x60] sm:$0xff]
      %v974 = vld [vmem:[%s2 + $0x68] sm:$0xff]
      %v975 = vld [vmem:[%s2 + $0x70] sm:$0xff]
      %v976 = vld [vmem:[%s2 + $0x78] sm:$0xff]
      %v977 = vld [vmem:[%s2 + $0x80] sm:$0xff]
      %v978 = vld [vmem:[%s2 + $0x88] sm:$0xff]
      %v979 = vld [vmem:[%s2 + $0x90] sm:$0xff]
      %v980 = vld [vmem:[%s2 + $0x98] sm:$0xff]
      %v981 = vld [vmem:[%s2 + $0xa0] sm:$0xff]
      %v982 = vld [vmem:[%s2 + $0xa8] sm:$0xff]
      %v983 = vld [vmem:[%s2 + $0xb0] sm:$0xff]
      %v984 = vld [vmem:[%s2 + $0xb8] sm:$0xff]
      %v985 = vld [vmem:[%s2 + $0xc0] sm:$0xff]
      %v986 = vld [vmem:[%s2 + $0xc8] sm:$0xff]
      %v987 = vld [vmem:[%s2 + $0xd0] sm:$0xff]
      %v988 = vld [vmem:[%s2 + $0xd8] sm:$0xff]
      %v989 = vld [vmem:[%s2 + $0xe0] sm:$0xff]
      %v990 = vld [vmem:[%s2 + $0xe8] sm:$0xff]
      %v991 = vld [vmem:[%s2 + $0xf0] sm:$0xff]
      %v992 = vld [vmem:[%s2 + $0xf8] sm:$0xff]
      %v993 = vld [vmem:[%s2 + $0x100] sm:$0xff]
      %v994 = vld [vmem:[%s2 + $0x108] sm:$0xff]
      %v995 = vld [vmem:[%s2 + $0x110] sm:$0xff]
      %v996 = vld [vmem:[%s2 + $0x118] sm:$0xff]
      %v997 = vld [vmem:[%s2 + $0x120] sm:$0xff]
      %v998 = vld [vmem:[%s2 + $0x128] sm:$0xff]
      %v999 = vld [vmem:[%s2 + $0x130] sm:$0xff]
      %v1000 = vld [vmem:[%s2 + $0x138] sm:$0xff]
      %v1001 = vld [vmem:[%s2 + $0x140] sm:$0xff]
      %v1002 = vld [vmem:[%s2 + $0x148] sm:$0xff]
      %v1003 = vld [vmem:[%s2 + $0x150] sm:$0xff]
      %v1004 = vld [vmem:[%s2 + $0x158] sm:$0xff]
      %v1005 = vld [vmem:[%s2 + $0x160] sm:$0xff]
      %v1006 = vld [vmem:[%s2 + $0x168] sm:$0xff]
      %v1007 = vld [vmem:[%s2 + $0x170] sm:$0xff]
      %v1008 = vld [vmem:[%s2 + $0x178] sm:$0xff]
      %v1009 = vld [vmem:[%s2 + $0x180] sm:$0xff]
      %v1010 = vld [vmem:[%s2 + $0x188] sm:$0xff]
      %v1011 = vld [vmem:[%s2 + $0x190] sm:$0xff]
      %v1012 = vld [vmem:[%s2 + $0x198] sm:$0xff]
      %v1013 = vld [vmem:[%s2 + $0x1a0] sm:$0xff]
      %v1014 = vld [vmem:[%s2 + $0x1a8] sm:$0xff]
      %v1015 = vld [vmem:[%s2 + $0x1b0] sm:$0xff]
      %v1016 = vld [vmem:[%s2 + $0x1b8] sm:$0xff]
      %v1017 = vld [vmem:[%s2 + $0x1c0] sm:$0xff]
      %v1018 = vld [vmem:[%s2 + $0x1c8] sm:$0xff]
      %v1019 = vld [vmem:[%s2 + $0x1d0] sm:$0xff]
      %v1020 = vld [vmem:[%s2 + $0x1d8] sm:$0xff]
      %v1021 = vld [vmem:[%s2 + $0x1e0] sm:$0xff]
      %v1022 = vld [vmem:[%s2 + $0x1e8] sm:$0xff]
      %v1023 = vld [vmem:[%s2 + $0x1f0] sm:$0xff]
      %v1024 = vld [vmem:[%s2 + $0x1f8] sm:$0xff]
      %1025 = vmatprep.subr.mxu0 %v962
      %1026 = vmatpush1.msra.mxu0 %v961
      %1027 = vmatprep.subr.mxu0 %v966
      %1028 = vmatpush1.msra.mxu0 %v965
      %1029 = vmatprep.subr.mxu0 %v970
      %1030 = vmatpush1.msra.mxu0 %v969
      %1031 = vmatprep.subr.mxu0 %v974
      %1032 = vmatpush1.msra.mxu0 %v973
      %1033 = vmatprep.subr.mxu0 %v978
      %1034 = vmatpush1.msra.mxu0 %v977
      %1035 = vmatprep.subr.mxu0 %v982
      %1036 = vmatpush1.msra.mxu0 %v981
      %1037 = vmatprep.subr.mxu0 %v986
      %1038 = vmatpush1.msra.mxu0 %v985
      %1039 = vmatprep.subr.mxu0 %v990
      %1040 = vmatpush1.msra.mxu0 %v989
      %1041 = vmatprep.subr.mxu0 %v994
      %1042 = vmatpush1.msra.mxu0 %v993
      %1043 = vmatprep.subr.mxu0 %v998
      %1044 = vmatpush1.msra.mxu0 %v997
      %1045 = vmatprep.subr.mxu0 %v1002
      %1046 = vmatpush1.msra.mxu0 %v1001
      %1047 = vmatprep.subr.mxu0 %v1006
      %1048 = vmatpush1.msra.mxu0 %v1005
      %1049 = vmatprep.subr.mxu0 %v1010
      %1050 = vmatpush1.msra.mxu0 %v1009
      %1051 = vmatprep.subr.mxu0 %v1014
      %1052 = vmatpush1.msra.mxu0 %v1013
      %1053 = vmatprep.subr.mxu0 %v1018
      %1054 = vmatpush1.msra.mxu0 %v1017
      %1055 = vmatprep.subr.mxu0 %v1022
      %1056 = vmatpush1.msra.mxu0 %v1021
      %1057 = vmatprep.subr.mxu0 0.0
      %1058 = vmatpush1.msra.mxu0 0.0
      %1059 = vmatprep.subr.mxu0 0.0
      %1060 = vmatpush1.msra.mxu0 0.0
      %1061 = vmatprep.subr.mxu0 0.0
      %1062 = vmatpush1.msra.mxu0 0.0
      %1063 = vmatprep.subr.mxu0 0.0
      %1064 = vmatpush1.msra.mxu0 0.0
      %1065 = vmatprep.subr.mxu0 0.0
      %1066 = vmatpush1.msra.mxu0 0.0
      %1067 = vmatprep.subr.mxu0 0.0
      %1068 = vmatpush1.msra.mxu0 0.0
      %1069 = vmatprep.subr.mxu0 0.0
      %1070 = vmatpush1.msra.mxu0 0.0
      %1071 = vmatprep.subr.mxu0 0.0
      %1072 = vmatpush1.msra.mxu0 0.0
      %1073 = vmatprep.subr.mxu0 0.0
      %1074 = vmatpush1.msra.mxu0 0.0
      %1075 = vmatprep.subr.mxu0 0.0
      %1076 = vmatpush1.msra.mxu0 0.0
      %1077 = vmatprep.subr.mxu0 0.0
      %1078 = vmatpush1.msra.mxu0 0.0
      %1079 = vmatprep.subr.mxu0 0.0
      %1080 = vmatpush1.msra.mxu0 0.0
      %1081 = vmatprep.subr.mxu0 0.0
      %1082 = vmatpush1.msra.mxu0 0.0
      %1083 = vmatprep.subr.mxu0 0.0
      %1084 = vmatpush1.msra.mxu0 0.0
      %1085 = vmatprep.subr.mxu0 0.0
      %1086 = vmatpush1.msra.mxu0 0.0
      %1087 = vmatprep.subr.mxu0 0.0
      %1088 = vmatpush1.msra.mxu0 0.0
      %1089 = vmatprep.mubr.f32.mxu0 0.0
      %1090 = vmatmul.mubr.f32.gmra.mrb[0].mxu0 %v960
      %v1091 = vpop.f32.mrb[0].mxu0
      %v1092 = vadd.f32 0.0, %v1091
      %v1093 = vpop.f32.mrb[0].mxu0
      %v1094 = vadd.f32 0.0, %v1093
      %1095 = vdwg.mxu0
      %1096 = vmatprep.subr.mxu0 %v964
      %1097 = vmatpush1.msra.mxu0 %v963
      %1098 = vmatprep.subr.mxu0 %v968
      %1099 = vmatpush1.msra.mxu0 %v967
      %1100 = vmatprep.subr.mxu0 %v972
      %1101 = vmatpush1.msra.mxu0 %v971
      %1102 = vmatprep.subr.mxu0 %v976
      %1103 = vmatpush1.msra.mxu0 %v975
      %1104 = vmatprep.subr.mxu0 %v980
      %1105 = vmatpush1.msra.mxu0 %v979
      %1106 = vmatprep.subr.mxu0 %v984
      %1107 = vmatpush1.msra.mxu0 %v983
      %1108 = vmatprep.subr.mxu0 %v988
      %1109 = vmatpush1.msra.mxu0 %v987
      %1110 = vmatprep.subr.mxu0 %v992
      %1111 = vmatpush1.msra.mxu0 %v991
      %1112 = vmatprep.subr.mxu0 %v996
      %1113 = vmatpush1.msra.mxu0 %v995
      %1114 = vmatprep.subr.mxu0 %v1000
      %1115 = vmatpush1.msra.mxu0 %v999
      %1116 = vmatprep.subr.mxu0 %v1004
      %1117 = vmatpush1.msra.mxu0 %v1003
      %1118 = vmatprep.subr.mxu0 %v1008
      %1119 = vmatpush1.msra.mxu0 %v1007
      %1120 = vmatprep.subr.mxu0 %v1012
      %1121 = vmatpush1.msra.mxu0 %v1011
      %1122 = vmatprep.subr.mxu0 %v1016
      %1123 = vmatpush1.msra.mxu0 %v1015
      %1124 = vmatprep.subr.mxu0 %v1020
      %1125 = vmatpush1.msra.mxu0 %v1019
      %1126 = vmatprep.subr.mxu0 %v1024
      %1127 = vmatpush1.msra.mxu0 %v1023
      %1128 = vmatprep.subr.mxu0 0.0
      %1129 = vmatpush1.msra.mxu0 0.0
      %1130 = vmatprep.subr.mxu0 0.0
      %1131 = vmatpush1.msra.mxu0 0.0
      %1132 = vmatprep.subr.mxu0 0.0
      %1133 = vmatpush1.msra.mxu0 0.0
      %1134 = vmatprep.subr.mxu0 0.0
      %1135 = vmatpush1.msra.mxu0 0.0
      %1136 = vmatprep.subr.mxu0 0.0
      %1137 = vmatpush1.msra.mxu0 0.0
      %1138 = vmatprep.subr.mxu0 0.0
      %1139 = vmatpush1.msra.mxu0 0.0
      %1140 = vmatprep.subr.mxu0 0.0
      %1141 = vmatpush1.msra.mxu0 0.0
      %1142 = vmatprep.subr.mxu0 0.0
      %1143 = vmatpush1.msra.mxu0 0.0
      %1144 = vmatprep.subr.mxu0 0.0
      %1145 = vmatpush1.msra.mxu0 0.0
      %1146 = vmatprep.subr.mxu0 0.0
      %1147 = vmatpush1.msra.mxu0 0.0
      %1148 = vmatprep.subr.mxu0 0.0
      %1149 = vmatpush1.msra.mxu0 0.0
      %1150 = vmatprep.subr.mxu0 0.0
      %1151 = vmatpush1.msra.mxu0 0.0
      %1152 = vmatprep.subr.mxu0 0.0
      %1153 = vmatpush1.msra.mxu0 0.0
      %1154 = vmatprep.subr.mxu0 0.0
      %1155 = vmatpush1.msra.mxu0 0.0
      %1156 = vmatprep.subr.mxu0 0.0
      %1157 = vmatpush1.msra.mxu0 0.0
      %1158 = vmatprep.subr.mxu0 0.0
      %1159 = vmatpush1.msra.mxu0 0.0
      %1160 = vmatprep.mubr.f32.mxu0 0.0
      %1161 = vmatmul.mubr.f32.gmra.mrb[0].mxu0 %v960
      %v1162 = vpop.f32.mrb[0].mxu0
      %v1163 = vadd.f32 0.0, %v1162
      %v1164 = vpop.f32.mrb[0].mxu0
      %v1165 = vadd.f32 0.0, %v1164
      %1166 = vdwg.mxu0
      %s1167 = scalar_lea.vmem %s227, 32
      %v1168 = vld [vmem:[%s1167] sm:$0xff]
      %v1169 = vld [vmem:[%s1167 + $0x8] sm:$0xff]
      %v1170 = vld [vmem:[%s1167 + $0x10] sm:$0xff]
      %v1171 = vld [vmem:[%s1167 + $0x18] sm:$0xff]
      %v1172 = vadd.f32 %v1168, %v1092
      %v1173 = vadd.f32 %v1169, %v1094
      %v1174 = vadd.f32 %v1170, %v1163
      %v1175 = vadd.f32 %v1171, %v1165
      %v1176 = vxor.u32 %v1172, 2147483648
      %v1177 = vxor.u32 %v1173, 2147483648
      %v1178 = vxor.u32 %v1174, 2147483648
      %v1179 = vmul.f32 %v1176, 1.442695
      %v1180 = vpow.pop %v1179
      %v1181 = vmul.f32 %v1177, 1.442695
      %v1182 = vpow.pop %v1181
      %v1183 = vmul.f32 %v1178, 1.442695
      %v1184 = vpow.pop %v1183
      %v1185 = vadd.f32 %v1180, 1.0
      %v1186 = vadd.f32 %v1182, 1.0
      %v1187 = vadd.f32 %v1184, 1.0
      %v1188 = vrcp.pop %v1185
      %v1189 = vmul.f32 1.0, %v1188
      %v1190 = vrcp.pop %v1186
      %v1191 = vmul.f32 1.0, %v1190
      %v1192 = vrcp.pop %v1187
      %v1193 = vmul.f32 1.0, %v1192
      %v1194 = vtanh.pop %v1175
      %v1195 = vld [vmem:[#allocation3] sm:$0xff]
      %v1196 = vmul.f32 %v1191, %v1195
      %v1197 = vmul.f32 %v1189, %v1194
      %v1198 = vadd.f32 %v1196, %v1197
      %v1199 = vtanh.pop %v1198
      %v1200 = vmul.f32 %v1193, %v1199
      %1201 = vst [vmem:[#allocation2] sm:$0xff] %v1200
      %1202 = vst [vmem:[#allocation3] sm:$0xff] %v1198
      %v1203 = vld [vmem:[%s511] sm:$0xff]
      %v1204 = vld [vmem:[%s513] sm:$0xff]
      %v1205 = vld [vmem:[%s513 + $0x8] sm:$0xff]
      %v1206 = vld [vmem:[%s513 + $0x10] sm:$0xff]
      %v1207 = vld [vmem:[%s513 + $0x18] sm:$0xff]
      %v1208 = vld [vmem:[%s513 + $0x20] sm:$0xff]
      %v1209 = vld [vmem:[%s513 + $0x28] sm:$0xff]
      %v1210 = vld [vmem:[%s513 + $0x30] sm:$0xff]
      %v1211 = vld [vmem:[%s513 + $0x38] sm:$0xff]
      %v1212 = vld [vmem:[%s513 + $0x40] sm:$0xff]
      %v1213 = vld [vmem:[%s513 + $0x48] sm:$0xff]
      %v1214 = vld [vmem:[%s513 + $0x50] sm:$0xff]
      %v1215 = vld [vmem:[%s513 + $0x58] sm:$0xff]
      %v1216 = vld [vmem:[%s513 + $0x60] sm:$0xff]
      %v1217 = vld [vmem:[%s513 + $0x68] sm:$0xff]
      %v1218 = vld [vmem:[%s513 + $0x70] sm:$0xff]
      %v1219 = vld [vmem:[%s513 + $0x78] sm:$0xff]
      %v1220 = vld [vmem:[%s513 + $0x80] sm:$0xff]
      %v1221 = vld [vmem:[%s513 + $0x88] sm:$0xff]
      %v1222 = vld [vmem:[%s513 + $0x90] sm:$0xff]
      %v1223 = vld [vmem:[%s513 + $0x98] sm:$0xff]
      %v1224 = vld [vmem:[%s513 + $0xa0] sm:$0xff]
      %v1225 = vld [vmem:[%s513 + $0xa8] sm:$0xff]
      %v1226 = vld [vmem:[%s513 + $0xb0] sm:$0xff]
      %v1227 = vld [vmem:[%s513 + $0xb8] sm:$0xff]
      %v1228 = vld [vmem:[%s513 + $0xc0] sm:$0xff]
      %v1229 = vld [vmem:[%s513 + $0xc8] sm:$0xff]
      %v1230 = vld [vmem:[%s513 + $0xd0] sm:$0xff]
      %v1231 = vld [vmem:[%s513 + $0xd8] sm:$0xff]
      %v1232 = vld [vmem:[%s513 + $0xe0] sm:$0xff]
      %v1233 = vld [vmem:[%s513 + $0xe8] sm:$0xff]
      %v1234 = vld [vmem:[%s513 + $0xf0] sm:$0xff]
      %v1235 = vld [vmem:[%s513 + $0xf8] sm:$0xff]
      %v1236 = vld [vmem:[%s513 + $0x100] sm:$0xff]
      %v1237 = vld [vmem:[%s513 + $0x108] sm:$0xff]
      %v1238 = vld [vmem:[%s513 + $0x110] sm:$0xff]
      %v1239 = vld [vmem:[%s513 + $0x118] sm:$0xff]
      %v1240 = vld [vmem:[%s513 + $0x120] sm:$0xff]
      %v1241 = vld [vmem:[%s513 + $0x128] sm:$0xff]
      %v1242 = vld [vmem:[%s513 + $0x130] sm:$0xff]
      %v1243 = vld [vmem:[%s513 + $0x138] sm:$0xff]
      %v1244 = vld [vmem:[%s513 + $0x140] sm:$0xff]
      %v1245 = vld [vmem:[%s513 + $0x148] sm:$0xff]
      %v1246 = vld [vmem:[%s513 + $0x150] sm:$0xff]
      %v1247 = vld [vmem:[%s513 + $0x158] sm:$0xff]
      %v1248 = vld [vmem:[%s513 + $0x160] sm:$0xff]
      %v1249 = vld [vmem:[%s513 + $0x168] sm:$0xff]
      %v1250 = vld [vmem:[%s513 + $0x170] sm:$0xff]
      %v1251 = vld [vmem:[%s513 + $0x178] sm:$0xff]
      %v1252 = vld [vmem:[%s513 + $0x180] sm:$0xff]
      %v1253 = vld [vmem:[%s513 + $0x188] sm:$0xff]
      %v1254 = vld [vmem:[%s513 + $0x190] sm:$0xff]
      %v1255 = vld [vmem:[%s513 + $0x198] sm:$0xff]
      %v1256 = vld [vmem:[%s513 + $0x1a0] sm:$0xff]
      %v1257 = vld [vmem:[%s513 + $0x1a8] sm:$0xff]
      %v1258 = vld [vmem:[%s513 + $0x1b0] sm:$0xff]
      %v1259 = vld [vmem:[%s513 + $0x1b8] sm:$0xff]
      %v1260 = vld [vmem:[%s513 + $0x1c0] sm:$0xff]
      %v1261 = vld [vmem:[%s513 + $0x1c8] sm:$0xff]
      %v1262 = vld [vmem:[%s513 + $0x1d0] sm:$0xff]
      %v1263 = vld [vmem:[%s513 + $0x1d8] sm:$0xff]
      %v1264 = vld [vmem:[%s513 + $0x1e0] sm:$0xff]
      %v1265 = vld [vmem:[%s513 + $0x1e8] sm:$0xff]
      %v1266 = vld [vmem:[%s513 + $0x1f0] sm:$0xff]
      %v1267 = vld [vmem:[%s513 + $0x1f8] sm:$0xff]
      %1268 = vmatprep.subr.mxu0 %v1205
      %1269 = vmatpush1.msra.mxu0 %v1204
      %1270 = vmatprep.subr.mxu0 %v1209
      %1271 = vmatpush1.msra.mxu0 %v1208
      %1272 = vmatprep.subr.mxu0 %v1213
      %1273 = vmatpush1.msra.mxu0 %v1212
      %1274 = vmatprep.subr.mxu0 %v1217
      %1275 = vmatpush1.msra.mxu0 %v1216
      %1276 = vmatprep.subr.mxu0 %v1221
      %1277 = vmatpush1.msra.mxu0 %v1220
      %1278 = vmatprep.subr.mxu0 %v1225
      %1279 = vmatpush1.msra.mxu0 %v1224
      %1280 = vmatprep.subr.mxu0 %v1229
      %1281 = vmatpush1.msra.mxu0 %v1228
      %1282 = vmatprep.subr.mxu0 %v1233
      %1283 = vmatpush1.msra.mxu0 %v1232
      %1284 = vmatprep.subr.mxu0 %v1237
      %1285 = vmatpush1.msra.mxu0 %v1236
      %1286 = vmatprep.subr.mxu0 %v1241
      %1287 = vmatpush1.msra.mxu0 %v1240
      %1288 = vmatprep.subr.mxu0 %v1245
      %1289 = vmatpush1.msra.mxu0 %v1244
      %1290 = vmatprep.subr.mxu0 %v1249
      %1291 = vmatpush1.msra.mxu0 %v1248
      %1292 = vmatprep.subr.mxu0 %v1253
      %1293 = vmatpush1.msra.mxu0 %v1252
      %1294 = vmatprep.subr.mxu0 %v1257
      %1295 = vmatpush1.msra.mxu0 %v1256
      %1296 = vmatprep.subr.mxu0 %v1261
      %1297 = vmatpush1.msra.mxu0 %v1260
      %1298 = vmatprep.subr.mxu0 %v1265
      %1299 = vmatpush1.msra.mxu0 %v1264
      %1300 = vmatprep.subr.mxu0 0.0
      %1301 = vmatpush1.msra.mxu0 0.0
      %1302 = vmatprep.subr.mxu0 0.0
      %1303 = vmatpush1.msra.mxu0 0.0
      %1304 = vmatprep.subr.mxu0 0.0
      %1305 = vmatpush1.msra.mxu0 0.0
      %1306 = vmatprep.subr.mxu0 0.0
      %1307 = vmatpush1.msra.mxu0 0.0
      %1308 = vmatprep.subr.mxu0 0.0
      %1309 = vmatpush1.msra.mxu0 0.0
      %1310 = vmatprep.subr.mxu0 0.0
      %1311 = vmatpush1.msra.mxu0 0.0
      %1312 = vmatprep.subr.mxu0 0.0
      %1313 = vmatpush1.msra.mxu0 0.0
      %1314 = vmatprep.subr.mxu0 0.0
      %1315 = vmatpush1.msra.mxu0 0.0
      %1316 = vmatprep.subr.mxu0 0.0
      %1317 = vmatpush1.msra.mxu0 0.0
      %1318 = vmatprep.subr.mxu0 0.0
      %1319 = vmatpush1.msra.mxu0 0.0
      %1320 = vmatprep.subr.mxu0 0.0
      %1321 = vmatpush1.msra.mxu0 0.0
      %1322 = vmatprep.subr.mxu0 0.0
      %1323 = vmatpush1.msra.mxu0 0.0
      %1324 = vmatprep.subr.mxu0 0.0
      %1325 = vmatpush1.msra.mxu0 0.0
      %1326 = vmatprep.subr.mxu0 0.0
      %1327 = vmatpush1.msra.mxu0 0.0
      %1328 = vmatprep.subr.mxu0 0.0
      %1329 = vmatpush1.msra.mxu0 0.0
      %1330 = vmatprep.subr.mxu0 0.0
      %1331 = vmatpush1.msra.mxu0 0.0
      %1332 = vmatprep.mubr.f32.mxu0 0.0
      %1333 = vmatmul.mubr.f32.gmra.mrb[0].mxu0 %v1203
      %v1334 = vpop.f32.mrb[0].mxu0
      %v1335 = vadd.f32 0.0, %v1334
      %v1336 = vpop.f32.mrb[0].mxu0
      %v1337 = vadd.f32 0.0, %v1336
      %1338 = vdwg.mxu0
      %1339 = vmatprep.subr.mxu0 %v1207
      %1340 = vmatpush1.msra.mxu0 %v1206
      %1341 = vmatprep.subr.mxu0 %v1211
      %1342 = vmatpush1.msra.mxu0 %v1210
      %1343 = vmatprep.subr.mxu0 %v1215
      %1344 = vmatpush1.msra.mxu0 %v1214
      %1345 = vmatprep.subr.mxu0 %v1219
      %1346 = vmatpush1.msra.mxu0 %v1218
      %1347 = vmatprep.subr.mxu0 %v1223
      %1348 = vmatpush1.msra.mxu0 %v1222
      %1349 = vmatprep.subr.mxu0 %v1227
      %1350 = vmatpush1.msra.mxu0 %v1226
      %1351 = vmatprep.subr.mxu0 %v1231
      %1352 = vmatpush1.msra.mxu0 %v1230
      %1353 = vmatprep.subr.mxu0 %v1235
      %1354 = vmatpush1.msra.mxu0 %v1234
      %1355 = vmatprep.subr.mxu0 %v1239
      %1356 = vmatpush1.msra.mxu0 %v1238
      %1357 = vmatprep.subr.mxu0 %v1243
      %1358 = vmatpush1.msra.mxu0 %v1242
      %1359 = vmatprep.subr.mxu0 %v1247
      %1360 = vmatpush1.msra.mxu0 %v1246
      %1361 = vmatprep.subr.mxu0 %v1251
      %1362 = vmatpush1.msra.mxu0 %v1250
      %1363 = vmatprep.subr.mxu0 %v1255
      %1364 = vmatpush1.msra.mxu0 %v1254
      %1365 = vmatprep.subr.mxu0 %v1259
      %1366 = vmatpush1.msra.mxu0 %v1258
      %1367 = vmatprep.subr.mxu0 %v1263
      %1368 = vmatpush1.msra.mxu0 %v1262
      %1369 = vmatprep.subr.mxu0 %v1267
      %1370 = vmatpush1.msra.mxu0 %v1266
      %1371 = vmatprep.subr.mxu0 0.0
      %1372 = vmatpush1.msra.mxu0 0.0
      %1373 = vmatprep.subr.mxu0 0.0
      %1374 = vmatpush1.msra.mxu0 0.0
      %1375 = vmatprep.subr.mxu0 0.0
      %1376 = vmatpush1.msra.mxu0 0.0
      %1377 = vmatprep.subr.mxu0 0.0
      %1378 = vmatpush1.msra.mxu0 0.0
      %1379 = vmatprep.subr.mxu0 0.0
      %1380 = vmatpush1.msra.mxu0 0.0
      %1381 = vmatprep.subr.mxu0 0.0
      %1382 = vmatpush1.msra.mxu0 0.0
      %1383 = vmatprep.subr.mxu0 0.0
      %1384 = vmatpush1.msra.mxu0 0.0
      %1385 = vmatprep.subr.mxu0 0.0
      %1386 = vmatpush1.msra.mxu0 0.0
      %1387 = vmatprep.subr.mxu0 0.0
      %1388 = vmatpush1.msra.mxu0 0.0
      %1389 = vmatprep.subr.mxu0 0.0
      %1390 = vmatpush1.msra.mxu0 0.0
      %1391 = vmatprep.subr.mxu0 0.0
      %1392 = vmatpush1.msra.mxu0 0.0
      %1393 = vmatprep.subr.mxu0 0.0
      %1394 = vmatpush1.msra.mxu0 0.0
      %1395 = vmatprep.subr.mxu0 0.0
      %1396 = vmatpush1.msra.mxu0 0.0
      %1397 = vmatprep.subr.mxu0 0.0
      %1398 = vmatpush1.msra.mxu0 0.0
      %1399 = vmatprep.subr.mxu0 0.0
      %1400 = vmatpush1.msra.mxu0 0.0
      %1401 = vmatprep.subr.mxu0 0.0
      %1402 = vmatpush1.msra.mxu0 0.0
      %1403 = vmatprep.mubr.f32.mxu0 0.0
      %1404 = vmatmul.mubr.f32.gmra.mrb[0].mxu0 %v1203
      %v1405 = vpop.f32.mrb[0].mxu0
      %v1406 = vadd.f32 0.0, %v1405
      %v1407 = vpop.f32.mrb[0].mxu0
      %v1408 = vadd.f32 0.0, %v1407
      %1409 = vdwg.mxu0
      %v1410 = vld [vmem:[%s720] sm:$0xff]
      %v1411 = vld [vmem:[%s720 + $0x8] sm:$0xff]
      %v1412 = vld [vmem:[%s720 + $0x10] sm:$0xff]
      %v1413 = vld [vmem:[%s720 + $0x18] sm:$0xff]
      %v1414 = vld [vmem:[%s720 + $0x20] sm:$0xff]
      %v1415 = vld [vmem:[%s720 + $0x28] sm:$0xff]
      %v1416 = vld [vmem:[%s720 + $0x30] sm:$0xff]
      %v1417 = vld [vmem:[%s720 + $0x38] sm:$0xff]
      %v1418 = vld [vmem:[%s720 + $0x40] sm:$0xff]
      %v1419 = vld [vmem:[%s720 + $0x48] sm:$0xff]
      %v1420 = vld [vmem:[%s720 + $0x50] sm:$0xff]
      %v1421 = vld [vmem:[%s720 + $0x58] sm:$0xff]
      %v1422 = vld [vmem:[%s720 + $0x60] sm:$0xff]
      %v1423 = vld [vmem:[%s720 + $0x68] sm:$0xff]
      %v1424 = vld [vmem:[%s720 + $0x70] sm:$0xff]
      %v1425 = vld [vmem:[%s720 + $0x78] sm:$0xff]
      %v1426 = vld [vmem:[%s720 + $0x80] sm:$0xff]
      %v1427 = vld [vmem:[%s720 + $0x88] sm:$0xff]
      %v1428 = vld [vmem:[%s720 + $0x90] sm:$0xff]
      %v1429 = vld [vmem:[%s720 + $0x98] sm:$0xff]
      %v1430 = vld [vmem:[%s720 + $0xa0] sm:$0xff]
      %v1431 = vld [vmem:[%s720 + $0xa8] sm:$0xff]
      %v1432 = vld [vmem:[%s720 + $0xb0] sm:$0xff]
      %v1433 = vld [vmem:[%s720 + $0xb8] sm:$0xff]
      %v1434 = vld [vmem:[%s720 + $0xc0] sm:$0xff]
      %v1435 = vld [vmem:[%s720 + $0xc8] sm:$0xff]
      %v1436 = vld [vmem:[%s720 + $0xd0] sm:$0xff]
      %v1437 = vld [vmem:[%s720 + $0xd8] sm:$0xff]
      %v1438 = vld [vmem:[%s720 + $0xe0] sm:$0xff]
      %v1439 = vld [vmem:[%s720 + $0xe8] sm:$0xff]
      %v1440 = vld [vmem:[%s720 + $0xf0] sm:$0xff]
      %v1441 = vld [vmem:[%s720 + $0xf8] sm:$0xff]
      %v1442 = vld [vmem:[%s720 + $0x100] sm:$0xff]
      %v1443 = vld [vmem:[%s720 + $0x108] sm:$0xff]
      %v1444 = vld [vmem:[%s720 + $0x110] sm:$0xff]
      %v1445 = vld [vmem:[%s720 + $0x118] sm:$0xff]
      %v1446 = vld [vmem:[%s720 + $0x120] sm:$0xff]
      %v1447 = vld [vmem:[%s720 + $0x128] sm:$0xff]
      %v1448 = vld [vmem:[%s720 + $0x130] sm:$0xff]
      %v1449 = vld [vmem:[%s720 + $0x138] sm:$0xff]
      %v1450 = vld [vmem:[%s720 + $0x140] sm:$0xff]
      %v1451 = vld [vmem:[%s720 + $0x148] sm:$0xff]
      %v1452 = vld [vmem:[%s720 + $0x150] sm:$0xff]
      %v1453 = vld [vmem:[%s720 + $0x158] sm:$0xff]
      %v1454 = vld [vmem:[%s720 + $0x160] sm:$0xff]
      %v1455 = vld [vmem:[%s720 + $0x168] sm:$0xff]
      %v1456 = vld [vmem:[%s720 + $0x170] sm:$0xff]
      %v1457 = vld [vmem:[%s720 + $0x178] sm:$0xff]
      %v1458 = vld [vmem:[%s720 + $0x180] sm:$0xff]
      %v1459 = vld [vmem:[%s720 + $0x188] sm:$0xff]
      %v1460 = vld [vmem:[%s720 + $0x190] sm:$0xff]
      %v1461 = vld [vmem:[%s720 + $0x198] sm:$0xff]
      %v1462 = vld [vmem:[%s720 + $0x1a0] sm:$0xff]
      %v1463 = vld [vmem:[%s720 + $0x1a8] sm:$0xff]
      %v1464 = vld [vmem:[%s720 + $0x1b0] sm:$0xff]
      %v1465 = vld [vmem:[%s720 + $0x1b8] sm:$0xff]
      %v1466 = vld [vmem:[%s720 + $0x1c0] sm:$0xff]
      %v1467 = vld [vmem:[%s720 + $0x1c8] sm:$0xff]
      %v1468 = vld [vmem:[%s720 + $0x1d0] sm:$0xff]
      %v1469 = vld [vmem:[%s720 + $0x1d8] sm:$0xff]
      %v1470 = vld [vmem:[%s720 + $0x1e0] sm:$0xff]
      %v1471 = vld [vmem:[%s720 + $0x1e8] sm:$0xff]
      %v1472 = vld [vmem:[%s720 + $0x1f0] sm:$0xff]
      %v1473 = vld [vmem:[%s720 + $0x1f8] sm:$0xff]
      %1474 = vmatprep.subr.mxu0 %v1411
      %1475 = vmatpush1.msra.mxu0 %v1410
      %1476 = vmatprep.subr.mxu0 %v1415
      %1477 = vmatpush1.msra.mxu0 %v1414
      %1478 = vmatprep.subr.mxu0 %v1419
      %1479 = vmatpush1.msra.mxu0 %v1418
      %1480 = vmatprep.subr.mxu0 %v1423
      %1481 = vmatpush1.msra.mxu0 %v1422
      %1482 = vmatprep.subr.mxu0 %v1427
      %1483 = vmatpush1.msra.mxu0 %v1426
      %1484 = vmatprep.subr.mxu0 %v1431
      %1485 = vmatpush1.msra.mxu0 %v1430
      %1486 = vmatprep.subr.mxu0 %v1435
      %1487 = vmatpush1.msra.mxu0 %v1434
      %1488 = vmatprep.subr.mxu0 %v1439
      %1489 = vmatpush1.msra.mxu0 %v1438
      %1490 = vmatprep.subr.mxu0 %v1443
      %1491 = vmatpush1.msra.mxu0 %v1442
      %1492 = vmatprep.subr.mxu0 %v1447
      %1493 = vmatpush1.msra.mxu0 %v1446
      %1494 = vmatprep.subr.mxu0 %v1451
      %1495 = vmatpush1.msra.mxu0 %v1450
      %1496 = vmatprep.subr.mxu0 %v1455
      %1497 = vmatpush1.msra.mxu0 %v1454
      %1498 = vmatprep.subr.mxu0 %v1459
      %1499 = vmatpush1.msra.mxu0 %v1458
      %1500 = vmatprep.subr.mxu0 %v1463
      %1501 = vmatpush1.msra.mxu0 %v1462
      %1502 = vmatprep.subr.mxu0 %v1467
      %1503 = vmatpush1.msra.mxu0 %v1466
      %1504 = vmatprep.subr.mxu0 %v1471
      %1505 = vmatpush1.msra.mxu0 %v1470
      %1506 = vmatprep.subr.mxu0 0.0
      %1507 = vmatpush1.msra.mxu0 0.0
      %1508 = vmatprep.subr.mxu0 0.0
      %1509 = vmatpush1.msra.mxu0 0.0
      %1510 = vmatprep.subr.mxu0 0.0
      %1511 = vmatpush1.msra.mxu0 0.0
      %1512 = vmatprep.subr.mxu0 0.0
      %1513 = vmatpush1.msra.mxu0 0.0
      %1514 = vmatprep.subr.mxu0 0.0
      %1515 = vmatpush1.msra.mxu0 0.0
      %1516 = vmatprep.subr.mxu0 0.0
      %1517 = vmatpush1.msra.mxu0 0.0
      %1518 = vmatprep.subr.mxu0 0.0
      %1519 = vmatpush1.msra.mxu0 0.0
      %1520 = vmatprep.subr.mxu0 0.0
      %1521 = vmatpush1.msra.mxu0 0.0
      %1522 = vmatprep.subr.mxu0 0.0
      %1523 = vmatpush1.msra.mxu0 0.0
      %1524 = vmatprep.subr.mxu0 0.0
      %1525 = vmatpush1.msra.mxu0 0.0
      %1526 = vmatprep.subr.mxu0 0.0
      %1527 = vmatpush1.msra.mxu0 0.0
      %1528 = vmatprep.subr.mxu0 0.0
      %1529 = vmatpush1.msra.mxu0 0.0
      %1530 = vmatprep.subr.mxu0 0.0
      %1531 = vmatpush1.msra.mxu0 0.0
      %1532 = vmatprep.subr.mxu0 0.0
      %1533 = vmatpush1.msra.mxu0 0.0
      %1534 = vmatprep.subr.mxu0 0.0
      %1535 = vmatpush1.msra.mxu0 0.0
      %1536 = vmatprep.subr.mxu0 0.0
      %1537 = vmatpush1.msra.mxu0 0.0
      %1538 = vmatprep.mubr.f32.mxu0 0.0
      %1539 = vmatmul.mubr.f32.gmra.mrb[0].mxu0 %v1200
      %v1540 = vpop.f32.mrb[0].mxu0
      %v1541 = vadd.f32 %v1335, %v1540
      %v1542 = vpop.f32.mrb[0].mxu0
      %v1543 = vadd.f32 %v1337, %v1542
      %1544 = vdwg.mxu0
      %1545 = vmatprep.subr.mxu0 %v1413
      %1546 = vmatpush1.msra.mxu0 %v1412
      %1547 = vmatprep.subr.mxu0 %v1417
      %1548 = vmatpush1.msra.mxu0 %v1416
      %1549 = vmatprep.subr.mxu0 %v1421
      %1550 = vmatpush1.msra.mxu0 %v1420
      %1551 = vmatprep.subr.mxu0 %v1425
      %1552 = vmatpush1.msra.mxu0 %v1424
      %1553 = vmatprep.subr.mxu0 %v1429
      %1554 = vmatpush1.msra.mxu0 %v1428
      %1555 = vmatprep.subr.mxu0 %v1433
      %1556 = vmatpush1.msra.mxu0 %v1432
      %1557 = vmatprep.subr.mxu0 %v1437
      %1558 = vmatpush1.msra.mxu0 %v1436
      %1559 = vmatprep.subr.mxu0 %v1441
      %1560 = vmatpush1.msra.mxu0 %v1440
      %1561 = vmatprep.subr.mxu0 %v1445
      %1562 = vmatpush1.msra.mxu0 %v1444
      %1563 = vmatprep.subr.mxu0 %v1449
      %1564 = vmatpush1.msra.mxu0 %v1448
      %1565 = vmatprep.subr.mxu0 %v1453
      %1566 = vmatpush1.msra.mxu0 %v1452
      %1567 = vmatprep.subr.mxu0 %v1457
      %1568 = vmatpush1.msra.mxu0 %v1456
      %1569 = vmatprep.subr.mxu0 %v1461
      %1570 = vmatpush1.msra.mxu0 %v1460
      %1571 = vmatprep.subr.mxu0 %v1465
      %1572 = vmatpush1.msra.mxu0 %v1464
      %1573 = vmatprep.subr.mxu0 %v1469
      %1574 = vmatpush1.msra.mxu0 %v1468
      %1575 = vmatprep.subr.mxu0 %v1473
      %1576 = vmatpush1.msra.mxu0 %v1472
      %1577 = vmatprep.subr.mxu0 0.0
      %1578 = vmatpush1.msra.mxu0 0.0
      %1579 = vmatprep.subr.mxu0 0.0
      %1580 = vmatpush1.msra.mxu0 0.0
      %1581 = vmatprep.subr.mxu0 0.0
      %1582 = vmatpush1.msra.mxu0 0.0
      %1583 = vmatprep.subr.mxu0 0.0
      %1584 = vmatpush1.msra.mxu0 0.0
      %1585 = vmatprep.subr.mxu0 0.0
      %1586 = vmatpush1.msra.mxu0 0.0
      %1587 = vmatprep.subr.mxu0 0.0
      %1588 = vmatpush1.msra.mxu0 0.0
      %1589 = vmatprep.subr.mxu0 0.0
      %1590 = vmatpush1.msra.mxu0 0.0
      %1591 = vmatprep.subr.mxu0 0.0
      %1592 = vmatpush1.msra.mxu0 0.0
      %1593 = vmatprep.subr.mxu0 0.0
      %1594 = vmatpush1.msra.mxu0 0.0
      %1595 = vmatprep.subr.mxu0 0.0
      %1596 = vmatpush1.msra.mxu0 0.0
      %1597 = vmatprep.subr.mxu0 0.0
      %1598 = vmatpush1.msra.mxu0 0.0
      %1599 = vmatprep.subr.mxu0 0.0
      %1600 = vmatpush1.msra.mxu0 0.0
      %1601 = vmatprep.subr.mxu0 0.0
      %1602 = vmatpush1.msra.mxu0 0.0
      %1603 = vmatprep.subr.mxu0 0.0
      %1604 = vmatpush1.msra.mxu0 0.0
      %1605 = vmatprep.subr.mxu0 0.0
      %1606 = vmatpush1.msra.mxu0 0.0
      %1607 = vmatprep.subr.mxu0 0.0
      %1608 = vmatpush1.msra.mxu0 0.0
      %1609 = vmatprep.mubr.f32.mxu0 0.0
      %1610 = vmatmul.mubr.f32.gmra.mrb[0].mxu0 %v1200
      %v1611 = vpop.f32.mrb[0].mxu0
      %v1612 = vadd.f32 %v1406, %v1611
      %v1613 = vpop.f32.mrb[0].mxu0
      %v1614 = vadd.f32 %v1408, %v1613
      %1615 = vdwg.mxu0
      %v1616 = vadd.f32 %v1541, %v252
      %v1617 = vadd.f32 %v1543, %v256
      %v1618 = vadd.f32 %v1612, %v260
      %v1619 = vadd.f32 %v1614, %v264
      %v1620 = vxor.u32 %v1616, 2147483648
      %v1621 = vxor.u32 %v1617, 2147483648
      %v1622 = vxor.u32 %v1618, 2147483648
      %v1623 = vmul.f32 %v1620, 1.442695
      %v1624 = vpow.pop %v1623
      %v1625 = vmul.f32 %v1621, 1.442695
      %v1626 = vpow.pop %v1625
      %v1627 = vmul.f32 %v1622, 1.442695
      %v1628 = vpow.pop %v1627
      %v1629 = vadd.f32 %v1624, 1.0
      %v1630 = vadd.f32 %v1626, 1.0
      %v1631 = vadd.f32 %v1628, 1.0
      %v1632 = vrcp.pop %v1629
      %v1633 = vmul.f32 1.0, %v1632
      %v1634 = vrcp.pop %v1630
      %v1635 = vmul.f32 1.0, %v1634
      %v1636 = vrcp.pop %v1631
      %v1637 = vmul.f32 1.0, %v1636
      %v1638 = vtanh.pop %v1619
      %v1639 = vld [vmem:[%s950] sm:$0xff]
      %v1640 = vmul.f32 %v1635, %v1639
      %v1641 = vmul.f32 %v1633, %v1638
      %v1642 = vadd.f32 %v1640, %v1641
      %v1643 = vtanh.pop %v1642
      %v1644 = vmul.f32 %v1637, %v1643
      %1645 = vst [vmem:[%s511] sm:$0xff] %v1644
      %1646 = vst [vmem:[%s950] sm:$0xff] %v1642
      %s1647 = scalar_lea.vmem %s236, 8
      %1648 = vst [vmem:[%s1647] sm:$0xff] %v1644
      %v1649 = vld [vmem:[#allocation2] sm:$0xff]
      %v1650 = vld [vmem:[%s2] sm:$0xff]
      %v1651 = vld [vmem:[%s2 + $0x8] sm:$0xff]
      %v1652 = vld [vmem:[%s2 + $0x10] sm:$0xff]
      %v1653 = vld [vmem:[%s2 + $0x18] sm:$0xff]
      %v1654 = vld [vmem:[%s2 + $0x20] sm:$0xff]
      %v1655 = vld [vmem:[%s2 + $0x28] sm:$0xff]
      %v1656 = vld [vmem:[%s2 + $0x30] sm:$0xff]
      %v1657 = vld [vmem:[%s2 + $0x38] sm:$0xff]
      %v1658 = vld [vmem:[%s2 + $0x40] sm:$0xff]
      %v1659 = vld [vmem:[%s2 + $0x48] sm:$0xff]
      %v1660 = vld [vmem:[%s2 + $0x50] sm:$0xff]
      %v1661 = vld [vmem:[%s2 + $0x58] sm:$0xff]
      %v1662 = vld [vmem:[%s2 + $0x60] sm:$0xff]
      %v1663 = vld [vmem:[%s2 + $0x68] sm:$0xff]
      %v1664 = vld [vmem:[%s2 + $0x70] sm:$0xff]
      %v1665 = vld [vmem:[%s2 + $0x78] sm:$0xff]
      %v1666 = vld [vmem:[%s2 + $0x80] sm:$0xff]
      %v1667 = vld [vmem:[%s2 + $0x88] sm:$0xff]
      %v1668 = vld [vmem:[%s2 + $0x90] sm:$0xff]
      %v1669 = vld [vmem:[%s2 + $0x98] sm:$0xff]
      %v1670 = vld [vmem:[%s2 + $0xa0] sm:$0xff]
      %v1671 = vld [vmem:[%s2 + $0xa8] sm:$0xff]
      %v1672 = vld [vmem:[%s2 + $0xb0] sm:$0xff]
      %v1673 = vld [vmem:[%s2 + $0xb8] sm:$0xff]
      %v1674 = vld [vmem:[%s2 + $0xc0] sm:$0xff]
      %v1675 = vld [vmem:[%s2 + $0xc8] sm:$0xff]
      %v1676 = vld [vmem:[%s2 + $0xd0] sm:$0xff]
      %v1677 = vld [vmem:[%s2 + $0xd8] sm:$0xff]
      %v1678 = vld [vmem:[%s2 + $0xe0] sm:$0xff]
      %v1679 = vld [vmem:[%s2 + $0xe8] sm:$0xff]
      %v1680 = vld [vmem:[%s2 + $0xf0] sm:$0xff]
      %v1681 = vld [vmem:[%s2 + $0xf8] sm:$0xff]
      %v1682 = vld [vmem:[%s2 + $0x100] sm:$0xff]
      %v1683 = vld [vmem:[%s2 + $0x108] sm:$0xff]
      %v1684 = vld [vmem:[%s2 + $0x110] sm:$0xff]
      %v1685 = vld [vmem:[%s2 + $0x118] sm:$0xff]
      %v1686 = vld [vmem:[%s2 + $0x120] sm:$0xff]
      %v1687 = vld [vmem:[%s2 + $0x128] sm:$0xff]
      %v1688 = vld [vmem:[%s2 + $0x130] sm:$0xff]
      %v1689 = vld [vmem:[%s2 + $0x138] sm:$0xff]
      %v1690 = vld [vmem:[%s2 + $0x140] sm:$0xff]
      %v1691 = vld [vmem:[%s2 + $0x148] sm:$0xff]
      %v1692 = vld [vmem:[%s2 + $0x150] sm:$0xff]
      %v1693 = vld [vmem:[%s2 + $0x158] sm:$0xff]
      %v1694 = vld [vmem:[%s2 + $0x160] sm:$0xff]
      %v1695 = vld [vmem:[%s2 + $0x168] sm:$0xff]
      %v1696 = vld [vmem:[%s2 + $0x170] sm:$0xff]
      %v1697 = vld [vmem:[%s2 + $0x178] sm:$0xff]
      %v1698 = vld [vmem:[%s2 + $0x180] sm:$0xff]
      %v1699 = vld [vmem:[%s2 + $0x188] sm:$0xff]
      %v1700 = vld [vmem:[%s2 + $0x190] sm:$0xff]
      %v1701 = vld [vmem:[%s2 + $0x198] sm:$0xff]
      %v1702 = vld [vmem:[%s2 + $0x1a0] sm:$0xff]
      %v1703 = vld [vmem:[%s2 + $0x1a8] sm:$0xff]
      %v1704 = vld [vmem:[%s2 + $0x1b0] sm:$0xff]
      %v1705 = vld [vmem:[%s2 + $0x1b8] sm:$0xff]
      %v1706 = vld [vmem:[%s2 + $0x1c0] sm:$0xff]
      %v1707 = vld [vmem:[%s2 + $0x1c8] sm:$0xff]
      %v1708 = vld [vmem:[%s2 + $0x1d0] sm:$0xff]
      %v1709 = vld [vmem:[%s2 + $0x1d8] sm:$0xff]
      %v1710 = vld [vmem:[%s2 + $0x1e0] sm:$0xff]
      %v1711 = vld [vmem:[%s2 + $0x1e8] sm:$0xff]
      %v1712 = vld [vmem:[%s2 + $0x1f0] sm:$0xff]
      %v1713 = vld [vmem:[%s2 + $0x1f8] sm:$0xff]
      %1714 = vmatprep.subr.mxu0 %v1651
      %1715 = vmatpush1.msra.mxu0 %v1650
      %1716 = vmatprep.subr.mxu0 %v1655
      %1717 = vmatpush1.msra.mxu0 %v1654
      %1718 = vmatprep.subr.mxu0 %v1659
      %1719 = vmatpush1.msra.mxu0 %v1658
      %1720 = vmatprep.subr.mxu0 %v1663
      %1721 = vmatpush1.msra.mxu0 %v1662
      %1722 = vmatprep.subr.mxu0 %v1667
      %1723 = vmatpush1.msra.mxu0 %v1666
      %1724 = vmatprep.subr.mxu0 %v1671
      %1725 = vmatpush1.msra.mxu0 %v1670
      %1726 = vmatprep.subr.mxu0 %v1675
      %1727 = vmatpush1.msra.mxu0 %v1674
      %1728 = vmatprep.subr.mxu0 %v1679
      %1729 = vmatpush1.msra.mxu0 %v1678
      %1730 = vmatprep.subr.mxu0 %v1683
      %1731 = vmatpush1.msra.mxu0 %v1682
      %1732 = vmatprep.subr.mxu0 %v1687
      %1733 = vmatpush1.msra.mxu0 %v1686
      %1734 = vmatprep.subr.mxu0 %v1691
      %1735 = vmatpush1.msra.mxu0 %v1690
      %1736 = vmatprep.subr.mxu0 %v1695
      %1737 = vmatpush1.msra.mxu0 %v1694
      %1738 = vmatprep.subr.mxu0 %v1699
      %1739 = vmatpush1.msra.mxu0 %v1698
      %1740 = vmatprep.subr.mxu0 %v1703
      %1741 = vmatpush1.msra.mxu0 %v1702
      %1742 = vmatprep.subr.mxu0 %v1707
      %1743 = vmatpush1.msra.mxu0 %v1706
      %1744 = vmatprep.subr.mxu0 %v1711
      %1745 = vmatpush1.msra.mxu0 %v1710
      %1746 = vmatprep.subr.mxu0 0.0
      %1747 = vmatpush1.msra.mxu0 0.0
      %1748 = vmatprep.subr.mxu0 0.0
      %1749 = vmatpush1.msra.mxu0 0.0
      %1750 = vmatprep.subr.mxu0 0.0
      %1751 = vmatpush1.msra.mxu0 0.0
      %1752 = vmatprep.subr.mxu0 0.0
      %1753 = vmatpush1.msra.mxu0 0.0
      %1754 = vmatprep.subr.mxu0 0.0
      %1755 = vmatpush1.msra.mxu0 0.0
      %1756 = vmatprep.subr.mxu0 0.0
      %1757 = vmatpush1.msra.mxu0 0.0
      %1758 = vmatprep.subr.mxu0 0.0
      %1759 = vmatpush1.msra.mxu0 0.0
      %1760 = vmatprep.subr.mxu0 0.0
      %1761 = vmatpush1.msra.mxu0 0.0
      %1762 = vmatprep.subr.mxu0 0.0
      %1763 = vmatpush1.msra.mxu0 0.0
      %1764 = vmatprep.subr.mxu0 0.0
      %1765 = vmatpush1.msra.mxu0 0.0
      %1766 = vmatprep.subr.mxu0 0.0
      %1767 = vmatpush1.msra.mxu0 0.0
      %1768 = vmatprep.subr.mxu0 0.0
      %1769 = vmatpush1.msra.mxu0 0.0
      %1770 = vmatprep.subr.mxu0 0.0
      %1771 = vmatpush1.msra.mxu0 0.0
      %1772 = vmatprep.subr.mxu0 0.0
      %1773 = vmatpush1.msra.mxu0 0.0
      %1774 = vmatprep.subr.mxu0 0.0
      %1775 = vmatpush1.msra.mxu0 0.0
      %1776 = vmatprep.subr.mxu0 0.0
      %1777 = vmatpush1.msra.mxu0 0.0
      %1778 = vmatprep.mubr.f32.mxu0 0.0
      %1779 = vmatmul.mubr.f32.gmra.mrb[0].mxu0 %v1649
      %v1780 = vpop.f32.mrb[0].mxu0
      %v1781 = vadd.f32 0.0, %v1780
      %v1782 = vpop.f32.mrb[0].mxu0
      %v1783 = vadd.f32 0.0, %v1782
      %1784 = vdwg.mxu0
      %1785 = vmatprep.subr.mxu0 %v1653
      %1786 = vmatpush1.msra.mxu0 %v1652
      %1787 = vmatprep.subr.mxu0 %v1657
      %1788 = vmatpush1.msra.mxu0 %v1656
      %1789 = vmatprep.subr.mxu0 %v1661
      %1790 = vmatpush1.msra.mxu0 %v1660
      %1791 = vmatprep.subr.mxu0 %v1665
      %1792 = vmatpush1.msra.mxu0 %v1664
      %1793 = vmatprep.subr.mxu0 %v1669
      %1794 = vmatpush1.msra.mxu0 %v1668
      %1795 = vmatprep.subr.mxu0 %v1673
      %1796 = vmatpush1.msra.mxu0 %v1672
      %1797 = vmatprep.subr.mxu0 %v1677
      %1798 = vmatpush1.msra.mxu0 %v1676
      %1799 = vmatprep.subr.mxu0 %v1681
      %1800 = vmatpush1.msra.mxu0 %v1680
      %1801 = vmatprep.subr.mxu0 %v1685
      %1802 = vmatpush1.msra.mxu0 %v1684
      %1803 = vmatprep.subr.mxu0 %v1689
      %1804 = vmatpush1.msra.mxu0 %v1688
      %1805 = vmatprep.subr.mxu0 %v1693
      %1806 = vmatpush1.msra.mxu0 %v1692
      %1807 = vmatprep.subr.mxu0 %v1697
      %1808 = vmatpush1.msra.mxu0 %v1696
      %1809 = vmatprep.subr.mxu0 %v1701
      %1810 = vmatpush1.msra.mxu0 %v1700
      %1811 = vmatprep.subr.mxu0 %v1705
      %1812 = vmatpush1.msra.mxu0 %v1704
      %1813 = vmatprep.subr.mxu0 %v1709
      %1814 = vmatpush1.msra.mxu0 %v1708
      %1815 = vmatprep.subr.mxu0 %v1713
      %1816 = vmatpush1.msra.mxu0 %v1712
      %1817 = vmatprep.subr.mxu0 0.0
      %1818 = vmatpush1.msra.mxu0 0.0
      %1819 = vmatprep.subr.mxu0 0.0
      %1820 = vmatpush1.msra.mxu0 0.0
      %1821 = vmatprep.subr.mxu0 0.0
      %1822 = vmatpush1.msra.mxu0 0.0
      %1823 = vmatprep.subr.mxu0 0.0
      %1824 = vmatpush1.msra.mxu0 0.0
      %1825 = vmatprep.subr.mxu0 0.0
      %1826 = vmatpush1.msra.mxu0 0.0
      %1827 = vmatprep.subr.mxu0 0.0
      %1828 = vmatpush1.msra.mxu0 0.0
      %1829 = vmatprep.subr.mxu0 0.0
      %1830 = vmatpush1.msra.mxu0 0.0
      %1831 = vmatprep.subr.mxu0 0.0
      %1832 = vmatpush1.msra.mxu0 0.0
      %1833 = vmatprep.subr.mxu0 0.0
      %1834 = vmatpush1.msra.mxu0 0.0
      %1835 = vmatprep.subr.mxu0 0.0
      %1836 = vmatpush1.msra.mxu0 0.0
      %1837 = vmatprep.subr.mxu0 0.0
      %1838 = vmatpush1.msra.mxu0 0.0
      %1839 = vmatprep.subr.mxu0 0.0
      %1840 = vmatpush1.msra.mxu0 0.0
      %1841 = vmatprep.subr.mxu0 0.0
      %1842 = vmatpush1.msra.mxu0 0.0
      %1843 = vmatprep.subr.mxu0 0.0
      %1844 = vmatpush1.msra.mxu0 0.0
      %1845 = vmatprep.subr.mxu0 0.0
      %1846 = vmatpush1.msra.mxu0 0.0
      %1847 = vmatprep.subr.mxu0 0.0
      %1848 = vmatpush1.msra.mxu0 0.0
      %1849 = vmatprep.mubr.f32.mxu0 0.0
      %1850 = vmatmul.mubr.f32.gmra.mrb[0].mxu0 %v1649
      %v1851 = vpop.f32.mrb[0].mxu0
      %v1852 = vadd.f32 0.0, %v1851
      %v1853 = vpop.f32.mrb[0].mxu0
      %v1854 = vadd.f32 0.0, %v1853
      %1855 = vdwg.mxu0
      %s1856 = scalar_lea.vmem %s227, 64
      %v1857 = vld [vmem:[%s1856] sm:$0xff]
      %v1858 = vld [vmem:[%s1856 + $0x8] sm:$0xff]
      %v1859 = vld [vmem:[%s1856 + $0x10] sm:$0xff]
      %v1860 = vld [vmem:[%s1856 + $0x18] sm:$0xff]
      %v1861 = vadd.f32 %v1857, %v1781
      %v1862 = vadd.f32 %v1858, %v1783
      %v1863 = vadd.f32 %v1859, %v1852
      %v1864 = vadd.f32 %v1860, %v1854
      %v1865 = vxor.u32 %v1861, 2147483648
      %v1866 = vxor.u32 %v1862, 2147483648
      %v1867 = vxor.u32 %v1863, 2147483648
      %v1868 = vmul.f32 %v1865, 1.442695
      %v1869 = vpow.pop %v1868
      %v1870 = vmul.f32 %v1866, 1.442695
      %v1871 = vpow.pop %v1870
      %v1872 = vmul.f32 %v1867, 1.442695
      %v1873 = vpow.pop %v1872
      %v1874 = vadd.f32 %v1869, 1.0
      %v1875 = vadd.f32 %v1871, 1.0
      %v1876 = vadd.f32 %v1873, 1.0
      %v1877 = vrcp.pop %v1874
      %v1878 = vmul.f32 1.0, %v1877
      %v1879 = vrcp.pop %v1875
      %v1880 = vmul.f32 1.0, %v1879
      %v1881 = vrcp.pop %v1876
      %v1882 = vmul.f32 1.0, %v1881
      %v1883 = vtanh.pop %v1864
      %v1884 = vld [vmem:[#allocation3] sm:$0xff]
      %v1885 = vmul.f32 %v1880, %v1884
      %v1886 = vmul.f32 %v1878, %v1883
      %v1887 = vadd.f32 %v1885, %v1886
      %v1888 = vtanh.pop %v1887
      %v1889 = vmul.f32 %v1882, %v1888
      %1890 = vst [vmem:[#allocation2] sm:$0xff] %v1889
      %1891 = vst [vmem:[#allocation3] sm:$0xff] %v1887
      %v1892 = vld [vmem:[%s511] sm:$0xff]
      %v1893 = vld [vmem:[%s513] sm:$0xff]
      %v1894 = vld [vmem:[%s513 + $0x8] sm:$0xff]
      %v1895 = vld [vmem:[%s513 + $0x10] sm:$0xff]
      %v1896 = vld [vmem:[%s513 + $0x18] sm:$0xff]
      %v1897 = vld [vmem:[%s513 + $0x20] sm:$0xff]
      %v1898 = vld [vmem:[%s513 + $0x28] sm:$0xff]
      %v1899 = vld [vmem:[%s513 + $0x30] sm:$0xff]
      %v1900 = vld [vmem:[%s513 + $0x38] sm:$0xff]
      %v1901 = vld [vmem:[%s513 + $0x40] sm:$0xff]
      %v1902 = vld [vmem:[%s513 + $0x48] sm:$0xff]
      %v1903 = vld [vmem:[%s513 + $0x50] sm:$0xff]
      %v1904 = vld [vmem:[%s513 + $0x58] sm:$0xff]
      %v1905 = vld [vmem:[%s513 + $0x60] sm:$0xff]
      %v1906 = vld [vmem:[%s513 + $0x68] sm:$0xff]
      %v1907 = vld [vmem:[%s513 + $0x70] sm:$0xff]
      %v1908 = vld [vmem:[%s513 + $0x78] sm:$0xff]
      %v1909 = vld [vmem:[%s513 + $0x80] sm:$0xff]
      %v1910 = vld [vmem:[%s513 + $0x88] sm:$0xff]
      %v1911 = vld [vmem:[%s513 + $0x90] sm:$0xff]
      %v1912 = vld [vmem:[%s513 + $0x98] sm:$0xff]
      %v1913 = vld [vmem:[%s513 + $0xa0] sm:$0xff]
      %v1914 = vld [vmem:[%s513 + $0xa8] sm:$0xff]
      %v1915 = vld [vmem:[%s513 + $0xb0] sm:$0xff]
      %v1916 = vld [vmem:[%s513 + $0xb8] sm:$0xff]
      %v1917 = vld [vmem:[%s513 + $0xc0] sm:$0xff]
      %v1918 = vld [vmem:[%s513 + $0xc8] sm:$0xff]
      %v1919 = vld [vmem:[%s513 + $0xd0] sm:$0xff]
      %v1920 = vld [vmem:[%s513 + $0xd8] sm:$0xff]
      %v1921 = vld [vmem:[%s513 + $0xe0] sm:$0xff]
      %v1922 = vld [vmem:[%s513 + $0xe8] sm:$0xff]
      %v1923 = vld [vmem:[%s513 + $0xf0] sm:$0xff]
      %v1924 = vld [vmem:[%s513 + $0xf8] sm:$0xff]
      %v1925 = vld [vmem:[%s513 + $0x100] sm:$0xff]
      %v1926 = vld [vmem:[%s513 + $0x108] sm:$0xff]
      %v1927 = vld [vmem:[%s513 + $0x110] sm:$0xff]
      %v1928 = vld [vmem:[%s513 + $0x118] sm:$0xff]
      %v1929 = vld [vmem:[%s513 + $0x120] sm:$0xff]
      %v1930 = vld [vmem:[%s513 + $0x128] sm:$0xff]
      %v1931 = vld [vmem:[%s513 + $0x130] sm:$0xff]
      %v1932 = vld [vmem:[%s513 + $0x138] sm:$0xff]
      %v1933 = vld [vmem:[%s513 + $0x140] sm:$0xff]
      %v1934 = vld [vmem:[%s513 + $0x148] sm:$0xff]
      %v1935 = vld [vmem:[%s513 + $0x150] sm:$0xff]
      %v1936 = vld [vmem:[%s513 + $0x158] sm:$0xff]
      %v1937 = vld [vmem:[%s513 + $0x160] sm:$0xff]
      %v1938 = vld [vmem:[%s513 + $0x168] sm:$0xff]
      %v1939 = vld [vmem:[%s513 + $0x170] sm:$0xff]
      %v1940 = vld [vmem:[%s513 + $0x178] sm:$0xff]
      %v1941 = vld [vmem:[%s513 + $0x180] sm:$0xff]
      %v1942 = vld [vmem:[%s513 + $0x188] sm:$0xff]
      %v1943 = vld [vmem:[%s513 + $0x190] sm:$0xff]
      %v1944 = vld [vmem:[%s513 + $0x198] sm:$0xff]
      %v1945 = vld [vmem:[%s513 + $0x1a0] sm:$0xff]
      %v1946 = vld [vmem:[%s513 + $0x1a8] sm:$0xff]
      %v1947 = vld [vmem:[%s513 + $0x1b0] sm:$0xff]
      %v1948 = vld [vmem:[%s513 + $0x1b8] sm:$0xff]
      %v1949 = vld [vmem:[%s513 + $0x1c0] sm:$0xff]
      %v1950 = vld [vmem:[%s513 + $0x1c8] sm:$0xff]
      %v1951 = vld [vmem:[%s513 + $0x1d0] sm:$0xff]
      %v1952 = vld [vmem:[%s513 + $0x1d8] sm:$0xff]
      %v1953 = vld [vmem:[%s513 + $0x1e0] sm:$0xff]
      %v1954 = vld [vmem:[%s513 + $0x1e8] sm:$0xff]
      %v1955 = vld [vmem:[%s513 + $0x1f0] sm:$0xff]
      %v1956 = vld [vmem:[%s513 + $0x1f8] sm:$0xff]
      %1957 = vmatprep.subr.mxu0 %v1894
      %1958 = vmatpush1.msra.mxu0 %v1893
      %1959 = vmatprep.subr.mxu0 %v1898
      %1960 = vmatpush1.msra.mxu0 %v1897
      %1961 = vmatprep.subr.mxu0 %v1902
      %1962 = vmatpush1.msra.mxu0 %v1901
      %1963 = vmatprep.subr.mxu0 %v1906
      %1964 = vmatpush1.msra.mxu0 %v1905
      %1965 = vmatprep.subr.mxu0 %v1910
      %1966 = vmatpush1.msra.mxu0 %v1909
      %1967 = vmatprep.subr.mxu0 %v1914
      %1968 = vmatpush1.msra.mxu0 %v1913
      %1969 = vmatprep.subr.mxu0 %v1918
      %1970 = vmatpush1.msra.mxu0 %v1917
      %1971 = vmatprep.subr.mxu0 %v1922
      %1972 = vmatpush1.msra.mxu0 %v1921
      %1973 = vmatprep.subr.mxu0 %v1926
      %1974 = vmatpush1.msra.mxu0 %v1925
      %1975 = vmatprep.subr.mxu0 %v1930
      %1976 = vmatpush1.msra.mxu0 %v1929
      %1977 = vmatprep.subr.mxu0 %v1934
      %1978 = vmatpush1.msra.mxu0 %v1933
      %1979 = vmatprep.subr.mxu0 %v1938
      %1980 = vmatpush1.msra.mxu0 %v1937
      %1981 = vmatprep.subr.mxu0 %v1942
      %1982 = vmatpush1.msra.mxu0 %v1941
      %1983 = vmatprep.subr.mxu0 %v1946
      %1984 = vmatpush1.msra.mxu0 %v1945
      %1985 = vmatprep.subr.mxu0 %v1950
      %1986 = vmatpush1.msra.mxu0 %v1949
      %1987 = vmatprep.subr.mxu0 %v1954
      %1988 = vmatpush1.msra.mxu0 %v1953
      %1989 = vmatprep.subr.mxu0 0.0
      %1990 = vmatpush1.msra.mxu0 0.0
      %1991 = vmatprep.subr.mxu0 0.0
      %1992 = vmatpush1.msra.mxu0 0.0
      %1993 = vmatprep.subr.mxu0 0.0
      %1994 = vmatpush1.msra.mxu0 0.0
      %1995 = vmatprep.subr.mxu0 0.0
      %1996 = vmatpush1.msra.mxu0 0.0
      %1997 = vmatprep.subr.mxu0 0.0
      %1998 = vmatpush1.msra.mxu0 0.0
      %1999 = vmatprep.subr.mxu0 0.0
      %2000 = vmatpush1.msra.mxu0 0.0
      %2001 = vmatprep.subr.mxu0 0.0
      %2002 = vmatpush1.msra.mxu0 0.0
      %2003 = vmatprep.subr.mxu0 0.0
      %2004 = vmatpush1.msra.mxu0 0.0
      %2005 = vmatprep.subr.mxu0 0.0
      %2006 = vmatpush1.msra.mxu0 0.0
      %2007 = vmatprep.subr.mxu0 0.0
      %2008 = vmatpush1.msra.mxu0 0.0
      %2009 = vmatprep.subr.mxu0 0.0
      %2010 = vmatpush1.msra.mxu0 0.0
      %2011 = vmatprep.subr.mxu0 0.0
      %2012 = vmatpush1.msra.mxu0 0.0
      %2013 = vmatprep.subr.mxu0 0.0
      %2014 = vmatpush1.msra.mxu0 0.0
      %2015 = vmatprep.subr.mxu0 0.0
      %2016 = vmatpush1.msra.mxu0 0.0
      %2017 = vmatprep.subr.mxu0 0.0
      %2018 = vmatpush1.msra.mxu0 0.0
      %2019 = vmatprep.subr.mxu0 0.0
      %2020 = vmatpush1.msra.mxu0 0.0
      %2021 = vmatprep.mubr.f32.mxu0 0.0
      %2022 = vmatmul.mubr.f32.gmra.mrb[0].mxu0 %v1892
      %v2023 = vpop.f32.mrb[0].mxu0
      %v2024 = vadd.f32 0.0, %v2023
      %v2025 = vpop.f32.mrb[0].mxu0
      %v2026 = vadd.f32 0.0, %v2025
      %2027 = vdwg.mxu0
      %2028 = vmatprep.subr.mxu0 %v1896
      %2029 = vmatpush1.msra.mxu0 %v1895
      %2030 = vmatprep.subr.mxu0 %v1900
      %2031 = vmatpush1.msra.mxu0 %v1899
      %2032 = vmatprep.subr.mxu0 %v1904
      %2033 = vmatpush1.msra.mxu0 %v1903
      %2034 = vmatprep.subr.mxu0 %v1908
      %2035 = vmatpush1.msra.mxu0 %v1907
      %2036 = vmatprep.subr.mxu0 %v1912
      %2037 = vmatpush1.msra.mxu0 %v1911
      %2038 = vmatprep.subr.mxu0 %v1916
      %2039 = vmatpush1.msra.mxu0 %v1915
      %2040 = vmatprep.subr.mxu0 %v1920
      %2041 = vmatpush1.msra.mxu0 %v1919
      %2042 = vmatprep.subr.mxu0 %v1924
      %2043 = vmatpush1.msra.mxu0 %v1923
      %2044 = vmatprep.subr.mxu0 %v1928
      %2045 = vmatpush1.msra.mxu0 %v1927
      %2046 = vmatprep.subr.mxu0 %v1932
      %2047 = vmatpush1.msra.mxu0 %v1931
      %2048 = vmatprep.subr.mxu0 %v1936
      %2049 = vmatpush1.msra.mxu0 %v1935
      %2050 = vmatprep.subr.mxu0 %v1940
      %2051 = vmatpush1.msra.mxu0 %v1939
      %2052 = vmatprep.subr.mxu0 %v1944
      %2053 = vmatpush1.msra.mxu0 %v1943
      %2054 = vmatprep.subr.mxu0 %v1948
      %2055 = vmatpush1.msra.mxu0 %v1947
      %2056 = vmatprep.subr.mxu0 %v1952
      %2057 = vmatpush1.msra.mxu0 %v1951
      %2058 = vmatprep.subr.mxu0 %v1956
      %2059 = vmatpush1.msra.mxu0 %v1955
      %2060 = vmatprep.subr.mxu0 0.0
      %2061 = vmatpush1.msra.mxu0 0.0
      %2062 = vmatprep.subr.mxu0 0.0
      %2063 = vmatpush1.msra.mxu0 0.0
      %2064 = vmatprep.subr.mxu0 0.0
      %2065 = vmatpush1.msra.mxu0 0.0
      %2066 = vmatprep.subr.mxu0 0.0
      %2067 = vmatpush1.msra.mxu0 0.0
      %2068 = vmatprep.subr.mxu0 0.0
      %2069 = vmatpush1.msra.mxu0 0.0
      %2070 = vmatprep.subr.mxu0 0.0
      %2071 = vmatpush1.msra.mxu0 0.0
      %2072 = vmatprep.subr.mxu0 0.0
      %2073 = vmatpush1.msra.mxu0 0.0
      %2074 = vmatprep.subr.mxu0 0.0
      %2075 = vmatpush1.msra.mxu0 0.0
      %2076 = vmatprep.subr.mxu0 0.0
      %2077 = vmatpush1.msra.mxu0 0.0
      %2078 = vmatprep.subr.mxu0 0.0
      %2079 = vmatpush1.msra.mxu0 0.0
      %2080 = vmatprep.subr.mxu0 0.0
      %2081 = vmatpush1.msra.mxu0 0.0
      %2082 = vmatprep.subr.mxu0 0.0
      %2083 = vmatpush1.msra.mxu0 0.0
      %2084 = vmatprep.subr.mxu0 0.0
      %2085 = vmatpush1.msra.mxu0 0.0
      %2086 = vmatprep.subr.mxu0 0.0
      %2087 = vmatpush1.msra.mxu0 0.0
      %2088 = vmatprep.subr.mxu0 0.0
      %2089 = vmatpush1.msra.mxu0 0.0
      %2090 = vmatprep.subr.mxu0 0.0
      %2091 = vmatpush1.msra.mxu0 0.0
      %2092 = vmatprep.mubr.f32.mxu0 0.0
      %2093 = vmatmul.mubr.f32.gmra.mrb[0].mxu0 %v1892
      %v2094 = vpop.f32.mrb[0].mxu0
      %v2095 = vadd.f32 0.0, %v2094
      %v2096 = vpop.f32.mrb[0].mxu0
      %v2097 = vadd.f32 0.0, %v2096
      %2098 = vdwg.mxu0
      %v2099 = vld [vmem:[%s720] sm:$0xff]
      %v2100 = vld [vmem:[%s720 + $0x8] sm:$0xff]
      %v2101 = vld [vmem:[%s720 + $0x10] sm:$0xff]
      %v2102 = vld [vmem:[%s720 + $0x18] sm:$0xff]
      %v2103 = vld [vmem:[%s720 + $0x20] sm:$0xff]
      %v2104 = vld [vmem:[%s720 + $0x28] sm:$0xff]
      %v2105 = vld [vmem:[%s720 + $0x30] sm:$0xff]
      %v2106 = vld [vmem:[%s720 + $0x38] sm:$0xff]
      %v2107 = vld [vmem:[%s720 + $0x40] sm:$0xff]
      %v2108 = vld [vmem:[%s720 + $0x48] sm:$0xff]
      %v2109 = vld [vmem:[%s720 + $0x50] sm:$0xff]
      %v2110 = vld [vmem:[%s720 + $0x58] sm:$0xff]
      %v2111 = vld [vmem:[%s720 + $0x60] sm:$0xff]
      %v2112 = vld [vmem:[%s720 + $0x68] sm:$0xff]
      %v2113 = vld [vmem:[%s720 + $0x70] sm:$0xff]
      %v2114 = vld [vmem:[%s720 + $0x78] sm:$0xff]
      %v2115 = vld [vmem:[%s720 + $0x80] sm:$0xff]
      %v2116 = vld [vmem:[%s720 + $0x88] sm:$0xff]
      %v2117 = vld [vmem:[%s720 + $0x90] sm:$0xff]
      %v2118 = vld [vmem:[%s720 + $0x98] sm:$0xff]
      %v2119 = vld [vmem:[%s720 + $0xa0] sm:$0xff]
      %v2120 = vld [vmem:[%s720 + $0xa8] sm:$0xff]
      %v2121 = vld [vmem:[%s720 + $0xb0] sm:$0xff]
      %v2122 = vld [vmem:[%s720 + $0xb8] sm:$0xff]
      %v2123 = vld [vmem:[%s720 + $0xc0] sm:$0xff]
      %v2124 = vld [vmem:[%s720 + $0xc8] sm:$0xff]
      %v2125 = vld [vmem:[%s720 + $0xd0] sm:$0xff]
      %v2126 = vld [vmem:[%s720 + $0xd8] sm:$0xff]
      %v2127 = vld [vmem:[%s720 + $0xe0] sm:$0xff]
      %v2128 = vld [vmem:[%s720 + $0xe8] sm:$0xff]
      %v2129 = vld [vmem:[%s720 + $0xf0] sm:$0xff]
      %v2130 = vld [vmem:[%s720 + $0xf8] sm:$0xff]
      %v2131 = vld [vmem:[%s720 + $0x100] sm:$0xff]
      %v2132 = vld [vmem:[%s720 + $0x108] sm:$0xff]
      %v2133 = vld [vmem:[%s720 + $0x110] sm:$0xff]
      %v2134 = vld [vmem:[%s720 + $0x118] sm:$0xff]
      %v2135 = vld [vmem:[%s720 + $0x120] sm:$0xff]
      %v2136 = vld [vmem:[%s720 + $0x128] sm:$0xff]
      %v2137 = vld [vmem:[%s720 + $0x130] sm:$0xff]
      %v2138 = vld [vmem:[%s720 + $0x138] sm:$0xff]
      %v2139 = vld [vmem:[%s720 + $0x140] sm:$0xff]
      %v2140 = vld [vmem:[%s720 + $0x148] sm:$0xff]
      %v2141 = vld [vmem:[%s720 + $0x150] sm:$0xff]
      %v2142 = vld [vmem:[%s720 + $0x158] sm:$0xff]
      %v2143 = vld [vmem:[%s720 + $0x160] sm:$0xff]
      %v2144 = vld [vmem:[%s720 + $0x168] sm:$0xff]
      %v2145 = vld [vmem:[%s720 + $0x170] sm:$0xff]
      %v2146 = vld [vmem:[%s720 + $0x178] sm:$0xff]
      %v2147 = vld [vmem:[%s720 + $0x180] sm:$0xff]
      %v2148 = vld [vmem:[%s720 + $0x188] sm:$0xff]
      %v2149 = vld [vmem:[%s720 + $0x190] sm:$0xff]
      %v2150 = vld [vmem:[%s720 + $0x198] sm:$0xff]
      %v2151 = vld [vmem:[%s720 + $0x1a0] sm:$0xff]
      %v2152 = vld [vmem:[%s720 + $0x1a8] sm:$0xff]
      %v2153 = vld [vmem:[%s720 + $0x1b0] sm:$0xff]
      %v2154 = vld [vmem:[%s720 + $0x1b8] sm:$0xff]
      %v2155 = vld [vmem:[%s720 + $0x1c0] sm:$0xff]
      %v2156 = vld [vmem:[%s720 + $0x1c8] sm:$0xff]
      %v2157 = vld [vmem:[%s720 + $0x1d0] sm:$0xff]
      %v2158 = vld [vmem:[%s720 + $0x1d8] sm:$0xff]
      %v2159 = vld [vmem:[%s720 + $0x1e0] sm:$0xff]
      %v2160 = vld [vmem:[%s720 + $0x1e8] sm:$0xff]
      %v2161 = vld [vmem:[%s720 + $0x1f0] sm:$0xff]
      %v2162 = vld [vmem:[%s720 + $0x1f8] sm:$0xff]
      %2163 = vmatprep.subr.mxu0 %v2100
      %2164 = vmatpush1.msra.mxu0 %v2099
      %2165 = vmatprep.subr.mxu0 %v2104
      %2166 = vmatpush1.msra.mxu0 %v2103
      %2167 = vmatprep.subr.mxu0 %v2108
      %2168 = vmatpush1.msra.mxu0 %v2107
      %2169 = vmatprep.subr.mxu0 %v2112
      %2170 = vmatpush1.msra.mxu0 %v2111
      %2171 = vmatprep.subr.mxu0 %v2116
      %2172 = vmatpush1.msra.mxu0 %v2115
      %2173 = vmatprep.subr.mxu0 %v2120
      %2174 = vmatpush1.msra.mxu0 %v2119
      %2175 = vmatprep.subr.mxu0 %v2124
      %2176 = vmatpush1.msra.mxu0 %v2123
      %2177 = vmatprep.subr.mxu0 %v2128
      %2178 = vmatpush1.msra.mxu0 %v2127
      %2179 = vmatprep.subr.mxu0 %v2132
      %2180 = vmatpush1.msra.mxu0 %v2131
      %2181 = vmatprep.subr.mxu0 %v2136
      %2182 = vmatpush1.msra.mxu0 %v2135
      %2183 = vmatprep.subr.mxu0 %v2140
      %2184 = vmatpush1.msra.mxu0 %v2139
      %2185 = vmatprep.subr.mxu0 %v2144
      %2186 = vmatpush1.msra.mxu0 %v2143
      %2187 = vmatprep.subr.mxu0 %v2148
      %2188 = vmatpush1.msra.mxu0 %v2147
      %2189 = vmatprep.subr.mxu0 %v2152
      %2190 = vmatpush1.msra.mxu0 %v2151
      %2191 = vmatprep.subr.mxu0 %v2156
      %2192 = vmatpush1.msra.mxu0 %v2155
      %2193 = vmatprep.subr.mxu0 %v2160
      %2194 = vmatpush1.msra.mxu0 %v2159
      %2195 = vmatprep.subr.mxu0 0.0
      %2196 = vmatpush1.msra.mxu0 0.0
      %2197 = vmatprep.subr.mxu0 0.0
      %2198 = vmatpush1.msra.mxu0 0.0
      %2199 = vmatprep.subr.mxu0 0.0
      %2200 = vmatpush1.msra.mxu0 0.0
      %2201 = vmatprep.subr.mxu0 0.0
      %2202 = vmatpush1.msra.mxu0 0.0
      %2203 = vmatprep.subr.mxu0 0.0
      %2204 = vmatpush1.msra.mxu0 0.0
      %2205 = vmatprep.subr.mxu0 0.0
      %2206 = vmatpush1.msra.mxu0 0.0
      %2207 = vmatprep.subr.mxu0 0.0
      %2208 = vmatpush1.msra.mxu0 0.0
      %2209 = vmatprep.subr.mxu0 0.0
      %2210 = vmatpush1.msra.mxu0 0.0
      %2211 = vmatprep.subr.mxu0 0.0
      %2212 = vmatpush1.msra.mxu0 0.0
      %2213 = vmatprep.subr.mxu0 0.0
      %2214 = vmatpush1.msra.mxu0 0.0
      %2215 = vmatprep.subr.mxu0 0.0
      %2216 = vmatpush1.msra.mxu0 0.0
      %2217 = vmatprep.subr.mxu0 0.0
      %2218 = vmatpush1.msra.mxu0 0.0
      %2219 = vmatprep.subr.mxu0 0.0
      %2220 = vmatpush1.msra.mxu0 0.0
      %2221 = vmatprep.subr.mxu0 0.0
      %2222 = vmatpush1.msra.mxu0 0.0
      %2223 = vmatprep.subr.mxu0 0.0
      %2224 = vmatpush1.msra.mxu0 0.0
      %2225 = vmatprep.subr.mxu0 0.0
      %2226 = vmatpush1.msra.mxu0 0.0
      %2227 = vmatprep.mubr.f32.mxu0 0.0
      %2228 = vmatmul.mubr.f32.gmra.mrb[0].mxu0 %v1889
      %v2229 = vpop.f32.mrb[0].mxu0
      %v2230 = vadd.f32 %v2024, %v2229
      %v2231 = vpop.f32.mrb[0].mxu0
      %v2232 = vadd.f32 %v2026, %v2231
      %2233 = vdwg.mxu0
      %2234 = vmatprep.subr.mxu0 %v2102
      %2235 = vmatpush1.msra.mxu0 %v2101
      %2236 = vmatprep.subr.mxu0 %v2106
      %2237 = vmatpush1.msra.mxu0 %v2105
      %2238 = vmatprep.subr.mxu0 %v2110
      %2239 = vmatpush1.msra.mxu0 %v2109
      %2240 = vmatprep.subr.mxu0 %v2114
      %2241 = vmatpush1.msra.mxu0 %v2113
      %2242 = vmatprep.subr.mxu0 %v2118
      %2243 = vmatpush1.msra.mxu0 %v2117
      %2244 = vmatprep.subr.mxu0 %v2122
      %2245 = vmatpush1.msra.mxu0 %v2121
      %2246 = vmatprep.subr.mxu0 %v2126
      %2247 = vmatpush1.msra.mxu0 %v2125
      %2248 = vmatprep.subr.mxu0 %v2130
      %2249 = vmatpush1.msra.mxu0 %v2129
      %2250 = vmatprep.subr.mxu0 %v2134
      %2251 = vmatpush1.msra.mxu0 %v2133
      %2252 = vmatprep.subr.mxu0 %v2138
      %2253 = vmatpush1.msra.mxu0 %v2137
      %2254 = vmatprep.subr.mxu0 %v2142
      %2255 = vmatpush1.msra.mxu0 %v2141
      %2256 = vmatprep.subr.mxu0 %v2146
      %2257 = vmatpush1.msra.mxu0 %v2145
      %2258 = vmatprep.subr.mxu0 %v2150
      %2259 = vmatpush1.msra.mxu0 %v2149
      %2260 = vmatprep.subr.mxu0 %v2154
      %2261 = vmatpush1.msra.mxu0 %v2153
      %2262 = vmatprep.subr.mxu0 %v2158
      %2263 = vmatpush1.msra.mxu0 %v2157
      %2264 = vmatprep.subr.mxu0 %v2162
      %2265 = vmatpush1.msra.mxu0 %v2161
      %2266 = vmatprep.subr.mxu0 0.0
      %2267 = vmatpush1.msra.mxu0 0.0
      %2268 = vmatprep.subr.mxu0 0.0
      %2269 = vmatpush1.msra.mxu0 0.0
      %2270 = vmatprep.subr.mxu0 0.0
      %2271 = vmatpush1.msra.mxu0 0.0
      %2272 = vmatprep.subr.mxu0 0.0
      %2273 = vmatpush1.msra.mxu0 0.0
      %2274 = vmatprep.subr.mxu0 0.0
      %2275 = vmatpush1.msra.mxu0 0.0
      %2276 = vmatprep.subr.mxu0 0.0
      %2277 = vmatpush1.msra.mxu0 0.0
      %2278 = vmatprep.subr.mxu0 0.0
      %2279 = vmatpush1.msra.mxu0 0.0
      %2280 = vmatprep.subr.mxu0 0.0
      %2281 = vmatpush1.msra.mxu0 0.0
      %2282 = vmatprep.subr.mxu0 0.0
      %2283 = vmatpush1.msra.mxu0 0.0
      %2284 = vmatprep.subr.mxu0 0.0
      %2285 = vmatpush1.msra.mxu0 0.0
      %2286 = vmatprep.subr.mxu0 0.0
      %2287 = vmatpush1.msra.mxu0 0.0
      %2288 = vmatprep.subr.mxu0 0.0
      %2289 = vmatpush1.msra.mxu0 0.0
      %2290 = vmatprep.subr.mxu0 0.0
      %2291 = vmatpush1.msra.mxu0 0.0
      %2292 = vmatprep.subr.mxu0 0.0
      %2293 = vmatpush1.msra.mxu0 0.0
      %2294 = vmatprep.subr.mxu0 0.0
      %2295 = vmatpush1.msra.mxu0 0.0
      %2296 = vmatprep.subr.mxu0 0.0
      %2297 = vmatpush1.msra.mxu0 0.0
      %2298 = vmatprep.mubr.f32.mxu0 0.0
      %2299 = vmatmul.mubr.f32.gmra.mrb[0].mxu0 %v1889
      %v2300 = vpop.f32.mrb[0].mxu0
      %v2301 = vadd.f32 %v2095, %v2300
      %v2302 = vpop.f32.mrb[0].mxu0
      %v2303 = vadd.f32 %v2097, %v2302
      %2304 = vdwg.mxu0
      %v2305 = vadd.f32 %v2230, %v252
      %v2306 = vadd.f32 %v2232, %v256
      %v2307 = vadd.f32 %v2301, %v260
      %v2308 = vadd.f32 %v2303, %v264
      %v2309 = vxor.u32 %v2305, 2147483648
      %v2310 = vxor.u32 %v2306, 2147483648
      %v2311 = vxor.u32 %v2307, 2147483648
      %v2312 = vmul.f32 %v2309, 1.442695
      %v2313 = vpow.pop %v2312
      %v2314 = vmul.f32 %v2310, 1.442695
      %v2315 = vpow.pop %v2314
      %v2316 = vmul.f32 %v2311, 1.442695
      %v2317 = vpow.pop %v2316
      %v2318 = vadd.f32 %v2313, 1.0
      %v2319 = vadd.f32 %v2315, 1.0
      %v2320 = vadd.f32 %v2317, 1.0
      %v2321 = vrcp.pop %v2318
      %v2322 = vmul.f32 1.0, %v2321
      %v2323 = vrcp.pop %v2319
      %v2324 = vmul.f32 1.0, %v2323
      %v2325 = vrcp.pop %v2320
      %v2326 = vmul.f32 1.0, %v2325
      %v2327 = vtanh.pop %v2308
      %v2328 = vld [vmem:[%s950] sm:$0xff]
      %v2329 = vmul.f32 %v2324, %v2328
      %v2330 = vmul.f32 %v2322, %v2327
      %v2331 = vadd.f32 %v2329, %v2330
      %v2332 = vtanh.pop %v2331
      %v2333 = vmul.f32 %v2326, %v2332
      %2334 = vst [vmem:[%s511] sm:$0xff] %v2333
      %2335 = vst [vmem:[%s950] sm:$0xff] %v2331
      %s2336 = scalar_lea.vmem %s236, 16
      %2337 = vst [vmem:[%s2336] sm:$0xff] %v2333
      %v2338 = vld [vmem:[#allocation2] sm:$0xff]
      %v2339 = vld [vmem:[%s2] sm:$0xff]
      %v2340 = vld [vmem:[%s2 + $0x8] sm:$0xff]
      %v2341 = vld [vmem:[%s2 + $0x10] sm:$0xff]
      %v2342 = vld [vmem:[%s2 + $0x18] sm:$0xff]
      %v2343 = vld [vmem:[%s2 + $0x20] sm:$0xff]
      %v2344 = vld [vmem:[%s2 + $0x28] sm:$0xff]
      %v2345 = vld [vmem:[%s2 + $0x30] sm:$0xff]
      %v2346 = vld [vmem:[%s2 + $0x38] sm:$0xff]
      %v2347 = vld [vmem:[%s2 + $0x40] sm:$0xff]
      %v2348 = vld [vmem:[%s2 + $0x48] sm:$0xff]
      %v2349 = vld [vmem:[%s2 + $0x50] sm:$0xff]
      %v2350 = vld [vmem:[%s2 + $0x58] sm:$0xff]
      %v2351 = vld [vmem:[%s2 + $0x60] sm:$0xff]
      %v2352 = vld [vmem:[%s2 + $0x68] sm:$0xff]
      %v2353 = vld [vmem:[%s2 + $0x70] sm:$0xff]
      %v2354 = vld [vmem:[%s2 + $0x78] sm:$0xff]
      %v2355 = vld [vmem:[%s2 + $0x80] sm:$0xff]
      %v2356 = vld [vmem:[%s2 + $0x88] sm:$0xff]
      %v2357 = vld [vmem:[%s2 + $0x90] sm:$0xff]
      %v2358 = vld [vmem:[%s2 + $0x98] sm:$0xff]
      %v2359 = vld [vmem:[%s2 + $0xa0] sm:$0xff]
      %v2360 = vld [vmem:[%s2 + $0xa8] sm:$0xff]
      %v2361 = vld [vmem:[%s2 + $0xb0] sm:$0xff]
      %v2362 = vld [vmem:[%s2 + $0xb8] sm:$0xff]
      %v2363 = vld [vmem:[%s2 + $0xc0] sm:$0xff]
      %v2364 = vld [vmem:[%s2 + $0xc8] sm:$0xff]
      %v2365 = vld [vmem:[%s2 + $0xd0] sm:$0xff]
      %v2366 = vld [vmem:[%s2 + $0xd8] sm:$0xff]
      %v2367 = vld [vmem:[%s2 + $0xe0] sm:$0xff]
      %v2368 = vld [vmem:[%s2 + $0xe8] sm:$0xff]
      %v2369 = vld [vmem:[%s2 + $0xf0] sm:$0xff]
      %v2370 = vld [vmem:[%s2 + $0xf8] sm:$0xff]
      %v2371 = vld [vmem:[%s2 + $0x100] sm:$0xff]
      %v2372 = vld [vmem:[%s2 + $0x108] sm:$0xff]
      %v2373 = vld [vmem:[%s2 + $0x110] sm:$0xff]
      %v2374 = vld [vmem:[%s2 + $0x118] sm:$0xff]
      %v2375 = vld [vmem:[%s2 + $0x120] sm:$0xff]
      %v2376 = vld [vmem:[%s2 + $0x128] sm:$0xff]
      %v2377 = vld [vmem:[%s2 + $0x130] sm:$0xff]
      %v2378 = vld [vmem:[%s2 + $0x138] sm:$0xff]
      %v2379 = vld [vmem:[%s2 + $0x140] sm:$0xff]
      %v2380 = vld [vmem:[%s2 + $0x148] sm:$0xff]
      %v2381 = vld [vmem:[%s2 + $0x150] sm:$0xff]
      %v2382 = vld [vmem:[%s2 + $0x158] sm:$0xff]
      %v2383 = vld [vmem:[%s2 + $0x160] sm:$0xff]
      %v2384 = vld [vmem:[%s2 + $0x168] sm:$0xff]
      %v2385 = vld [vmem:[%s2 + $0x170] sm:$0xff]
      %v2386 = vld [vmem:[%s2 + $0x178] sm:$0xff]
      %v2387 = vld [vmem:[%s2 + $0x180] sm:$0xff]
      %v2388 = vld [vmem:[%s2 + $0x188] sm:$0xff]
      %v2389 = vld [vmem:[%s2 + $0x190] sm:$0xff]
      %v2390 = vld [vmem:[%s2 + $0x198] sm:$0xff]
      %v2391 = vld [vmem:[%s2 + $0x1a0] sm:$0xff]
      %v2392 = vld [vmem:[%s2 + $0x1a8] sm:$0xff]
      %v2393 = vld [vmem:[%s2 + $0x1b0] sm:$0xff]
      %v2394 = vld [vmem:[%s2 + $0x1b8] sm:$0xff]
      %v2395 = vld [vmem:[%s2 + $0x1c0] sm:$0xff]
      %v2396 = vld [vmem:[%s2 + $0x1c8] sm:$0xff]
      %v2397 = vld [vmem:[%s2 + $0x1d0] sm:$0xff]
      %v2398 = vld [vmem:[%s2 + $0x1d8] sm:$0xff]
      %v2399 = vld [vmem:[%s2 + $0x1e0] sm:$0xff]
      %v2400 = vld [vmem:[%s2 + $0x1e8] sm:$0xff]
      %v2401 = vld [vmem:[%s2 + $0x1f0] sm:$0xff]
      %v2402 = vld [vmem:[%s2 + $0x1f8] sm:$0xff]
      %2403 = vmatprep.subr.mxu0 %v2340
      %2404 = vmatpush1.msra.mxu0 %v2339
      %2405 = vmatprep.subr.mxu0 %v2344
      %2406 = vmatpush1.msra.mxu0 %v2343
      %2407 = vmatprep.subr.mxu0 %v2348
      %2408 = vmatpush1.msra.mxu0 %v2347
      %2409 = vmatprep.subr.mxu0 %v2352
      %2410 = vmatpush1.msra.mxu0 %v2351
      %2411 = vmatprep.subr.mxu0 %v2356
      %2412 = vmatpush1.msra.mxu0 %v2355
      %2413 = vmatprep.subr.mxu0 %v2360
      %2414 = vmatpush1.msra.mxu0 %v2359
      %2415 = vmatprep.subr.mxu0 %v2364
      %2416 = vmatpush1.msra.mxu0 %v2363
      %2417 = vmatprep.subr.mxu0 %v2368
      %2418 = vmatpush1.msra.mxu0 %v2367
      %2419 = vmatprep.subr.mxu0 %v2372
      %2420 = vmatpush1.msra.mxu0 %v2371
      %2421 = vmatprep.subr.mxu0 %v2376
      %2422 = vmatpush1.msra.mxu0 %v2375
      %2423 = vmatprep.subr.mxu0 %v2380
      %2424 = vmatpush1.msra.mxu0 %v2379
      %2425 = vmatprep.subr.mxu0 %v2384
      %2426 = vmatpush1.msra.mxu0 %v2383
      %2427 = vmatprep.subr.mxu0 %v2388
      %2428 = vmatpush1.msra.mxu0 %v2387
      %2429 = vmatprep.subr.mxu0 %v2392
      %2430 = vmatpush1.msra.mxu0 %v2391
      %2431 = vmatprep.subr.mxu0 %v2396
      %2432 = vmatpush1.msra.mxu0 %v2395
      %2433 = vmatprep.subr.mxu0 %v2400
      %2434 = vmatpush1.msra.mxu0 %v2399
      %2435 = vmatprep.subr.mxu0 0.0
      %2436 = vmatpush1.msra.mxu0 0.0
      %2437 = vmatprep.subr.mxu0 0.0
      %2438 = vmatpush1.msra.mxu0 0.0
      %2439 = vmatprep.subr.mxu0 0.0
      %2440 = vmatpush1.msra.mxu0 0.0
      %2441 = vmatprep.subr.mxu0 0.0
      %2442 = vmatpush1.msra.mxu0 0.0
      %2443 = vmatprep.subr.mxu0 0.0
      %2444 = vmatpush1.msra.mxu0 0.0
      %2445 = vmatprep.subr.mxu0 0.0
      %2446 = vmatpush1.msra.mxu0 0.0
      %2447 = vmatprep.subr.mxu0 0.0
      %2448 = vmatpush1.msra.mxu0 0.0
      %2449 = vmatprep.subr.mxu0 0.0
      %2450 = vmatpush1.msra.mxu0 0.0
      %2451 = vmatprep.subr.mxu0 0.0
      %2452 = vmatpush1.msra.mxu0 0.0
      %2453 = vmatprep.subr.mxu0 0.0
      %2454 = vmatpush1.msra.mxu0 0.0
      %2455 = vmatprep.subr.mxu0 0.0
      %2456 = vmatpush1.msra.mxu0 0.0
      %2457 = vmatprep.subr.mxu0 0.0
      %2458 = vmatpush1.msra.mxu0 0.0
      %2459 = vmatprep.subr.mxu0 0.0
      %2460 = vmatpush1.msra.mxu0 0.0
      %2461 = vmatprep.subr.mxu0 0.0
      %2462 = vmatpush1.msra.mxu0 0.0
      %2463 = vmatprep.subr.mxu0 0.0
      %2464 = vmatpush1.msra.mxu0 0.0
      %2465 = vmatprep.subr.mxu0 0.0
      %2466 = vmatpush1.msra.mxu0 0.0
      %2467 = vmatprep.mubr.f32.mxu0 0.0
      %2468 = vmatmul.mubr.f32.gmra.mrb[0].mxu0 %v2338
      %v2469 = vpop.f32.mrb[0].mxu0
      %v2470 = vadd.f32 0.0, %v2469
      %v2471 = vpop.f32.mrb[0].mxu0
      %v2472 = vadd.f32 0.0, %v2471
      %2473 = vdwg.mxu0
      %2474 = vmatprep.subr.mxu0 %v2342
      %2475 = vmatpush1.msra.mxu0 %v2341
      %2476 = vmatprep.subr.mxu0 %v2346
      %2477 = vmatpush1.msra.mxu0 %v2345
      %2478 = vmatprep.subr.mxu0 %v2350
      %2479 = vmatpush1.msra.mxu0 %v2349
      %2480 = vmatprep.subr.mxu0 %v2354
      %2481 = vmatpush1.msra.mxu0 %v2353
      %2482 = vmatprep.subr.mxu0 %v2358
      %2483 = vmatpush1.msra.mxu0 %v2357
      %2484 = vmatprep.subr.mxu0 %v2362
      %2485 = vmatpush1.msra.mxu0 %v2361
      %2486 = vmatprep.subr.mxu0 %v2366
      %2487 = vmatpush1.msra.mxu0 %v2365
      %2488 = vmatprep.subr.mxu0 %v2370
      %2489 = vmatpush1.msra.mxu0 %v2369
      %2490 = vmatprep.subr.mxu0 %v2374
      %2491 = vmatpush1.msra.mxu0 %v2373
      %2492 = vmatprep.subr.mxu0 %v2378
      %2493 = vmatpush1.msra.mxu0 %v2377
      %2494 = vmatprep.subr.mxu0 %v2382
      %2495 = vmatpush1.msra.mxu0 %v2381
      %2496 = vmatprep.subr.mxu0 %v2386
      %2497 = vmatpush1.msra.mxu0 %v2385
      %2498 = vmatprep.subr.mxu0 %v2390
      %2499 = vmatpush1.msra.mxu0 %v2389
      %2500 = vmatprep.subr.mxu0 %v2394
      %2501 = vmatpush1.msra.mxu0 %v2393
      %2502 = vmatprep.subr.mxu0 %v2398
      %2503 = vmatpush1.msra.mxu0 %v2397
      %2504 = vmatprep.subr.mxu0 %v2402
      %2505 = vmatpush1.msra.mxu0 %v2401
      %2506 = vmatprep.subr.mxu0 0.0
      %2507 = vmatpush1.msra.mxu0 0.0
      %2508 = vmatprep.subr.mxu0 0.0
      %2509 = vmatpush1.msra.mxu0 0.0
      %2510 = vmatprep.subr.mxu0 0.0
      %2511 = vmatpush1.msra.mxu0 0.0
      %2512 = vmatprep.subr.mxu0 0.0
      %2513 = vmatpush1.msra.mxu0 0.0
      %2514 = vmatprep.subr.mxu0 0.0
      %2515 = vmatpush1.msra.mxu0 0.0
      %2516 = vmatprep.subr.mxu0 0.0
      %2517 = vmatpush1.msra.mxu0 0.0
      %2518 = vmatprep.subr.mxu0 0.0
      %2519 = vmatpush1.msra.mxu0 0.0
      %2520 = vmatprep.subr.mxu0 0.0
      %2521 = vmatpush1.msra.mxu0 0.0
      %2522 = vmatprep.subr.mxu0 0.0
      %2523 = vmatpush1.msra.mxu0 0.0
      %2524 = vmatprep.subr.mxu0 0.0
      %2525 = vmatpush1.msra.mxu0 0.0
      %2526 = vmatprep.subr.mxu0 0.0
      %2527 = vmatpush1.msra.mxu0 0.0
      %2528 = vmatprep.subr.mxu0 0.0
      %2529 = vmatpush1.msra.mxu0 0.0
      %2530 = vmatprep.subr.mxu0 0.0
      %2531 = vmatpush1.msra.mxu0 0.0
      %2532 = vmatprep.subr.mxu0 0.0
      %2533 = vmatpush1.msra.mxu0 0.0
      %2534 = vmatprep.subr.mxu0 0.0
      %2535 = vmatpush1.msra.mxu0 0.0
      %2536 = vmatprep.subr.mxu0 0.0
      %2537 = vmatpush1.msra.mxu0 0.0
      %2538 = vmatprep.mubr.f32.mxu0 0.0
      %2539 = vmatmul.mubr.f32.gmra.mrb[0].mxu0 %v2338
      %v2540 = vpop.f32.mrb[0].mxu0
      %v2541 = vadd.f32 0.0, %v2540
      %v2542 = vpop.f32.mrb[0].mxu0
      %v2543 = vadd.f32 0.0, %v2542
      %2544 = vdwg.mxu0
      %s2545 = scalar_lea.vmem %s227, 96
      %v2546 = vld [vmem:[%s2545] sm:$0xff]
      %v2547 = vld [vmem:[%s2545 + $0x8] sm:$0xff]
      %v2548 = vld [vmem:[%s2545 + $0x10] sm:$0xff]
      %v2549 = vld [vmem:[%s2545 + $0x18] sm:$0xff]
      %v2550 = vadd.f32 %v2546, %v2470
      %v2551 = vadd.f32 %v2547, %v2472
      %v2552 = vadd.f32 %v2548, %v2541
      %v2553 = vadd.f32 %v2549, %v2543
      %v2554 = vxor.u32 %v2550, 2147483648
      %v2555 = vxor.u32 %v2551, 2147483648
      %v2556 = vxor.u32 %v2552, 2147483648
      %v2557 = vmul.f32 %v2554, 1.442695
      %v2558 = vpow.pop %v2557
      %v2559 = vmul.f32 %v2555, 1.442695
      %v2560 = vpow.pop %v2559
      %v2561 = vmul.f32 %v2556, 1.442695
      %v2562 = vpow.pop %v2561
      %v2563 = vadd.f32 %v2558, 1.0
      %v2564 = vadd.f32 %v2560, 1.0
      %v2565 = vadd.f32 %v2562, 1.0
      %v2566 = vrcp.pop %v2563
      %v2567 = vmul.f32 1.0, %v2566
      %v2568 = vrcp.pop %v2564
      %v2569 = vmul.f32 1.0, %v2568
      %v2570 = vrcp.pop %v2565
      %v2571 = vmul.f32 1.0, %v2570
      %v2572 = vtanh.pop %v2553
      %v2573 = vld [vmem:[#allocation3] sm:$0xff]
      %v2574 = vmul.f32 %v2569, %v2573
      %v2575 = vmul.f32 %v2567, %v2572
      %v2576 = vadd.f32 %v2574, %v2575
      %v2577 = vtanh.pop %v2576
      %v2578 = vmul.f32 %v2571, %v2577
      %2579 = vst [vmem:[#allocation2] sm:$0xff] %v2578
      %2580 = vst [vmem:[#allocation3] sm:$0xff] %v2576
      %v2581 = vld [vmem:[%s511] sm:$0xff]
      %v2582 = vld [vmem:[%s513] sm:$0xff]
      %v2583 = vld [vmem:[%s513 + $0x8] sm:$0xff]
      %v2584 = vld [vmem:[%s513 + $0x10] sm:$0xff]
      %v2585 = vld [vmem:[%s513 + $0x18] sm:$0xff]
      %v2586 = vld [vmem:[%s513 + $0x20] sm:$0xff]
      %v2587 = vld [vmem:[%s513 + $0x28] sm:$0xff]
      %v2588 = vld [vmem:[%s513 + $0x30] sm:$0xff]
      %v2589 = vld [vmem:[%s513 + $0x38] sm:$0xff]
      %v2590 = vld [vmem:[%s513 + $0x40] sm:$0xff]
      %v2591 = vld [vmem:[%s513 + $0x48] sm:$0xff]
      %v2592 = vld [vmem:[%s513 + $0x50] sm:$0xff]
      %v2593 = vld [vmem:[%s513 + $0x58] sm:$0xff]
      %v2594 = vld [vmem:[%s513 + $0x60] sm:$0xff]
      %v2595 = vld [vmem:[%s513 + $0x68] sm:$0xff]
      %v2596 = vld [vmem:[%s513 + $0x70] sm:$0xff]
      %v2597 = vld [vmem:[%s513 + $0x78] sm:$0xff]
      %v2598 = vld [vmem:[%s513 + $0x80] sm:$0xff]
      %v2599 = vld [vmem:[%s513 + $0x88] sm:$0xff]
      %v2600 = vld [vmem:[%s513 + $0x90] sm:$0xff]
      %v2601 = vld [vmem:[%s513 + $0x98] sm:$0xff]
      %v2602 = vld [vmem:[%s513 + $0xa0] sm:$0xff]
      %v2603 = vld [vmem:[%s513 + $0xa8] sm:$0xff]
      %v2604 = vld [vmem:[%s513 + $0xb0] sm:$0xff]
      %v2605 = vld [vmem:[%s513 + $0xb8] sm:$0xff]
      %v2606 = vld [vmem:[%s513 + $0xc0] sm:$0xff]
      %v2607 = vld [vmem:[%s513 + $0xc8] sm:$0xff]
      %v2608 = vld [vmem:[%s513 + $0xd0] sm:$0xff]
      %v2609 = vld [vmem:[%s513 + $0xd8] sm:$0xff]
      %v2610 = vld [vmem:[%s513 + $0xe0] sm:$0xff]
      %v2611 = vld [vmem:[%s513 + $0xe8] sm:$0xff]
      %v2612 = vld [vmem:[%s513 + $0xf0] sm:$0xff]
      %v2613 = vld [vmem:[%s513 + $0xf8] sm:$0xff]
      %v2614 = vld [vmem:[%s513 + $0x100] sm:$0xff]
      %v2615 = vld [vmem:[%s513 + $0x108] sm:$0xff]
      %v2616 = vld [vmem:[%s513 + $0x110] sm:$0xff]
      %v2617 = vld [vmem:[%s513 + $0x118] sm:$0xff]
      %v2618 = vld [vmem:[%s513 + $0x120] sm:$0xff]
      %v2619 = vld [vmem:[%s513 + $0x128] sm:$0xff]
      %v2620 = vld [vmem:[%s513 + $0x130] sm:$0xff]
      %v2621 = vld [vmem:[%s513 + $0x138] sm:$0xff]
      %v2622 = vld [vmem:[%s513 + $0x140] sm:$0xff]
      %v2623 = vld [vmem:[%s513 + $0x148] sm:$0xff]
      %v2624 = vld [vmem:[%s513 + $0x150] sm:$0xff]
      %v2625 = vld [vmem:[%s513 + $0x158] sm:$0xff]
      %v2626 = vld [vmem:[%s513 + $0x160] sm:$0xff]
      %v2627 = vld [vmem:[%s513 + $0x168] sm:$0xff]
      %v2628 = vld [vmem:[%s513 + $0x170] sm:$0xff]
      %v2629 = vld [vmem:[%s513 + $0x178] sm:$0xff]
      %v2630 = vld [vmem:[%s513 + $0x180] sm:$0xff]
      %v2631 = vld [vmem:[%s513 + $0x188] sm:$0xff]
      %v2632 = vld [vmem:[%s513 + $0x190] sm:$0xff]
      %v2633 = vld [vmem:[%s513 + $0x198] sm:$0xff]
      %v2634 = vld [vmem:[%s513 + $0x1a0] sm:$0xff]
      %v2635 = vld [vmem:[%s513 + $0x1a8] sm:$0xff]
      %v2636 = vld [vmem:[%s513 + $0x1b0] sm:$0xff]
      %v2637 = vld [vmem:[%s513 + $0x1b8] sm:$0xff]
      %v2638 = vld [vmem:[%s513 + $0x1c0] sm:$0xff]
      %v2639 = vld [vmem:[%s513 + $0x1c8] sm:$0xff]
      %v2640 = vld [vmem:[%s513 + $0x1d0] sm:$0xff]
      %v2641 = vld [vmem:[%s513 + $0x1d8] sm:$0xff]
      %v2642 = vld [vmem:[%s513 + $0x1e0] sm:$0xff]
      %v2643 = vld [vmem:[%s513 + $0x1e8] sm:$0xff]
      %v2644 = vld [vmem:[%s513 + $0x1f0] sm:$0xff]
      %v2645 = vld [vmem:[%s513 + $0x1f8] sm:$0xff]
      %2646 = vmatprep.subr.mxu0 %v2583
      %2647 = vmatpush1.msra.mxu0 %v2582
      %2648 = vmatprep.subr.mxu0 %v2587
      %2649 = vmatpush1.msra.mxu0 %v2586
      %2650 = vmatprep.subr.mxu0 %v2591
      %2651 = vmatpush1.msra.mxu0 %v2590
      %2652 = vmatprep.subr.mxu0 %v2595
      %2653 = vmatpush1.msra.mxu0 %v2594
      %2654 = vmatprep.subr.mxu0 %v2599
      %2655 = vmatpush1.msra.mxu0 %v2598
      %2656 = vmatprep.subr.mxu0 %v2603
      %2657 = vmatpush1.msra.mxu0 %v2602
      %2658 = vmatprep.subr.mxu0 %v2607
      %2659 = vmatpush1.msra.mxu0 %v2606
      %2660 = vmatprep.subr.mxu0 %v2611
      %2661 = vmatpush1.msra.mxu0 %v2610
      %2662 = vmatprep.subr.mxu0 %v2615
      %2663 = vmatpush1.msra.mxu0 %v2614
      %2664 = vmatprep.subr.mxu0 %v2619
      %2665 = vmatpush1.msra.mxu0 %v2618
      %2666 = vmatprep.subr.mxu0 %v2623
      %2667 = vmatpush1.msra.mxu0 %v2622
      %2668 = vmatprep.subr.mxu0 %v2627
      %2669 = vmatpush1.msra.mxu0 %v2626
      %2670 = vmatprep.subr.mxu0 %v2631
      %2671 = vmatpush1.msra.mxu0 %v2630
      %2672 = vmatprep.subr.mxu0 %v2635
      %2673 = vmatpush1.msra.mxu0 %v2634
      %2674 = vmatprep.subr.mxu0 %v2639
      %2675 = vmatpush1.msra.mxu0 %v2638
      %2676 = vmatprep.subr.mxu0 %v2643
      %2677 = vmatpush1.msra.mxu0 %v2642
      %2678 = vmatprep.subr.mxu0 0.0
      %2679 = vmatpush1.msra.mxu0 0.0
      %2680 = vmatprep.subr.mxu0 0.0
      %2681 = vmatpush1.msra.mxu0 0.0
      %2682 = vmatprep.subr.mxu0 0.0
      %2683 = vmatpush1.msra.mxu0 0.0
      %2684 = vmatprep.subr.mxu0 0.0
      %2685 = vmatpush1.msra.mxu0 0.0
      %2686 = vmatprep.subr.mxu0 0.0
      %2687 = vmatpush1.msra.mxu0 0.0
      %2688 = vmatprep.subr.mxu0 0.0
      %2689 = vmatpush1.msra.mxu0 0.0
      %2690 = vmatprep.subr.mxu0 0.0
      %2691 = vmatpush1.msra.mxu0 0.0
      %2692 = vmatprep.subr.mxu0 0.0
      %2693 = vmatpush1.msra.mxu0 0.0
      %2694 = vmatprep.subr.mxu0 0.0
      %2695 = vmatpush1.msra.mxu0 0.0
      %2696 = vmatprep.subr.mxu0 0.0
      %2697 = vmatpush1.msra.mxu0 0.0
      %2698 = vmatprep.subr.mxu0 0.0
      %2699 = vmatpush1.msra.mxu0 0.0
      %2700 = vmatprep.subr.mxu0 0.0
      %2701 = vmatpush1.msra.mxu0 0.0
      %2702 = vmatprep.subr.mxu0 0.0
      %2703 = vmatpush1.msra.mxu0 0.0
      %2704 = vmatprep.subr.mxu0 0.0
      %2705 = vmatpush1.msra.mxu0 0.0
      %2706 = vmatprep.subr.mxu0 0.0
      %2707 = vmatpush1.msra.mxu0 0.0
      %2708 = vmatprep.subr.mxu0 0.0
      %2709 = vmatpush1.msra.mxu0 0.0
      %2710 = vmatprep.mubr.f32.mxu0 0.0
      %2711 = vmatmul.mubr.f32.gmra.mrb[0].mxu0 %v2581
      %v2712 = vpop.f32.mrb[0].mxu0
      %v2713 = vadd.f32 0.0, %v2712
      %v2714 = vpop.f32.mrb[0].mxu0
      %v2715 = vadd.f32 0.0, %v2714
      %2716 = vdwg.mxu0
      %2717 = vmatprep.subr.mxu0 %v2585
      %2718 = vmatpush1.msra.mxu0 %v2584
      %2719 = vmatprep.subr.mxu0 %v2589
      %2720 = vmatpush1.msra.mxu0 %v2588
      %2721 = vmatprep.subr.mxu0 %v2593
      %2722 = vmatpush1.msra.mxu0 %v2592
      %2723 = vmatprep.subr.mxu0 %v2597
      %2724 = vmatpush1.msra.mxu0 %v2596
      %2725 = vmatprep.subr.mxu0 %v2601
      %2726 = vmatpush1.msra.mxu0 %v2600
      %2727 = vmatprep.subr.mxu0 %v2605
      %2728 = vmatpush1.msra.mxu0 %v2604
      %2729 = vmatprep.subr.mxu0 %v2609
      %2730 = vmatpush1.msra.mxu0 %v2608
      %2731 = vmatprep.subr.mxu0 %v2613
      %2732 = vmatpush1.msra.mxu0 %v2612
      %2733 = vmatprep.subr.mxu0 %v2617
      %2734 = vmatpush1.msra.mxu0 %v2616
      %2735 = vmatprep.subr.mxu0 %v2621
      %2736 = vmatpush1.msra.mxu0 %v2620
      %2737 = vmatprep.subr.mxu0 %v2625
      %2738 = vmatpush1.msra.mxu0 %v2624
      %2739 = vmatprep.subr.mxu0 %v2629
      %2740 = vmatpush1.msra.mxu0 %v2628
      %2741 = vmatprep.subr.mxu0 %v2633
      %2742 = vmatpush1.msra.mxu0 %v2632
      %2743 = vmatprep.subr.mxu0 %v2637
      %2744 = vmatpush1.msra.mxu0 %v2636
      %2745 = vmatprep.subr.mxu0 %v2641
      %2746 = vmatpush1.msra.mxu0 %v2640
      %2747 = vmatprep.subr.mxu0 %v2645
      %2748 = vmatpush1.msra.mxu0 %v2644
      %2749 = vmatprep.subr.mxu0 0.0
      %2750 = vmatpush1.msra.mxu0 0.0
      %2751 = vmatprep.subr.mxu0 0.0
      %2752 = vmatpush1.msra.mxu0 0.0
      %2753 = vmatprep.subr.mxu0 0.0
      %2754 = vmatpush1.msra.mxu0 0.0
      %2755 = vmatprep.subr.mxu0 0.0
      %2756 = vmatpush1.msra.mxu0 0.0
      %2757 = vmatprep.subr.mxu0 0.0
      %2758 = vmatpush1.msra.mxu0 0.0
      %2759 = vmatprep.subr.mxu0 0.0
      %2760 = vmatpush1.msra.mxu0 0.0
      %2761 = vmatprep.subr.mxu0 0.0
      %2762 = vmatpush1.msra.mxu0 0.0
      %2763 = vmatprep.subr.mxu0 0.0
      %2764 = vmatpush1.msra.mxu0 0.0
      %2765 = vmatprep.subr.mxu0 0.0
      %2766 = vmatpush1.msra.mxu0 0.0
      %2767 = vmatprep.subr.mxu0 0.0
      %2768 = vmatpush1.msra.mxu0 0.0
      %2769 = vmatprep.subr.mxu0 0.0
      %2770 = vmatpush1.msra.mxu0 0.0
      %2771 = vmatprep.subr.mxu0 0.0
      %2772 = vmatpush1.msra.mxu0 0.0
      %2773 = vmatprep.subr.mxu0 0.0
      %2774 = vmatpush1.msra.mxu0 0.0
      %2775 = vmatprep.subr.mxu0 0.0
      %2776 = vmatpush1.msra.mxu0 0.0
      %2777 = vmatprep.subr.mxu0 0.0
      %2778 = vmatpush1.msra.mxu0 0.0
      %2779 = vmatprep.subr.mxu0 0.0
      %2780 = vmatpush1.msra.mxu0 0.0
      %2781 = vmatprep.mubr.f32.mxu0 0.0
      %2782 = vmatmul.mubr.f32.gmra.mrb[0].mxu0 %v2581
      %v2783 = vpop.f32.mrb[0].mxu0
      %v2784 = vadd.f32 0.0, %v2783
      %v2785 = vpop.f32.mrb[0].mxu0
      %v2786 = vadd.f32 0.0, %v2785
      %2787 = vdwg.mxu0
      %v2788 = vld [vmem:[%s720] sm:$0xff]
      %v2789 = vld [vmem:[%s720 + $0x8] sm:$0xff]
      %v2790 = vld [vmem:[%s720 + $0x10] sm:$0xff]
      %v2791 = vld [vmem:[%s720 + $0x18] sm:$0xff]
      %v2792 = vld [vmem:[%s720 + $0x20] sm:$0xff]
      %v2793 = vld [vmem:[%s720 + $0x28] sm:$0xff]
      %v2794 = vld [vmem:[%s720 + $0x30] sm:$0xff]
      %v2795 = vld [vmem:[%s720 + $0x38] sm:$0xff]
      %v2796 = vld [vmem:[%s720 + $0x40] sm:$0xff]
      %v2797 = vld [vmem:[%s720 + $0x48] sm:$0xff]
      %v2798 = vld [vmem:[%s720 + $0x50] sm:$0xff]
      %v2799 = vld [vmem:[%s720 + $0x58] sm:$0xff]
      %v2800 = vld [vmem:[%s720 + $0x60] sm:$0xff]
      %v2801 = vld [vmem:[%s720 + $0x68] sm:$0xff]
      %v2802 = vld [vmem:[%s720 + $0x70] sm:$0xff]
      %v2803 = vld [vmem:[%s720 + $0x78] sm:$0xff]
      %v2804 = vld [vmem:[%s720 + $0x80] sm:$0xff]
      %v2805 = vld [vmem:[%s720 + $0x88] sm:$0xff]
      %v2806 = vld [vmem:[%s720 + $0x90] sm:$0xff]
      %v2807 = vld [vmem:[%s720 + $0x98] sm:$0xff]
      %v2808 = vld [vmem:[%s720 + $0xa0] sm:$0xff]
      %v2809 = vld [vmem:[%s720 + $0xa8] sm:$0xff]
      %v2810 = vld [vmem:[%s720 + $0xb0] sm:$0xff]
      %v2811 = vld [vmem:[%s720 + $0xb8] sm:$0xff]
      %v2812 = vld [vmem:[%s720 + $0xc0] sm:$0xff]
      %v2813 = vld [vmem:[%s720 + $0xc8] sm:$0xff]
      %v2814 = vld [vmem:[%s720 + $0xd0] sm:$0xff]
      %v2815 = vld [vmem:[%s720 + $0xd8] sm:$0xff]
      %v2816 = vld [vmem:[%s720 + $0xe0] sm:$0xff]
      %v2817 = vld [vmem:[%s720 + $0xe8] sm:$0xff]
      %v2818 = vld [vmem:[%s720 + $0xf0] sm:$0xff]
      %v2819 = vld [vmem:[%s720 + $0xf8] sm:$0xff]
      %v2820 = vld [vmem:[%s720 + $0x100] sm:$0xff]
      %v2821 = vld [vmem:[%s720 + $0x108] sm:$0xff]
      %v2822 = vld [vmem:[%s720 + $0x110] sm:$0xff]
      %v2823 = vld [vmem:[%s720 + $0x118] sm:$0xff]
      %v2824 = vld [vmem:[%s720 + $0x120] sm:$0xff]
      %v2825 = vld [vmem:[%s720 + $0x128] sm:$0xff]
      %v2826 = vld [vmem:[%s720 + $0x130] sm:$0xff]
      %v2827 = vld [vmem:[%s720 + $0x138] sm:$0xff]
      %v2828 = vld [vmem:[%s720 + $0x140] sm:$0xff]
      %v2829 = vld [vmem:[%s720 + $0x148] sm:$0xff]
      %v2830 = vld [vmem:[%s720 + $0x150] sm:$0xff]
      %v2831 = vld [vmem:[%s720 + $0x158] sm:$0xff]
      %v2832 = vld [vmem:[%s720 + $0x160] sm:$0xff]
      %v2833 = vld [vmem:[%s720 + $0x168] sm:$0xff]
      %v2834 = vld [vmem:[%s720 + $0x170] sm:$0xff]
      %v2835 = vld [vmem:[%s720 + $0x178] sm:$0xff]
      %v2836 = vld [vmem:[%s720 + $0x180] sm:$0xff]
      %v2837 = vld [vmem:[%s720 + $0x188] sm:$0xff]
      %v2838 = vld [vmem:[%s720 + $0x190] sm:$0xff]
      %v2839 = vld [vmem:[%s720 + $0x198] sm:$0xff]
      %v2840 = vld [vmem:[%s720 + $0x1a0] sm:$0xff]
      %v2841 = vld [vmem:[%s720 + $0x1a8] sm:$0xff]
      %v2842 = vld [vmem:[%s720 + $0x1b0] sm:$0xff]
      %v2843 = vld [vmem:[%s720 + $0x1b8] sm:$0xff]
      %v2844 = vld [vmem:[%s720 + $0x1c0] sm:$0xff]
      %v2845 = vld [vmem:[%s720 + $0x1c8] sm:$0xff]
      %v2846 = vld [vmem:[%s720 + $0x1d0] sm:$0xff]
      %v2847 = vld [vmem:[%s720 + $0x1d8] sm:$0xff]
      %v2848 = vld [vmem:[%s720 + $0x1e0] sm:$0xff]
      %v2849 = vld [vmem:[%s720 + $0x1e8] sm:$0xff]
      %v2850 = vld [vmem:[%s720 + $0x1f0] sm:$0xff]
      %v2851 = vld [vmem:[%s720 + $0x1f8] sm:$0xff]
      %2852 = vmatprep.subr.mxu0 %v2789
      %2853 = vmatpush1.msra.mxu0 %v2788
      %2854 = vmatprep.subr.mxu0 %v2793
      %2855 = vmatpush1.msra.mxu0 %v2792
      %2856 = vmatprep.subr.mxu0 %v2797
      %2857 = vmatpush1.msra.mxu0 %v2796
      %2858 = vmatprep.subr.mxu0 %v2801
      %2859 = vmatpush1.msra.mxu0 %v2800
      %2860 = vmatprep.subr.mxu0 %v2805
      %2861 = vmatpush1.msra.mxu0 %v2804
      %2862 = vmatprep.subr.mxu0 %v2809
      %2863 = vmatpush1.msra.mxu0 %v2808
      %2864 = vmatprep.subr.mxu0 %v2813
      %2865 = vmatpush1.msra.mxu0 %v2812
      %2866 = vmatprep.subr.mxu0 %v2817
      %2867 = vmatpush1.msra.mxu0 %v2816
      %2868 = vmatprep.subr.mxu0 %v2821
      %2869 = vmatpush1.msra.mxu0 %v2820
      %2870 = vmatprep.subr.mxu0 %v2825
      %2871 = vmatpush1.msra.mxu0 %v2824
      %2872 = vmatprep.subr.mxu0 %v2829
      %2873 = vmatpush1.msra.mxu0 %v2828
      %2874 = vmatprep.subr.mxu0 %v2833
      %2875 = vmatpush1.msra.mxu0 %v2832
      %2876 = vmatprep.subr.mxu0 %v2837
      %2877 = vmatpush1.msra.mxu0 %v2836
      %2878 = vmatprep.subr.mxu0 %v2841
      %2879 = vmatpush1.msra.mxu0 %v2840
      %2880 = vmatprep.subr.mxu0 %v2845
      %2881 = vmatpush1.msra.mxu0 %v2844
      %2882 = vmatprep.subr.mxu0 %v2849
      %2883 = vmatpush1.msra.mxu0 %v2848
      %2884 = vmatprep.subr.mxu0 0.0
      %2885 = vmatpush1.msra.mxu0 0.0
      %2886 = vmatprep.subr.mxu0 0.0
      %2887 = vmatpush1.msra.mxu0 0.0
      %2888 = vmatprep.subr.mxu0 0.0
      %2889 = vmatpush1.msra.mxu0 0.0
      %2890 = vmatprep.subr.mxu0 0.0
      %2891 = vmatpush1.msra.mxu0 0.0
      %2892 = vmatprep.subr.mxu0 0.0
      %2893 = vmatpush1.msra.mxu0 0.0
      %2894 = vmatprep.subr.mxu0 0.0
      %2895 = vmatpush1.msra.mxu0 0.0
      %2896 = vmatprep.subr.mxu0 0.0
      %2897 = vmatpush1.msra.mxu0 0.0
      %2898 = vmatprep.subr.mxu0 0.0
      %2899 = vmatpush1.msra.mxu0 0.0
      %2900 = vmatprep.subr.mxu0 0.0
      %2901 = vmatpush1.msra.mxu0 0.0
      %2902 = vmatprep.subr.mxu0 0.0
      %2903 = vmatpush1.msra.mxu0 0.0
      %2904 = vmatprep.subr.mxu0 0.0
      %2905 = vmatpush1.msra.mxu0 0.0
      %2906 = vmatprep.subr.mxu0 0.0
      %2907 = vmatpush1.msra.mxu0 0.0
      %2908 = vmatprep.subr.mxu0 0.0
      %2909 = vmatpush1.msra.mxu0 0.0
      %2910 = vmatprep.subr.mxu0 0.0
      %2911 = vmatpush1.msra.mxu0 0.0
      %2912 = vmatprep.subr.mxu0 0.0
      %2913 = vmatpush1.msra.mxu0 0.0
      %2914 = vmatprep.subr.mxu0 0.0
      %2915 = vmatpush1.msra.mxu0 0.0
      %2916 = vmatprep.mubr.f32.mxu0 0.0
      %2917 = vmatmul.mubr.f32.gmra.mrb[0].mxu0 %v2578
      %v2918 = vpop.f32.mrb[0].mxu0
      %v2919 = vadd.f32 %v2713, %v2918
      %v2920 = vpop.f32.mrb[0].mxu0
      %v2921 = vadd.f32 %v2715, %v2920
      %2922 = vdwg.mxu0
      %2923 = vmatprep.subr.mxu0 %v2791
      %2924 = vmatpush1.msra.mxu0 %v2790
      %2925 = vmatprep.subr.mxu0 %v2795
      %2926 = vmatpush1.msra.mxu0 %v2794
      %2927 = vmatprep.subr.mxu0 %v2799
      %2928 = vmatpush1.msra.mxu0 %v2798
      %2929 = vmatprep.subr.mxu0 %v2803
      %2930 = vmatpush1.msra.mxu0 %v2802
      %2931 = vmatprep.subr.mxu0 %v2807
      %2932 = vmatpush1.msra.mxu0 %v2806
      %2933 = vmatprep.subr.mxu0 %v2811
      %2934 = vmatpush1.msra.mxu0 %v2810
      %2935 = vmatprep.subr.mxu0 %v2815
      %2936 = vmatpush1.msra.mxu0 %v2814
      %2937 = vmatprep.subr.mxu0 %v2819
      %2938 = vmatpush1.msra.mxu0 %v2818
      %2939 = vmatprep.subr.mxu0 %v2823
      %2940 = vmatpush1.msra.mxu0 %v2822
      %2941 = vmatprep.subr.mxu0 %v2827
      %2942 = vmatpush1.msra.mxu0 %v2826
      %2943 = vmatprep.subr.mxu0 %v2831
      %2944 = vmatpush1.msra.mxu0 %v2830
      %2945 = vmatprep.subr.mxu0 %v2835
      %2946 = vmatpush1.msra.mxu0 %v2834
      %2947 = vmatprep.subr.mxu0 %v2839
      %2948 = vmatpush1.msra.mxu0 %v2838
      %2949 = vmatprep.subr.mxu0 %v2843
      %2950 = vmatpush1.msra.mxu0 %v2842
      %2951 = vmatprep.subr.mxu0 %v2847
      %2952 = vmatpush1.msra.mxu0 %v2846
      %2953 = vmatprep.subr.mxu0 %v2851
      %2954 = vmatpush1.msra.mxu0 %v2850
      %2955 = vmatprep.subr.mxu0 0.0
      %2956 = vmatpush1.msra.mxu0 0.0
      %2957 = vmatprep.subr.mxu0 0.0
      %2958 = vmatpush1.msra.mxu0 0.0
      %2959 = vmatprep.subr.mxu0 0.0
      %2960 = vmatpush1.msra.mxu0 0.0
      %2961 = vmatprep.subr.mxu0 0.0
      %2962 = vmatpush1.msra.mxu0 0.0
      %2963 = vmatprep.subr.mxu0 0.0
      %2964 = vmatpush1.msra.mxu0 0.0
      %2965 = vmatprep.subr.mxu0 0.0
      %2966 = vmatpush1.msra.mxu0 0.0
      %2967 = vmatprep.subr.mxu0 0.0
      %2968 = vmatpush1.msra.mxu0 0.0
      %2969 = vmatprep.subr.mxu0 0.0
      %2970 = vmatpush1.msra.mxu0 0.0
      %2971 = vmatprep.subr.mxu0 0.0
      %2972 = vmatpush1.msra.mxu0 0.0
      %2973 = vmatprep.subr.mxu0 0.0
      %2974 = vmatpush1.msra.mxu0 0.0
      %2975 = vmatprep.subr.mxu0 0.0
      %2976 = vmatpush1.msra.mxu0 0.0
      %2977 = vmatprep.subr.mxu0 0.0
      %2978 = vmatpush1.msra.mxu0 0.0
      %2979 = vmatprep.subr.mxu0 0.0
      %2980 = vmatpush1.msra.mxu0 0.0
      %2981 = vmatprep.subr.mxu0 0.0
      %2982 = vmatpush1.msra.mxu0 0.0
      %2983 = vmatprep.subr.mxu0 0.0
      %2984 = vmatpush1.msra.mxu0 0.0
      %2985 = vmatprep.subr.mxu0 0.0
      %2986 = vmatpush1.msra.mxu0 0.0
      %2987 = vmatprep.mubr.f32.mxu0 0.0
      %2988 = vmatmul.mubr.f32.gmra.mrb[0].mxu0 %v2578
      %v2989 = vpop.f32.mrb[0].mxu0
      %v2990 = vadd.f32 %v2784, %v2989
      %v2991 = vpop.f32.mrb[0].mxu0
      %v2992 = vadd.f32 %v2786, %v2991
      %2993 = vdwg.mxu0
      %v2994 = vadd.f32 %v2919, %v252
      %v2995 = vadd.f32 %v2921, %v256
      %v2996 = vadd.f32 %v2990, %v260
      %v2997 = vadd.f32 %v2992, %v264
      %v2998 = vxor.u32 %v2994, 2147483648
      %v2999 = vxor.u32 %v2995, 2147483648
      %v3000 = vxor.u32 %v2996, 2147483648
      %v3001 = vmul.f32 %v2998, 1.442695
      %v3002 = vpow.pop %v3001
      %v3003 = vmul.f32 %v2999, 1.442695
      %v3004 = vpow.pop %v3003
      %v3005 = vmul.f32 %v3000, 1.442695
      %v3006 = vpow.pop %v3005
      %v3007 = vadd.f32 %v3002, 1.0
      %v3008 = vadd.f32 %v3004, 1.0
      %v3009 = vadd.f32 %v3006, 1.0
      %v3010 = vrcp.pop %v3007
      %v3011 = vmul.f32 1.0, %v3010
      %v3012 = vrcp.pop %v3008
      %v3013 = vmul.f32 1.0, %v3012
      %v3014 = vrcp.pop %v3009
      %v3015 = vmul.f32 1.0, %v3014
      %v3016 = vtanh.pop %v2997
      %v3017 = vld [vmem:[%s950] sm:$0xff]
      %v3018 = vmul.f32 %v3013, %v3017
      %v3019 = vmul.f32 %v3011, %v3016
      %v3020 = vadd.f32 %v3018, %v3019
      %v3021 = vtanh.pop %v3020
      %v3022 = vmul.f32 %v3015, %v3021
      %3023 = vst [vmem:[%s511] sm:$0xff] %v3022
      %3024 = vst [vmem:[%s950] sm:$0xff] %v3020
      %s3025 = scalar_lea.vmem %s236, 24
      %3026 = vst [vmem:[%s3025] sm:$0xff] %v3022
      %v3027 = vld [vmem:[#allocation2] sm:$0xff]
      %v3028 = vld [vmem:[%s2] sm:$0xff]
      %v3029 = vld [vmem:[%s2 + $0x8] sm:$0xff]
      %v3030 = vld [vmem:[%s2 + $0x10] sm:$0xff]
      %v3031 = vld [vmem:[%s2 + $0x18] sm:$0xff]
      %v3032 = vld [vmem:[%s2 + $0x20] sm:$0xff]
      %v3033 = vld [vmem:[%s2 + $0x28] sm:$0xff]
      %v3034 = vld [vmem:[%s2 + $0x30] sm:$0xff]
      %v3035 = vld [vmem:[%s2 + $0x38] sm:$0xff]
      %v3036 = vld [vmem:[%s2 + $0x40] sm:$0xff]
      %v3037 = vld [vmem:[%s2 + $0x48] sm:$0xff]
      %v3038 = vld [vmem:[%s2 + $0x50] sm:$0xff]
      %v3039 = vld [vmem:[%s2 + $0x58] sm:$0xff]
      %v3040 = vld [vmem:[%s2 + $0x60] sm:$0xff]
      %v3041 = vld [vmem:[%s2 + $0x68] sm:$0xff]
      %v3042 = vld [vmem:[%s2 + $0x70] sm:$0xff]
      %v3043 = vld [vmem:[%s2 + $0x78] sm:$0xff]
      %v3044 = vld [vmem:[%s2 + $0x80] sm:$0xff]
      %v3045 = vld [vmem:[%s2 + $0x88] sm:$0xff]
      %v3046 = vld [vmem:[%s2 + $0x90] sm:$0xff]
      %v3047 = vld [vmem:[%s2 + $0x98] sm:$0xff]
      %v3048 = vld [vmem:[%s2 + $0xa0] sm:$0xff]
      %v3049 = vld [vmem:[%s2 + $0xa8] sm:$0xff]
      %v3050 = vld [vmem:[%s2 + $0xb0] sm:$0xff]
      %v3051 = vld [vmem:[%s2 + $0xb8] sm:$0xff]
      %v3052 = vld [vmem:[%s2 + $0xc0] sm:$0xff]
      %v3053 = vld [vmem:[%s2 + $0xc8] sm:$0xff]
      %v3054 = vld [vmem:[%s2 + $0xd0] sm:$0xff]
      %v3055 = vld [vmem:[%s2 + $0xd8] sm:$0xff]
      %v3056 = vld [vmem:[%s2 + $0xe0] sm:$0xff]
      %v3057 = vld [vmem:[%s2 + $0xe8] sm:$0xff]
      %v3058 = vld [vmem:[%s2 + $0xf0] sm:$0xff]
      %v3059 = vld [vmem:[%s2 + $0xf8] sm:$0xff]
      %v3060 = vld [vmem:[%s2 + $0x100] sm:$0xff]
      %v3061 = vld [vmem:[%s2 + $0x108] sm:$0xff]
      %v3062 = vld [vmem:[%s2 + $0x110] sm:$0xff]
      %v3063 = vld [vmem:[%s2 + $0x118] sm:$0xff]
      %v3064 = vld [vmem:[%s2 + $0x120] sm:$0xff]
      %v3065 = vld [vmem:[%s2 + $0x128] sm:$0xff]
      %v3066 = vld [vmem:[%s2 + $0x130] sm:$0xff]
      %v3067 = vld [vmem:[%s2 + $0x138] sm:$0xff]
      %v3068 = vld [vmem:[%s2 + $0x140] sm:$0xff]
      %v3069 = vld [vmem:[%s2 + $0x148] sm:$0xff]
      %v3070 = vld [vmem:[%s2 + $0x150] sm:$0xff]
      %v3071 = vld [vmem:[%s2 + $0x158] sm:$0xff]
      %v3072 = vld [vmem:[%s2 + $0x160] sm:$0xff]
      %v3073 = vld [vmem:[%s2 + $0x168] sm:$0xff]
      %v3074 = vld [vmem:[%s2 + $0x170] sm:$0xff]
      %v3075 = vld [vmem:[%s2 + $0x178] sm:$0xff]
      %v3076 = vld [vmem:[%s2 + $0x180] sm:$0xff]
      %v3077 = vld [vmem:[%s2 + $0x188] sm:$0xff]
      %v3078 = vld [vmem:[%s2 + $0x190] sm:$0xff]
      %v3079 = vld [vmem:[%s2 + $0x198] sm:$0xff]
      %v3080 = vld [vmem:[%s2 + $0x1a0] sm:$0xff]
      %v3081 = vld [vmem:[%s2 + $0x1a8] sm:$0xff]
      %v3082 = vld [vmem:[%s2 + $0x1b0] sm:$0xff]
      %v3083 = vld [vmem:[%s2 + $0x1b8] sm:$0xff]
      %v3084 = vld [vmem:[%s2 + $0x1c0] sm:$0xff]
      %v3085 = vld [vmem:[%s2 + $0x1c8] sm:$0xff]
      %v3086 = vld [vmem:[%s2 + $0x1d0] sm:$0xff]
      %v3087 = vld [vmem:[%s2 + $0x1d8] sm:$0xff]
      %v3088 = vld [vmem:[%s2 + $0x1e0] sm:$0xff]
      %v3089 = vld [vmem:[%s2 + $0x1e8] sm:$0xff]
      %v3090 = vld [vmem:[%s2 + $0x1f0] sm:$0xff]
      %v3091 = vld [vmem:[%s2 + $0x1f8] sm:$0xff]
      %3092 = vmatprep.subr.mxu0 %v3029
      %3093 = vmatpush1.msra.mxu0 %v3028
      %3094 = vmatprep.subr.mxu0 %v3033
      %3095 = vmatpush1.msra.mxu0 %v3032
      %3096 = vmatprep.subr.mxu0 %v3037
      %3097 = vmatpush1.msra.mxu0 %v3036
      %3098 = vmatprep.subr.mxu0 %v3041
      %3099 = vmatpush1.msra.mxu0 %v3040
      %3100 = vmatprep.subr.mxu0 %v3045
      %3101 = vmatpush1.msra.mxu0 %v3044
      %3102 = vmatprep.subr.mxu0 %v3049
      %3103 = vmatpush1.msra.mxu0 %v3048
      %3104 = vmatprep.subr.mxu0 %v3053
      %3105 = vmatpush1.msra.mxu0 %v3052
      %3106 = vmatprep.subr.mxu0 %v3057
      %3107 = vmatpush1.msra.mxu0 %v3056
      %3108 = vmatprep.subr.mxu0 %v3061
      %3109 = vmatpush1.msra.mxu0 %v3060
      %3110 = vmatprep.subr.mxu0 %v3065
      %3111 = vmatpush1.msra.mxu0 %v3064
      %3112 = vmatprep.subr.mxu0 %v3069
      %3113 = vmatpush1.msra.mxu0 %v3068
      %3114 = vmatprep.subr.mxu0 %v3073
      %3115 = vmatpush1.msra.mxu0 %v3072
      %3116 = vmatprep.subr.mxu0 %v3077
      %3117 = vmatpush1.msra.mxu0 %v3076
      %3118 = vmatprep.subr.mxu0 %v3081
      %3119 = vmatpush1.msra.mxu0 %v3080
      %3120 = vmatprep.subr.mxu0 %v3085
      %3121 = vmatpush1.msra.mxu0 %v3084
      %3122 = vmatprep.subr.mxu0 %v3089
      %3123 = vmatpush1.msra.mxu0 %v3088
      %3124 = vmatprep.subr.mxu0 0.0
      %3125 = vmatpush1.msra.mxu0 0.0
      %3126 = vmatprep.subr.mxu0 0.0
      %3127 = vmatpush1.msra.mxu0 0.0
      %3128 = vmatprep.subr.mxu0 0.0
      %3129 = vmatpush1.msra.mxu0 0.0
      %3130 = vmatprep.subr.mxu0 0.0
      %3131 = vmatpush1.msra.mxu0 0.0
      %3132 = vmatprep.subr.mxu0 0.0
      %3133 = vmatpush1.msra.mxu0 0.0
      %3134 = vmatprep.subr.mxu0 0.0
      %3135 = vmatpush1.msra.mxu0 0.0
      %3136 = vmatprep.subr.mxu0 0.0
      %3137 = vmatpush1.msra.mxu0 0.0
      %3138 = vmatprep.subr.mxu0 0.0
      %3139 = vmatpush1.msra.mxu0 0.0
      %3140 = vmatprep.subr.mxu0 0.0
      %3141 = vmatpush1.msra.mxu0 0.0
      %3142 = vmatprep.subr.mxu0 0.0
      %3143 = vmatpush1.msra.mxu0 0.0
      %3144 = vmatprep.subr.mxu0 0.0
      %3145 = vmatpush1.msra.mxu0 0.0
      %3146 = vmatprep.subr.mxu0 0.0
      %3147 = vmatpush1.msra.mxu0 0.0
      %3148 = vmatprep.subr.mxu0 0.0
      %3149 = vmatpush1.msra.mxu0 0.0
      %3150 = vmatprep.subr.mxu0 0.0
      %3151 = vmatpush1.msra.mxu0 0.0
      %3152 = vmatprep.subr.mxu0 0.0
      %3153 = vmatpush1.msra.mxu0 0.0
      %3154 = vmatprep.subr.mxu0 0.0
      %3155 = vmatpush1.msra.mxu0 0.0
      %3156 = vmatprep.mubr.f32.mxu0 0.0
      %3157 = vmatmul.mubr.f32.gmra.mrb[0].mxu0 %v3027
      %v3158 = vpop.f32.mrb[0].mxu0
      %v3159 = vadd.f32 0.0, %v3158
      %v3160 = vpop.f32.mrb[0].mxu0
      %v3161 = vadd.f32 0.0, %v3160
      %3162 = vdwg.mxu0
      %3163 = vmatprep.subr.mxu0 %v3031
      %3164 = vmatpush1.msra.mxu0 %v3030
      %3165 = vmatprep.subr.mxu0 %v3035
      %3166 = vmatpush1.msra.mxu0 %v3034
      %3167 = vmatprep.subr.mxu0 %v3039
      %3168 = vmatpush1.msra.mxu0 %v3038
      %3169 = vmatprep.subr.mxu0 %v3043
      %3170 = vmatpush1.msra.mxu0 %v3042
      %3171 = vmatprep.subr.mxu0 %v3047
      %3172 = vmatpush1.msra.mxu0 %v3046
      %3173 = vmatprep.subr.mxu0 %v3051
      %3174 = vmatpush1.msra.mxu0 %v3050
      %3175 = vmatprep.subr.mxu0 %v3055
      %3176 = vmatpush1.msra.mxu0 %v3054
      %3177 = vmatprep.subr.mxu0 %v3059
      %3178 = vmatpush1.msra.mxu0 %v3058
      %3179 = vmatprep.subr.mxu0 %v3063
      %3180 = vmatpush1.msra.mxu0 %v3062
      %3181 = vmatprep.subr.mxu0 %v3067
      %3182 = vmatpush1.msra.mxu0 %v3066
      %3183 = vmatprep.subr.mxu0 %v3071
      %3184 = vmatpush1.msra.mxu0 %v3070
      %3185 = vmatprep.subr.mxu0 %v3075
      %3186 = vmatpush1.msra.mxu0 %v3074
      %3187 = vmatprep.subr.mxu0 %v3079
      %3188 = vmatpush1.msra.mxu0 %v3078
      %3189 = vmatprep.subr.mxu0 %v3083
      %3190 = vmatpush1.msra.mxu0 %v3082
      %3191 = vmatprep.subr.mxu0 %v3087
      %3192 = vmatpush1.msra.mxu0 %v3086
      %3193 = vmatprep.subr.mxu0 %v3091
      %3194 = vmatpush1.msra.mxu0 %v3090
      %3195 = vmatprep.subr.mxu0 0.0
      %3196 = vmatpush1.msra.mxu0 0.0
      %3197 = vmatprep.subr.mxu0 0.0
      %3198 = vmatpush1.msra.mxu0 0.0
      %3199 = vmatprep.subr.mxu0 0.0
      %3200 = vmatpush1.msra.mxu0 0.0
      %3201 = vmatprep.subr.mxu0 0.0
      %3202 = vmatpush1.msra.mxu0 0.0
      %3203 = vmatprep.subr.mxu0 0.0
      %3204 = vmatpush1.msra.mxu0 0.0
      %3205 = vmatprep.subr.mxu0 0.0
      %3206 = vmatpush1.msra.mxu0 0.0
      %3207 = vmatprep.subr.mxu0 0.0
      %3208 = vmatpush1.msra.mxu0 0.0
      %3209 = vmatprep.subr.mxu0 0.0
      %3210 = vmatpush1.msra.mxu0 0.0
      %3211 = vmatprep.subr.mxu0 0.0
      %3212 = vmatpush1.msra.mxu0 0.0
      %3213 = vmatprep.subr.mxu0 0.0
      %3214 = vmatpush1.msra.mxu0 0.0
      %3215 = vmatprep.subr.mxu0 0.0
      %3216 = vmatpush1.msra.mxu0 0.0
      %3217 = vmatprep.subr.mxu0 0.0
      %3218 = vmatpush1.msra.mxu0 0.0
      %3219 = vmatprep.subr.mxu0 0.0
      %3220 = vmatpush1.msra.mxu0 0.0
      %3221 = vmatprep.subr.mxu0 0.0
      %3222 = vmatpush1.msra.mxu0 0.0
      %3223 = vmatprep.subr.mxu0 0.0
      %3224 = vmatpush1.msra.mxu0 0.0
      %3225 = vmatprep.subr.mxu0 0.0
      %3226 = vmatpush1.msra.mxu0 0.0
      %3227 = vmatprep.mubr.f32.mxu0 0.0
      %3228 = vmatmul.mubr.f32.gmra.mrb[0].mxu0 %v3027
      %v3229 = vpop.f32.mrb[0].mxu0
      %v3230 = vadd.f32 0.0, %v3229
      %v3231 = vpop.f32.mrb[0].mxu0
      %v3232 = vadd.f32 0.0, %v3231
      %3233 = vdwg.mxu0
      %s3234 = scalar_lea.vmem %s227, 128
      %v3235 = vld [vmem:[%s3234] sm:$0xff]
      %v3236 = vld [vmem:[%s3234 + $0x8] sm:$0xff]
      %v3237 = vld [vmem:[%s3234 + $0x10] sm:$0xff]
      %v3238 = vld [vmem:[%s3234 + $0x18] sm:$0xff]
      %v3239 = vadd.f32 %v3235, %v3159
      %v3240 = vadd.f32 %v3236, %v3161
      %v3241 = vadd.f32 %v3237, %v3230
      %v3242 = vadd.f32 %v3238, %v3232
      %v3243 = vxor.u32 %v3239, 2147483648
      %v3244 = vxor.u32 %v3240, 2147483648
      %v3245 = vxor.u32 %v3241, 2147483648
      %v3246 = vmul.f32 %v3243, 1.442695
      %v3247 = vpow.pop %v3246
      %v3248 = vmul.f32 %v3244, 1.442695
      %v3249 = vpow.pop %v3248
      %v3250 = vmul.f32 %v3245, 1.442695
      %v3251 = vpow.pop %v3250
      %v3252 = vadd.f32 %v3247, 1.0
      %v3253 = vadd.f32 %v3249, 1.0
      %v3254 = vadd.f32 %v3251, 1.0
      %v3255 = vrcp.pop %v3252
      %v3256 = vmul.f32 1.0, %v3255
      %v3257 = vrcp.pop %v3253
      %v3258 = vmul.f32 1.0, %v3257
      %v3259 = vrcp.pop %v3254
      %v3260 = vmul.f32 1.0, %v3259
      %v3261 = vtanh.pop %v3242
      %v3262 = vld [vmem:[#allocation3] sm:$0xff]
      %v3263 = vmul.f32 %v3258, %v3262
      %v3264 = vmul.f32 %v3256, %v3261
      %v3265 = vadd.f32 %v3263, %v3264
      %v3266 = vtanh.pop %v3265
      %v3267 = vmul.f32 %v3260, %v3266
      %3268 = vst [vmem:[#allocation2] sm:$0xff] %v3267
      %3269 = vst [vmem:[#allocation3] sm:$0xff] %v3265
      %v3270 = vld [vmem:[%s511] sm:$0xff]
      %v3271 = vld [vmem:[%s513] sm:$0xff]
      %v3272 = vld [vmem:[%s513 + $0x8] sm:$0xff]
      %v3273 = vld [vmem:[%s513 + $0x10] sm:$0xff]
      %v3274 = vld [vmem:[%s513 + $0x18] sm:$0xff]
      %v3275 = vld [vmem:[%s513 + $0x20] sm:$0xff]
      %v3276 = vld [vmem:[%s513 + $0x28] sm:$0xff]
      %v3277 = vld [vmem:[%s513 + $0x30] sm:$0xff]
      %v3278 = vld [vmem:[%s513 + $0x38] sm:$0xff]
      %v3279 = vld [vmem:[%s513 + $0x40] sm:$0xff]
      %v3280 = vld [vmem:[%s513 + $0x48] sm:$0xff]
      %v3281 = vld [vmem:[%s513 + $0x50] sm:$0xff]
      %v3282 = vld [vmem:[%s513 + $0x58] sm:$0xff]
      %v3283 = vld [vmem:[%s513 + $0x60] sm:$0xff]
      %v3284 = vld [vmem:[%s513 + $0x68] sm:$0xff]
      %v3285 = vld [vmem:[%s513 + $0x70] sm:$0xff]
      %v3286 = vld [vmem:[%s513 + $0x78] sm:$0xff]
      %v3287 = vld [vmem:[%s513 + $0x80] sm:$0xff]
      %v3288 = vld [vmem:[%s513 + $0x88] sm:$0xff]
      %v3289 = vld [vmem:[%s513 + $0x90] sm:$0xff]
      %v3290 = vld [vmem:[%s513 + $0x98] sm:$0xff]
      %v3291 = vld [vmem:[%s513 + $0xa0] sm:$0xff]
      %v3292 = vld [vmem:[%s513 + $0xa8] sm:$0xff]
      %v3293 = vld [vmem:[%s513 + $0xb0] sm:$0xff]
      %v3294 = vld [vmem:[%s513 + $0xb8] sm:$0xff]
      %v3295 = vld [vmem:[%s513 + $0xc0] sm:$0xff]
      %v3296 = vld [vmem:[%s513 + $0xc8] sm:$0xff]
      %v3297 = vld [vmem:[%s513 + $0xd0] sm:$0xff]
      %v3298 = vld [vmem:[%s513 + $0xd8] sm:$0xff]
      %v3299 = vld [vmem:[%s513 + $0xe0] sm:$0xff]
      %v3300 = vld [vmem:[%s513 + $0xe8] sm:$0xff]
      %v3301 = vld [vmem:[%s513 + $0xf0] sm:$0xff]
      %v3302 = vld [vmem:[%s513 + $0xf8] sm:$0xff]
      %v3303 = vld [vmem:[%s513 + $0x100] sm:$0xff]
      %v3304 = vld [vmem:[%s513 + $0x108] sm:$0xff]
      %v3305 = vld [vmem:[%s513 + $0x110] sm:$0xff]
      %v3306 = vld [vmem:[%s513 + $0x118] sm:$0xff]
      %v3307 = vld [vmem:[%s513 + $0x120] sm:$0xff]
      %v3308 = vld [vmem:[%s513 + $0x128] sm:$0xff]
      %v3309 = vld [vmem:[%s513 + $0x130] sm:$0xff]
      %v3310 = vld [vmem:[%s513 + $0x138] sm:$0xff]
      %v3311 = vld [vmem:[%s513 + $0x140] sm:$0xff]
      %v3312 = vld [vmem:[%s513 + $0x148] sm:$0xff]
      %v3313 = vld [vmem:[%s513 + $0x150] sm:$0xff]
      %v3314 = vld [vmem:[%s513 + $0x158] sm:$0xff]
      %v3315 = vld [vmem:[%s513 + $0x160] sm:$0xff]
      %v3316 = vld [vmem:[%s513 + $0x168] sm:$0xff]
      %v3317 = vld [vmem:[%s513 + $0x170] sm:$0xff]
      %v3318 = vld [vmem:[%s513 + $0x178] sm:$0xff]
      %v3319 = vld [vmem:[%s513 + $0x180] sm:$0xff]
      %v3320 = vld [vmem:[%s513 + $0x188] sm:$0xff]
      %v3321 = vld [vmem:[%s513 + $0x190] sm:$0xff]
      %v3322 = vld [vmem:[%s513 + $0x198] sm:$0xff]
      %v3323 = vld [vmem:[%s513 + $0x1a0] sm:$0xff]
      %v3324 = vld [vmem:[%s513 + $0x1a8] sm:$0xff]
      %v3325 = vld [vmem:[%s513 + $0x1b0] sm:$0xff]
      %v3326 = vld [vmem:[%s513 + $0x1b8] sm:$0xff]
      %v3327 = vld [vmem:[%s513 + $0x1c0] sm:$0xff]
      %v3328 = vld [vmem:[%s513 + $0x1c8] sm:$0xff]
      %v3329 = vld [vmem:[%s513 + $0x1d0] sm:$0xff]
      %v3330 = vld [vmem:[%s513 + $0x1d8] sm:$0xff]
      %v3331 = vld [vmem:[%s513 + $0x1e0] sm:$0xff]
      %v3332 = vld [vmem:[%s513 + $0x1e8] sm:$0xff]
      %v3333 = vld [vmem:[%s513 + $0x1f0] sm:$0xff]
      %v3334 = vld [vmem:[%s513 + $0x1f8] sm:$0xff]
      %3335 = vmatprep.subr.mxu0 %v3272
      %3336 = vmatpush1.msra.mxu0 %v3271
      %3337 = vmatprep.subr.mxu0 %v3276
      %3338 = vmatpush1.msra.mxu0 %v3275
      %3339 = vmatprep.subr.mxu0 %v3280
      %3340 = vmatpush1.msra.mxu0 %v3279
      %3341 = vmatprep.subr.mxu0 %v3284
      %3342 = vmatpush1.msra.mxu0 %v3283
      %3343 = vmatprep.subr.mxu0 %v3288
      %3344 = vmatpush1.msra.mxu0 %v3287
      %3345 = vmatprep.subr.mxu0 %v3292
      %3346 = vmatpush1.msra.mxu0 %v3291
      %3347 = vmatprep.subr.mxu0 %v3296
      %3348 = vmatpush1.msra.mxu0 %v3295
      %3349 = vmatprep.subr.mxu0 %v3300
      %3350 = vmatpush1.msra.mxu0 %v3299
      %3351 = vmatprep.subr.mxu0 %v3304
      %3352 = vmatpush1.msra.mxu0 %v3303
      %3353 = vmatprep.subr.mxu0 %v3308
      %3354 = vmatpush1.msra.mxu0 %v3307
      %3355 = vmatprep.subr.mxu0 %v3312
      %3356 = vmatpush1.msra.mxu0 %v3311
      %3357 = vmatprep.subr.mxu0 %v3316
      %3358 = vmatpush1.msra.mxu0 %v3315
      %3359 = vmatprep.subr.mxu0 %v3320
      %3360 = vmatpush1.msra.mxu0 %v3319
      %3361 = vmatprep.subr.mxu0 %v3324
      %3362 = vmatpush1.msra.mxu0 %v3323
      %3363 = vmatprep.subr.mxu0 %v3328
      %3364 = vmatpush1.msra.mxu0 %v3327
      %3365 = vmatprep.subr.mxu0 %v3332
      %3366 = vmatpush1.msra.mxu0 %v3331
      %3367 = vmatprep.subr.mxu0 0.0
      %3368 = vmatpush1.msra.mxu0 0.0
      %3369 = vmatprep.subr.mxu0 0.0
      %3370 = vmatpush1.msra.mxu0 0.0
      %3371 = vmatprep.subr.mxu0 0.0
      %3372 = vmatpush1.msra.mxu0 0.0
      %3373 = vmatprep.subr.mxu0 0.0
      %3374 = vmatpush1.msra.mxu0 0.0
      %3375 = vmatprep.subr.mxu0 0.0
      %3376 = vmatpush1.msra.mxu0 0.0
      %3377 = vmatprep.subr.mxu0 0.0
      %3378 = vmatpush1.msra.mxu0 0.0
      %3379 = vmatprep.subr.mxu0 0.0
      %3380 = vmatpush1.msra.mxu0 0.0
      %3381 = vmatprep.subr.mxu0 0.0
      %3382 = vmatpush1.msra.mxu0 0.0
      %3383 = vmatprep.subr.mxu0 0.0
      %3384 = vmatpush1.msra.mxu0 0.0
      %3385 = vmatprep.subr.mxu0 0.0
      %3386 = vmatpush1.msra.mxu0 0.0
      %3387 = vmatprep.subr.mxu0 0.0
      %3388 = vmatpush1.msra.mxu0 0.0
      %3389 = vmatprep.subr.mxu0 0.0
      %3390 = vmatpush1.msra.mxu0 0.0
      %3391 = vmatprep.subr.mxu0 0.0
      %3392 = vmatpush1.msra.mxu0 0.0
      %3393 = vmatprep.subr.mxu0 0.0
      %3394 = vmatpush1.msra.mxu0 0.0
      %3395 = vmatprep.subr.mxu0 0.0
      %3396 = vmatpush1.msra.mxu0 0.0
      %3397 = vmatprep.subr.mxu0 0.0
      %3398 = vmatpush1.msra.mxu0 0.0
      %3399 = vmatprep.mubr.f32.mxu0 0.0
      %3400 = vmatmul.mubr.f32.gmra.mrb[0].mxu0 %v3270
      %v3401 = vpop.f32.mrb[0].mxu0
      %v3402 = vadd.f32 0.0, %v3401
      %v3403 = vpop.f32.mrb[0].mxu0
      %v3404 = vadd.f32 0.0, %v3403
      %3405 = vdwg.mxu0
      %3406 = vmatprep.subr.mxu0 %v3274
      %3407 = vmatpush1.msra.mxu0 %v3273
      %3408 = vmatprep.subr.mxu0 %v3278
      %3409 = vmatpush1.msra.mxu0 %v3277
      %3410 = vmatprep.subr.mxu0 %v3282
      %3411 = vmatpush1.msra.mxu0 %v3281
      %3412 = vmatprep.subr.mxu0 %v3286
      %3413 = vmatpush1.msra.mxu0 %v3285
      %3414 = vmatprep.subr.mxu0 %v3290
      %3415 = vmatpush1.msra.mxu0 %v3289
      %3416 = vmatprep.subr.mxu0 %v3294
      %3417 = vmatpush1.msra.mxu0 %v3293
      %3418 = vmatprep.subr.mxu0 %v3298
      %3419 = vmatpush1.msra.mxu0 %v3297
      %3420 = vmatprep.subr.mxu0 %v3302
      %3421 = vmatpush1.msra.mxu0 %v3301
      %3422 = vmatprep.subr.mxu0 %v3306
      %3423 = vmatpush1.msra.mxu0 %v3305
      %3424 = vmatprep.subr.mxu0 %v3310
      %3425 = vmatpush1.msra.mxu0 %v3309
      %3426 = vmatprep.subr.mxu0 %v3314
      %3427 = vmatpush1.msra.mxu0 %v3313
      %3428 = vmatprep.subr.mxu0 %v3318
      %3429 = vmatpush1.msra.mxu0 %v3317
      %3430 = vmatprep.subr.mxu0 %v3322
      %3431 = vmatpush1.msra.mxu0 %v3321
      %3432 = vmatprep.subr.mxu0 %v3326
      %3433 = vmatpush1.msra.mxu0 %v3325
      %3434 = vmatprep.subr.mxu0 %v3330
      %3435 = vmatpush1.msra.mxu0 %v3329
      %3436 = vmatprep.subr.mxu0 %v3334
      %3437 = vmatpush1.msra.mxu0 %v3333
      %3438 = vmatprep.subr.mxu0 0.0
      %3439 = vmatpush1.msra.mxu0 0.0
      %3440 = vmatprep.subr.mxu0 0.0
      %3441 = vmatpush1.msra.mxu0 0.0
      %3442 = vmatprep.subr.mxu0 0.0
      %3443 = vmatpush1.msra.mxu0 0.0
      %3444 = vmatprep.subr.mxu0 0.0
      %3445 = vmatpush1.msra.mxu0 0.0
      %3446 = vmatprep.subr.mxu0 0.0
      %3447 = vmatpush1.msra.mxu0 0.0
      %3448 = vmatprep.subr.mxu0 0.0
      %3449 = vmatpush1.msra.mxu0 0.0
      %3450 = vmatprep.subr.mxu0 0.0
      %3451 = vmatpush1.msra.mxu0 0.0
      %3452 = vmatprep.subr.mxu0 0.0
      %3453 = vmatpush1.msra.mxu0 0.0
      %3454 = vmatprep.subr.mxu0 0.0
      %3455 = vmatpush1.msra.mxu0 0.0
      %3456 = vmatprep.subr.mxu0 0.0
      %3457 = vmatpush1.msra.mxu0 0.0
      %3458 = vmatprep.subr.mxu0 0.0
      %3459 = vmatpush1.msra.mxu0 0.0
      %3460 = vmatprep.subr.mxu0 0.0
      %3461 = vmatpush1.msra.mxu0 0.0
      %3462 = vmatprep.subr.mxu0 0.0
      %3463 = vmatpush1.msra.mxu0 0.0
      %3464 = vmatprep.subr.mxu0 0.0
      %3465 = vmatpush1.msra.mxu0 0.0
      %3466 = vmatprep.subr.mxu0 0.0
      %3467 = vmatpush1.msra.mxu0 0.0
      %3468 = vmatprep.subr.mxu0 0.0
      %3469 = vmatpush1.msra.mxu0 0.0
      %3470 = vmatprep.mubr.f32.mxu0 0.0
      %3471 = vmatmul.mubr.f32.gmra.mrb[0].mxu0 %v3270
      %v3472 = vpop.f32.mrb[0].mxu0
      %v3473 = vadd.f32 0.0, %v3472
      %v3474 = vpop.f32.mrb[0].mxu0
      %v3475 = vadd.f32 0.0, %v3474
      %3476 = vdwg.mxu0
      %v3477 = vld [vmem:[%s720] sm:$0xff]
      %v3478 = vld [vmem:[%s720 + $0x8] sm:$0xff]
      %v3479 = vld [vmem:[%s720 + $0x10] sm:$0xff]
      %v3480 = vld [vmem:[%s720 + $0x18] sm:$0xff]
      %v3481 = vld [vmem:[%s720 + $0x20] sm:$0xff]
      %v3482 = vld [vmem:[%s720 + $0x28] sm:$0xff]
      %v3483 = vld [vmem:[%s720 + $0x30] sm:$0xff]
      %v3484 = vld [vmem:[%s720 + $0x38] sm:$0xff]
      %v3485 = vld [vmem:[%s720 + $0x40] sm:$0xff]
      %v3486 = vld [vmem:[%s720 + $0x48] sm:$0xff]
      %v3487 = vld [vmem:[%s720 + $0x50] sm:$0xff]
      %v3488 = vld [vmem:[%s720 + $0x58] sm:$0xff]
      %v3489 = vld [vmem:[%s720 + $0x60] sm:$0xff]
      %v3490 = vld [vmem:[%s720 + $0x68] sm:$0xff]
      %v3491 = vld [vmem:[%s720 + $0x70] sm:$0xff]
      %v3492 = vld [vmem:[%s720 + $0x78] sm:$0xff]
      %v3493 = vld [vmem:[%s720 + $0x80] sm:$0xff]
      %v3494 = vld [vmem:[%s720 + $0x88] sm:$0xff]
      %v3495 = vld [vmem:[%s720 + $0x90] sm:$0xff]
      %v3496 = vld [vmem:[%s720 + $0x98] sm:$0xff]
      %v3497 = vld [vmem:[%s720 + $0xa0] sm:$0xff]
      %v3498 = vld [vmem:[%s720 + $0xa8] sm:$0xff]
      %v3499 = vld [vmem:[%s720 + $0xb0] sm:$0xff]
      %v3500 = vld [vmem:[%s720 + $0xb8] sm:$0xff]
      %v3501 = vld [vmem:[%s720 + $0xc0] sm:$0xff]
      %v3502 = vld [vmem:[%s720 + $0xc8] sm:$0xff]
      %v3503 = vld [vmem:[%s720 + $0xd0] sm:$0xff]
      %v3504 = vld [vmem:[%s720 + $0xd8] sm:$0xff]
      %v3505 = vld [vmem:[%s720 + $0xe0] sm:$0xff]
      %v3506 = vld [vmem:[%s720 + $0xe8] sm:$0xff]
      %v3507 = vld [vmem:[%s720 + $0xf0] sm:$0xff]
      %v3508 = vld [vmem:[%s720 + $0xf8] sm:$0xff]
      %v3509 = vld [vmem:[%s720 + $0x100] sm:$0xff]
      %v3510 = vld [vmem:[%s720 + $0x108] sm:$0xff]
      %v3511 = vld [vmem:[%s720 + $0x110] sm:$0xff]
      %v3512 = vld [vmem:[%s720 + $0x118] sm:$0xff]
      %v3513 = vld [vmem:[%s720 + $0x120] sm:$0xff]
      %v3514 = vld [vmem:[%s720 + $0x128] sm:$0xff]
      %v3515 = vld [vmem:[%s720 + $0x130] sm:$0xff]
      %v3516 = vld [vmem:[%s720 + $0x138] sm:$0xff]
      %v3517 = vld [vmem:[%s720 + $0x140] sm:$0xff]
      %v3518 = vld [vmem:[%s720 + $0x148] sm:$0xff]
      %v3519 = vld [vmem:[%s720 + $0x150] sm:$0xff]
      %v3520 = vld [vmem:[%s720 + $0x158] sm:$0xff]
      %v3521 = vld [vmem:[%s720 + $0x160] sm:$0xff]
      %v3522 = vld [vmem:[%s720 + $0x168] sm:$0xff]
      %v3523 = vld [vmem:[%s720 + $0x170] sm:$0xff]
      %v3524 = vld [vmem:[%s720 + $0x178] sm:$0xff]
      %v3525 = vld [vmem:[%s720 + $0x180] sm:$0xff]
      %v3526 = vld [vmem:[%s720 + $0x188] sm:$0xff]
      %v3527 = vld [vmem:[%s720 + $0x190] sm:$0xff]
      %v3528 = vld [vmem:[%s720 + $0x198] sm:$0xff]
      %v3529 = vld [vmem:[%s720 + $0x1a0] sm:$0xff]
      %v3530 = vld [vmem:[%s720 + $0x1a8] sm:$0xff]
      %v3531 = vld [vmem:[%s720 + $0x1b0] sm:$0xff]
      %v3532 = vld [vmem:[%s720 + $0x1b8] sm:$0xff]
      %v3533 = vld [vmem:[%s720 + $0x1c0] sm:$0xff]
      %v3534 = vld [vmem:[%s720 + $0x1c8] sm:$0xff]
      %v3535 = vld [vmem:[%s720 + $0x1d0] sm:$0xff]
      %v3536 = vld [vmem:[%s720 + $0x1d8] sm:$0xff]
      %v3537 = vld [vmem:[%s720 + $0x1e0] sm:$0xff]
      %v3538 = vld [vmem:[%s720 + $0x1e8] sm:$0xff]
      %v3539 = vld [vmem:[%s720 + $0x1f0] sm:$0xff]
      %v3540 = vld [vmem:[%s720 + $0x1f8] sm:$0xff]
      %3541 = vmatprep.subr.mxu0 %v3478
      %3542 = vmatpush1.msra.mxu0 %v3477
      %3543 = vmatprep.subr.mxu0 %v3482
      %3544 = vmatpush1.msra.mxu0 %v3481
      %3545 = vmatprep.subr.mxu0 %v3486
      %3546 = vmatpush1.msra.mxu0 %v3485
      %3547 = vmatprep.subr.mxu0 %v3490
      %3548 = vmatpush1.msra.mxu0 %v3489
      %3549 = vmatprep.subr.mxu0 %v3494
      %3550 = vmatpush1.msra.mxu0 %v3493
      %3551 = vmatprep.subr.mxu0 %v3498
      %3552 = vmatpush1.msra.mxu0 %v3497
      %3553 = vmatprep.subr.mxu0 %v3502
      %3554 = vmatpush1.msra.mxu0 %v3501
      %3555 = vmatprep.subr.mxu0 %v3506
      %3556 = vmatpush1.msra.mxu0 %v3505
      %3557 = vmatprep.subr.mxu0 %v3510
      %3558 = vmatpush1.msra.mxu0 %v3509
      %3559 = vmatprep.subr.mxu0 %v3514
      %3560 = vmatpush1.msra.mxu0 %v3513
      %3561 = vmatprep.subr.mxu0 %v3518
      %3562 = vmatpush1.msra.mxu0 %v3517
      %3563 = vmatprep.subr.mxu0 %v3522
      %3564 = vmatpush1.msra.mxu0 %v3521
      %3565 = vmatprep.subr.mxu0 %v3526
      %3566 = vmatpush1.msra.mxu0 %v3525
      %3567 = vmatprep.subr.mxu0 %v3530
      %3568 = vmatpush1.msra.mxu0 %v3529
      %3569 = vmatprep.subr.mxu0 %v3534
      %3570 = vmatpush1.msra.mxu0 %v3533
      %3571 = vmatprep.subr.mxu0 %v3538
      %3572 = vmatpush1.msra.mxu0 %v3537
      %3573 = vmatprep.subr.mxu0 0.0
      %3574 = vmatpush1.msra.mxu0 0.0
      %3575 = vmatprep.subr.mxu0 0.0
      %3576 = vmatpush1.msra.mxu0 0.0
      %3577 = vmatprep.subr.mxu0 0.0
      %3578 = vmatpush1.msra.mxu0 0.0
      %3579 = vmatprep.subr.mxu0 0.0
      %3580 = vmatpush1.msra.mxu0 0.0
      %3581 = vmatprep.subr.mxu0 0.0
      %3582 = vmatpush1.msra.mxu0 0.0
      %3583 = vmatprep.subr.mxu0 0.0
      %3584 = vmatpush1.msra.mxu0 0.0
      %3585 = vmatprep.subr.mxu0 0.0
      %3586 = vmatpush1.msra.mxu0 0.0
      %3587 = vmatprep.subr.mxu0 0.0
      %3588 = vmatpush1.msra.mxu0 0.0
      %3589 = vmatprep.subr.mxu0 0.0
      %3590 = vmatpush1.msra.mxu0 0.0
      %3591 = vmatprep.subr.mxu0 0.0
      %3592 = vmatpush1.msra.mxu0 0.0
      %3593 = vmatprep.subr.mxu0 0.0
      %3594 = vmatpush1.msra.mxu0 0.0
      %3595 = vmatprep.subr.mxu0 0.0
      %3596 = vmatpush1.msra.mxu0 0.0
      %3597 = vmatprep.subr.mxu0 0.0
      %3598 = vmatpush1.msra.mxu0 0.0
      %3599 = vmatprep.subr.mxu0 0.0
      %3600 = vmatpush1.msra.mxu0 0.0
      %3601 = vmatprep.subr.mxu0 0.0
      %3602 = vmatpush1.msra.mxu0 0.0
      %3603 = vmatprep.subr.mxu0 0.0
      %3604 = vmatpush1.msra.mxu0 0.0
      %3605 = vmatprep.mubr.f32.mxu0 0.0
      %3606 = vmatmul.mubr.f32.gmra.mrb[0].mxu0 %v3267
      %v3607 = vpop.f32.mrb[0].mxu0
      %v3608 = vadd.f32 %v3402, %v3607
      %v3609 = vpop.f32.mrb[0].mxu0
      %v3610 = vadd.f32 %v3404, %v3609
      %3611 = vdwg.mxu0
      %3612 = vmatprep.subr.mxu0 %v3480
      %3613 = vmatpush1.msra.mxu0 %v3479
      %3614 = vmatprep.subr.mxu0 %v3484
      %3615 = vmatpush1.msra.mxu0 %v3483
      %3616 = vmatprep.subr.mxu0 %v3488
      %3617 = vmatpush1.msra.mxu0 %v3487
      %3618 = vmatprep.subr.mxu0 %v3492
      %3619 = vmatpush1.msra.mxu0 %v3491
      %3620 = vmatprep.subr.mxu0 %v3496
      %3621 = vmatpush1.msra.mxu0 %v3495
      %3622 = vmatprep.subr.mxu0 %v3500
      %3623 = vmatpush1.msra.mxu0 %v3499
      %3624 = vmatprep.subr.mxu0 %v3504
      %3625 = vmatpush1.msra.mxu0 %v3503
      %3626 = vmatprep.subr.mxu0 %v3508
      %3627 = vmatpush1.msra.mxu0 %v3507
      %3628 = vmatprep.subr.mxu0 %v3512
      %3629 = vmatpush1.msra.mxu0 %v3511
      %3630 = vmatprep.subr.mxu0 %v3516
      %3631 = vmatpush1.msra.mxu0 %v3515
      %3632 = vmatprep.subr.mxu0 %v3520
      %3633 = vmatpush1.msra.mxu0 %v3519
      %3634 = vmatprep.subr.mxu0 %v3524
      %3635 = vmatpush1.msra.mxu0 %v3523
      %3636 = vmatprep.subr.mxu0 %v3528
      %3637 = vmatpush1.msra.mxu0 %v3527
      %3638 = vmatprep.subr.mxu0 %v3532
      %3639 = vmatpush1.msra.mxu0 %v3531
      %3640 = vmatprep.subr.mxu0 %v3536
      %3641 = vmatpush1.msra.mxu0 %v3535
      %3642 = vmatprep.subr.mxu0 %v3540
      %3643 = vmatpush1.msra.mxu0 %v3539
      %3644 = vmatprep.subr.mxu0 0.0
      %3645 = vmatpush1.msra.mxu0 0.0
      %3646 = vmatprep.subr.mxu0 0.0
      %3647 = vmatpush1.msra.mxu0 0.0
      %3648 = vmatprep.subr.mxu0 0.0
      %3649 = vmatpush1.msra.mxu0 0.0
      %3650 = vmatprep.subr.mxu0 0.0
      %3651 = vmatpush1.msra.mxu0 0.0
      %3652 = vmatprep.subr.mxu0 0.0
      %3653 = vmatpush1.msra.mxu0 0.0
      %3654 = vmatprep.subr.mxu0 0.0
      %3655 = vmatpush1.msra.mxu0 0.0
      %3656 = vmatprep.subr.mxu0 0.0
      %3657 = vmatpush1.msra.mxu0 0.0
      %3658 = vmatprep.subr.mxu0 0.0
      %3659 = vmatpush1.msra.mxu0 0.0
      %3660 = vmatprep.subr.mxu0 0.0
      %3661 = vmatpush1.msra.mxu0 0.0
      %3662 = vmatprep.subr.mxu0 0.0
      %3663 = vmatpush1.msra.mxu0 0.0
      %3664 = vmatprep.subr.mxu0 0.0
      %3665 = vmatpush1.msra.mxu0 0.0
      %3666 = vmatprep.subr.mxu0 0.0
      %3667 = vmatpush1.msra.mxu0 0.0
      %3668 = vmatprep.subr.mxu0 0.0
      %3669 = vmatpush1.msra.mxu0 0.0
      %3670 = vmatprep.subr.mxu0 0.0
      %3671 = vmatpush1.msra.mxu0 0.0
      %3672 = vmatprep.subr.mxu0 0.0
      %3673 = vmatpush1.msra.mxu0 0.0
      %3674 = vmatprep.subr.mxu0 0.0
      %3675 = vmatpush1.msra.mxu0 0.0
      %3676 = vmatprep.mubr.f32.mxu0 0.0
      %3677 = vmatmul.mubr.f32.gmra.mrb[0].mxu0 %v3267
      %v3678 = vpop.f32.mrb[0].mxu0
      %v3679 = vadd.f32 %v3473, %v3678
      %v3680 = vpop.f32.mrb[0].mxu0
      %v3681 = vadd.f32 %v3475, %v3680
      %3682 = vdwg.mxu0
      %v3683 = vadd.f32 %v3608, %v252
      %v3684 = vadd.f32 %v3610, %v256
      %v3685 = vadd.f32 %v3679, %v260
      %v3686 = vadd.f32 %v3681, %v264
      %v3687 = vxor.u32 %v3683, 2147483648
      %v3688 = vxor.u32 %v3684, 2147483648
      %v3689 = vxor.u32 %v3685, 2147483648
      %v3690 = vmul.f32 %v3687, 1.442695
      %v3691 = vpow.pop %v3690
      %v3692 = vmul.f32 %v3688, 1.442695
      %v3693 = vpow.pop %v3692
      %v3694 = vmul.f32 %v3689, 1.442695
      %v3695 = vpow.pop %v3694
      %v3696 = vadd.f32 %v3691, 1.0
      %v3697 = vadd.f32 %v3693, 1.0
      %v3698 = vadd.f32 %v3695, 1.0
      %v3699 = vrcp.pop %v3696
      %v3700 = vmul.f32 1.0, %v3699
      %v3701 = vrcp.pop %v3697
      %v3702 = vmul.f32 1.0, %v3701
      %v3703 = vrcp.pop %v3698
      %v3704 = vmul.f32 1.0, %v3703
      %v3705 = vtanh.pop %v3686
      %v3706 = vld [vmem:[%s950] sm:$0xff]
      %v3707 = vmul.f32 %v3702, %v3706
      %v3708 = vmul.f32 %v3700, %v3705
      %v3709 = vadd.f32 %v3707, %v3708
      %v3710 = vtanh.pop %v3709
      %v3711 = vmul.f32 %v3704, %v3710
      %3712 = vst [vmem:[%s511] sm:$0xff] %v3711
      %3713 = vst [vmem:[%s950] sm:$0xff] %v3709
      %s3714 = scalar_lea.vmem %s236, 32
      %3715 = vst [vmem:[%s3714] sm:$0xff] %v3711
      %v3716 = vld [vmem:[#allocation2] sm:$0xff]
      %v3717 = vld [vmem:[%s2] sm:$0xff]
      %v3718 = vld [vmem:[%s2 + $0x8] sm:$0xff]
      %v3719 = vld [vmem:[%s2 + $0x10] sm:$0xff]
      %v3720 = vld [vmem:[%s2 + $0x18] sm:$0xff]
      %v3721 = vld [vmem:[%s2 + $0x20] sm:$0xff]
      %v3722 = vld [vmem:[%s2 + $0x28] sm:$0xff]
      %v3723 = vld [vmem:[%s2 + $0x30] sm:$0xff]
      %v3724 = vld [vmem:[%s2 + $0x38] sm:$0xff]
      %v3725 = vld [vmem:[%s2 + $0x40] sm:$0xff]
      %v3726 = vld [vmem:[%s2 + $0x48] sm:$0xff]
      %v3727 = vld [vmem:[%s2 + $0x50] sm:$0xff]
      %v3728 = vld [vmem:[%s2 + $0x58] sm:$0xff]
      %v3729 = vld [vmem:[%s2 + $0x60] sm:$0xff]
      %v3730 = vld [vmem:[%s2 + $0x68] sm:$0xff]
      %v3731 = vld [vmem:[%s2 + $0x70] sm:$0xff]
      %v3732 = vld [vmem:[%s2 + $0x78] sm:$0xff]
      %v3733 = vld [vmem:[%s2 + $0x80] sm:$0xff]
      %v3734 = vld [vmem:[%s2 + $0x88] sm:$0xff]
      %v3735 = vld [vmem:[%s2 + $0x90] sm:$0xff]
      %v3736 = vld [vmem:[%s2 + $0x98] sm:$0xff]
      %v3737 = vld [vmem:[%s2 + $0xa0] sm:$0xff]
      %v3738 = vld [vmem:[%s2 + $0xa8] sm:$0xff]
      %v3739 = vld [vmem:[%s2 + $0xb0] sm:$0xff]
      %v3740 = vld [vmem:[%s2 + $0xb8] sm:$0xff]
      %v3741 = vld [vmem:[%s2 + $0xc0] sm:$0xff]
      %v3742 = vld [vmem:[%s2 + $0xc8] sm:$0xff]
      %v3743 = vld [vmem:[%s2 + $0xd0] sm:$0xff]
      %v3744 = vld [vmem:[%s2 + $0xd8] sm:$0xff]
      %v3745 = vld [vmem:[%s2 + $0xe0] sm:$0xff]
      %v3746 = vld [vmem:[%s2 + $0xe8] sm:$0xff]
      %v3747 = vld [vmem:[%s2 + $0xf0] sm:$0xff]
      %v3748 = vld [vmem:[%s2 + $0xf8] sm:$0xff]
      %v3749 = vld [vmem:[%s2 + $0x100] sm:$0xff]
      %v3750 = vld [vmem:[%s2 + $0x108] sm:$0xff]
      %v3751 = vld [vmem:[%s2 + $0x110] sm:$0xff]
      %v3752 = vld [vmem:[%s2 + $0x118] sm:$0xff]
      %v3753 = vld [vmem:[%s2 + $0x120] sm:$0xff]
      %v3754 = vld [vmem:[%s2 + $0x128] sm:$0xff]
      %v3755 = vld [vmem:[%s2 + $0x130] sm:$0xff]
      %v3756 = vld [vmem:[%s2 + $0x138] sm:$0xff]
      %v3757 = vld [vmem:[%s2 + $0x140] sm:$0xff]
      %v3758 = vld [vmem:[%s2 + $0x148] sm:$0xff]
      %v3759 = vld [vmem:[%s2 + $0x150] sm:$0xff]
      %v3760 = vld [vmem:[%s2 + $0x158] sm:$0xff]
      %v3761 = vld [vmem:[%s2 + $0x160] sm:$0xff]
      %v3762 = vld [vmem:[%s2 + $0x168] sm:$0xff]
      %v3763 = vld [vmem:[%s2 + $0x170] sm:$0xff]
      %v3764 = vld [vmem:[%s2 + $0x178] sm:$0xff]
      %v3765 = vld [vmem:[%s2 + $0x180] sm:$0xff]
      %v3766 = vld [vmem:[%s2 + $0x188] sm:$0xff]
      %v3767 = vld [vmem:[%s2 + $0x190] sm:$0xff]
      %v3768 = vld [vmem:[%s2 + $0x198] sm:$0xff]
      %v3769 = vld [vmem:[%s2 + $0x1a0] sm:$0xff]
      %v3770 = vld [vmem:[%s2 + $0x1a8] sm:$0xff]
      %v3771 = vld [vmem:[%s2 + $0x1b0] sm:$0xff]
      %v3772 = vld [vmem:[%s2 + $0x1b8] sm:$0xff]
      %v3773 = vld [vmem:[%s2 + $0x1c0] sm:$0xff]
      %v3774 = vld [vmem:[%s2 + $0x1c8] sm:$0xff]
      %v3775 = vld [vmem:[%s2 + $0x1d0] sm:$0xff]
      %v3776 = vld [vmem:[%s2 + $0x1d8] sm:$0xff]
      %v3777 = vld [vmem:[%s2 + $0x1e0] sm:$0xff]
      %v3778 = vld [vmem:[%s2 + $0x1e8] sm:$0xff]
      %v3779 = vld [vmem:[%s2 + $0x1f0] sm:$0xff]
      %v3780 = vld [vmem:[%s2 + $0x1f8] sm:$0xff]
      %3781 = vmatprep.subr.mxu0 %v3718
      %3782 = vmatpush1.msra.mxu0 %v3717
      %3783 = vmatprep.subr.mxu0 %v3722
      %3784 = vmatpush1.msra.mxu0 %v3721
      %3785 = vmatprep.subr.mxu0 %v3726
      %3786 = vmatpush1.msra.mxu0 %v3725
      %3787 = vmatprep.subr.mxu0 %v3730
      %3788 = vmatpush1.msra.mxu0 %v3729
      %3789 = vmatprep.subr.mxu0 %v3734
      %3790 = vmatpush1.msra.mxu0 %v3733
      %3791 = vmatprep.subr.mxu0 %v3738
      %3792 = vmatpush1.msra.mxu0 %v3737
      %3793 = vmatprep.subr.mxu0 %v3742
      %3794 = vmatpush1.msra.mxu0 %v3741
      %3795 = vmatprep.subr.mxu0 %v3746
      %3796 = vmatpush1.msra.mxu0 %v3745
      %3797 = vmatprep.subr.mxu0 %v3750
      %3798 = vmatpush1.msra.mxu0 %v3749
      %3799 = vmatprep.subr.mxu0 %v3754
      %3800 = vmatpush1.msra.mxu0 %v3753
      %3801 = vmatprep.subr.mxu0 %v3758
      %3802 = vmatpush1.msra.mxu0 %v3757
      %3803 = vmatprep.subr.mxu0 %v3762
      %3804 = vmatpush1.msra.mxu0 %v3761
      %3805 = vmatprep.subr.mxu0 %v3766
      %3806 = vmatpush1.msra.mxu0 %v3765
      %3807 = vmatprep.subr.mxu0 %v3770
      %3808 = vmatpush1.msra.mxu0 %v3769
      %3809 = vmatprep.subr.mxu0 %v3774
      %3810 = vmatpush1.msra.mxu0 %v3773
      %3811 = vmatprep.subr.mxu0 %v3778
      %3812 = vmatpush1.msra.mxu0 %v3777
      %3813 = vmatprep.subr.mxu0 0.0
      %3814 = vmatpush1.msra.mxu0 0.0
      %3815 = vmatprep.subr.mxu0 0.0
      %3816 = vmatpush1.msra.mxu0 0.0
      %3817 = vmatprep.subr.mxu0 0.0
      %3818 = vmatpush1.msra.mxu0 0.0
      %3819 = vmatprep.subr.mxu0 0.0
      %3820 = vmatpush1.msra.mxu0 0.0
      %3821 = vmatprep.subr.mxu0 0.0
      %3822 = vmatpush1.msra.mxu0 0.0
      %3823 = vmatprep.subr.mxu0 0.0
      %3824 = vmatpush1.msra.mxu0 0.0
      %3825 = vmatprep.subr.mxu0 0.0
      %3826 = vmatpush1.msra.mxu0 0.0
      %3827 = vmatprep.subr.mxu0 0.0
      %3828 = vmatpush1.msra.mxu0 0.0
      %3829 = vmatprep.subr.mxu0 0.0
      %3830 = vmatpush1.msra.mxu0 0.0
      %3831 = vmatprep.subr.mxu0 0.0
      %3832 = vmatpush1.msra.mxu0 0.0
      %3833 = vmatprep.subr.mxu0 0.0
      %3834 = vmatpush1.msra.mxu0 0.0
      %3835 = vmatprep.subr.mxu0 0.0
      %3836 = vmatpush1.msra.mxu0 0.0
      %3837 = vmatprep.subr.mxu0 0.0
      %3838 = vmatpush1.msra.mxu0 0.0
      %3839 = vmatprep.subr.mxu0 0.0
      %3840 = vmatpush1.msra.mxu0 0.0
      %3841 = vmatprep.subr.mxu0 0.0
      %3842 = vmatpush1.msra.mxu0 0.0
      %3843 = vmatprep.subr.mxu0 0.0
      %3844 = vmatpush1.msra.mxu0 0.0
      %3845 = vmatprep.mubr.f32.mxu0 0.0
      %3846 = vmatmul.mubr.f32.gmra.mrb[0].mxu0 %v3716
      %v3847 = vpop.f32.mrb[0].mxu0
      %v3848 = vadd.f32 0.0, %v3847
      %v3849 = vpop.f32.mrb[0].mxu0
      %v3850 = vadd.f32 0.0, %v3849
      %3851 = vdwg.mxu0
      %3852 = vmatprep.subr.mxu0 %v3720
      %3853 = vmatpush1.msra.mxu0 %v3719
      %3854 = vmatprep.subr.mxu0 %v3724
      %3855 = vmatpush1.msra.mxu0 %v3723
      %3856 = vmatprep.subr.mxu0 %v3728
      %3857 = vmatpush1.msra.mxu0 %v3727
      %3858 = vmatprep.subr.mxu0 %v3732
      %3859 = vmatpush1.msra.mxu0 %v3731
      %3860 = vmatprep.subr.mxu0 %v3736
      %3861 = vmatpush1.msra.mxu0 %v3735
      %3862 = vmatprep.subr.mxu0 %v3740
      %3863 = vmatpush1.msra.mxu0 %v3739
      %3864 = vmatprep.subr.mxu0 %v3744
      %3865 = vmatpush1.msra.mxu0 %v3743
      %3866 = vmatprep.subr.mxu0 %v3748
      %3867 = vmatpush1.msra.mxu0 %v3747
      %3868 = vmatprep.subr.mxu0 %v3752
      %3869 = vmatpush1.msra.mxu0 %v3751
      %3870 = vmatprep.subr.mxu0 %v3756
      %3871 = vmatpush1.msra.mxu0 %v3755
      %3872 = vmatprep.subr.mxu0 %v3760
      %3873 = vmatpush1.msra.mxu0 %v3759
      %3874 = vmatprep.subr.mxu0 %v3764
      %3875 = vmatpush1.msra.mxu0 %v3763
      %3876 = vmatprep.subr.mxu0 %v3768
      %3877 = vmatpush1.msra.mxu0 %v3767
      %3878 = vmatprep.subr.mxu0 %v3772
      %3879 = vmatpush1.msra.mxu0 %v3771
      %3880 = vmatprep.subr.mxu0 %v3776
      %3881 = vmatpush1.msra.mxu0 %v3775
      %3882 = vmatprep.subr.mxu0 %v3780
      %3883 = vmatpush1.msra.mxu0 %v3779
      %3884 = vmatprep.subr.mxu0 0.0
      %3885 = vmatpush1.msra.mxu0 0.0
      %3886 = vmatprep.subr.mxu0 0.0
      %3887 = vmatpush1.msra.mxu0 0.0
      %3888 = vmatprep.subr.mxu0 0.0
      %3889 = vmatpush1.msra.mxu0 0.0
      %3890 = vmatprep.subr.mxu0 0.0
      %3891 = vmatpush1.msra.mxu0 0.0
      %3892 = vmatprep.subr.mxu0 0.0
      %3893 = vmatpush1.msra.mxu0 0.0
      %3894 = vmatprep.subr.mxu0 0.0
      %3895 = vmatpush1.msra.mxu0 0.0
      %3896 = vmatprep.subr.mxu0 0.0
      %3897 = vmatpush1.msra.mxu0 0.0
      %3898 = vmatprep.subr.mxu0 0.0
      %3899 = vmatpush1.msra.mxu0 0.0
      %3900 = vmatprep.subr.mxu0 0.0
      %3901 = vmatpush1.msra.mxu0 0.0
      %3902 = vmatprep.subr.mxu0 0.0
      %3903 = vmatpush1.msra.mxu0 0.0
      %3904 = vmatprep.subr.mxu0 0.0
      %3905 = vmatpush1.msra.mxu0 0.0
      %3906 = vmatprep.subr.mxu0 0.0
      %3907 = vmatpush1.msra.mxu0 0.0
      %3908 = vmatprep.subr.mxu0 0.0
      %3909 = vmatpush1.msra.mxu0 0.0
      %3910 = vmatprep.subr.mxu0 0.0
      %3911 = vmatpush1.msra.mxu0 0.0
      %3912 = vmatprep.subr.mxu0 0.0
      %3913 = vmatpush1.msra.mxu0 0.0
      %3914 = vmatprep.subr.mxu0 0.0
      %3915 = vmatpush1.msra.mxu0 0.0
      %3916 = vmatprep.mubr.f32.mxu0 0.0
      %3917 = vmatmul.mubr.f32.gmra.mrb[0].mxu0 %v3716
      %v3918 = vpop.f32.mrb[0].mxu0
      %v3919 = vadd.f32 0.0, %v3918
      %v3920 = vpop.f32.mrb[0].mxu0
      %v3921 = vadd.f32 0.0, %v3920
      %3922 = vdwg.mxu0
      %s3923 = scalar_lea.vmem %s227, 160
      %v3924 = vld [vmem:[%s3923] sm:$0xff]
      %v3925 = vld [vmem:[%s3923 + $0x8] sm:$0xff]
      %v3926 = vld [vmem:[%s3923 + $0x10] sm:$0xff]
      %v3927 = vld [vmem:[%s3923 + $0x18] sm:$0xff]
      %v3928 = vadd.f32 %v3924, %v3848
      %v3929 = vadd.f32 %v3925, %v3850
      %v3930 = vadd.f32 %v3926, %v3919
      %v3931 = vadd.f32 %v3927, %v3921
      %v3932 = vxor.u32 %v3928, 2147483648
      %v3933 = vxor.u32 %v3929, 2147483648
      %v3934 = vxor.u32 %v3930, 2147483648
      %v3935 = vmul.f32 %v3932, 1.442695
      %v3936 = vpow.pop %v3935
      %v3937 = vmul.f32 %v3933, 1.442695
      %v3938 = vpow.pop %v3937
      %v3939 = vmul.f32 %v3934, 1.442695
      %v3940 = vpow.pop %v3939
      %v3941 = vadd.f32 %v3936, 1.0
      %v3942 = vadd.f32 %v3938, 1.0
      %v3943 = vadd.f32 %v3940, 1.0
      %v3944 = vrcp.pop %v3941
      %v3945 = vmul.f32 1.0, %v3944
      %v3946 = vrcp.pop %v3942
      %v3947 = vmul.f32 1.0, %v3946
      %v3948 = vrcp.pop %v3943
      %v3949 = vmul.f32 1.0, %v3948
      %v3950 = vtanh.pop %v3931
      %v3951 = vld [vmem:[#allocation3] sm:$0xff]
      %v3952 = vmul.f32 %v3947, %v3951
      %v3953 = vmul.f32 %v3945, %v3950
      %v3954 = vadd.f32 %v3952, %v3953
      %v3955 = vtanh.pop %v3954
      %v3956 = vmul.f32 %v3949, %v3955
      %3957 = vst [vmem:[#allocation2] sm:$0xff] %v3956
      %3958 = vst [vmem:[#allocation3] sm:$0xff] %v3954
      %v3959 = vld [vmem:[%s511] sm:$0xff]
      %v3960 = vld [vmem:[%s513] sm:$0xff]
      %v3961 = vld [vmem:[%s513 + $0x8] sm:$0xff]
      %v3962 = vld [vmem:[%s513 + $0x10] sm:$0xff]
      %v3963 = vld [vmem:[%s513 + $0x18] sm:$0xff]
      %v3964 = vld [vmem:[%s513 + $0x20] sm:$0xff]
      %v3965 = vld [vmem:[%s513 + $0x28] sm:$0xff]
      %v3966 = vld [vmem:[%s513 + $0x30] sm:$0xff]
      %v3967 = vld [vmem:[%s513 + $0x38] sm:$0xff]
      %v3968 = vld [vmem:[%s513 + $0x40] sm:$0xff]
      %v3969 = vld [vmem:[%s513 + $0x48] sm:$0xff]
      %v3970 = vld [vmem:[%s513 + $0x50] sm:$0xff]
      %v3971 = vld [vmem:[%s513 + $0x58] sm:$0xff]
      %v3972 = vld [vmem:[%s513 + $0x60] sm:$0xff]
      %v3973 = vld [vmem:[%s513 + $0x68] sm:$0xff]
      %v3974 = vld [vmem:[%s513 + $0x70] sm:$0xff]
      %v3975 = vld [vmem:[%s513 + $0x78] sm:$0xff]
      %v3976 = vld [vmem:[%s513 + $0x80] sm:$0xff]
      %v3977 = vld [vmem:[%s513 + $0x88] sm:$0xff]
      %v3978 = vld [vmem:[%s513 + $0x90] sm:$0xff]
      %v3979 = vld [vmem:[%s513 + $0x98] sm:$0xff]
      %v3980 = vld [vmem:[%s513 + $0xa0] sm:$0xff]
      %v3981 = vld [vmem:[%s513 + $0xa8] sm:$0xff]
      %v3982 = vld [vmem:[%s513 + $0xb0] sm:$0xff]
      %v3983 = vld [vmem:[%s513 + $0xb8] sm:$0xff]
      %v3984 = vld [vmem:[%s513 + $0xc0] sm:$0xff]
      %v3985 = vld [vmem:[%s513 + $0xc8] sm:$0xff]
      %v3986 = vld [vmem:[%s513 + $0xd0] sm:$0xff]
      %v3987 = vld [vmem:[%s513 + $0xd8] sm:$0xff]
      %v3988 = vld [vmem:[%s513 + $0xe0] sm:$0xff]
      %v3989 = vld [vmem:[%s513 + $0xe8] sm:$0xff]
      %v3990 = vld [vmem:[%s513 + $0xf0] sm:$0xff]
      %v3991 = vld [vmem:[%s513 + $0xf8] sm:$0xff]
      %v3992 = vld [vmem:[%s513 + $0x100] sm:$0xff]
      %v3993 = vld [vmem:[%s513 + $0x108] sm:$0xff]
      %v3994 = vld [vmem:[%s513 + $0x110] sm:$0xff]
      %v3995 = vld [vmem:[%s513 + $0x118] sm:$0xff]
      %v3996 = vld [vmem:[%s513 + $0x120] sm:$0xff]
      %v3997 = vld [vmem:[%s513 + $0x128] sm:$0xff]
      %v3998 = vld [vmem:[%s513 + $0x130] sm:$0xff]
      %v3999 = vld [vmem:[%s513 + $0x138] sm:$0xff]
      %v4000 = vld [vmem:[%s513 + $0x140] sm:$0xff]
      %v4001 = vld [vmem:[%s513 + $0x148] sm:$0xff]
      %v4002 = vld [vmem:[%s513 + $0x150] sm:$0xff]
      %v4003 = vld [vmem:[%s513 + $0x158] sm:$0xff]
      %v4004 = vld [vmem:[%s513 + $0x160] sm:$0xff]
      %v4005 = vld [vmem:[%s513 + $0x168] sm:$0xff]
      %v4006 = vld [vmem:[%s513 + $0x170] sm:$0xff]
      %v4007 = vld [vmem:[%s513 + $0x178] sm:$0xff]
      %v4008 = vld [vmem:[%s513 + $0x180] sm:$0xff]
      %v4009 = vld [vmem:[%s513 + $0x188] sm:$0xff]
      %v4010 = vld [vmem:[%s513 + $0x190] sm:$0xff]
      %v4011 = vld [vmem:[%s513 + $0x198] sm:$0xff]
      %v4012 = vld [vmem:[%s513 + $0x1a0] sm:$0xff]
      %v4013 = vld [vmem:[%s513 + $0x1a8] sm:$0xff]
      %v4014 = vld [vmem:[%s513 + $0x1b0] sm:$0xff]
      %v4015 = vld [vmem:[%s513 + $0x1b8] sm:$0xff]
      %v4016 = vld [vmem:[%s513 + $0x1c0] sm:$0xff]
      %v4017 = vld [vmem:[%s513 + $0x1c8] sm:$0xff]
      %v4018 = vld [vmem:[%s513 + $0x1d0] sm:$0xff]
      %v4019 = vld [vmem:[%s513 + $0x1d8] sm:$0xff]
      %v4020 = vld [vmem:[%s513 + $0x1e0] sm:$0xff]
      %v4021 = vld [vmem:[%s513 + $0x1e8] sm:$0xff]
      %v4022 = vld [vmem:[%s513 + $0x1f0] sm:$0xff]
      %v4023 = vld [vmem:[%s513 + $0x1f8] sm:$0xff]
      %4024 = vmatprep.subr.mxu0 %v3961
      %4025 = vmatpush1.msra.mxu0 %v3960
      %4026 = vmatprep.subr.mxu0 %v3965
      %4027 = vmatpush1.msra.mxu0 %v3964
      %4028 = vmatprep.subr.mxu0 %v3969
      %4029 = vmatpush1.msra.mxu0 %v3968
      %4030 = vmatprep.subr.mxu0 %v3973
      %4031 = vmatpush1.msra.mxu0 %v3972
      %4032 = vmatprep.subr.mxu0 %v3977
      %4033 = vmatpush1.msra.mxu0 %v3976
      %4034 = vmatprep.subr.mxu0 %v3981
      %4035 = vmatpush1.msra.mxu0 %v3980
      %4036 = vmatprep.subr.mxu0 %v3985
      %4037 = vmatpush1.msra.mxu0 %v3984
      %4038 = vmatprep.subr.mxu0 %v3989
      %4039 = vmatpush1.msra.mxu0 %v3988
      %4040 = vmatprep.subr.mxu0 %v3993
      %4041 = vmatpush1.msra.mxu0 %v3992
      %4042 = vmatprep.subr.mxu0 %v3997
      %4043 = vmatpush1.msra.mxu0 %v3996
      %4044 = vmatprep.subr.mxu0 %v4001
      %4045 = vmatpush1.msra.mxu0 %v4000
      %4046 = vmatprep.subr.mxu0 %v4005
      %4047 = vmatpush1.msra.mxu0 %v4004
      %4048 = vmatprep.subr.mxu0 %v4009
      %4049 = vmatpush1.msra.mxu0 %v4008
      %4050 = vmatprep.subr.mxu0 %v4013
      %4051 = vmatpush1.msra.mxu0 %v4012
      %4052 = vmatprep.subr.mxu0 %v4017
      %4053 = vmatpush1.msra.mxu0 %v4016
      %4054 = vmatprep.subr.mxu0 %v4021
      %4055 = vmatpush1.msra.mxu0 %v4020
      %4056 = vmatprep.subr.mxu0 0.0
      %4057 = vmatpush1.msra.mxu0 0.0
      %4058 = vmatprep.subr.mxu0 0.0
      %4059 = vmatpush1.msra.mxu0 0.0
      %4060 = vmatprep.subr.mxu0 0.0
      %4061 = vmatpush1.msra.mxu0 0.0
      %4062 = vmatprep.subr.mxu0 0.0
      %4063 = vmatpush1.msra.mxu0 0.0
      %4064 = vmatprep.subr.mxu0 0.0
      %4065 = vmatpush1.msra.mxu0 0.0
      %4066 = vmatprep.subr.mxu0 0.0
      %4067 = vmatpush1.msra.mxu0 0.0
      %4068 = vmatprep.subr.mxu0 0.0
      %4069 = vmatpush1.msra.mxu0 0.0
      %4070 = vmatprep.subr.mxu0 0.0
      %4071 = vmatpush1.msra.mxu0 0.0
      %4072 = vmatprep.subr.mxu0 0.0
      %4073 = vmatpush1.msra.mxu0 0.0
      %4074 = vmatprep.subr.mxu0 0.0
      %4075 = vmatpush1.msra.mxu0 0.0
      %4076 = vmatprep.subr.mxu0 0.0
      %4077 = vmatpush1.msra.mxu0 0.0
      %4078 = vmatprep.subr.mxu0 0.0
      %4079 = vmatpush1.msra.mxu0 0.0
      %4080 = vmatprep.subr.mxu0 0.0
      %4081 = vmatpush1.msra.mxu0 0.0
      %4082 = vmatprep.subr.mxu0 0.0
      %4083 = vmatpush1.msra.mxu0 0.0
      %4084 = vmatprep.subr.mxu0 0.0
      %4085 = vmatpush1.msra.mxu0 0.0
      %4086 = vmatprep.subr.mxu0 0.0
      %4087 = vmatpush1.msra.mxu0 0.0
      %4088 = vmatprep.mubr.f32.mxu0 0.0
      %4089 = vmatmul.mubr.f32.gmra.mrb[0].mxu0 %v3959
      %v4090 = vpop.f32.mrb[0].mxu0
      %v4091 = vadd.f32 0.0, %v4090
      %v4092 = vpop.f32.mrb[0].mxu0
      %v4093 = vadd.f32 0.0, %v4092
      %4094 = vdwg.mxu0
      %4095 = vmatprep.subr.mxu0 %v3963
      %4096 = vmatpush1.msra.mxu0 %v3962
      %4097 = vmatprep.subr.mxu0 %v3967
      %4098 = vmatpush1.msra.mxu0 %v3966
      %4099 = vmatprep.subr.mxu0 %v3971
      %4100 = vmatpush1.msra.mxu0 %v3970
      %4101 = vmatprep.subr.mxu0 %v3975
      %4102 = vmatpush1.msra.mxu0 %v3974
      %4103 = vmatprep.subr.mxu0 %v3979
      %4104 = vmatpush1.msra.mxu0 %v3978
      %4105 = vmatprep.subr.mxu0 %v3983
      %4106 = vmatpush1.msra.mxu0 %v3982
      %4107 = vmatprep.subr.mxu0 %v3987
      %4108 = vmatpush1.msra.mxu0 %v3986
      %4109 = vmatprep.subr.mxu0 %v3991
      %4110 = vmatpush1.msra.mxu0 %v3990
      %4111 = vmatprep.subr.mxu0 %v3995
      %4112 = vmatpush1.msra.mxu0 %v3994
      %4113 = vmatprep.subr.mxu0 %v3999
      %4114 = vmatpush1.msra.mxu0 %v3998
      %4115 = vmatprep.subr.mxu0 %v4003
      %4116 = vmatpush1.msra.mxu0 %v4002
      %4117 = vmatprep.subr.mxu0 %v4007
      %4118 = vmatpush1.msra.mxu0 %v4006
      %4119 = vmatprep.subr.mxu0 %v4011
      %4120 = vmatpush1.msra.mxu0 %v4010
      %4121 = vmatprep.subr.mxu0 %v4015
      %4122 = vmatpush1.msra.mxu0 %v4014
      %4123 = vmatprep.subr.mxu0 %v4019
      %4124 = vmatpush1.msra.mxu0 %v4018
      %4125 = vmatprep.subr.mxu0 %v4023
      %4126 = vmatpush1.msra.mxu0 %v4022
      %4127 = vmatprep.subr.mxu0 0.0
      %4128 = vmatpush1.msra.mxu0 0.0
      %4129 = vmatprep.subr.mxu0 0.0
      %4130 = vmatpush1.msra.mxu0 0.0
      %4131 = vmatprep.subr.mxu0 0.0
      %4132 = vmatpush1.msra.mxu0 0.0
      %4133 = vmatprep.subr.mxu0 0.0
      %4134 = vmatpush1.msra.mxu0 0.0
      %4135 = vmatprep.subr.mxu0 0.0
      %4136 = vmatpush1.msra.mxu0 0.0
      %4137 = vmatprep.subr.mxu0 0.0
      %4138 = vmatpush1.msra.mxu0 0.0
      %4139 = vmatprep.subr.mxu0 0.0
      %4140 = vmatpush1.msra.mxu0 0.0
      %4141 = vmatprep.subr.mxu0 0.0
      %4142 = vmatpush1.msra.mxu0 0.0
      %4143 = vmatprep.subr.mxu0 0.0
      %4144 = vmatpush1.msra.mxu0 0.0
      %4145 = vmatprep.subr.mxu0 0.0
      %4146 = vmatpush1.msra.mxu0 0.0
      %4147 = vmatprep.subr.mxu0 0.0
      %4148 = vmatpush1.msra.mxu0 0.0
      %4149 = vmatprep.subr.mxu0 0.0
      %4150 = vmatpush1.msra.mxu0 0.0
      %4151 = vmatprep.subr.mxu0 0.0
      %4152 = vmatpush1.msra.mxu0 0.0
      %4153 = vmatprep.subr.mxu0 0.0
      %4154 = vmatpush1.msra.mxu0 0.0
      %4155 = vmatprep.subr.mxu0 0.0
      %4156 = vmatpush1.msra.mxu0 0.0
      %4157 = vmatprep.subr.mxu0 0.0
      %4158 = vmatpush1.msra.mxu0 0.0
      %4159 = vmatprep.mubr.f32.mxu0 0.0
      %4160 = vmatmul.mubr.f32.gmra.mrb[0].mxu0 %v3959
      %v4161 = vpop.f32.mrb[0].mxu0
      %v4162 = vadd.f32 0.0, %v4161
      %v4163 = vpop.f32.mrb[0].mxu0
      %v4164 = vadd.f32 0.0, %v4163
      %4165 = vdwg.mxu0
      %v4166 = vld [vmem:[%s720] sm:$0xff]
      %v4167 = vld [vmem:[%s720 + $0x8] sm:$0xff]
      %v4168 = vld [vmem:[%s720 + $0x10] sm:$0xff]
      %v4169 = vld [vmem:[%s720 + $0x18] sm:$0xff]
      %v4170 = vld [vmem:[%s720 + $0x20] sm:$0xff]
      %v4171 = vld [vmem:[%s720 + $0x28] sm:$0xff]
      %v4172 = vld [vmem:[%s720 + $0x30] sm:$0xff]
      %v4173 = vld [vmem:[%s720 + $0x38] sm:$0xff]
      %v4174 = vld [vmem:[%s720 + $0x40] sm:$0xff]
      %v4175 = vld [vmem:[%s720 + $0x48] sm:$0xff]
      %v4176 = vld [vmem:[%s720 + $0x50] sm:$0xff]
      %v4177 = vld [vmem:[%s720 + $0x58] sm:$0xff]
      %v4178 = vld [vmem:[%s720 + $0x60] sm:$0xff]
      %v4179 = vld [vmem:[%s720 + $0x68] sm:$0xff]
      %v4180 = vld [vmem:[%s720 + $0x70] sm:$0xff]
      %v4181 = vld [vmem:[%s720 + $0x78] sm:$0xff]
      %v4182 = vld [vmem:[%s720 + $0x80] sm:$0xff]
      %v4183 = vld [vmem:[%s720 + $0x88] sm:$0xff]
      %v4184 = vld [vmem:[%s720 + $0x90] sm:$0xff]
      %v4185 = vld [vmem:[%s720 + $0x98] sm:$0xff]
      %v4186 = vld [vmem:[%s720 + $0xa0] sm:$0xff]
      %v4187 = vld [vmem:[%s720 + $0xa8] sm:$0xff]
      %v4188 = vld [vmem:[%s720 + $0xb0] sm:$0xff]
      %v4189 = vld [vmem:[%s720 + $0xb8] sm:$0xff]
      %v4190 = vld [vmem:[%s720 + $0xc0] sm:$0xff]
      %v4191 = vld [vmem:[%s720 + $0xc8] sm:$0xff]
      %v4192 = vld [vmem:[%s720 + $0xd0] sm:$0xff]
      %v4193 = vld [vmem:[%s720 + $0xd8] sm:$0xff]
      %v4194 = vld [vmem:[%s720 + $0xe0] sm:$0xff]
      %v4195 = vld [vmem:[%s720 + $0xe8] sm:$0xff]
      %v4196 = vld [vmem:[%s720 + $0xf0] sm:$0xff]
      %v4197 = vld [vmem:[%s720 + $0xf8] sm:$0xff]
      %v4198 = vld [vmem:[%s720 + $0x100] sm:$0xff]
      %v4199 = vld [vmem:[%s720 + $0x108] sm:$0xff]
      %v4200 = vld [vmem:[%s720 + $0x110] sm:$0xff]
      %v4201 = vld [vmem:[%s720 + $0x118] sm:$0xff]
      %v4202 = vld [vmem:[%s720 + $0x120] sm:$0xff]
      %v4203 = vld [vmem:[%s720 + $0x128] sm:$0xff]
      %v4204 = vld [vmem:[%s720 + $0x130] sm:$0xff]
      %v4205 = vld [vmem:[%s720 + $0x138] sm:$0xff]
      %v4206 = vld [vmem:[%s720 + $0x140] sm:$0xff]
      %v4207 = vld [vmem:[%s720 + $0x148] sm:$0xff]
      %v4208 = vld [vmem:[%s720 + $0x150] sm:$0xff]
      %v4209 = vld [vmem:[%s720 + $0x158] sm:$0xff]
      %v4210 = vld [vmem:[%s720 + $0x160] sm:$0xff]
      %v4211 = vld [vmem:[%s720 + $0x168] sm:$0xff]
      %v4212 = vld [vmem:[%s720 + $0x170] sm:$0xff]
      %v4213 = vld [vmem:[%s720 + $0x178] sm:$0xff]
      %v4214 = vld [vmem:[%s720 + $0x180] sm:$0xff]
      %v4215 = vld [vmem:[%s720 + $0x188] sm:$0xff]
      %v4216 = vld [vmem:[%s720 + $0x190] sm:$0xff]
      %v4217 = vld [vmem:[%s720 + $0x198] sm:$0xff]
      %v4218 = vld [vmem:[%s720 + $0x1a0] sm:$0xff]
      %v4219 = vld [vmem:[%s720 + $0x1a8] sm:$0xff]
      %v4220 = vld [vmem:[%s720 + $0x1b0] sm:$0xff]
      %v4221 = vld [vmem:[%s720 + $0x1b8] sm:$0xff]
      %v4222 = vld [vmem:[%s720 + $0x1c0] sm:$0xff]
      %v4223 = vld [vmem:[%s720 + $0x1c8] sm:$0xff]
      %v4224 = vld [vmem:[%s720 + $0x1d0] sm:$0xff]
      %v4225 = vld [vmem:[%s720 + $0x1d8] sm:$0xff]
      %v4226 = vld [vmem:[%s720 + $0x1e0] sm:$0xff]
      %v4227 = vld [vmem:[%s720 + $0x1e8] sm:$0xff]
      %v4228 = vld [vmem:[%s720 + $0x1f0] sm:$0xff]
      %v4229 = vld [vmem:[%s720 + $0x1f8] sm:$0xff]
      %4230 = vmatprep.subr.mxu0 %v4167
      %4231 = vmatpush1.msra.mxu0 %v4166
      %4232 = vmatprep.subr.mxu0 %v4171
      %4233 = vmatpush1.msra.mxu0 %v4170
      %4234 = vmatprep.subr.mxu0 %v4175
      %4235 = vmatpush1.msra.mxu0 %v4174
      %4236 = vmatprep.subr.mxu0 %v4179
      %4237 = vmatpush1.msra.mxu0 %v4178
      %4238 = vmatprep.subr.mxu0 %v4183
      %4239 = vmatpush1.msra.mxu0 %v4182
      %4240 = vmatprep.subr.mxu0 %v4187
      %4241 = vmatpush1.msra.mxu0 %v4186
      %4242 = vmatprep.subr.mxu0 %v4191
      %4243 = vmatpush1.msra.mxu0 %v4190
      %4244 = vmatprep.subr.mxu0 %v4195
      %4245 = vmatpush1.msra.mxu0 %v4194
      %4246 = vmatprep.subr.mxu0 %v4199
      %4247 = vmatpush1.msra.mxu0 %v4198
      %4248 = vmatprep.subr.mxu0 %v4203
      %4249 = vmatpush1.msra.mxu0 %v4202
      %4250 = vmatprep.subr.mxu0 %v4207
      %4251 = vmatpush1.msra.mxu0 %v4206
      %4252 = vmatprep.subr.mxu0 %v4211
      %4253 = vmatpush1.msra.mxu0 %v4210
      %4254 = vmatprep.subr.mxu0 %v4215
      %4255 = vmatpush1.msra.mxu0 %v4214
      %4256 = vmatprep.subr.mxu0 %v4219
      %4257 = vmatpush1.msra.mxu0 %v4218
      %4258 = vmatprep.subr.mxu0 %v4223
      %4259 = vmatpush1.msra.mxu0 %v4222
      %4260 = vmatprep.subr.mxu0 %v4227
      %4261 = vmatpush1.msra.mxu0 %v4226
      %4262 = vmatprep.subr.mxu0 0.0
      %4263 = vmatpush1.msra.mxu0 0.0
      %4264 = vmatprep.subr.mxu0 0.0
      %4265 = vmatpush1.msra.mxu0 0.0
      %4266 = vmatprep.subr.mxu0 0.0
      %4267 = vmatpush1.msra.mxu0 0.0
      %4268 = vmatprep.subr.mxu0 0.0
      %4269 = vmatpush1.msra.mxu0 0.0
      %4270 = vmatprep.subr.mxu0 0.0
      %4271 = vmatpush1.msra.mxu0 0.0
      %4272 = vmatprep.subr.mxu0 0.0
      %4273 = vmatpush1.msra.mxu0 0.0
      %4274 = vmatprep.subr.mxu0 0.0
      %4275 = vmatpush1.msra.mxu0 0.0
      %4276 = vmatprep.subr.mxu0 0.0
      %4277 = vmatpush1.msra.mxu0 0.0
      %4278 = vmatprep.subr.mxu0 0.0
      %4279 = vmatpush1.msra.mxu0 0.0
      %4280 = vmatprep.subr.mxu0 0.0
      %4281 = vmatpush1.msra.mxu0 0.0
      %4282 = vmatprep.subr.mxu0 0.0
      %4283 = vmatpush1.msra.mxu0 0.0
      %4284 = vmatprep.subr.mxu0 0.0
      %4285 = vmatpush1.msra.mxu0 0.0
      %4286 = vmatprep.subr.mxu0 0.0
      %4287 = vmatpush1.msra.mxu0 0.0
      %4288 = vmatprep.subr.mxu0 0.0
      %4289 = vmatpush1.msra.mxu0 0.0
      %4290 = vmatprep.subr.mxu0 0.0
      %4291 = vmatpush1.msra.mxu0 0.0
      %4292 = vmatprep.subr.mxu0 0.0
      %4293 = vmatpush1.msra.mxu0 0.0
      %4294 = vmatprep.mubr.f32.mxu0 0.0
      %4295 = vmatmul.mubr.f32.gmra.mrb[0].mxu0 %v3956
      %v4296 = vpop.f32.mrb[0].mxu0
      %v4297 = vadd.f32 %v4091, %v4296
      %v4298 = vpop.f32.mrb[0].mxu0
      %v4299 = vadd.f32 %v4093, %v4298
      %4300 = vdwg.mxu0
      %4301 = vmatprep.subr.mxu0 %v4169
      %4302 = vmatpush1.msra.mxu0 %v4168
      %4303 = vmatprep.subr.mxu0 %v4173
      %4304 = vmatpush1.msra.mxu0 %v4172
      %4305 = vmatprep.subr.mxu0 %v4177
      %4306 = vmatpush1.msra.mxu0 %v4176
      %4307 = vmatprep.subr.mxu0 %v4181
      %4308 = vmatpush1.msra.mxu0 %v4180
      %4309 = vmatprep.subr.mxu0 %v4185
      %4310 = vmatpush1.msra.mxu0 %v4184
      %4311 = vmatprep.subr.mxu0 %v4189
      %4312 = vmatpush1.msra.mxu0 %v4188
      %4313 = vmatprep.subr.mxu0 %v4193
      %4314 = vmatpush1.msra.mxu0 %v4192
      %4315 = vmatprep.subr.mxu0 %v4197
      %4316 = vmatpush1.msra.mxu0 %v4196
      %4317 = vmatprep.subr.mxu0 %v4201
      %4318 = vmatpush1.msra.mxu0 %v4200
      %4319 = vmatprep.subr.mxu0 %v4205
      %4320 = vmatpush1.msra.mxu0 %v4204
      %4321 = vmatprep.subr.mxu0 %v4209
      %4322 = vmatpush1.msra.mxu0 %v4208
      %4323 = vmatprep.subr.mxu0 %v4213
      %4324 = vmatpush1.msra.mxu0 %v4212
      %4325 = vmatprep.subr.mxu0 %v4217
      %4326 = vmatpush1.msra.mxu0 %v4216
      %4327 = vmatprep.subr.mxu0 %v4221
      %4328 = vmatpush1.msra.mxu0 %v4220
      %4329 = vmatprep.subr.mxu0 %v4225
      %4330 = vmatpush1.msra.mxu0 %v4224
      %4331 = vmatprep.subr.mxu0 %v4229
      %4332 = vmatpush1.msra.mxu0 %v4228
      %4333 = vmatprep.subr.mxu0 0.0
      %4334 = vmatpush1.msra.mxu0 0.0
      %4335 = vmatprep.subr.mxu0 0.0
      %4336 = vmatpush1.msra.mxu0 0.0
      %4337 = vmatprep.subr.mxu0 0.0
      %4338 = vmatpush1.msra.mxu0 0.0
      %4339 = vmatprep.subr.mxu0 0.0
      %4340 = vmatpush1.msra.mxu0 0.0
      %4341 = vmatprep.subr.mxu0 0.0
      %4342 = vmatpush1.msra.mxu0 0.0
      %4343 = vmatprep.subr.mxu0 0.0
      %4344 = vmatpush1.msra.mxu0 0.0
      %4345 = vmatprep.subr.mxu0 0.0
      %4346 = vmatpush1.msra.mxu0 0.0
      %4347 = vmatprep.subr.mxu0 0.0
      %4348 = vmatpush1.msra.mxu0 0.0
      %4349 = vmatprep.subr.mxu0 0.0
      %4350 = vmatpush1.msra.mxu0 0.0
      %4351 = vmatprep.subr.mxu0 0.0
      %4352 = vmatpush1.msra.mxu0 0.0
      %4353 = vmatprep.subr.mxu0 0.0
      %4354 = vmatpush1.msra.mxu0 0.0
      %4355 = vmatprep.subr.mxu0 0.0
      %4356 = vmatpush1.msra.mxu0 0.0
      %4357 = vmatprep.subr.mxu0 0.0
      %4358 = vmatpush1.msra.mxu0 0.0
      %4359 = vmatprep.subr.mxu0 0.0
      %4360 = vmatpush1.msra.mxu0 0.0
      %4361 = vmatprep.subr.mxu0 0.0
      %4362 = vmatpush1.msra.mxu0 0.0
      %4363 = vmatprep.subr.mxu0 0.0
      %4364 = vmatpush1.msra.mxu0 0.0
      %4365 = vmatprep.mubr.f32.mxu0 0.0
      %4366 = vmatmul.mubr.f32.gmra.mrb[0].mxu0 %v3956
      %v4367 = vpop.f32.mrb[0].mxu0
      %v4368 = vadd.f32 %v4162, %v4367
      %v4369 = vpop.f32.mrb[0].mxu0
      %v4370 = vadd.f32 %v4164, %v4369
      %4371 = vdwg.mxu0
      %v4372 = vadd.f32 %v4297, %v252
      %v4373 = vadd.f32 %v4299, %v256
      %v4374 = vadd.f32 %v4368, %v260
      %v4375 = vadd.f32 %v4370, %v264
      %v4376 = vxor.u32 %v4372, 2147483648
      %v4377 = vxor.u32 %v4373, 2147483648
      %v4378 = vxor.u32 %v4374, 2147483648
      %v4379 = vmul.f32 %v4376, 1.442695
      %v4380 = vpow.pop %v4379
      %v4381 = vmul.f32 %v4377, 1.442695
      %v4382 = vpow.pop %v4381
      %v4383 = vmul.f32 %v4378, 1.442695
      %v4384 = vpow.pop %v4383
      %v4385 = vadd.f32 %v4380, 1.0
      %v4386 = vadd.f32 %v4382, 1.0
      %v4387 = vadd.f32 %v4384, 1.0
      %v4388 = vrcp.pop %v4385
      %v4389 = vmul.f32 1.0, %v4388
      %v4390 = vrcp.pop %v4386
      %v4391 = vmul.f32 1.0, %v4390
      %v4392 = vrcp.pop %v4387
      %v4393 = vmul.f32 1.0, %v4392
      %v4394 = vtanh.pop %v4375
      %v4395 = vld [vmem:[%s950] sm:$0xff]
      %v4396 = vmul.f32 %v4391, %v4395
      %v4397 = vmul.f32 %v4389, %v4394
      %v4398 = vadd.f32 %v4396, %v4397
      %v4399 = vtanh.pop %v4398
      %v4400 = vmul.f32 %v4393, %v4399
      %4401 = vst [vmem:[%s511] sm:$0xff] %v4400
      %4402 = vst [vmem:[%s950] sm:$0xff] %v4398
      %s4403 = scalar_lea.vmem %s236, 40
      %4404 = vst [vmem:[%s4403] sm:$0xff] %v4400
      %v4405 = vld [vmem:[#allocation2] sm:$0xff]
      %v4406 = vld [vmem:[%s2] sm:$0xff]
      %v4407 = vld [vmem:[%s2 + $0x8] sm:$0xff]
      %v4408 = vld [vmem:[%s2 + $0x10] sm:$0xff]
      %v4409 = vld [vmem:[%s2 + $0x18] sm:$0xff]
      %v4410 = vld [vmem:[%s2 + $0x20] sm:$0xff]
      %v4411 = vld [vmem:[%s2 + $0x28] sm:$0xff]
      %v4412 = vld [vmem:[%s2 + $0x30] sm:$0xff]
      %v4413 = vld [vmem:[%s2 + $0x38] sm:$0xff]
      %v4414 = vld [vmem:[%s2 + $0x40] sm:$0xff]
      %v4415 = vld [vmem:[%s2 + $0x48] sm:$0xff]
      %v4416 = vld [vmem:[%s2 + $0x50] sm:$0xff]
      %v4417 = vld [vmem:[%s2 + $0x58] sm:$0xff]
      %v4418 = vld [vmem:[%s2 + $0x60] sm:$0xff]
      %v4419 = vld [vmem:[%s2 + $0x68] sm:$0xff]
      %v4420 = vld [vmem:[%s2 + $0x70] sm:$0xff]
      %v4421 = vld [vmem:[%s2 + $0x78] sm:$0xff]
      %v4422 = vld [vmem:[%s2 + $0x80] sm:$0xff]
      %v4423 = vld [vmem:[%s2 + $0x88] sm:$0xff]
      %v4424 = vld [vmem:[%s2 + $0x90] sm:$0xff]
      %v4425 = vld [vmem:[%s2 + $0x98] sm:$0xff]
      %v4426 = vld [vmem:[%s2 + $0xa0] sm:$0xff]
      %v4427 = vld [vmem:[%s2 + $0xa8] sm:$0xff]
      %v4428 = vld [vmem:[%s2 + $0xb0] sm:$0xff]
      %v4429 = vld [vmem:[%s2 + $0xb8] sm:$0xff]
      %v4430 = vld [vmem:[%s2 + $0xc0] sm:$0xff]
      %v4431 = vld [vmem:[%s2 + $0xc8] sm:$0xff]
      %v4432 = vld [vmem:[%s2 + $0xd0] sm:$0xff]
      %v4433 = vld [vmem:[%s2 + $0xd8] sm:$0xff]
      %v4434 = vld [vmem:[%s2 + $0xe0] sm:$0xff]
      %v4435 = vld [vmem:[%s2 + $0xe8] sm:$0xff]
      %v4436 = vld [vmem:[%s2 + $0xf0] sm:$0xff]
      %v4437 = vld [vmem:[%s2 + $0xf8] sm:$0xff]
      %v4438 = vld [vmem:[%s2 + $0x100] sm:$0xff]
      %v4439 = vld [vmem:[%s2 + $0x108] sm:$0xff]
      %v4440 = vld [vmem:[%s2 + $0x110] sm:$0xff]
      %v4441 = vld [vmem:[%s2 + $0x118] sm:$0xff]
      %v4442 = vld [vmem:[%s2 + $0x120] sm:$0xff]
      %v4443 = vld [vmem:[%s2 + $0x128] sm:$0xff]
      %v4444 = vld [vmem:[%s2 + $0x130] sm:$0xff]
      %v4445 = vld [vmem:[%s2 + $0x138] sm:$0xff]
      %v4446 = vld [vmem:[%s2 + $0x140] sm:$0xff]
      %v4447 = vld [vmem:[%s2 + $0x148] sm:$0xff]
      %v4448 = vld [vmem:[%s2 + $0x150] sm:$0xff]
      %v4449 = vld [vmem:[%s2 + $0x158] sm:$0xff]
      %v4450 = vld [vmem:[%s2 + $0x160] sm:$0xff]
      %v4451 = vld [vmem:[%s2 + $0x168] sm:$0xff]
      %v4452 = vld [vmem:[%s2 + $0x170] sm:$0xff]
      %v4453 = vld [vmem:[%s2 + $0x178] sm:$0xff]
      %v4454 = vld [vmem:[%s2 + $0x180] sm:$0xff]
      %v4455 = vld [vmem:[%s2 + $0x188] sm:$0xff]
      %v4456 = vld [vmem:[%s2 + $0x190] sm:$0xff]
      %v4457 = vld [vmem:[%s2 + $0x198] sm:$0xff]
      %v4458 = vld [vmem:[%s2 + $0x1a0] sm:$0xff]
      %v4459 = vld [vmem:[%s2 + $0x1a8] sm:$0xff]
      %v4460 = vld [vmem:[%s2 + $0x1b0] sm:$0xff]
      %v4461 = vld [vmem:[%s2 + $0x1b8] sm:$0xff]
      %v4462 = vld [vmem:[%s2 + $0x1c0] sm:$0xff]
      %v4463 = vld [vmem:[%s2 + $0x1c8] sm:$0xff]
      %v4464 = vld [vmem:[%s2 + $0x1d0] sm:$0xff]
      %v4465 = vld [vmem:[%s2 + $0x1d8] sm:$0xff]
      %v4466 = vld [vmem:[%s2 + $0x1e0] sm:$0xff]
      %v4467 = vld [vmem:[%s2 + $0x1e8] sm:$0xff]
      %v4468 = vld [vmem:[%s2 + $0x1f0] sm:$0xff]
      %v4469 = vld [vmem:[%s2 + $0x1f8] sm:$0xff]
      %4470 = vmatprep.subr.mxu0 %v4407
      %4471 = vmatpush1.msra.mxu0 %v4406
      %4472 = vmatprep.subr.mxu0 %v4411
      %4473 = vmatpush1.msra.mxu0 %v4410
      %4474 = vmatprep.subr.mxu0 %v4415
      %4475 = vmatpush1.msra.mxu0 %v4414
      %4476 = vmatprep.subr.mxu0 %v4419
      %4477 = vmatpush1.msra.mxu0 %v4418
      %4478 = vmatprep.subr.mxu0 %v4423
      %4479 = vmatpush1.msra.mxu0 %v4422
      %4480 = vmatprep.subr.mxu0 %v4427
      %4481 = vmatpush1.msra.mxu0 %v4426
      %4482 = vmatprep.subr.mxu0 %v4431
      %4483 = vmatpush1.msra.mxu0 %v4430
      %4484 = vmatprep.subr.mxu0 %v4435
      %4485 = vmatpush1.msra.mxu0 %v4434
      %4486 = vmatprep.subr.mxu0 %v4439
      %4487 = vmatpush1.msra.mxu0 %v4438
      %4488 = vmatprep.subr.mxu0 %v4443
      %4489 = vmatpush1.msra.mxu0 %v4442
      %4490 = vmatprep.subr.mxu0 %v4447
      %4491 = vmatpush1.msra.mxu0 %v4446
      %4492 = vmatprep.subr.mxu0 %v4451
      %4493 = vmatpush1.msra.mxu0 %v4450
      %4494 = vmatprep.subr.mxu0 %v4455
      %4495 = vmatpush1.msra.mxu0 %v4454
      %4496 = vmatprep.subr.mxu0 %v4459
      %4497 = vmatpush1.msra.mxu0 %v4458
      %4498 = vmatprep.subr.mxu0 %v4463
      %4499 = vmatpush1.msra.mxu0 %v4462
      %4500 = vmatprep.subr.mxu0 %v4467
      %4501 = vmatpush1.msra.mxu0 %v4466
      %4502 = vmatprep.subr.mxu0 0.0
      %4503 = vmatpush1.msra.mxu0 0.0
      %4504 = vmatprep.subr.mxu0 0.0
      %4505 = vmatpush1.msra.mxu0 0.0
      %4506 = vmatprep.subr.mxu0 0.0
      %4507 = vmatpush1.msra.mxu0 0.0
      %4508 = vmatprep.subr.mxu0 0.0
      %4509 = vmatpush1.msra.mxu0 0.0
      %4510 = vmatprep.subr.mxu0 0.0
      %4511 = vmatpush1.msra.mxu0 0.0
      %4512 = vmatprep.subr.mxu0 0.0
      %4513 = vmatpush1.msra.mxu0 0.0
      %4514 = vmatprep.subr.mxu0 0.0
      %4515 = vmatpush1.msra.mxu0 0.0
      %4516 = vmatprep.subr.mxu0 0.0
      %4517 = vmatpush1.msra.mxu0 0.0
      %4518 = vmatprep.subr.mxu0 0.0
      %4519 = vmatpush1.msra.mxu0 0.0
      %4520 = vmatprep.subr.mxu0 0.0
      %4521 = vmatpush1.msra.mxu0 0.0
      %4522 = vmatprep.subr.mxu0 0.0
      %4523 = vmatpush1.msra.mxu0 0.0
      %4524 = vmatprep.subr.mxu0 0.0
      %4525 = vmatpush1.msra.mxu0 0.0
      %4526 = vmatprep.subr.mxu0 0.0
      %4527 = vmatpush1.msra.mxu0 0.0
      %4528 = vmatprep.subr.mxu0 0.0
      %4529 = vmatpush1.msra.mxu0 0.0
      %4530 = vmatprep.subr.mxu0 0.0
      %4531 = vmatpush1.msra.mxu0 0.0
      %4532 = vmatprep.subr.mxu0 0.0
      %4533 = vmatpush1.msra.mxu0 0.0
      %4534 = vmatprep.mubr.f32.mxu0 0.0
      %4535 = vmatmul.mubr.f32.gmra.mrb[0].mxu0 %v4405
      %v4536 = vpop.f32.mrb[0].mxu0
      %v4537 = vadd.f32 0.0, %v4536
      %v4538 = vpop.f32.mrb[0].mxu0
      %v4539 = vadd.f32 0.0, %v4538
      %4540 = vdwg.mxu0
      %4541 = vmatprep.subr.mxu0 %v4409
      %4542 = vmatpush1.msra.mxu0 %v4408
      %4543 = vmatprep.subr.mxu0 %v4413
      %4544 = vmatpush1.msra.mxu0 %v4412
      %4545 = vmatprep.subr.mxu0 %v4417
      %4546 = vmatpush1.msra.mxu0 %v4416
      %4547 = vmatprep.subr.mxu0 %v4421
      %4548 = vmatpush1.msra.mxu0 %v4420
      %4549 = vmatprep.subr.mxu0 %v4425
      %4550 = vmatpush1.msra.mxu0 %v4424
      %4551 = vmatprep.subr.mxu0 %v4429
      %4552 = vmatpush1.msra.mxu0 %v4428
      %4553 = vmatprep.subr.mxu0 %v4433
      %4554 = vmatpush1.msra.mxu0 %v4432
      %4555 = vmatprep.subr.mxu0 %v4437
      %4556 = vmatpush1.msra.mxu0 %v4436
      %4557 = vmatprep.subr.mxu0 %v4441
      %4558 = vmatpush1.msra.mxu0 %v4440
      %4559 = vmatprep.subr.mxu0 %v4445
      %4560 = vmatpush1.msra.mxu0 %v4444
      %4561 = vmatprep.subr.mxu0 %v4449
      %4562 = vmatpush1.msra.mxu0 %v4448
      %4563 = vmatprep.subr.mxu0 %v4453
      %4564 = vmatpush1.msra.mxu0 %v4452
      %4565 = vmatprep.subr.mxu0 %v4457
      %4566 = vmatpush1.msra.mxu0 %v4456
      %4567 = vmatprep.subr.mxu0 %v4461
      %4568 = vmatpush1.msra.mxu0 %v4460
      %4569 = vmatprep.subr.mxu0 %v4465
      %4570 = vmatpush1.msra.mxu0 %v4464
      %4571 = vmatprep.subr.mxu0 %v4469
      %4572 = vmatpush1.msra.mxu0 %v4468
      %4573 = vmatprep.subr.mxu0 0.0
      %4574 = vmatpush1.msra.mxu0 0.0
      %4575 = vmatprep.subr.mxu0 0.0
      %4576 = vmatpush1.msra.mxu0 0.0
      %4577 = vmatprep.subr.mxu0 0.0
      %4578 = vmatpush1.msra.mxu0 0.0
      %4579 = vmatprep.subr.mxu0 0.0
      %4580 = vmatpush1.msra.mxu0 0.0
      %4581 = vmatprep.subr.mxu0 0.0
      %4582 = vmatpush1.msra.mxu0 0.0
      %4583 = vmatprep.subr.mxu0 0.0
      %4584 = vmatpush1.msra.mxu0 0.0
      %4585 = vmatprep.subr.mxu0 0.0
      %4586 = vmatpush1.msra.mxu0 0.0
      %4587 = vmatprep.subr.mxu0 0.0
      %4588 = vmatpush1.msra.mxu0 0.0
      %4589 = vmatprep.subr.mxu0 0.0
      %4590 = vmatpush1.msra.mxu0 0.0
      %4591 = vmatprep.subr.mxu0 0.0
      %4592 = vmatpush1.msra.mxu0 0.0
      %4593 = vmatprep.subr.mxu0 0.0
      %4594 = vmatpush1.msra.mxu0 0.0
      %4595 = vmatprep.subr.mxu0 0.0
      %4596 = vmatpush1.msra.mxu0 0.0
      %4597 = vmatprep.subr.mxu0 0.0
      %4598 = vmatpush1.msra.mxu0 0.0
      %4599 = vmatprep.subr.mxu0 0.0
      %4600 = vmatpush1.msra.mxu0 0.0
      %4601 = vmatprep.subr.mxu0 0.0
      %4602 = vmatpush1.msra.mxu0 0.0
      %4603 = vmatprep.subr.mxu0 0.0
      %4604 = vmatpush1.msra.mxu0 0.0
      %4605 = vmatprep.mubr.f32.mxu0 0.0
      %4606 = vmatmul.mubr.f32.gmra.mrb[0].mxu0 %v4405
      %v4607 = vpop.f32.mrb[0].mxu0
      %v4608 = vadd.f32 0.0, %v4607
      %v4609 = vpop.f32.mrb[0].mxu0
      %v4610 = vadd.f32 0.0, %v4609
      %4611 = vdwg.mxu0
      %s4612 = scalar_lea.vmem %s227, 192
      %v4613 = vld [vmem:[%s4612] sm:$0xff]
      %v4614 = vld [vmem:[%s4612 + $0x8] sm:$0xff]
      %v4615 = vld [vmem:[%s4612 + $0x10] sm:$0xff]
      %v4616 = vld [vmem:[%s4612 + $0x18] sm:$0xff]
      %v4617 = vadd.f32 %v4613, %v4537
      %v4618 = vadd.f32 %v4614, %v4539
      %v4619 = vadd.f32 %v4615, %v4608
      %v4620 = vadd.f32 %v4616, %v4610
      %v4621 = vxor.u32 %v4617, 2147483648
      %v4622 = vxor.u32 %v4618, 2147483648
      %v4623 = vxor.u32 %v4619, 2147483648
      %v4624 = vmul.f32 %v4621, 1.442695
      %v4625 = vpow.pop %v4624
      %v4626 = vmul.f32 %v4622, 1.442695
      %v4627 = vpow.pop %v4626
      %v4628 = vmul.f32 %v4623, 1.442695
      %v4629 = vpow.pop %v4628
      %v4630 = vadd.f32 %v4625, 1.0
      %v4631 = vadd.f32 %v4627, 1.0
      %v4632 = vadd.f32 %v4629, 1.0
      %v4633 = vrcp.pop %v4630
      %v4634 = vmul.f32 1.0, %v4633
      %v4635 = vrcp.pop %v4631
      %v4636 = vmul.f32 1.0, %v4635
      %v4637 = vrcp.pop %v4632
      %v4638 = vmul.f32 1.0, %v4637
      %v4639 = vtanh.pop %v4620
      %v4640 = vld [vmem:[#allocation3] sm:$0xff]
      %v4641 = vmul.f32 %v4636, %v4640
      %v4642 = vmul.f32 %v4634, %v4639
      %v4643 = vadd.f32 %v4641, %v4642
      %v4644 = vtanh.pop %v4643
      %v4645 = vmul.f32 %v4638, %v4644
      %4646 = vst [vmem:[#allocation2] sm:$0xff] %v4645
      %4647 = vst [vmem:[#allocation3] sm:$0xff] %v4643
      %v4648 = vld [vmem:[%s511] sm:$0xff]
      %v4649 = vld [vmem:[%s513] sm:$0xff]
      %v4650 = vld [vmem:[%s513 + $0x8] sm:$0xff]
      %v4651 = vld [vmem:[%s513 + $0x10] sm:$0xff]
      %v4652 = vld [vmem:[%s513 + $0x18] sm:$0xff]
      %v4653 = vld [vmem:[%s513 + $0x20] sm:$0xff]
      %v4654 = vld [vmem:[%s513 + $0x28] sm:$0xff]
      %v4655 = vld [vmem:[%s513 + $0x30] sm:$0xff]
      %v4656 = vld [vmem:[%s513 + $0x38] sm:$0xff]
      %v4657 = vld [vmem:[%s513 + $0x40] sm:$0xff]
      %v4658 = vld [vmem:[%s513 + $0x48] sm:$0xff]
      %v4659 = vld [vmem:[%s513 + $0x50] sm:$0xff]
      %v4660 = vld [vmem:[%s513 + $0x58] sm:$0xff]
      %v4661 = vld [vmem:[%s513 + $0x60] sm:$0xff]
      %v4662 = vld [vmem:[%s513 + $0x68] sm:$0xff]
      %v4663 = vld [vmem:[%s513 + $0x70] sm:$0xff]
      %v4664 = vld [vmem:[%s513 + $0x78] sm:$0xff]
      %v4665 = vld [vmem:[%s513 + $0x80] sm:$0xff]
      %v4666 = vld [vmem:[%s513 + $0x88] sm:$0xff]
      %v4667 = vld [vmem:[%s513 + $0x90] sm:$0xff]
      %v4668 = vld [vmem:[%s513 + $0x98] sm:$0xff]
      %v4669 = vld [vmem:[%s513 + $0xa0] sm:$0xff]
      %v4670 = vld [vmem:[%s513 + $0xa8] sm:$0xff]
      %v4671 = vld [vmem:[%s513 + $0xb0] sm:$0xff]
      %v4672 = vld [vmem:[%s513 + $0xb8] sm:$0xff]
      %v4673 = vld [vmem:[%s513 + $0xc0] sm:$0xff]
      %v4674 = vld [vmem:[%s513 + $0xc8] sm:$0xff]
      %v4675 = vld [vmem:[%s513 + $0xd0] sm:$0xff]
      %v4676 = vld [vmem:[%s513 + $0xd8] sm:$0xff]
      %v4677 = vld [vmem:[%s513 + $0xe0] sm:$0xff]
      %v4678 = vld [vmem:[%s513 + $0xe8] sm:$0xff]
      %v4679 = vld [vmem:[%s513 + $0xf0] sm:$0xff]
      %v4680 = vld [vmem:[%s513 + $0xf8] sm:$0xff]
      %v4681 = vld [vmem:[%s513 + $0x100] sm:$0xff]
      %v4682 = vld [vmem:[%s513 + $0x108] sm:$0xff]
      %v4683 = vld [vmem:[%s513 + $0x110] sm:$0xff]
      %v4684 = vld [vmem:[%s513 + $0x118] sm:$0xff]
      %v4685 = vld [vmem:[%s513 + $0x120] sm:$0xff]
      %v4686 = vld [vmem:[%s513 + $0x128] sm:$0xff]
      %v4687 = vld [vmem:[%s513 + $0x130] sm:$0xff]
      %v4688 = vld [vmem:[%s513 + $0x138] sm:$0xff]
      %v4689 = vld [vmem:[%s513 + $0x140] sm:$0xff]
      %v4690 = vld [vmem:[%s513 + $0x148] sm:$0xff]
      %v4691 = vld [vmem:[%s513 + $0x150] sm:$0xff]
      %v4692 = vld [vmem:[%s513 + $0x158] sm:$0xff]
      %v4693 = vld [vmem:[%s513 + $0x160] sm:$0xff]
      %v4694 = vld [vmem:[%s513 + $0x168] sm:$0xff]
      %v4695 = vld [vmem:[%s513 + $0x170] sm:$0xff]
      %v4696 = vld [vmem:[%s513 + $0x178] sm:$0xff]
      %v4697 = vld [vmem:[%s513 + $0x180] sm:$0xff]
      %v4698 = vld [vmem:[%s513 + $0x188] sm:$0xff]
      %v4699 = vld [vmem:[%s513 + $0x190] sm:$0xff]
      %v4700 = vld [vmem:[%s513 + $0x198] sm:$0xff]
      %v4701 = vld [vmem:[%s513 + $0x1a0] sm:$0xff]
      %v4702 = vld [vmem:[%s513 + $0x1a8] sm:$0xff]
      %v4703 = vld [vmem:[%s513 + $0x1b0] sm:$0xff]
      %v4704 = vld [vmem:[%s513 + $0x1b8] sm:$0xff]
      %v4705 = vld [vmem:[%s513 + $0x1c0] sm:$0xff]
      %v4706 = vld [vmem:[%s513 + $0x1c8] sm:$0xff]
      %v4707 = vld [vmem:[%s513 + $0x1d0] sm:$0xff]
      %v4708 = vld [vmem:[%s513 + $0x1d8] sm:$0xff]
      %v4709 = vld [vmem:[%s513 + $0x1e0] sm:$0xff]
      %v4710 = vld [vmem:[%s513 + $0x1e8] sm:$0xff]
      %v4711 = vld [vmem:[%s513 + $0x1f0] sm:$0xff]
      %v4712 = vld [vmem:[%s513 + $0x1f8] sm:$0xff]
      %4713 = vmatprep.subr.mxu0 %v4650
      %4714 = vmatpush1.msra.mxu0 %v4649
      %4715 = vmatprep.subr.mxu0 %v4654
      %4716 = vmatpush1.msra.mxu0 %v4653
      %4717 = vmatprep.subr.mxu0 %v4658
      %4718 = vmatpush1.msra.mxu0 %v4657
      %4719 = vmatprep.subr.mxu0 %v4662
      %4720 = vmatpush1.msra.mxu0 %v4661
      %4721 = vmatprep.subr.mxu0 %v4666
      %4722 = vmatpush1.msra.mxu0 %v4665
      %4723 = vmatprep.subr.mxu0 %v4670
      %4724 = vmatpush1.msra.mxu0 %v4669
      %4725 = vmatprep.subr.mxu0 %v4674
      %4726 = vmatpush1.msra.mxu0 %v4673
      %4727 = vmatprep.subr.mxu0 %v4678
      %4728 = vmatpush1.msra.mxu0 %v4677
      %4729 = vmatprep.subr.mxu0 %v4682
      %4730 = vmatpush1.msra.mxu0 %v4681
      %4731 = vmatprep.subr.mxu0 %v4686
      %4732 = vmatpush1.msra.mxu0 %v4685
      %4733 = vmatprep.subr.mxu0 %v4690
      %4734 = vmatpush1.msra.mxu0 %v4689
      %4735 = vmatprep.subr.mxu0 %v4694
      %4736 = vmatpush1.msra.mxu0 %v4693
      %4737 = vmatprep.subr.mxu0 %v4698
      %4738 = vmatpush1.msra.mxu0 %v4697
      %4739 = vmatprep.subr.mxu0 %v4702
      %4740 = vmatpush1.msra.mxu0 %v4701
      %4741 = vmatprep.subr.mxu0 %v4706
      %4742 = vmatpush1.msra.mxu0 %v4705
      %4743 = vmatprep.subr.mxu0 %v4710
      %4744 = vmatpush1.msra.mxu0 %v4709
      %4745 = vmatprep.subr.mxu0 0.0
      %4746 = vmatpush1.msra.mxu0 0.0
      %4747 = vmatprep.subr.mxu0 0.0
      %4748 = vmatpush1.msra.mxu0 0.0
      %4749 = vmatprep.subr.mxu0 0.0
      %4750 = vmatpush1.msra.mxu0 0.0
      %4751 = vmatprep.subr.mxu0 0.0
      %4752 = vmatpush1.msra.mxu0 0.0
      %4753 = vmatprep.subr.mxu0 0.0
      %4754 = vmatpush1.msra.mxu0 0.0
      %4755 = vmatprep.subr.mxu0 0.0
      %4756 = vmatpush1.msra.mxu0 0.0
      %4757 = vmatprep.subr.mxu0 0.0
      %4758 = vmatpush1.msra.mxu0 0.0
      %4759 = vmatprep.subr.mxu0 0.0
      %4760 = vmatpush1.msra.mxu0 0.0
      %4761 = vmatprep.subr.mxu0 0.0
      %4762 = vmatpush1.msra.mxu0 0.0
      %4763 = vmatprep.subr.mxu0 0.0
      %4764 = vmatpush1.msra.mxu0 0.0
      %4765 = vmatprep.subr.mxu0 0.0
      %4766 = vmatpush1.msra.mxu0 0.0
      %4767 = vmatprep.subr.mxu0 0.0
      %4768 = vmatpush1.msra.mxu0 0.0
      %4769 = vmatprep.subr.mxu0 0.0
      %4770 = vmatpush1.msra.mxu0 0.0
      %4771 = vmatprep.subr.mxu0 0.0
      %4772 = vmatpush1.msra.mxu0 0.0
      %4773 = vmatprep.subr.mxu0 0.0
      %4774 = vmatpush1.msra.mxu0 0.0
      %4775 = vmatprep.subr.mxu0 0.0
      %4776 = vmatpush1.msra.mxu0 0.0
      %4777 = vmatprep.mubr.f32.mxu0 0.0
      %4778 = vmatmul.mubr.f32.gmra.mrb[0].mxu0 %v4648
      %v4779 = vpop.f32.mrb[0].mxu0
      %v4780 = vadd.f32 0.0, %v4779
      %v4781 = vpop.f32.mrb[0].mxu0
      %v4782 = vadd.f32 0.0, %v4781
      %4783 = vdwg.mxu0
      %4784 = vmatprep.subr.mxu0 %v4652
      %4785 = vmatpush1.msra.mxu0 %v4651
      %4786 = vmatprep.subr.mxu0 %v4656
      %4787 = vmatpush1.msra.mxu0 %v4655
      %4788 = vmatprep.subr.mxu0 %v4660
      %4789 = vmatpush1.msra.mxu0 %v4659
      %4790 = vmatprep.subr.mxu0 %v4664
      %4791 = vmatpush1.msra.mxu0 %v4663
      %4792 = vmatprep.subr.mxu0 %v4668
      %4793 = vmatpush1.msra.mxu0 %v4667
      %4794 = vmatprep.subr.mxu0 %v4672
      %4795 = vmatpush1.msra.mxu0 %v4671
      %4796 = vmatprep.subr.mxu0 %v4676
      %4797 = vmatpush1.msra.mxu0 %v4675
      %4798 = vmatprep.subr.mxu0 %v4680
      %4799 = vmatpush1.msra.mxu0 %v4679
      %4800 = vmatprep.subr.mxu0 %v4684
      %4801 = vmatpush1.msra.mxu0 %v4683
      %4802 = vmatprep.subr.mxu0 %v4688
      %4803 = vmatpush1.msra.mxu0 %v4687
      %4804 = vmatprep.subr.mxu0 %v4692
      %4805 = vmatpush1.msra.mxu0 %v4691
      %4806 = vmatprep.subr.mxu0 %v4696
      %4807 = vmatpush1.msra.mxu0 %v4695
      %4808 = vmatprep.subr.mxu0 %v4700
      %4809 = vmatpush1.msra.mxu0 %v4699
      %4810 = vmatprep.subr.mxu0 %v4704
      %4811 = vmatpush1.msra.mxu0 %v4703
      %4812 = vmatprep.subr.mxu0 %v4708
      %4813 = vmatpush1.msra.mxu0 %v4707
      %4814 = vmatprep.subr.mxu0 %v4712
      %4815 = vmatpush1.msra.mxu0 %v4711
      %4816 = vmatprep.subr.mxu0 0.0
      %4817 = vmatpush1.msra.mxu0 0.0
      %4818 = vmatprep.subr.mxu0 0.0
      %4819 = vmatpush1.msra.mxu0 0.0
      %4820 = vmatprep.subr.mxu0 0.0
      %4821 = vmatpush1.msra.mxu0 0.0
      %4822 = vmatprep.subr.mxu0 0.0
      %4823 = vmatpush1.msra.mxu0 0.0
      %4824 = vmatprep.subr.mxu0 0.0
      %4825 = vmatpush1.msra.mxu0 0.0
      %4826 = vmatprep.subr.mxu0 0.0
      %4827 = vmatpush1.msra.mxu0 0.0
      %4828 = vmatprep.subr.mxu0 0.0
      %4829 = vmatpush1.msra.mxu0 0.0
      %4830 = vmatprep.subr.mxu0 0.0
      %4831 = vmatpush1.msra.mxu0 0.0
      %4832 = vmatprep.subr.mxu0 0.0
      %4833 = vmatpush1.msra.mxu0 0.0
      %4834 = vmatprep.subr.mxu0 0.0
      %4835 = vmatpush1.msra.mxu0 0.0
      %4836 = vmatprep.subr.mxu0 0.0
      %4837 = vmatpush1.msra.mxu0 0.0
      %4838 = vmatprep.subr.mxu0 0.0
      %4839 = vmatpush1.msra.mxu0 0.0
      %4840 = vmatprep.subr.mxu0 0.0
      %4841 = vmatpush1.msra.mxu0 0.0
      %4842 = vmatprep.subr.mxu0 0.0
      %4843 = vmatpush1.msra.mxu0 0.0
      %4844 = vmatprep.subr.mxu0 0.0
      %4845 = vmatpush1.msra.mxu0 0.0
      %4846 = vmatprep.subr.mxu0 0.0
      %4847 = vmatpush1.msra.mxu0 0.0
      %4848 = vmatprep.mubr.f32.mxu0 0.0
      %4849 = vmatmul.mubr.f32.gmra.mrb[0].mxu0 %v4648
      %v4850 = vpop.f32.mrb[0].mxu0
      %v4851 = vadd.f32 0.0, %v4850
      %v4852 = vpop.f32.mrb[0].mxu0
      %v4853 = vadd.f32 0.0, %v4852
      %4854 = vdwg.mxu0
      %v4855 = vld [vmem:[%s720] sm:$0xff]
      %v4856 = vld [vmem:[%s720 + $0x8] sm:$0xff]
      %v4857 = vld [vmem:[%s720 + $0x10] sm:$0xff]
      %v4858 = vld [vmem:[%s720 + $0x18] sm:$0xff]
      %v4859 = vld [vmem:[%s720 + $0x20] sm:$0xff]
      %v4860 = vld [vmem:[%s720 + $0x28] sm:$0xff]
      %v4861 = vld [vmem:[%s720 + $0x30] sm:$0xff]
      %v4862 = vld [vmem:[%s720 + $0x38] sm:$0xff]
      %v4863 = vld [vmem:[%s720 + $0x40] sm:$0xff]
      %v4864 = vld [vmem:[%s720 + $0x48] sm:$0xff]
      %v4865 = vld [vmem:[%s720 + $0x50] sm:$0xff]
      %v4866 = vld [vmem:[%s720 + $0x58] sm:$0xff]
      %v4867 = vld [vmem:[%s720 + $0x60] sm:$0xff]
      %v4868 = vld [vmem:[%s720 + $0x68] sm:$0xff]
      %v4869 = vld [vmem:[%s720 + $0x70] sm:$0xff]
      %v4870 = vld [vmem:[%s720 + $0x78] sm:$0xff]
      %v4871 = vld [vmem:[%s720 + $0x80] sm:$0xff]
      %v4872 = vld [vmem:[%s720 + $0x88] sm:$0xff]
      %v4873 = vld [vmem:[%s720 + $0x90] sm:$0xff]
      %v4874 = vld [vmem:[%s720 + $0x98] sm:$0xff]
      %v4875 = vld [vmem:[%s720 + $0xa0] sm:$0xff]
      %v4876 = vld [vmem:[%s720 + $0xa8] sm:$0xff]
      %v4877 = vld [vmem:[%s720 + $0xb0] sm:$0xff]
      %v4878 = vld [vmem:[%s720 + $0xb8] sm:$0xff]
      %v4879 = vld [vmem:[%s720 + $0xc0] sm:$0xff]
      %v4880 = vld [vmem:[%s720 + $0xc8] sm:$0xff]
      %v4881 = vld [vmem:[%s720 + $0xd0] sm:$0xff]
      %v4882 = vld [vmem:[%s720 + $0xd8] sm:$0xff]
      %v4883 = vld [vmem:[%s720 + $0xe0] sm:$0xff]
      %v4884 = vld [vmem:[%s720 + $0xe8] sm:$0xff]
      %v4885 = vld [vmem:[%s720 + $0xf0] sm:$0xff]
      %v4886 = vld [vmem:[%s720 + $0xf8] sm:$0xff]
      %v4887 = vld [vmem:[%s720 + $0x100] sm:$0xff]
      %v4888 = vld [vmem:[%s720 + $0x108] sm:$0xff]
      %v4889 = vld [vmem:[%s720 + $0x110] sm:$0xff]
      %v4890 = vld [vmem:[%s720 + $0x118] sm:$0xff]
      %v4891 = vld [vmem:[%s720 + $0x120] sm:$0xff]
      %v4892 = vld [vmem:[%s720 + $0x128] sm:$0xff]
      %v4893 = vld [vmem:[%s720 + $0x130] sm:$0xff]
      %v4894 = vld [vmem:[%s720 + $0x138] sm:$0xff]
      %v4895 = vld [vmem:[%s720 + $0x140] sm:$0xff]
      %v4896 = vld [vmem:[%s720 + $0x148] sm:$0xff]
      %v4897 = vld [vmem:[%s720 + $0x150] sm:$0xff]
      %v4898 = vld [vmem:[%s720 + $0x158] sm:$0xff]
      %v4899 = vld [vmem:[%s720 + $0x160] sm:$0xff]
      %v4900 = vld [vmem:[%s720 + $0x168] sm:$0xff]
      %v4901 = vld [vmem:[%s720 + $0x170] sm:$0xff]
      %v4902 = vld [vmem:[%s720 + $0x178] sm:$0xff]
      %v4903 = vld [vmem:[%s720 + $0x180] sm:$0xff]
      %v4904 = vld [vmem:[%s720 + $0x188] sm:$0xff]
      %v4905 = vld [vmem:[%s720 + $0x190] sm:$0xff]
      %v4906 = vld [vmem:[%s720 + $0x198] sm:$0xff]
      %v4907 = vld [vmem:[%s720 + $0x1a0] sm:$0xff]
      %v4908 = vld [vmem:[%s720 + $0x1a8] sm:$0xff]
      %v4909 = vld [vmem:[%s720 + $0x1b0] sm:$0xff]
      %v4910 = vld [vmem:[%s720 + $0x1b8] sm:$0xff]
      %v4911 = vld [vmem:[%s720 + $0x1c0] sm:$0xff]
      %v4912 = vld [vmem:[%s720 + $0x1c8] sm:$0xff]
      %v4913 = vld [vmem:[%s720 + $0x1d0] sm:$0xff]
      %v4914 = vld [vmem:[%s720 + $0x1d8] sm:$0xff]
      %v4915 = vld [vmem:[%s720 + $0x1e0] sm:$0xff]
      %v4916 = vld [vmem:[%s720 + $0x1e8] sm:$0xff]
      %v4917 = vld [vmem:[%s720 + $0x1f0] sm:$0xff]
      %v4918 = vld [vmem:[%s720 + $0x1f8] sm:$0xff]
      %4919 = vmatprep.subr.mxu0 %v4856
      %4920 = vmatpush1.msra.mxu0 %v4855
      %4921 = vmatprep.subr.mxu0 %v4860
      %4922 = vmatpush1.msra.mxu0 %v4859
      %4923 = vmatprep.subr.mxu0 %v4864
      %4924 = vmatpush1.msra.mxu0 %v4863
      %4925 = vmatprep.subr.mxu0 %v4868
      %4926 = vmatpush1.msra.mxu0 %v4867
      %4927 = vmatprep.subr.mxu0 %v4872
      %4928 = vmatpush1.msra.mxu0 %v4871
      %4929 = vmatprep.subr.mxu0 %v4876
      %4930 = vmatpush1.msra.mxu0 %v4875
      %4931 = vmatprep.subr.mxu0 %v4880
      %4932 = vmatpush1.msra.mxu0 %v4879
      %4933 = vmatprep.subr.mxu0 %v4884
      %4934 = vmatpush1.msra.mxu0 %v4883
      %4935 = vmatprep.subr.mxu0 %v4888
      %4936 = vmatpush1.msra.mxu0 %v4887
      %4937 = vmatprep.subr.mxu0 %v4892
      %4938 = vmatpush1.msra.mxu0 %v4891
      %4939 = vmatprep.subr.mxu0 %v4896
      %4940 = vmatpush1.msra.mxu0 %v4895
      %4941 = vmatprep.subr.mxu0 %v4900
      %4942 = vmatpush1.msra.mxu0 %v4899
      %4943 = vmatprep.subr.mxu0 %v4904
      %4944 = vmatpush1.msra.mxu0 %v4903
      %4945 = vmatprep.subr.mxu0 %v4908
      %4946 = vmatpush1.msra.mxu0 %v4907
      %4947 = vmatprep.subr.mxu0 %v4912
      %4948 = vmatpush1.msra.mxu0 %v4911
      %4949 = vmatprep.subr.mxu0 %v4916
      %4950 = vmatpush1.msra.mxu0 %v4915
      %4951 = vmatprep.subr.mxu0 0.0
      %4952 = vmatpush1.msra.mxu0 0.0
      %4953 = vmatprep.subr.mxu0 0.0
      %4954 = vmatpush1.msra.mxu0 0.0
      %4955 = vmatprep.subr.mxu0 0.0
      %4956 = vmatpush1.msra.mxu0 0.0
      %4957 = vmatprep.subr.mxu0 0.0
      %4958 = vmatpush1.msra.mxu0 0.0
      %4959 = vmatprep.subr.mxu0 0.0
      %4960 = vmatpush1.msra.mxu0 0.0
      %4961 = vmatprep.subr.mxu0 0.0
      %4962 = vmatpush1.msra.mxu0 0.0
      %4963 = vmatprep.subr.mxu0 0.0
      %4964 = vmatpush1.msra.mxu0 0.0
      %4965 = vmatprep.subr.mxu0 0.0
      %4966 = vmatpush1.msra.mxu0 0.0
      %4967 = vmatprep.subr.mxu0 0.0
      %4968 = vmatpush1.msra.mxu0 0.0
      %4969 = vmatprep.subr.mxu0 0.0
      %4970 = vmatpush1.msra.mxu0 0.0
      %4971 = vmatprep.subr.mxu0 0.0
      %4972 = vmatpush1.msra.mxu0 0.0
      %4973 = vmatprep.subr.mxu0 0.0
      %4974 = vmatpush1.msra.mxu0 0.0
      %4975 = vmatprep.subr.mxu0 0.0
      %4976 = vmatpush1.msra.mxu0 0.0
      %4977 = vmatprep.subr.mxu0 0.0
      %4978 = vmatpush1.msra.mxu0 0.0
      %4979 = vmatprep.subr.mxu0 0.0
      %4980 = vmatpush1.msra.mxu0 0.0
      %4981 = vmatprep.subr.mxu0 0.0
      %4982 = vmatpush1.msra.mxu0 0.0
      %4983 = vmatprep.mubr.f32.mxu0 0.0
      %4984 = vmatmul.mubr.f32.gmra.mrb[0].mxu0 %v4645
      %v4985 = vpop.f32.mrb[0].mxu0
      %v4986 = vadd.f32 %v4780, %v4985
      %v4987 = vpop.f32.mrb[0].mxu0
      %v4988 = vadd.f32 %v4782, %v4987
      %4989 = vdwg.mxu0
      %4990 = vmatprep.subr.mxu0 %v4858
      %4991 = vmatpush1.msra.mxu0 %v4857
      %4992 = vmatprep.subr.mxu0 %v4862
      %4993 = vmatpush1.msra.mxu0 %v4861
      %4994 = vmatprep.subr.mxu0 %v4866
      %4995 = vmatpush1.msra.mxu0 %v4865
      %4996 = vmatprep.subr.mxu0 %v4870
      %4997 = vmatpush1.msra.mxu0 %v4869
      %4998 = vmatprep.subr.mxu0 %v4874
      %4999 = vmatpush1.msra.mxu0 %v4873
      %5000 = vmatprep.subr.mxu0 %v4878
      %5001 = vmatpush1.msra.mxu0 %v4877
      %5002 = vmatprep.subr.mxu0 %v4882
      %5003 = vmatpush1.msra.mxu0 %v4881
      %5004 = vmatprep.subr.mxu0 %v4886
      %5005 = vmatpush1.msra.mxu0 %v4885
      %5006 = vmatprep.subr.mxu0 %v4890
      %5007 = vmatpush1.msra.mxu0 %v4889
      %5008 = vmatprep.subr.mxu0 %v4894
      %5009 = vmatpush1.msra.mxu0 %v4893
      %5010 = vmatprep.subr.mxu0 %v4898
      %5011 = vmatpush1.msra.mxu0 %v4897
      %5012 = vmatprep.subr.mxu0 %v4902
      %5013 = vmatpush1.msra.mxu0 %v4901
      %5014 = vmatprep.subr.mxu0 %v4906
      %5015 = vmatpush1.msra.mxu0 %v4905
      %5016 = vmatprep.subr.mxu0 %v4910
      %5017 = vmatpush1.msra.mxu0 %v4909
      %5018 = vmatprep.subr.mxu0 %v4914
      %5019 = vmatpush1.msra.mxu0 %v4913
      %5020 = vmatprep.subr.mxu0 %v4918
      %5021 = vmatpush1.msra.mxu0 %v4917
      %5022 = vmatprep.subr.mxu0 0.0
      %5023 = vmatpush1.msra.mxu0 0.0
      %5024 = vmatprep.subr.mxu0 0.0
      %5025 = vmatpush1.msra.mxu0 0.0
      %5026 = vmatprep.subr.mxu0 0.0
      %5027 = vmatpush1.msra.mxu0 0.0
      %5028 = vmatprep.subr.mxu0 0.0
      %5029 = vmatpush1.msra.mxu0 0.0
      %5030 = vmatprep.subr.mxu0 0.0
      %5031 = vmatpush1.msra.mxu0 0.0
      %5032 = vmatprep.subr.mxu0 0.0
      %5033 = vmatpush1.msra.mxu0 0.0
      %5034 = vmatprep.subr.mxu0 0.0
      %5035 = vmatpush1.msra.mxu0 0.0
      %5036 = vmatprep.subr.mxu0 0.0
      %5037 = vmatpush1.msra.mxu0 0.0
      %5038 = vmatprep.subr.mxu0 0.0
      %5039 = vmatpush1.msra.mxu0 0.0
      %5040 = vmatprep.subr.mxu0 0.0
      %5041 = vmatpush1.msra.mxu0 0.0
      %5042 = vmatprep.subr.mxu0 0.0
      %5043 = vmatpush1.msra.mxu0 0.0
      %5044 = vmatprep.subr.mxu0 0.0
      %5045 = vmatpush1.msra.mxu0 0.0
      %5046 = vmatprep.subr.mxu0 0.0
      %5047 = vmatpush1.msra.mxu0 0.0
      %5048 = vmatprep.subr.mxu0 0.0
      %5049 = vmatpush1.msra.mxu0 0.0
      %5050 = vmatprep.subr.mxu0 0.0
      %5051 = vmatpush1.msra.mxu0 0.0
      %5052 = vmatprep.subr.mxu0 0.0
      %5053 = vmatpush1.msra.mxu0 0.0
      %5054 = vmatprep.mubr.f32.mxu0 0.0
      %5055 = vmatmul.mubr.f32.gmra.mrb[0].mxu0 %v4645
      %v5056 = vpop.f32.mrb[0].mxu0
      %v5057 = vadd.f32 %v4851, %v5056
      %v5058 = vpop.f32.mrb[0].mxu0
      %v5059 = vadd.f32 %v4853, %v5058
      %5060 = vdwg.mxu0
      %v5061 = vadd.f32 %v4986, %v252
      %v5062 = vadd.f32 %v4988, %v256
      %v5063 = vadd.f32 %v5057, %v260
      %v5064 = vadd.f32 %v5059, %v264
      %v5065 = vxor.u32 %v5061, 2147483648
      %v5066 = vxor.u32 %v5062, 2147483648
      %v5067 = vxor.u32 %v5063, 2147483648
      %v5068 = vmul.f32 %v5065, 1.442695
      %v5069 = vpow.pop %v5068
      %v5070 = vmul.f32 %v5066, 1.442695
      %v5071 = vpow.pop %v5070
      %v5072 = vmul.f32 %v5067, 1.442695
      %v5073 = vpow.pop %v5072
      %v5074 = vadd.f32 %v5069, 1.0
      %v5075 = vadd.f32 %v5071, 1.0
      %v5076 = vadd.f32 %v5073, 1.0
      %v5077 = vrcp.pop %v5074
      %v5078 = vmul.f32 1.0, %v5077
      %v5079 = vrcp.pop %v5075
      %v5080 = vmul.f32 1.0, %v5079
      %v5081 = vrcp.pop %v5076
      %v5082 = vmul.f32 1.0, %v5081
      %v5083 = vtanh.pop %v5064
      %v5084 = vld [vmem:[%s950] sm:$0xff]
      %v5085 = vmul.f32 %v5080, %v5084
      %v5086 = vmul.f32 %v5078, %v5083
      %v5087 = vadd.f32 %v5085, %v5086
      %v5088 = vtanh.pop %v5087
      %v5089 = vmul.f32 %v5082, %v5088
      %5090 = vst [vmem:[%s511] sm:$0xff] %v5089
      %5091 = vst [vmem:[%s950] sm:$0xff] %v5087
      %s5092 = scalar_lea.vmem %s236, 48
      %5093 = vst [vmem:[%s5092] sm:$0xff] %v5089
      %v5094 = vld [vmem:[#allocation2] sm:$0xff]
      %v5095 = vld [vmem:[%s2] sm:$0xff]
      %v5096 = vld [vmem:[%s2 + $0x8] sm:$0xff]
      %v5097 = vld [vmem:[%s2 + $0x10] sm:$0xff]
      %v5098 = vld [vmem:[%s2 + $0x18] sm:$0xff]
      %v5099 = vld [vmem:[%s2 + $0x20] sm:$0xff]
      %v5100 = vld [vmem:[%s2 + $0x28] sm:$0xff]
      %v5101 = vld [vmem:[%s2 + $0x30] sm:$0xff]
      %v5102 = vld [vmem:[%s2 + $0x38] sm:$0xff]
      %v5103 = vld [vmem:[%s2 + $0x40] sm:$0xff]
      %v5104 = vld [vmem:[%s2 + $0x48] sm:$0xff]
      %v5105 = vld [vmem:[%s2 + $0x50] sm:$0xff]
      %v5106 = vld [vmem:[%s2 + $0x58] sm:$0xff]
      %v5107 = vld [vmem:[%s2 + $0x60] sm:$0xff]
      %v5108 = vld [vmem:[%s2 + $0x68] sm:$0xff]
      %v5109 = vld [vmem:[%s2 + $0x70] sm:$0xff]
      %v5110 = vld [vmem:[%s2 + $0x78] sm:$0xff]
      %v5111 = vld [vmem:[%s2 + $0x80] sm:$0xff]
      %v5112 = vld [vmem:[%s2 + $0x88] sm:$0xff]
      %v5113 = vld [vmem:[%s2 + $0x90] sm:$0xff]
      %v5114 = vld [vmem:[%s2 + $0x98] sm:$0xff]
      %v5115 = vld [vmem:[%s2 + $0xa0] sm:$0xff]
      %v5116 = vld [vmem:[%s2 + $0xa8] sm:$0xff]
      %v5117 = vld [vmem:[%s2 + $0xb0] sm:$0xff]
      %v5118 = vld [vmem:[%s2 + $0xb8] sm:$0xff]
      %v5119 = vld [vmem:[%s2 + $0xc0] sm:$0xff]
      %v5120 = vld [vmem:[%s2 + $0xc8] sm:$0xff]
      %v5121 = vld [vmem:[%s2 + $0xd0] sm:$0xff]
      %v5122 = vld [vmem:[%s2 + $0xd8] sm:$0xff]
      %v5123 = vld [vmem:[%s2 + $0xe0] sm:$0xff]
      %v5124 = vld [vmem:[%s2 + $0xe8] sm:$0xff]
      %v5125 = vld [vmem:[%s2 + $0xf0] sm:$0xff]
      %v5126 = vld [vmem:[%s2 + $0xf8] sm:$0xff]
      %v5127 = vld [vmem:[%s2 + $0x100] sm:$0xff]
      %v5128 = vld [vmem:[%s2 + $0x108] sm:$0xff]
      %v5129 = vld [vmem:[%s2 + $0x110] sm:$0xff]
      %v5130 = vld [vmem:[%s2 + $0x118] sm:$0xff]
      %v5131 = vld [vmem:[%s2 + $0x120] sm:$0xff]
      %v5132 = vld [vmem:[%s2 + $0x128] sm:$0xff]
      %v5133 = vld [vmem:[%s2 + $0x130] sm:$0xff]
      %v5134 = vld [vmem:[%s2 + $0x138] sm:$0xff]
      %v5135 = vld [vmem:[%s2 + $0x140] sm:$0xff]
      %v5136 = vld [vmem:[%s2 + $0x148] sm:$0xff]
      %v5137 = vld [vmem:[%s2 + $0x150] sm:$0xff]
      %v5138 = vld [vmem:[%s2 + $0x158] sm:$0xff]
      %v5139 = vld [vmem:[%s2 + $0x160] sm:$0xff]
      %v5140 = vld [vmem:[%s2 + $0x168] sm:$0xff]
      %v5141 = vld [vmem:[%s2 + $0x170] sm:$0xff]
      %v5142 = vld [vmem:[%s2 + $0x178] sm:$0xff]
      %v5143 = vld [vmem:[%s2 + $0x180] sm:$0xff]
      %v5144 = vld [vmem:[%s2 + $0x188] sm:$0xff]
      %v5145 = vld [vmem:[%s2 + $0x190] sm:$0xff]
      %v5146 = vld [vmem:[%s2 + $0x198] sm:$0xff]
      %v5147 = vld [vmem:[%s2 + $0x1a0] sm:$0xff]
      %v5148 = vld [vmem:[%s2 + $0x1a8] sm:$0xff]
      %v5149 = vld [vmem:[%s2 + $0x1b0] sm:$0xff]
      %v5150 = vld [vmem:[%s2 + $0x1b8] sm:$0xff]
      %v5151 = vld [vmem:[%s2 + $0x1c0] sm:$0xff]
      %v5152 = vld [vmem:[%s2 + $0x1c8] sm:$0xff]
      %v5153 = vld [vmem:[%s2 + $0x1d0] sm:$0xff]
      %v5154 = vld [vmem:[%s2 + $0x1d8] sm:$0xff]
      %v5155 = vld [vmem:[%s2 + $0x1e0] sm:$0xff]
      %v5156 = vld [vmem:[%s2 + $0x1e8] sm:$0xff]
      %v5157 = vld [vmem:[%s2 + $0x1f0] sm:$0xff]
      %v5158 = vld [vmem:[%s2 + $0x1f8] sm:$0xff]
      %5159 = vmatprep.subr.mxu0 %v5096
      %5160 = vmatpush1.msra.mxu0 %v5095
      %5161 = vmatprep.subr.mxu0 %v5100
      %5162 = vmatpush1.msra.mxu0 %v5099
      %5163 = vmatprep.subr.mxu0 %v5104
      %5164 = vmatpush1.msra.mxu0 %v5103
      %5165 = vmatprep.subr.mxu0 %v5108
      %5166 = vmatpush1.msra.mxu0 %v5107
      %5167 = vmatprep.subr.mxu0 %v5112
      %5168 = vmatpush1.msra.mxu0 %v5111
      %5169 = vmatprep.subr.mxu0 %v5116
      %5170 = vmatpush1.msra.mxu0 %v5115
      %5171 = vmatprep.subr.mxu0 %v5120
      %5172 = vmatpush1.msra.mxu0 %v5119
      %5173 = vmatprep.subr.mxu0 %v5124
      %5174 = vmatpush1.msra.mxu0 %v5123
      %5175 = vmatprep.subr.mxu0 %v5128
      %5176 = vmatpush1.msra.mxu0 %v5127
      %5177 = vmatprep.subr.mxu0 %v5132
      %5178 = vmatpush1.msra.mxu0 %v5131
      %5179 = vmatprep.subr.mxu0 %v5136
      %5180 = vmatpush1.msra.mxu0 %v5135
      %5181 = vmatprep.subr.mxu0 %v5140
      %5182 = vmatpush1.msra.mxu0 %v5139
      %5183 = vmatprep.subr.mxu0 %v5144
      %5184 = vmatpush1.msra.mxu0 %v5143
      %5185 = vmatprep.subr.mxu0 %v5148
      %5186 = vmatpush1.msra.mxu0 %v5147
      %5187 = vmatprep.subr.mxu0 %v5152
      %5188 = vmatpush1.msra.mxu0 %v5151
      %5189 = vmatprep.subr.mxu0 %v5156
      %5190 = vmatpush1.msra.mxu0 %v5155
      %5191 = vmatprep.subr.mxu0 0.0
      %5192 = vmatpush1.msra.mxu0 0.0
      %5193 = vmatprep.subr.mxu0 0.0
      %5194 = vmatpush1.msra.mxu0 0.0
      %5195 = vmatprep.subr.mxu0 0.0
      %5196 = vmatpush1.msra.mxu0 0.0
      %5197 = vmatprep.subr.mxu0 0.0
      %5198 = vmatpush1.msra.mxu0 0.0
      %5199 = vmatprep.subr.mxu0 0.0
      %5200 = vmatpush1.msra.mxu0 0.0
      %5201 = vmatprep.subr.mxu0 0.0
      %5202 = vmatpush1.msra.mxu0 0.0
      %5203 = vmatprep.subr.mxu0 0.0
      %5204 = vmatpush1.msra.mxu0 0.0
      %5205 = vmatprep.subr.mxu0 0.0
      %5206 = vmatpush1.msra.mxu0 0.0
      %5207 = vmatprep.subr.mxu0 0.0
      %5208 = vmatpush1.msra.mxu0 0.0
      %5209 = vmatprep.subr.mxu0 0.0
      %5210 = vmatpush1.msra.mxu0 0.0
      %5211 = vmatprep.subr.mxu0 0.0
      %5212 = vmatpush1.msra.mxu0 0.0
      %5213 = vmatprep.subr.mxu0 0.0
      %5214 = vmatpush1.msra.mxu0 0.0
      %5215 = vmatprep.subr.mxu0 0.0
      %5216 = vmatpush1.msra.mxu0 0.0
      %5217 = vmatprep.subr.mxu0 0.0
      %5218 = vmatpush1.msra.mxu0 0.0
      %5219 = vmatprep.subr.mxu0 0.0
      %5220 = vmatpush1.msra.mxu0 0.0
      %5221 = vmatprep.subr.mxu0 0.0
      %5222 = vmatpush1.msra.mxu0 0.0
      %5223 = vmatprep.mubr.f32.mxu0 0.0
      %5224 = vmatmul.mubr.f32.gmra.mrb[0].mxu0 %v5094
      %v5225 = vpop.f32.mrb[0].mxu0
      %v5226 = vadd.f32 0.0, %v5225
      %v5227 = vpop.f32.mrb[0].mxu0
      %v5228 = vadd.f32 0.0, %v5227
      %5229 = vdwg.mxu0
      %5230 = vmatprep.subr.mxu0 %v5098
      %5231 = vmatpush1.msra.mxu0 %v5097
      %5232 = vmatprep.subr.mxu0 %v5102
      %5233 = vmatpush1.msra.mxu0 %v5101
      %5234 = vmatprep.subr.mxu0 %v5106
      %5235 = vmatpush1.msra.mxu0 %v5105
      %5236 = vmatprep.subr.mxu0 %v5110
      %5237 = vmatpush1.msra.mxu0 %v5109
      %5238 = vmatprep.subr.mxu0 %v5114
      %5239 = vmatpush1.msra.mxu0 %v5113
      %5240 = vmatprep.subr.mxu0 %v5118
      %5241 = vmatpush1.msra.mxu0 %v5117
      %5242 = vmatprep.subr.mxu0 %v5122
      %5243 = vmatpush1.msra.mxu0 %v5121
      %5244 = vmatprep.subr.mxu0 %v5126
      %5245 = vmatpush1.msra.mxu0 %v5125
      %5246 = vmatprep.subr.mxu0 %v5130
      %5247 = vmatpush1.msra.mxu0 %v5129
      %5248 = vmatprep.subr.mxu0 %v5134
      %5249 = vmatpush1.msra.mxu0 %v5133
      %5250 = vmatprep.subr.mxu0 %v5138
      %5251 = vmatpush1.msra.mxu0 %v5137
      %5252 = vmatprep.subr.mxu0 %v5142
      %5253 = vmatpush1.msra.mxu0 %v5141
      %5254 = vmatprep.subr.mxu0 %v5146
      %5255 = vmatpush1.msra.mxu0 %v5145
      %5256 = vmatprep.subr.mxu0 %v5150
      %5257 = vmatpush1.msra.mxu0 %v5149
      %5258 = vmatprep.subr.mxu0 %v5154
      %5259 = vmatpush1.msra.mxu0 %v5153
      %5260 = vmatprep.subr.mxu0 %v5158
      %5261 = vmatpush1.msra.mxu0 %v5157
      %5262 = vmatprep.subr.mxu0 0.0
      %5263 = vmatpush1.msra.mxu0 0.0
      %5264 = vmatprep.subr.mxu0 0.0
      %5265 = vmatpush1.msra.mxu0 0.0
      %5266 = vmatprep.subr.mxu0 0.0
      %5267 = vmatpush1.msra.mxu0 0.0
      %5268 = vmatprep.subr.mxu0 0.0
      %5269 = vmatpush1.msra.mxu0 0.0
      %5270 = vmatprep.subr.mxu0 0.0
      %5271 = vmatpush1.msra.mxu0 0.0
      %5272 = vmatprep.subr.mxu0 0.0
      %5273 = vmatpush1.msra.mxu0 0.0
      %5274 = vmatprep.subr.mxu0 0.0
      %5275 = vmatpush1.msra.mxu0 0.0
      %5276 = vmatprep.subr.mxu0 0.0
      %5277 = vmatpush1.msra.mxu0 0.0
      %5278 = vmatprep.subr.mxu0 0.0
      %5279 = vmatpush1.msra.mxu0 0.0
      %5280 = vmatprep.subr.mxu0 0.0
      %5281 = vmatpush1.msra.mxu0 0.0
      %5282 = vmatprep.subr.mxu0 0.0
      %5283 = vmatpush1.msra.mxu0 0.0
      %5284 = vmatprep.subr.mxu0 0.0
      %5285 = vmatpush1.msra.mxu0 0.0
      %5286 = vmatprep.subr.mxu0 0.0
      %5287 = vmatpush1.msra.mxu0 0.0
      %5288 = vmatprep.subr.mxu0 0.0
      %5289 = vmatpush1.msra.mxu0 0.0
      %5290 = vmatprep.subr.mxu0 0.0
      %5291 = vmatpush1.msra.mxu0 0.0
      %5292 = vmatprep.subr.mxu0 0.0
      %5293 = vmatpush1.msra.mxu0 0.0
      %5294 = vmatprep.mubr.f32.mxu0 0.0
      %5295 = vmatmul.mubr.f32.gmra.mrb[0].mxu0 %v5094
      %v5296 = vpop.f32.mrb[0].mxu0
      %v5297 = vadd.f32 0.0, %v5296
      %v5298 = vpop.f32.mrb[0].mxu0
      %v5299 = vadd.f32 0.0, %v5298
      %5300 = vdwg.mxu0
      %s5301 = scalar_lea.vmem %s227, 224
      %v5302 = vld [vmem:[%s5301] sm:$0xff]
      %v5303 = vld [vmem:[%s5301 + $0x8] sm:$0xff]
      %v5304 = vld [vmem:[%s5301 + $0x10] sm:$0xff]
      %v5305 = vld [vmem:[%s5301 + $0x18] sm:$0xff]
      %v5306 = vadd.f32 %v5302, %v5226
      %v5307 = vadd.f32 %v5303, %v5228
      %v5308 = vadd.f32 %v5304, %v5297
      %v5309 = vadd.f32 %v5305, %v5299
      %v5310 = vxor.u32 %v5306, 2147483648
      %v5311 = vxor.u32 %v5307, 2147483648
      %v5312 = vxor.u32 %v5308, 2147483648
      %v5313 = vmul.f32 %v5310, 1.442695
      %v5314 = vpow.pop %v5313
      %v5315 = vmul.f32 %v5311, 1.442695
      %v5316 = vpow.pop %v5315
      %v5317 = vmul.f32 %v5312, 1.442695
      %v5318 = vpow.pop %v5317
      %v5319 = vadd.f32 %v5314, 1.0
      %v5320 = vadd.f32 %v5316, 1.0
      %v5321 = vadd.f32 %v5318, 1.0
      %v5322 = vrcp.pop %v5319
      %v5323 = vmul.f32 1.0, %v5322
      %v5324 = vrcp.pop %v5320
      %v5325 = vmul.f32 1.0, %v5324
      %v5326 = vrcp.pop %v5321
      %v5327 = vmul.f32 1.0, %v5326
      %v5328 = vtanh.pop %v5309
      %v5329 = vld [vmem:[#allocation3] sm:$0xff]
      %v5330 = vmul.f32 %v5325, %v5329
      %v5331 = vmul.f32 %v5323, %v5328
      %v5332 = vadd.f32 %v5330, %v5331
      %v5333 = vtanh.pop %v5332
      %v5334 = vmul.f32 %v5327, %v5333
      %5335 = vst [vmem:[#allocation2] sm:$0xff] %v5334
      %5336 = vst [vmem:[#allocation3] sm:$0xff] %v5332
      %v5337 = vld [vmem:[%s511] sm:$0xff]
      %v5338 = vld [vmem:[%s513] sm:$0xff]
      %v5339 = vld [vmem:[%s513 + $0x8] sm:$0xff]
      %v5340 = vld [vmem:[%s513 + $0x10] sm:$0xff]
      %v5341 = vld [vmem:[%s513 + $0x18] sm:$0xff]
      %v5342 = vld [vmem:[%s513 + $0x20] sm:$0xff]
      %v5343 = vld [vmem:[%s513 + $0x28] sm:$0xff]
      %v5344 = vld [vmem:[%s513 + $0x30] sm:$0xff]
      %v5345 = vld [vmem:[%s513 + $0x38] sm:$0xff]
      %v5346 = vld [vmem:[%s513 + $0x40] sm:$0xff]
      %v5347 = vld [vmem:[%s513 + $0x48] sm:$0xff]
      %v5348 = vld [vmem:[%s513 + $0x50] sm:$0xff]
      %v5349 = vld [vmem:[%s513 + $0x58] sm:$0xff]
      %v5350 = vld [vmem:[%s513 + $0x60] sm:$0xff]
      %v5351 = vld [vmem:[%s513 + $0x68] sm:$0xff]
      %v5352 = vld [vmem:[%s513 + $0x70] sm:$0xff]
      %v5353 = vld [vmem:[%s513 + $0x78] sm:$0xff]
      %v5354 = vld [vmem:[%s513 + $0x80] sm:$0xff]
      %v5355 = vld [vmem:[%s513 + $0x88] sm:$0xff]
      %v5356 = vld [vmem:[%s513 + $0x90] sm:$0xff]
      %v5357 = vld [vmem:[%s513 + $0x98] sm:$0xff]
      %v5358 = vld [vmem:[%s513 + $0xa0] sm:$0xff]
      %v5359 = vld [vmem:[%s513 + $0xa8] sm:$0xff]
      %v5360 = vld [vmem:[%s513 + $0xb0] sm:$0xff]
      %v5361 = vld [vmem:[%s513 + $0xb8] sm:$0xff]
      %v5362 = vld [vmem:[%s513 + $0xc0] sm:$0xff]
      %v5363 = vld [vmem:[%s513 + $0xc8] sm:$0xff]
      %v5364 = vld [vmem:[%s513 + $0xd0] sm:$0xff]
      %v5365 = vld [vmem:[%s513 + $0xd8] sm:$0xff]
      %v5366 = vld [vmem:[%s513 + $0xe0] sm:$0xff]
      %v5367 = vld [vmem:[%s513 + $0xe8] sm:$0xff]
      %v5368 = vld [vmem:[%s513 + $0xf0] sm:$0xff]
      %v5369 = vld [vmem:[%s513 + $0xf8] sm:$0xff]
      %v5370 = vld [vmem:[%s513 + $0x100] sm:$0xff]
      %v5371 = vld [vmem:[%s513 + $0x108] sm:$0xff]
      %v5372 = vld [vmem:[%s513 + $0x110] sm:$0xff]
      %v5373 = vld [vmem:[%s513 + $0x118] sm:$0xff]
      %v5374 = vld [vmem:[%s513 + $0x120] sm:$0xff]
      %v5375 = vld [vmem:[%s513 + $0x128] sm:$0xff]
      %v5376 = vld [vmem:[%s513 + $0x130] sm:$0xff]
      %v5377 = vld [vmem:[%s513 + $0x138] sm:$0xff]
      %v5378 = vld [vmem:[%s513 + $0x140] sm:$0xff]
      %v5379 = vld [vmem:[%s513 + $0x148] sm:$0xff]
      %v5380 = vld [vmem:[%s513 + $0x150] sm:$0xff]
      %v5381 = vld [vmem:[%s513 + $0x158] sm:$0xff]
      %v5382 = vld [vmem:[%s513 + $0x160] sm:$0xff]
      %v5383 = vld [vmem:[%s513 + $0x168] sm:$0xff]
      %v5384 = vld [vmem:[%s513 + $0x170] sm:$0xff]
      %v5385 = vld [vmem:[%s513 + $0x178] sm:$0xff]
      %v5386 = vld [vmem:[%s513 + $0x180] sm:$0xff]
      %v5387 = vld [vmem:[%s513 + $0x188] sm:$0xff]
      %v5388 = vld [vmem:[%s513 + $0x190] sm:$0xff]
      %v5389 = vld [vmem:[%s513 + $0x198] sm:$0xff]
      %v5390 = vld [vmem:[%s513 + $0x1a0] sm:$0xff]
      %v5391 = vld [vmem:[%s513 + $0x1a8] sm:$0xff]
      %v5392 = vld [vmem:[%s513 + $0x1b0] sm:$0xff]
      %v5393 = vld [vmem:[%s513 + $0x1b8] sm:$0xff]
      %v5394 = vld [vmem:[%s513 + $0x1c0] sm:$0xff]
      %v5395 = vld [vmem:[%s513 + $0x1c8] sm:$0xff]
      %v5396 = vld [vmem:[%s513 + $0x1d0] sm:$0xff]
      %v5397 = vld [vmem:[%s513 + $0x1d8] sm:$0xff]
      %v5398 = vld [vmem:[%s513 + $0x1e0] sm:$0xff]
      %v5399 = vld [vmem:[%s513 + $0x1e8] sm:$0xff]
      %v5400 = vld [vmem:[%s513 + $0x1f0] sm:$0xff]
      %v5401 = vld [vmem:[%s513 + $0x1f8] sm:$0xff]
      %5402 = vmatprep.subr.mxu0 %v5339
      %5403 = vmatpush1.msra.mxu0 %v5338
      %5404 = vmatprep.subr.mxu0 %v5343
      %5405 = vmatpush1.msra.mxu0 %v5342
      %5406 = vmatprep.subr.mxu0 %v5347
      %5407 = vmatpush1.msra.mxu0 %v5346
      %5408 = vmatprep.subr.mxu0 %v5351
      %5409 = vmatpush1.msra.mxu0 %v5350
      %5410 = vmatprep.subr.mxu0 %v5355
      %5411 = vmatpush1.msra.mxu0 %v5354
      %5412 = vmatprep.subr.mxu0 %v5359
      %5413 = vmatpush1.msra.mxu0 %v5358
      %5414 = vmatprep.subr.mxu0 %v5363
      %5415 = vmatpush1.msra.mxu0 %v5362
      %5416 = vmatprep.subr.mxu0 %v5367
      %5417 = vmatpush1.msra.mxu0 %v5366
      %5418 = vmatprep.subr.mxu0 %v5371
      %5419 = vmatpush1.msra.mxu0 %v5370
      %5420 = vmatprep.subr.mxu0 %v5375
      %5421 = vmatpush1.msra.mxu0 %v5374
      %5422 = vmatprep.subr.mxu0 %v5379
      %5423 = vmatpush1.msra.mxu0 %v5378
      %5424 = vmatprep.subr.mxu0 %v5383
      %5425 = vmatpush1.msra.mxu0 %v5382
      %5426 = vmatprep.subr.mxu0 %v5387
      %5427 = vmatpush1.msra.mxu0 %v5386
      %5428 = vmatprep.subr.mxu0 %v5391
      %5429 = vmatpush1.msra.mxu0 %v5390
      %5430 = vmatprep.subr.mxu0 %v5395
      %5431 = vmatpush1.msra.mxu0 %v5394
      %5432 = vmatprep.subr.mxu0 %v5399
      %5433 = vmatpush1.msra.mxu0 %v5398
      %5434 = vmatprep.subr.mxu0 0.0
      %5435 = vmatpush1.msra.mxu0 0.0
      %5436 = vmatprep.subr.mxu0 0.0
      %5437 = vmatpush1.msra.mxu0 0.0
      %5438 = vmatprep.subr.mxu0 0.0
      %5439 = vmatpush1.msra.mxu0 0.0
      %5440 = vmatprep.subr.mxu0 0.0
      %5441 = vmatpush1.msra.mxu0 0.0
      %5442 = vmatprep.subr.mxu0 0.0
      %5443 = vmatpush1.msra.mxu0 0.0
      %5444 = vmatprep.subr.mxu0 0.0
      %5445 = vmatpush1.msra.mxu0 0.0
      %5446 = vmatprep.subr.mxu0 0.0
      %5447 = vmatpush1.msra.mxu0 0.0
      %5448 = vmatprep.subr.mxu0 0.0
      %5449 = vmatpush1.msra.mxu0 0.0
      %5450 = vmatprep.subr.mxu0 0.0
      %5451 = vmatpush1.msra.mxu0 0.0
      %5452 = vmatprep.subr.mxu0 0.0
      %5453 = vmatpush1.msra.mxu0 0.0
      %5454 = vmatprep.subr.mxu0 0.0
      %5455 = vmatpush1.msra.mxu0 0.0
      %5456 = vmatprep.subr.mxu0 0.0
      %5457 = vmatpush1.msra.mxu0 0.0
      %5458 = vmatprep.subr.mxu0 0.0
      %5459 = vmatpush1.msra.mxu0 0.0
      %5460 = vmatprep.subr.mxu0 0.0
      %5461 = vmatpush1.msra.mxu0 0.0
      %5462 = vmatprep.subr.mxu0 0.0
      %5463 = vmatpush1.msra.mxu0 0.0
      %5464 = vmatprep.subr.mxu0 0.0
      %5465 = vmatpush1.msra.mxu0 0.0
      %5466 = vmatprep.mubr.f32.mxu0 0.0
      %5467 = vmatmul.mubr.f32.gmra.mrb[0].mxu0 %v5337
      %v5468 = vpop.f32.mrb[0].mxu0
      %v5469 = vadd.f32 0.0, %v5468
      %v5470 = vpop.f32.mrb[0].mxu0
      %v5471 = vadd.f32 0.0, %v5470
      %5472 = vdwg.mxu0
      %5473 = vmatprep.subr.mxu0 %v5341
      %5474 = vmatpush1.msra.mxu0 %v5340
      %5475 = vmatprep.subr.mxu0 %v5345
      %5476 = vmatpush1.msra.mxu0 %v5344
      %5477 = vmatprep.subr.mxu0 %v5349
      %5478 = vmatpush1.msra.mxu0 %v5348
      %5479 = vmatprep.subr.mxu0 %v5353
      %5480 = vmatpush1.msra.mxu0 %v5352
      %5481 = vmatprep.subr.mxu0 %v5357
      %5482 = vmatpush1.msra.mxu0 %v5356
      %5483 = vmatprep.subr.mxu0 %v5361
      %5484 = vmatpush1.msra.mxu0 %v5360
      %5485 = vmatprep.subr.mxu0 %v5365
      %5486 = vmatpush1.msra.mxu0 %v5364
      %5487 = vmatprep.subr.mxu0 %v5369
      %5488 = vmatpush1.msra.mxu0 %v5368
      %5489 = vmatprep.subr.mxu0 %v5373
      %5490 = vmatpush1.msra.mxu0 %v5372
      %5491 = vmatprep.subr.mxu0 %v5377
      %5492 = vmatpush1.msra.mxu0 %v5376
      %5493 = vmatprep.subr.mxu0 %v5381
      %5494 = vmatpush1.msra.mxu0 %v5380
      %5495 = vmatprep.subr.mxu0 %v5385
      %5496 = vmatpush1.msra.mxu0 %v5384
      %5497 = vmatprep.subr.mxu0 %v5389
      %5498 = vmatpush1.msra.mxu0 %v5388
      %5499 = vmatprep.subr.mxu0 %v5393
      %5500 = vmatpush1.msra.mxu0 %v5392
      %5501 = vmatprep.subr.mxu0 %v5397
      %5502 = vmatpush1.msra.mxu0 %v5396
      %5503 = vmatprep.subr.mxu0 %v5401
      %5504 = vmatpush1.msra.mxu0 %v5400
      %5505 = vmatprep.subr.mxu0 0.0
      %5506 = vmatpush1.msra.mxu0 0.0
      %5507 = vmatprep.subr.mxu0 0.0
      %5508 = vmatpush1.msra.mxu0 0.0
      %5509 = vmatprep.subr.mxu0 0.0
      %5510 = vmatpush1.msra.mxu0 0.0
      %5511 = vmatprep.subr.mxu0 0.0
      %5512 = vmatpush1.msra.mxu0 0.0
      %5513 = vmatprep.subr.mxu0 0.0
      %5514 = vmatpush1.msra.mxu0 0.0
      %5515 = vmatprep.subr.mxu0 0.0
      %5516 = vmatpush1.msra.mxu0 0.0
      %5517 = vmatprep.subr.mxu0 0.0
      %5518 = vmatpush1.msra.mxu0 0.0
      %5519 = vmatprep.subr.mxu0 0.0
      %5520 = vmatpush1.msra.mxu0 0.0
      %5521 = vmatprep.subr.mxu0 0.0
      %5522 = vmatpush1.msra.mxu0 0.0
      %5523 = vmatprep.subr.mxu0 0.0
      %5524 = vmatpush1.msra.mxu0 0.0
      %5525 = vmatprep.subr.mxu0 0.0
      %5526 = vmatpush1.msra.mxu0 0.0
      %5527 = vmatprep.subr.mxu0 0.0
      %5528 = vmatpush1.msra.mxu0 0.0
      %5529 = vmatprep.subr.mxu0 0.0
      %5530 = vmatpush1.msra.mxu0 0.0
      %5531 = vmatprep.subr.mxu0 0.0
      %5532 = vmatpush1.msra.mxu0 0.0
      %5533 = vmatprep.subr.mxu0 0.0
      %5534 = vmatpush1.msra.mxu0 0.0
      %5535 = vmatprep.subr.mxu0 0.0
      %5536 = vmatpush1.msra.mxu0 0.0
      %5537 = vmatprep.mubr.f32.mxu0 0.0
      %5538 = vmatmul.mubr.f32.gmra.mrb[0].mxu0 %v5337
      %v5539 = vpop.f32.mrb[0].mxu0
      %v5540 = vadd.f32 0.0, %v5539
      %v5541 = vpop.f32.mrb[0].mxu0
      %v5542 = vadd.f32 0.0, %v5541
      %5543 = vdwg.mxu0
      %v5544 = vld [vmem:[%s720] sm:$0xff]
      %v5545 = vld [vmem:[%s720 + $0x8] sm:$0xff]
      %v5546 = vld [vmem:[%s720 + $0x10] sm:$0xff]
      %v5547 = vld [vmem:[%s720 + $0x18] sm:$0xff]
      %v5548 = vld [vmem:[%s720 + $0x20] sm:$0xff]
      %v5549 = vld [vmem:[%s720 + $0x28] sm:$0xff]
      %v5550 = vld [vmem:[%s720 + $0x30] sm:$0xff]
      %v5551 = vld [vmem:[%s720 + $0x38] sm:$0xff]
      %v5552 = vld [vmem:[%s720 + $0x40] sm:$0xff]
      %v5553 = vld [vmem:[%s720 + $0x48] sm:$0xff]
      %v5554 = vld [vmem:[%s720 + $0x50] sm:$0xff]
      %v5555 = vld [vmem:[%s720 + $0x58] sm:$0xff]
      %v5556 = vld [vmem:[%s720 + $0x60] sm:$0xff]
      %v5557 = vld [vmem:[%s720 + $0x68] sm:$0xff]
      %v5558 = vld [vmem:[%s720 + $0x70] sm:$0xff]
      %v5559 = vld [vmem:[%s720 + $0x78] sm:$0xff]
      %v5560 = vld [vmem:[%s720 + $0x80] sm:$0xff]
      %v5561 = vld [vmem:[%s720 + $0x88] sm:$0xff]
      %v5562 = vld [vmem:[%s720 + $0x90] sm:$0xff]
      %v5563 = vld [vmem:[%s720 + $0x98] sm:$0xff]
      %v5564 = vld [vmem:[%s720 + $0xa0] sm:$0xff]
      %v5565 = vld [vmem:[%s720 + $0xa8] sm:$0xff]
      %v5566 = vld [vmem:[%s720 + $0xb0] sm:$0xff]
      %v5567 = vld [vmem:[%s720 + $0xb8] sm:$0xff]
      %v5568 = vld [vmem:[%s720 + $0xc0] sm:$0xff]
      %v5569 = vld [vmem:[%s720 + $0xc8] sm:$0xff]
      %v5570 = vld [vmem:[%s720 + $0xd0] sm:$0xff]
      %v5571 = vld [vmem:[%s720 + $0xd8] sm:$0xff]
      %v5572 = vld [vmem:[%s720 + $0xe0] sm:$0xff]
      %v5573 = vld [vmem:[%s720 + $0xe8] sm:$0xff]
      %v5574 = vld [vmem:[%s720 + $0xf0] sm:$0xff]
      %v5575 = vld [vmem:[%s720 + $0xf8] sm:$0xff]
      %v5576 = vld [vmem:[%s720 + $0x100] sm:$0xff]
      %v5577 = vld [vmem:[%s720 + $0x108] sm:$0xff]
      %v5578 = vld [vmem:[%s720 + $0x110] sm:$0xff]
      %v5579 = vld [vmem:[%s720 + $0x118] sm:$0xff]
      %v5580 = vld [vmem:[%s720 + $0x120] sm:$0xff]
      %v5581 = vld [vmem:[%s720 + $0x128] sm:$0xff]
      %v5582 = vld [vmem:[%s720 + $0x130] sm:$0xff]
      %v5583 = vld [vmem:[%s720 + $0x138] sm:$0xff]
      %v5584 = vld [vmem:[%s720 + $0x140] sm:$0xff]
      %v5585 = vld [vmem:[%s720 + $0x148] sm:$0xff]
      %v5586 = vld [vmem:[%s720 + $0x150] sm:$0xff]
      %v5587 = vld [vmem:[%s720 + $0x158] sm:$0xff]
      %v5588 = vld [vmem:[%s720 + $0x160] sm:$0xff]
      %v5589 = vld [vmem:[%s720 + $0x168] sm:$0xff]
      %v5590 = vld [vmem:[%s720 + $0x170] sm:$0xff]
      %v5591 = vld [vmem:[%s720 + $0x178] sm:$0xff]
      %v5592 = vld [vmem:[%s720 + $0x180] sm:$0xff]
      %v5593 = vld [vmem:[%s720 + $0x188] sm:$0xff]
      %v5594 = vld [vmem:[%s720 + $0x190] sm:$0xff]
      %v5595 = vld [vmem:[%s720 + $0x198] sm:$0xff]
      %v5596 = vld [vmem:[%s720 + $0x1a0] sm:$0xff]
      %v5597 = vld [vmem:[%s720 + $0x1a8] sm:$0xff]
      %v5598 = vld [vmem:[%s720 + $0x1b0] sm:$0xff]
      %v5599 = vld [vmem:[%s720 + $0x1b8] sm:$0xff]
      %v5600 = vld [vmem:[%s720 + $0x1c0] sm:$0xff]
      %v5601 = vld [vmem:[%s720 + $0x1c8] sm:$0xff]
      %v5602 = vld [vmem:[%s720 + $0x1d0] sm:$0xff]
      %v5603 = vld [vmem:[%s720 + $0x1d8] sm:$0xff]
      %v5604 = vld [vmem:[%s720 + $0x1e0] sm:$0xff]
      %v5605 = vld [vmem:[%s720 + $0x1e8] sm:$0xff]
      %v5606 = vld [vmem:[%s720 + $0x1f0] sm:$0xff]
      %v5607 = vld [vmem:[%s720 + $0x1f8] sm:$0xff]
      %5608 = vmatprep.subr.mxu0 %v5545
      %5609 = vmatpush1.msra.mxu0 %v5544
      %5610 = vmatprep.subr.mxu0 %v5549
      %5611 = vmatpush1.msra.mxu0 %v5548
      %5612 = vmatprep.subr.mxu0 %v5553
      %5613 = vmatpush1.msra.mxu0 %v5552
      %5614 = vmatprep.subr.mxu0 %v5557
      %5615 = vmatpush1.msra.mxu0 %v5556
      %5616 = vmatprep.subr.mxu0 %v5561
      %5617 = vmatpush1.msra.mxu0 %v5560
      %5618 = vmatprep.subr.mxu0 %v5565
      %5619 = vmatpush1.msra.mxu0 %v5564
      %5620 = vmatprep.subr.mxu0 %v5569
      %5621 = vmatpush1.msra.mxu0 %v5568
      %5622 = vmatprep.subr.mxu0 %v5573
      %5623 = vmatpush1.msra.mxu0 %v5572
      %5624 = vmatprep.subr.mxu0 %v5577
      %5625 = vmatpush1.msra.mxu0 %v5576
      %5626 = vmatprep.subr.mxu0 %v5581
      %5627 = vmatpush1.msra.mxu0 %v5580
      %5628 = vmatprep.subr.mxu0 %v5585
      %5629 = vmatpush1.msra.mxu0 %v5584
      %5630 = vmatprep.subr.mxu0 %v5589
      %5631 = vmatpush1.msra.mxu0 %v5588
      %5632 = vmatprep.subr.mxu0 %v5593
      %5633 = vmatpush1.msra.mxu0 %v5592
      %5634 = vmatprep.subr.mxu0 %v5597
      %5635 = vmatpush1.msra.mxu0 %v5596
      %5636 = vmatprep.subr.mxu0 %v5601
      %5637 = vmatpush1.msra.mxu0 %v5600
      %5638 = vmatprep.subr.mxu0 %v5605
      %5639 = vmatpush1.msra.mxu0 %v5604
      %5640 = vmatprep.subr.mxu0 0.0
      %5641 = vmatpush1.msra.mxu0 0.0
      %5642 = vmatprep.subr.mxu0 0.0
      %5643 = vmatpush1.msra.mxu0 0.0
      %5644 = vmatprep.subr.mxu0 0.0
      %5645 = vmatpush1.msra.mxu0 0.0
      %5646 = vmatprep.subr.mxu0 0.0
      %5647 = vmatpush1.msra.mxu0 0.0
      %5648 = vmatprep.subr.mxu0 0.0
      %5649 = vmatpush1.msra.mxu0 0.0
      %5650 = vmatprep.subr.mxu0 0.0
      %5651 = vmatpush1.msra.mxu0 0.0
      %5652 = vmatprep.subr.mxu0 0.0
      %5653 = vmatpush1.msra.mxu0 0.0
      %5654 = vmatprep.subr.mxu0 0.0
      %5655 = vmatpush1.msra.mxu0 0.0
      %5656 = vmatprep.subr.mxu0 0.0
      %5657 = vmatpush1.msra.mxu0 0.0
      %5658 = vmatprep.subr.mxu0 0.0
      %5659 = vmatpush1.msra.mxu0 0.0
      %5660 = vmatprep.subr.mxu0 0.0
      %5661 = vmatpush1.msra.mxu0 0.0
      %5662 = vmatprep.subr.mxu0 0.0
      %5663 = vmatpush1.msra.mxu0 0.0
      %5664 = vmatprep.subr.mxu0 0.0
      %5665 = vmatpush1.msra.mxu0 0.0
      %5666 = vmatprep.subr.mxu0 0.0
      %5667 = vmatpush1.msra.mxu0 0.0
      %5668 = vmatprep.subr.mxu0 0.0
      %5669 = vmatpush1.msra.mxu0 0.0
      %5670 = vmatprep.subr.mxu0 0.0
      %5671 = vmatpush1.msra.mxu0 0.0
      %5672 = vmatprep.mubr.f32.mxu0 0.0
      %5673 = vmatmul.mubr.f32.gmra.mrb[0].mxu0 %v5334
      %v5674 = vpop.f32.mrb[0].mxu0
      %v5675 = vadd.f32 %v5469, %v5674
      %v5676 = vpop.f32.mrb[0].mxu0
      %v5677 = vadd.f32 %v5471, %v5676
      %5678 = vdwg.mxu0
      %5679 = vmatprep.subr.mxu0 %v5547
      %5680 = vmatpush1.msra.mxu0 %v5546
      %5681 = vmatprep.subr.mxu0 %v5551
      %5682 = vmatpush1.msra.mxu0 %v5550
      %5683 = vmatprep.subr.mxu0 %v5555
      %5684 = vmatpush1.msra.mxu0 %v5554
      %5685 = vmatprep.subr.mxu0 %v5559
      %5686 = vmatpush1.msra.mxu0 %v5558
      %5687 = vmatprep.subr.mxu0 %v5563
      %5688 = vmatpush1.msra.mxu0 %v5562
      %5689 = vmatprep.subr.mxu0 %v5567
      %5690 = vmatpush1.msra.mxu0 %v5566
      %5691 = vmatprep.subr.mxu0 %v5571
      %5692 = vmatpush1.msra.mxu0 %v5570
      %5693 = vmatprep.subr.mxu0 %v5575
      %5694 = vmatpush1.msra.mxu0 %v5574
      %5695 = vmatprep.subr.mxu0 %v5579
      %5696 = vmatpush1.msra.mxu0 %v5578
      %5697 = vmatprep.subr.mxu0 %v5583
      %5698 = vmatpush1.msra.mxu0 %v5582
      %5699 = vmatprep.subr.mxu0 %v5587
      %5700 = vmatpush1.msra.mxu0 %v5586
      %5701 = vmatprep.subr.mxu0 %v5591
      %5702 = vmatpush1.msra.mxu0 %v5590
      %5703 = vmatprep.subr.mxu0 %v5595
      %5704 = vmatpush1.msra.mxu0 %v5594
      %5705 = vmatprep.subr.mxu0 %v5599
      %5706 = vmatpush1.msra.mxu0 %v5598
      %5707 = vmatprep.subr.mxu0 %v5603
      %5708 = vmatpush1.msra.mxu0 %v5602
      %5709 = vmatprep.subr.mxu0 %v5607
      %5710 = vmatpush1.msra.mxu0 %v5606
      %5711 = vmatprep.subr.mxu0 0.0
      %5712 = vmatpush1.msra.mxu0 0.0
      %5713 = vmatprep.subr.mxu0 0.0
      %5714 = vmatpush1.msra.mxu0 0.0
      %5715 = vmatprep.subr.mxu0 0.0
      %5716 = vmatpush1.msra.mxu0 0.0
      %5717 = vmatprep.subr.mxu0 0.0
      %5718 = vmatpush1.msra.mxu0 0.0
      %5719 = vmatprep.subr.mxu0 0.0
      %5720 = vmatpush1.msra.mxu0 0.0
      %5721 = vmatprep.subr.mxu0 0.0
      %5722 = vmatpush1.msra.mxu0 0.0
      %5723 = vmatprep.subr.mxu0 0.0
      %5724 = vmatpush1.msra.mxu0 0.0
      %5725 = vmatprep.subr.mxu0 0.0
      %5726 = vmatpush1.msra.mxu0 0.0
      %5727 = vmatprep.subr.mxu0 0.0
      %5728 = vmatpush1.msra.mxu0 0.0
      %5729 = vmatprep.subr.mxu0 0.0
      %5730 = vmatpush1.msra.mxu0 0.0
      %5731 = vmatprep.subr.mxu0 0.0
      %5732 = vmatpush1.msra.mxu0 0.0
      %5733 = vmatprep.subr.mxu0 0.0
      %5734 = vmatpush1.msra.mxu0 0.0
      %5735 = vmatprep.subr.mxu0 0.0
      %5736 = vmatpush1.msra.mxu0 0.0
      %5737 = vmatprep.subr.mxu0 0.0
      %5738 = vmatpush1.msra.mxu0 0.0
      %5739 = vmatprep.subr.mxu0 0.0
      %5740 = vmatpush1.msra.mxu0 0.0
      %5741 = vmatprep.subr.mxu0 0.0
      %5742 = vmatpush1.msra.mxu0 0.0
      %5743 = vmatprep.mubr.f32.mxu0 0.0
      %5744 = vmatmul.mubr.f32.gmra.mrb[0].mxu0 %v5334
      %v5745 = vpop.f32.mrb[0].mxu0
      %v5746 = vadd.f32 %v5540, %v5745
      %v5747 = vpop.f32.mrb[0].mxu0
      %v5748 = vadd.f32 %v5542, %v5747
      %5749 = vdwg.mxu0
      %v5750 = vadd.f32 %v5675, %v252
      %v5751 = vadd.f32 %v5677, %v256
      %v5752 = vadd.f32 %v5746, %v260
      %v5753 = vadd.f32 %v5748, %v264
      %v5754 = vxor.u32 %v5750, 2147483648
      %v5755 = vxor.u32 %v5751, 2147483648
      %v5756 = vxor.u32 %v5752, 2147483648
      %v5757 = vmul.f32 %v5754, 1.442695
      %v5758 = vpow.pop %v5757
      %v5759 = vmul.f32 %v5755, 1.442695
      %v5760 = vpow.pop %v5759
      %v5761 = vmul.f32 %v5756, 1.442695
      %v5762 = vpow.pop %v5761
      %v5763 = vadd.f32 %v5758, 1.0
      %v5764 = vadd.f32 %v5760, 1.0
      %v5765 = vadd.f32 %v5762, 1.0
      %v5766 = vrcp.pop %v5763
      %v5767 = vmul.f32 1.0, %v5766
      %v5768 = vrcp.pop %v5764
      %v5769 = vmul.f32 1.0, %v5768
      %v5770 = vrcp.pop %v5765
      %v5771 = vmul.f32 1.0, %v5770
      %v5772 = vtanh.pop %v5753
      %v5773 = vld [vmem:[%s950] sm:$0xff]
      %v5774 = vmul.f32 %v5769, %v5773
      %v5775 = vmul.f32 %v5767, %v5772
      %v5776 = vadd.f32 %v5774, %v5775
      %v5777 = vtanh.pop %v5776
      %v5778 = vmul.f32 %v5771, %v5777
      %5779 = vst [vmem:[%s511] sm:$0xff] %v5778
      %5780 = vst [vmem:[%s950] sm:$0xff] %v5776
      %s5781 = scalar_lea.vmem %s236, 56
      %5782 = vst [vmem:[%s5781] sm:$0xff] %v5778
      %s5783 = smul.u32 8, %s20
      %p5784 = scmp.lt.s32.totalorder %s5783, 15
      %s5785 = scalar_select %p5784, %s5783, 15
      %p5786 = scmp.lt.s32.totalorder %s19, 0
      %s5787 = scalar_select %p5786, %s19, 0
      %s5788 = sadd.s32 %s5787, %s5785
      %s5789 = smul.addr %s5788, 8
      %s5790 = scalar_lea.vmem %s4, %s5789
      // Predicated region
      $region41: #{custom_lstm_forward.6} parent=35 // pred_check
        %p5791 = pneg %p138
      $region42: #{custom_lstm_forward.6} parent=35 // pred_check_branch
        %5793 = sbr.rel (%p5791) target = $region44
      $region43: #{custom_lstm_forward.6} parent=35 // pred_region
        %s5794 = smul.u32 8, %s20
      $region44: #{custom_lstm_forward.6} parent=35 // pred_fallthru
        _
    $region36: #{custom_lstm_forward.6} parent=5 // pred_fallthru
      _
    %p5795 = scmp.le.s32.totalorder 2, %s10
    // Predicated region
    $region45: #{custom_lstm_forward.6} parent=5 // pred_check
      %p5796 = pneg %p5795
    $region46: #{custom_lstm_forward.6} parent=5 // pred_check_branch
      %5798 = sbr.rel (%p5796) target = $region48
    $region47: #{custom_lstm_forward.6} parent=5 // pred_region
      %s5799 = ssub.s32 %s10, 2
      // Predicated region
      $region49: #{custom_lstm_forward.6} parent=47 // pred_check
        %p5800 = pneg %p144
      $region50: #{custom_lstm_forward.6} parent=47 // pred_check_branch
        %5802 = sbr.rel (%p5800) target = $region52
      $region51: #{custom_lstm_forward.6} parent=47 // pred_region
        %s5803 = smul.u32 8, %s22
        %p5804 = scmp.lt.s32.totalorder %s5803, 15
        %s5805 = scalar_select %p5804, %s5803, 15
        %p5806 = scmp.lt.s32.totalorder %s21, 0
        %s5807 = scalar_select %p5806, %s21, 0
        %s5808 = sadd.s32 %s5807, %s5805
        %s5809 = smul.addr %s5808, 8
        %s5810 = scalar_lea.vmem %s4, %s5809
      $region52: #{custom_lstm_forward.6} parent=47 // pred_fallthru
        _
    $region48: #{custom_lstm_forward.6} parent=5 // pred_fallthru
      _
  $region6: #{custom_lstm_forward.6} parent=0 // loop_footer
    %s14 = sadd.s32 1, %s10
  $region7: #{custom_lstm_forward.6} parent=0 // loop_footer_branch
    %9 = sbr.rel target = $region3
  $region8: #{custom_lstm_forward.6} parent=0 // loop_exit
    _

</llo_original>
